<compile_context>
chip_gen: v7x
topology: tpu7x:2x2x1
jax: 0.10.0
libtpu: 0.0.40
codegen_flags: <defaults>
</compile_context>

<pallas_src>
import functools
import math

import numpy as np
import jax
import jax.numpy as jnp
from jax.experimental import pallas as pl
from jax.experimental.pallas import tpu as pltpu


# ------------------------------ helpers ------------------------------------

def _full_block_spec(a):
    zeros = (0,) * a.ndim
    return pl.BlockSpec(a.shape, lambda i, _z=zeros: _z)


def _layernorm(y, g, b, eps):
    mean = jnp.mean(y, axis=-1, keepdims=True)
    c = y - mean
    var = jnp.mean(c * c, axis=-1, keepdims=True)
    return c * jax.lax.rsqrt(var + eps) * g + b


@functools.lru_cache(maxsize=None)
def _conv_gather_plan(H, W):
    """Static gather indices / validity mask for the fused conv1->conv2 chain.

    For every conv2 output pixel p=(u,v) and conv2 tap t=(ki,kj) we need the
    9 (padded) raw-input pixels that conv1 uses to produce the conv1 value
    feeding that tap.  Taps whose conv1 position falls in conv2's zero padding
    are invalid (mask 0).
    """
    oh1 = (H - 1) // 2 + 1
    ow1 = (W - 1) // 2 + 1
    oh2 = (oh1 - 1) // 2 + 1
    ow2 = (ow1 - 1) // 2 + 1
    wp = W + 2
    opix = oh2 * ow2
    idx = np.zeros((opix, 9, 9), np.int32)
    mask = np.zeros((opix, 9), np.float32)
    for u in range(oh2):
        for v in range(ow2):
            p = u * ow2 + v
            for ki in range(3):
                for kj in range(3):
                    t = ki * 3 + kj
                    r = 2 * u + ki - 1
                    c = 2 * v + kj - 1
                    valid = (0 <= r < oh1) and (0 <= c < ow1)
                    mask[p, t] = 1.0 if valid else 0.0
                    if valid:
                        for a in range(3):
                            for b in range(3):
                                idx[p, t, a * 3 + b] = (2 * r + a) * wp + (2 * c + b)
    return idx, mask, oh1, ow1, oh2, ow2


# ------------------------- fused conv1+conv2+fc1 ----------------------------

def _conv_fc1_kernel(p_ref, w1_ref, b1_ref, w2_ref, b2_ref, wf_ref, bf_ref,
                     o_ref, pack_ref, *, opix, n_img):
    cdt = w1_ref.dtype
    # conv1 (+ReLU): one big matmul against a block-diagonal (81, 288) weight.
    # Invalid (conv2 zero-padding) taps have zeroed patches AND zeroed bias
    # rows in b1_ref, so they come out exactly 0 after the ReLU.
    y1 = jnp.dot(p_ref[...], w1_ref[...],
                 preferred_element_type=jnp.float32) + b1_ref[...]
    y1 = jnp.maximum(y1, 0.0)                                  # (opix*N, 288)

    # conv2 (+ReLU): one K=288 matmul.
    y2 = jnp.dot(y1.astype(cdt), w2_ref[...],
                 preferred_element_type=jnp.float32) + b2_ref[...]
    y2 = jnp.maximum(y2, 0.0)                                  # (opix*N, 32)

    # Repack rows (p, n) -> (n, p*32+c) in VMEM so fc1 is one K=512 matmul.
    for p in range(opix):
        pack_ref[:, p * 32:(p + 1) * 32] = (
            y2[p * n_img:(p + 1) * n_img, :].astype(pack_ref.dtype))

    h = jnp.dot(pack_ref[...], wf_ref[...],
                preferred_element_type=jnp.float32) + bf_ref[...]
    o_ref[...] = h.astype(o_ref.dtype)


def _conv_fc1_call(p1g, b1_full, prep, *, opix, n_img):
    e_dim = prep['fc1_wp'].shape[1]
    inputs = [p1g, prep['conv_w1bd'], b1_full, prep['conv_w2p'],
              prep['conv_b2'], prep['fc1_wp'], prep['fc1_b']]
    kernel = functools.partial(_conv_fc1_kernel, opix=opix, n_img=n_img)
    return pl.pallas_call(
        kernel,
        out_shape=jax.ShapeDtypeStruct((n_img, e_dim), jnp.float32),
        grid=(1,),
        in_specs=[_full_block_spec(a) for a in inputs],
        out_specs=pl.BlockSpec((n_img, e_dim), lambda i: (0, 0)),
        scratch_shapes=[pltpu.VMEM((n_img, opix * 32), prep['conv_w1bd'].dtype)],
        compiler_params=pltpu.CompilerParams(dimension_semantics=("arbitrary",)),
    )(*inputs)


# ---------------- fused transformer encoder stack (+ fc2 head) --------------

def _encoder_stack_kernel(src_ref, bias_ref, wqk_ref, bqk_ref, wvo_ref, bvo_ref,
                          bo_ref, g1_ref, beta1_ref, wff1_ref, bff1_ref,
                          wff2_ref, bff2_ref, g2_ref, beta2_ref,
                          wf2_ref, bf2_ref, o_ref, x_ref, *, nhead, eps):
    layer = pl.program_id(0)

    @pl.when(layer == 0)
    def _():
        x_ref[...] = src_ref[...]

    x = x_ref[...]                                   # (M, E) f32, rows = (b, s)
    m_rows, e_dim = x.shape
    dh = e_dim // nhead
    cdt = wqk_ref.dtype
    xc = x.astype(cdt)
    scale = 1.0 / math.sqrt(dh)
    bias = bias_ref[...]                             # host-precomputed (M, M)

    # Fused Q,K projection (N=2E) and fused V*out_proj projection (N=nhead*E).
    qk = jnp.dot(xc, wqk_ref[0], preferred_element_type=jnp.float32) + bqk_ref[0]
    vo = jnp.dot(xc, wvo_ref[0], preferred_element_type=jnp.float32) + bvo_ref[0]

    attn = jnp.broadcast_to(bo_ref[0], (m_rows, e_dim)).astype(jnp.float32)
    for h in range(nhead):
        qh = qk[:, h * dh:(h + 1) * dh]
        kh = qk[:, e_dim + h * dh:e_dim + (h + 1) * dh]
        s = jax.lax.dot_general(qh, kh, (((1,), (1,)), ((), ())),
                                preferred_element_type=jnp.float32)
        s = s * scale + bias
        s = s - jnp.max(s, axis=-1, keepdims=True)
        p = jnp.exp(s)
        p = p * pl.reciprocal(jnp.sum(p, axis=-1, keepdims=True), approx=True)
        attn = attn + jnp.dot(
            p.astype(cdt), vo[:, h * e_dim:(h + 1) * e_dim].astype(cdt),
            preferred_element_type=jnp.float32)

    # residual + LayerNorm1 (dropout = identity, eval mode)
    y = _layernorm(x + attn, g1_ref[0], beta1_ref[0], eps)

    # FFN: lin1 + ReLU + lin2; the (M, dim_ff) intermediate never leaves VMEM.
    ff = jnp.dot(y.astype(cdt), wff1_ref[0],
                 preferred_element_type=jnp.float32) + bff1_ref[0]
    ff = jnp.maximum(ff, 0.0)
    ff = jnp.dot(ff.astype(cdt), wff2_ref[0],
                 preferred_element_type=jnp.float32) + bff2_ref[0]
    z = _layernorm(y + ff, g2_ref[0], beta2_ref[0], eps)

    x_ref[...] = z                                   # activation stays resident

    @pl.when(layer == pl.num_programs(0) - 1)
    def _():
        out = jnp.dot(jnp.maximum(z, 0.0).astype(cdt), wf2_ref[...],
                      preferred_element_type=jnp.float32) + bf2_ref[...]
        o_ref[...] = out.astype(o_ref.dtype)


def _encoder_stack_call(src, attn_bias, prep, *, nhead, eps=1e-5):
    m_rows, e_dim = src.shape
    num_layers = prep['wqk'].shape[0]

    def const_spec(a):
        nd = a.ndim
        return pl.BlockSpec(a.shape, lambda l, _nd=nd: (0,) * _nd)

    def layer_spec(a):
        nd = a.ndim
        return pl.BlockSpec((1,) + a.shape[1:],
                            lambda l, _nd=nd: (l,) + (0,) * (_nd - 1))

    layer_keys = ['wqk', 'bqk', 'wvo', 'bvo', 'bo', 'ln1_g', 'ln1_b',
                  'w1', 'b1', 'w2', 'b2', 'ln2_g', 'ln2_b']
    inputs = ([src, attn_bias] + [prep[k] for k in layer_keys]
              + [prep['fc2_wt'], prep['fc2_b']])
    in_specs = ([const_spec(src), const_spec(attn_bias)]
                + [layer_spec(prep[k]) for k in layer_keys]
                + [const_spec(prep['fc2_wt']), const_spec(prep['fc2_b'])])

    kernel = functools.partial(_encoder_stack_kernel, nhead=nhead, eps=eps)
    return pl.pallas_call(
        kernel,
        out_shape=jax.ShapeDtypeStruct((m_rows, 1), jnp.float32),
        grid=(num_layers,),
        in_specs=in_specs,
        out_specs=pl.BlockSpec((m_rows, 1), lambda l: (0, 0)),
        scratch_shapes=[pltpu.VMEM((m_rows, e_dim), jnp.float32)],
        compiler_params=pltpu.CompilerParams(dimension_semantics=("arbitrary",)),
    )(*inputs)


# ------------------------- parameters (PyTorch layout) ----------------------

def init_params(key, num_fc_first, num_last, num_layers, dim_ff=2048):
    keys = [key]

    def take():
        keys[0], sub = jax.random.split(keys[0])
        return sub

    def w(shape, s=0.05):
        return s * jax.random.normal(take(), shape, jnp.float32)

    params = {
        'conv1_w': w((32, 1, 3, 3)),  'conv1_b': w((32,), 0.01),
        'conv2_w': w((32, 32, 3, 3)), 'conv2_b': w((32,), 0.01),
        'fc1_w':  w((num_last, num_fc_first)), 'fc1_b': w((num_last,), 0.01),
        'fc2_w':  w((1, num_last)),            'fc2_b': w((1,), 0.01),
        'layers': [],
    }
    for _ in range(num_layers):
        params['layers'].append({
            'in_proj_w':  w((3 * num_last, num_last)),
            'in_proj_b':  w((3 * num_last,), 0.01),
            'out_proj_w': w((num_last, num_last)),
            'out_proj_b': w((num_last,), 0.01),
            'lin1_w': w((dim_ff, num_last)),  'lin1_b': w((dim_ff,), 0.01),
            'lin2_w': w((num_last, dim_ff)),  'lin2_b': w((num_last,), 0.01),
            'ln1_g': jnp.ones((num_last,), jnp.float32),
            'ln1_b': jnp.zeros((num_last,), jnp.float32),
            'ln2_g': jnp.ones((num_last,), jnp.float32),
            'ln2_b': jnp.zeros((num_last,), jnp.float32),
        })
    return params


def prepare_params(params, *, H, W, nhead=8, param_dtype=jnp.bfloat16):
    """One-time host-side re-layout / fusion / bf16 cast of PyTorch params."""
    cdt = param_dtype
    E = params['fc1_w'].shape[0]
    assert E % nhead == 0
    dh = E // nhead
    _idx, mask, _oh1, _ow1, oh2, ow2 = _conv_gather_plan(H, W)
    opix = oh2 * ow2
    assert params['fc1_w'].shape[1] == 32 * opix

    w1_kc = jnp.asarray(params['conv1_w'], jnp.float32).reshape(32, 9).T  # (9,32)
    prep = {
        # block-diagonal conv1 weight: lane = (tap, channel)
        'conv_w1bd': jnp.kron(jnp.eye(9, dtype=jnp.float32), w1_kc).astype(cdt),
        # per-(pixel, tap) conv1 bias with the conv2-padding mask folded in
        'conv_b1_block': (jnp.asarray(mask)[:, :, None]
                          * jnp.asarray(params['conv1_b'], jnp.float32)
                          .reshape(1, 1, 32)).reshape(opix, 9 * 32),
        'conv_w2p': jnp.asarray(params['conv2_w'], jnp.float32)
                        .transpose(2, 3, 1, 0).reshape(9 * 32, 32).astype(cdt),
        'conv_b2': jnp.asarray(params['conv2_b'], jnp.float32).reshape(1, 32),
        # fc1 weight permuted to the (p, c) lane packing used by the kernel
        'fc1_wp': jnp.asarray(params['fc1_w'], jnp.float32)
                      .reshape(E, 32, opix).transpose(2, 1, 0)
                      .reshape(opix * 32, E).astype(cdt),
        'fc1_b': jnp.asarray(params['fc1_b'], jnp.float32).reshape(1, E),
        'fc2_wt': jnp.asarray(params['fc2_w'], jnp.float32).T.astype(cdt),  # (E,1)
        'fc2_b': jnp.asarray(params['fc2_b'], jnp.float32).reshape(1, 1),
    }

    wqk_l, bqk_l, wvo_l, bvo_l, bo_l = [], [], [], [], []
    g1_l, beta1_l, w1_l, b1_l, w2_l, b2_l, g2_l, beta2_l = ([] for _ in range(8))
    for lyr in params['layers']:
        w_in = jnp.asarray(lyr['in_proj_w'], jnp.float32)   # (3E, E) = [q;k;v]
        b_in = jnp.asarray(lyr['in_proj_b'], jnp.float32)
        wq, wk, wv = w_in[:E].T, w_in[E:2 * E].T, w_in[2 * E:].T    # (E, E) each
        bv = b_in[2 * E:]
        wo = jnp.asarray(lyr['out_proj_w'], jnp.float32).T           # (E, E)

        wqk_l.append(jnp.concatenate([wq, wk], axis=1))              # (E, 2E)
        bqk_l.append(jnp.concatenate([b_in[:E], b_in[E:2 * E]]).reshape(1, 2 * E))

        heads_w, heads_b = [], []
        for h in range(nhead):
            wv_h = wv[:, h * dh:(h + 1) * dh]                        # (E, dh)
            wo_h = wo[h * dh:(h + 1) * dh, :]                        # (dh, E)
            heads_w.append(wv_h @ wo_h)                              # (E, E)
            heads_b.append(bv[h * dh:(h + 1) * dh] @ wo_h)           # (E,)
        wvo_l.append(jnp.concatenate(heads_w, axis=1))               # (E, nhead*E)
        bvo_l.append(jnp.concatenate(heads_b).reshape(1, nhead * E))
        bo_l.append(jnp.asarray(lyr['out_proj_b'], jnp.float32).reshape(1, E))

        g1_l.append(jnp.asarray(lyr['ln1_g'], jnp.float32).reshape(1, E))
        beta1_l.append(jnp.asarray(lyr['ln1_b'], jnp.float32).reshape(1, E))
        w1_l.append(jnp.asarray(lyr['lin1_w'], jnp.float32).T)       # (E, dff)
        b1_l.append(jnp.asarray(lyr['lin1_b'], jnp.float32).reshape(1, -1))
        w2_l.append(jnp.asarray(lyr['lin2_w'], jnp.float32).T)       # (dff, E)
        b2_l.append(jnp.asarray(lyr['lin2_b'], jnp.float32).reshape(1, E))
        g2_l.append(jnp.asarray(lyr['ln2_g'], jnp.float32).reshape(1, E))
        beta2_l.append(jnp.asarray(lyr['ln2_b'], jnp.float32).reshape(1, E))

    prep.update({
        'wqk': jnp.stack(wqk_l).astype(cdt),   'bqk': jnp.stack(bqk_l),
        'wvo': jnp.stack(wvo_l).astype(cdt),   'bvo': jnp.stack(bvo_l),
        'bo': jnp.stack(bo_l),
        'ln1_g': jnp.stack(g1_l), 'ln1_b': jnp.stack(beta1_l),
        'w1': jnp.stack(w1_l).astype(cdt), 'b1': jnp.stack(b1_l),
        'w2': jnp.stack(w2_l).astype(cdt), 'b2': jnp.stack(b2_l),
        'ln2_g': jnp.stack(g2_l), 'ln2_b': jnp.stack(beta2_l),
    })
    return prep


# ------------------------------- forward ------------------------------------

def mnist_trans_forward(prep, x, *, nhead=8):
    B, S, C, H, W = x.shape
    assert C == 1
    n_img = B * S
    idx, mask, _oh1, _ow1, oh2, ow2 = _conv_gather_plan(H, W)
    opix = oh2 * ow2

    # Host-side static-index gather of the recompute-im2col (rows = (p, n),
    # lanes = (tap, 3x3 patch)), masked and pre-cast to bf16.
    # NOTE: this quantizes the raw network input to bf16 (same as the weights).
    xp = jnp.pad(x.reshape(n_img, H, W), ((0, 0), (1, 1), (1, 1)))
    xpf = xp.reshape(n_img, (H + 2) * (W + 2))
    g = jnp.take(xpf, jnp.asarray(idx.reshape(-1)), axis=1)
    g = g.reshape(n_img, opix, 81) * jnp.asarray(np.repeat(mask, 9, axis=1))[None]
    p1g = (g.transpose(1, 0, 2).reshape(opix * n_img, 81)
             .astype(prep['conv_w1bd'].dtype))
    b1_full = jnp.repeat(prep['conv_b1_block'], n_img, axis=0)  # (opix*N, 288)

    # fused conv1 -> conv2 -> fc1 (single pallas_call)
    h = _conv_fc1_call(p1g, b1_full, prep, opix=opix, n_img=n_img)  # (N, E)

    # Additive attention mask (batch_first=False: seq dim = B, batch dim = S);
    # rows ordered (b, s) -> batch index = row % S.
    r = np.arange(n_img)
    same = (r[:, None] % S) == (r[None, :] % S)
    attn_bias = jnp.asarray(np.where(same, 0.0, -1e30).astype(np.float32))

    # fused encoder stack + ReLU + fc2 head (single pallas_call, grid=layers)
    logits = _encoder_stack_call(h, attn_bias, prep, nhead=nhead)   # (N, 1)
    return logits.reshape(B, S, 1)


if __name__ == "__main__":
    B, S, H, W = 4, 4, 16, 16                     # jigsaw input: (B, tiles, 1, H, W)
    num_last, num_layers = 64, 2                  # d_model divisible by nhead=8
    num_fc_first = 32 * (H // 4) * (W // 4)       # = 512 after two stride-2 convs

    key = jax.random.PRNGKey(0)
    kx, kp = jax.random.split(key)
    x = jax.random.normal(kx, (B, S, 1, H, W), jnp.float32)
    params = init_params(kp, num_fc_first, num_last, num_layers)
    prep = prepare_params(params, H=H, W=W, nhead=8)

    fwd = jax.jit(functools.partial(mnist_trans_forward, nhead=8))
    out = fwd(prep, x)
    jax.block_until_ready(out)
    assert out.shape == (B, S, 1) and out.dtype == jnp.float32
    assert bool(jnp.all(jnp.isfinite(out)))
    print("KERNEL_OK")
</pallas_src>

<mosaic_0001>
module attributes {stable_mosaic.version = 11 : i64} {
  func.func @_conv_fc1_kernel(%arg0: i32, %arg1: memref<256x81xbf16, #tpu.memory_space<vmem>>, %arg2: memref<81x288xbf16, #tpu.memory_space<vmem>>, %arg3: memref<256x288xf32, #tpu.memory_space<vmem>>, %arg4: memref<288x32xbf16, #tpu.memory_space<vmem>>, %arg5: memref<1x32xf32, #tpu.memory_space<vmem>>, %arg6: memref<512x64xbf16, #tpu.memory_space<vmem>>, %arg7: memref<1x64xf32, #tpu.memory_space<vmem>>, %arg8: memref<16x64xf32, #tpu.memory_space<vmem>>, %arg9: memref<16x512xbf16, #tpu.memory_space<vmem>>) attributes {dimension_semantics = [#tpu.dimension_semantics<arbitrary>], iteration_bounds = array<i64: 1>, scalar_prefetch = 0 : i64, scratch_operands = 1 : i64, tpu.core_type = #tpu.core_type<tc>, window_params = [{pipeline_mode = #tpu.pipeline_mode<synchronous>, transform_indices = @transform_0, window_bounds = array<i64: 256, 81>}, {pipeline_mode = #tpu.pipeline_mode<synchronous>, transform_indices = @transform_1, window_bounds = array<i64: 81, 288>}, {pipeline_mode = #tpu.pipeline_mode<synchronous>, transform_indices = @transform_2, window_bounds = array<i64: 256, 288>}, {pipeline_mode = #tpu.pipeline_mode<synchronous>, transform_indices = @transform_3, window_bounds = array<i64: 288, 32>}, {pipeline_mode = #tpu.pipeline_mode<synchronous>, transform_indices = @transform_4, window_bounds = array<i64: 1, 32>}, {pipeline_mode = #tpu.pipeline_mode<synchronous>, transform_indices = @transform_5, window_bounds = array<i64: 512, 64>}, {pipeline_mode = #tpu.pipeline_mode<synchronous>, transform_indices = @transform_6, window_bounds = array<i64: 1, 64>}, {pipeline_mode = #tpu.pipeline_mode<synchronous>, transform_indices = @transform_7, window_bounds = array<i64: 16, 64>}]} {
    %c0 = arith.constant 0 : index
    %c0_0 = arith.constant 0 : index
    %0 = vector.load %arg1[%c0, %c0_0] : memref<256x81xbf16, #tpu.memory_space<vmem>>, vector<256x81xbf16>
    %c0_1 = arith.constant 0 : index
    %c0_2 = arith.constant 0 : index
    %1 = vector.load %arg2[%c0_1, %c0_2] : memref<81x288xbf16, #tpu.memory_space<vmem>>, vector<81x288xbf16>
    %cst = arith.constant dense<0.000000e+00> : vector<256x288xf32>
    %2 = tpu.matmul %0, %1, %cst {dimension_numbers = #tpu.dot_dimension_numbers<[1], [0], [0], [1], [0, 0, 1, 1], [], []>} : vector<256x81xbf16>, vector<81x288xbf16>, vector<256x288xf32> -> vector<256x288xf32>
    %c0_3 = arith.constant 0 : index
    %c0_4 = arith.constant 0 : index
    %3 = vector.load %arg3[%c0_3, %c0_4] : memref<256x288xf32, #tpu.memory_space<vmem>>, vector<256x288xf32>
    %4 = arith.addf %2, %3 : vector<256x288xf32>
    %cst_5 = arith.constant 0.000000e+00 : f32
    %5 = vector.broadcast %cst_5 : f32 to vector<256x288xf32>
    %6 = arith.maximumf %4, %5 : vector<256x288xf32>
    %7 = arith.truncf %6 : vector<256x288xf32> to vector<256x288xbf16>
    %c0_6 = arith.constant 0 : index
    %c0_7 = arith.constant 0 : index
    %8 = vector.load %arg4[%c0_6, %c0_7] : memref<288x32xbf16, #tpu.memory_space<vmem>>, vector<288x32xbf16>
    %cst_8 = arith.constant dense<0.000000e+00> : vector<256x32xf32>
    %9 = tpu.matmul %7, %8, %cst_8 {dimension_numbers = #tpu.dot_dimension_numbers<[1], [0], [0], [1], [0, 0, 1, 1], [], []>} : vector<256x288xbf16>, vector<288x32xbf16>, vector<256x32xf32> -> vector<256x32xf32>
    %c0_9 = arith.constant 0 : index
    %c0_10 = arith.constant 0 : index
    %10 = vector.load %arg5[%c0_9, %c0_10] : memref<1x32xf32, #tpu.memory_space<vmem>>, vector<1x32xf32>
    %11 = vector.broadcast %10 : vector<1x32xf32> to vector<256x32xf32>
    %12 = arith.addf %9, %11 : vector<256x32xf32>
    %cst_11 = arith.constant 0.000000e+00 : f32
    %13 = vector.broadcast %cst_11 : f32 to vector<256x32xf32>
    %14 = arith.maximumf %12, %13 : vector<256x32xf32>
    %15 = vector.extract_strided_slice %14 {offsets = [0, 0], sizes = [16, 32], strides = [1, 1]} : vector<256x32xf32> to vector<16x32xf32>
    %16 = arith.truncf %15 : vector<16x32xf32> to vector<16x32xbf16>
    %c0_12 = arith.constant 0 : index
    %c0_13 = arith.constant 0 : index
    %17 = vector.load %arg9[%c0_12, %c0_13] : memref<16x512xbf16, #tpu.memory_space<vmem>>, vector<16x32xbf16>
    tpu.vector_store %arg9[%c0_12, %c0_13], %16 {strides = array<i32>} : memref<16x512xbf16, #tpu.memory_space<vmem>>, vector<16x32xbf16>,
    %18 = vector.extract_strided_slice %14 {offsets = [16, 0], sizes = [16, 32], strides = [1, 1]} : vector<256x32xf32> to vector<16x32xf32>
    %19 = arith.truncf %18 : vector<16x32xf32> to vector<16x32xbf16>
    %c0_14 = arith.constant 0 : index
    %c32 = arith.constant 32 : index
    %20 = vector.load %arg9[%c0_14, %c32] : memref<16x512xbf16, #tpu.memory_space<vmem>>, vector<16x32xbf16>
    tpu.vector_store %arg9[%c0_14, %c32], %19 {strides = array<i32>} : memref<16x512xbf16, #tpu.memory_space<vmem>>, vector<16x32xbf16>,
    %21 = vector.extract_strided_slice %14 {offsets = [32, 0], sizes = [16, 32], strides = [1, 1]} : vector<256x32xf32> to vector<16x32xf32>
    %22 = arith.truncf %21 : vector<16x32xf32> to vector<16x32xbf16>
    %c0_15 = arith.constant 0 : index
    %c64 = arith.constant 64 : index
    %23 = vector.load %arg9[%c0_15, %c64] : memref<16x512xbf16, #tpu.memory_space<vmem>>, vector<16x32xbf16>
    tpu.vector_store %arg9[%c0_15, %c64], %22 {strides = array<i32>} : memref<16x512xbf16, #tpu.memory_space<vmem>>, vector<16x32xbf16>,
    %24 = vector.extract_strided_slice %14 {offsets = [48, 0], sizes = [16, 32], strides = [1, 1]} : vector<256x32xf32> to vector<16x32xf32>
    %25 = arith.truncf %24 : vector<16x32xf32> to vector<16x32xbf16>
    %c0_16 = arith.constant 0 : index
    %c96 = arith.constant 96 : index
    %26 = vector.load %arg9[%c0_16, %c96] : memref<16x512xbf16, #tpu.memory_space<vmem>>, vector<16x32xbf16>
    tpu.vector_store %arg9[%c0_16, %c96], %25 {strides = array<i32>} : memref<16x512xbf16, #tpu.memory_space<vmem>>, vector<16x32xbf16>,
    %27 = vector.extract_strided_slice %14 {offsets = [64, 0], sizes = [16, 32], strides = [1, 1]} : vector<256x32xf32> to vector<16x32xf32>
    %28 = arith.truncf %27 : vector<16x32xf32> to vector<16x32xbf16>
    %c0_17 = arith.constant 0 : index
    %c128 = arith.constant 128 : index
    %29 = vector.load %arg9[%c0_17, %c128] : memref<16x512xbf16, #tpu.memory_space<vmem>>, vector<16x32xbf16>
    tpu.vector_store %arg9[%c0_17, %c128], %28 {strides = array<i32>} : memref<16x512xbf16, #tpu.memory_space<vmem>>, vector<16x32xbf16>,
    %30 = vector.extract_strided_slice %14 {offsets = [80, 0], sizes = [16, 32], strides = [1, 1]} : vector<256x32xf32> to vector<16x32xf32>
    %31 = arith.truncf %30 : vector<16x32xf32> to vector<16x32xbf16>
    %c0_18 = arith.constant 0 : index
    %c160 = arith.constant 160 : index
    %32 = vector.load %arg9[%c0_18, %c160] : memref<16x512xbf16, #tpu.memory_space<vmem>>, vector<16x32xbf16>
    tpu.vector_store %arg9[%c0_18, %c160], %31 {strides = array<i32>} : memref<16x512xbf16, #tpu.memory_space<vmem>>, vector<16x32xbf16>,
    %33 = vector.extract_strided_slice %14 {offsets = [96, 0], sizes = [16, 32], strides = [1, 1]} : vector<256x32xf32> to vector<16x32xf32>
    %34 = arith.truncf %33 : vector<16x32xf32> to vector<16x32xbf16>
    %c0_19 = arith.constant 0 : index
    %c192 = arith.constant 192 : index
    %35 = vector.load %arg9[%c0_19, %c192] : memref<16x512xbf16, #tpu.memory_space<vmem>>, vector<16x32xbf16>
    tpu.vector_store %arg9[%c0_19, %c192], %34 {strides = array<i32>} : memref<16x512xbf16, #tpu.memory_space<vmem>>, vector<16x32xbf16>,
    %36 = vector.extract_strided_slice %14 {offsets = [112, 0], sizes = [16, 32], strides = [1, 1]} : vector<256x32xf32> to vector<16x32xf32>
    %37 = arith.truncf %36 : vector<16x32xf32> to vector<16x32xbf16>
    %c0_20 = arith.constant 0 : index
    %c224 = arith.constant 224 : index
    %38 = vector.load %arg9[%c0_20, %c224] : memref<16x512xbf16, #tpu.memory_space<vmem>>, vector<16x32xbf16>
    tpu.vector_store %arg9[%c0_20, %c224], %37 {strides = array<i32>} : memref<16x512xbf16, #tpu.memory_space<vmem>>, vector<16x32xbf16>,
    %39 = vector.extract_strided_slice %14 {offsets = [128, 0], sizes = [16, 32], strides = [1, 1]} : vector<256x32xf32> to vector<16x32xf32>
    %40 = arith.truncf %39 : vector<16x32xf32> to vector<16x32xbf16>
    %c0_21 = arith.constant 0 : index
    %c256 = arith.constant 256 : index
    %41 = vector.load %arg9[%c0_21, %c256] : memref<16x512xbf16, #tpu.memory_space<vmem>>, vector<16x32xbf16>
    tpu.vector_store %arg9[%c0_21, %c256], %40 {strides = array<i32>} : memref<16x512xbf16, #tpu.memory_space<vmem>>, vector<16x32xbf16>,
    %42 = vector.extract_strided_slice %14 {offsets = [144, 0], sizes = [16, 32], strides = [1, 1]} : vector<256x32xf32> to vector<16x32xf32>
    %43 = arith.truncf %42 : vector<16x32xf32> to vector<16x32xbf16>
    %c0_22 = arith.constant 0 : index
    %c288 = arith.constant 288 : index
    %44 = vector.load %arg9[%c0_22, %c288] : memref<16x512xbf16, #tpu.memory_space<vmem>>, vector<16x32xbf16>
    tpu.vector_store %arg9[%c0_22, %c288], %43 {strides = array<i32>} : memref<16x512xbf16, #tpu.memory_space<vmem>>, vector<16x32xbf16>,
    %45 = vector.extract_strided_slice %14 {offsets = [160, 0], sizes = [16, 32], strides = [1, 1]} : vector<256x32xf32> to vector<16x32xf32>
    %46 = arith.truncf %45 : vector<16x32xf32> to vector<16x32xbf16>
    %c0_23 = arith.constant 0 : index
    %c320 = arith.constant 320 : index
    %47 = vector.load %arg9[%c0_23, %c320] : memref<16x512xbf16, #tpu.memory_space<vmem>>, vector<16x32xbf16>
    tpu.vector_store %arg9[%c0_23, %c320], %46 {strides = array<i32>} : memref<16x512xbf16, #tpu.memory_space<vmem>>, vector<16x32xbf16>,
    %48 = vector.extract_strided_slice %14 {offsets = [176, 0], sizes = [16, 32], strides = [1, 1]} : vector<256x32xf32> to vector<16x32xf32>
    %49 = arith.truncf %48 : vector<16x32xf32> to vector<16x32xbf16>
    %c0_24 = arith.constant 0 : index
    %c352 = arith.constant 352 : index
    %50 = vector.load %arg9[%c0_24, %c352] : memref<16x512xbf16, #tpu.memory_space<vmem>>, vector<16x32xbf16>
    tpu.vector_store %arg9[%c0_24, %c352], %49 {strides = array<i32>} : memref<16x512xbf16, #tpu.memory_space<vmem>>, vector<16x32xbf16>,
    %51 = vector.extract_strided_slice %14 {offsets = [192, 0], sizes = [16, 32], strides = [1, 1]} : vector<256x32xf32> to vector<16x32xf32>
    %52 = arith.truncf %51 : vector<16x32xf32> to vector<16x32xbf16>
    %c0_25 = arith.constant 0 : index
    %c384 = arith.constant 384 : index
    %53 = vector.load %arg9[%c0_25, %c384] : memref<16x512xbf16, #tpu.memory_space<vmem>>, vector<16x32xbf16>
    tpu.vector_store %arg9[%c0_25, %c384], %52 {strides = array<i32>} : memref<16x512xbf16, #tpu.memory_space<vmem>>, vector<16x32xbf16>,
    %54 = vector.extract_strided_slice %14 {offsets = [208, 0], sizes = [16, 32], strides = [1, 1]} : vector<256x32xf32> to vector<16x32xf32>
    %55 = arith.truncf %54 : vector<16x32xf32> to vector<16x32xbf16>
    %c0_26 = arith.constant 0 : index
    %c416 = arith.constant 416 : index
    %56 = vector.load %arg9[%c0_26, %c416] : memref<16x512xbf16, #tpu.memory_space<vmem>>, vector<16x32xbf16>
    tpu.vector_store %arg9[%c0_26, %c416], %55 {strides = array<i32>} : memref<16x512xbf16, #tpu.memory_space<vmem>>, vector<16x32xbf16>,
    %57 = vector.extract_strided_slice %14 {offsets = [224, 0], sizes = [16, 32], strides = [1, 1]} : vector<256x32xf32> to vector<16x32xf32>
    %58 = arith.truncf %57 : vector<16x32xf32> to vector<16x32xbf16>
    %c0_27 = arith.constant 0 : index
    %c448 = arith.constant 448 : index
    %59 = vector.load %arg9[%c0_27, %c448] : memref<16x512xbf16, #tpu.memory_space<vmem>>, vector<16x32xbf16>
    tpu.vector_store %arg9[%c0_27, %c448], %58 {strides = array<i32>} : memref<16x512xbf16, #tpu.memory_space<vmem>>, vector<16x32xbf16>,
    %60 = vector.extract_strided_slice %14 {offsets = [240, 0], sizes = [16, 32], strides = [1, 1]} : vector<256x32xf32> to vector<16x32xf32>
    %61 = arith.truncf %60 : vector<16x32xf32> to vector<16x32xbf16>
    %c0_28 = arith.constant 0 : index
    %c480 = arith.constant 480 : index
    %62 = vector.load %arg9[%c0_28, %c480] : memref<16x512xbf16, #tpu.memory_space<vmem>>, vector<16x32xbf16>
    tpu.vector_store %arg9[%c0_28, %c480], %61 {strides = array<i32>} : memref<16x512xbf16, #tpu.memory_space<vmem>>, vector<16x32xbf16>,
    %c0_29 = arith.constant 0 : index
    %c0_30 = arith.constant 0 : index
    %63 = vector.load %arg9[%c0_29, %c0_30] : memref<16x512xbf16, #tpu.memory_space<vmem>>, vector<16x512xbf16>
    %c0_31 = arith.constant 0 : index
    %c0_32 = arith.constant 0 : index
    %64 = vector.load %arg6[%c0_31, %c0_32] : memref<512x64xbf16, #tpu.memory_space<vmem>>, vector<512x64xbf16>
    %cst_33 = arith.constant dense<0.000000e+00> : vector<16x64xf32>
    %65 = tpu.matmul %63, %64, %cst_33 {dimension_numbers = #tpu.dot_dimension_numbers<[1], [0], [0], [1], [0, 0, 1, 1], [], []>} : vector<16x512xbf16>, vector<512x64xbf16>, vector<16x64xf32> -> vector<16x64xf32>
    %c0_34 = arith.constant 0 : index
    %c0_35 = arith.constant 0 : index
    %66 = vector.load %arg7[%c0_34, %c0_35] : memref<1x64xf32, #tpu.memory_space<vmem>>, vector<1x64xf32>
    %67 = vector.broadcast %66 : vector<1x64xf32> to vector<16x64xf32>
    %68 = arith.addf %65, %67 : vector<16x64xf32>
    %c0_36 = arith.constant 0 : index
    %c0_37 = arith.constant 0 : index
    %69 = vector.load %arg8[%c0_36, %c0_37] : memref<16x64xf32, #tpu.memory_space<vmem>>, vector<16x64xf32>
    tpu.vector_store %arg8[%c0_36, %c0_37], %68 {strides = array<i32>} : memref<16x64xf32, #tpu.memory_space<vmem>>, vector<16x64xf32>,
    return
  }
  func.func @transform_0(%arg0: i32) -> (i32, i32) {
    %c0_i32 = arith.constant 0 : i32
    %c0_i32_0 = arith.constant 0 : i32
    %c0_i32_1 = arith.constant 0 : i32
    return %c0_i32, %c0_i32_0 : i32, i32
  }
  func.func @transform_1(%arg0: i32) -> (i32, i32) {
    %c0_i32 = arith.constant 0 : i32
    %c0_i32_0 = arith.constant 0 : i32
    %c0_i32_1 = arith.constant 0 : i32
    return %c0_i32, %c0_i32_0 : i32, i32
  }
  func.func @transform_2(%arg0: i32) -> (i32, i32) {
    %c0_i32 = arith.constant 0 : i32
    %c0_i32_0 = arith.constant 0 : i32
    %c0_i32_1 = arith.constant 0 : i32
    return %c0_i32, %c0_i32_0 : i32, i32
  }
  func.func @transform_3(%arg0: i32) -> (i32, i32) {
    %c0_i32 = arith.constant 0 : i32
    %c0_i32_0 = arith.constant 0 : i32
    %c0_i32_1 = arith.constant 0 : i32
    return %c0_i32, %c0_i32_0 : i32, i32
  }
  func.func @transform_4(%arg0: i32) -> (i32, i32) {
    %c0_i32 = arith.constant 0 : i32
    %c0_i32_0 = arith.constant 0 : i32
    %c0_i32_1 = arith.constant 0 : i32
    return %c0_i32, %c0_i32_0 : i32, i32
  }
  func.func @transform_5(%arg0: i32) -> (i32, i32) {
    %c0_i32 = arith.constant 0 : i32
    %c0_i32_0 = arith.constant 0 : i32
    %c0_i32_1 = arith.constant 0 : i32
    return %c0_i32, %c0_i32_0 : i32, i32
  }
  func.func @transform_6(%arg0: i32) -> (i32, i32) {
    %c0_i32 = arith.constant 0 : i32
    %c0_i32_0 = arith.constant 0 : i32
    %c0_i32_1 = arith.constant 0 : i32
    return %c0_i32, %c0_i32_0 : i32, i32
  }
  func.func @transform_7(%arg0: i32) -> (i32, i32) {
    %c0_i32 = arith.constant 0 : i32
    %c0_i32_0 = arith.constant 0 : i32
    %c0_i32_1 = arith.constant 0 : i32
    return %c0_i32, %c0_i32_0 : i32, i32
  }
}

module attributes {stable_mosaic.version = 11 : i64} {
  func.func @_encoder_stack_kernel(%arg0: i32, %arg1: memref<16x64xf32, #tpu.memory_space<vmem>>, %arg2: memref<16x16xf32, #tpu.memory_space<vmem>>, %arg3: memref<1x64x128xbf16, #tpu.memory_space<vmem>>, %arg4: memref<1x1x128xf32, #tpu.memory_space<vmem>>, %arg5: memref<1x64x512xbf16, #tpu.memory_space<vmem>>, %arg6: memref<1x1x512xf32, #tpu.memory_space<vmem>>, %arg7: memref<1x1x64xf32, #tpu.memory_space<vmem>>, %arg8: memref<1x1x64xf32, #tpu.memory_space<vmem>>, %arg9: memref<1x1x64xf32, #tpu.memory_space<vmem>>, %arg10: memref<1x64x2048xbf16, #tpu.memory_space<vmem>>, %arg11: memref<1x1x2048xf32, #tpu.memory_space<vmem>>, %arg12: memref<1x2048x64xbf16, #tpu.memory_space<vmem>>, %arg13: memref<1x1x64xf32, #tpu.memory_space<vmem>>, %arg14: memref<1x1x64xf32, #tpu.memory_space<vmem>>, %arg15: memref<1x1x64xf32, #tpu.memory_space<vmem>>, %arg16: memref<64x1xbf16, #tpu.memory_space<vmem>>, %arg17: memref<1x1xf32, #tpu.memory_space<vmem>>, %arg18: memref<16x1xf32, #tpu.memory_space<vmem>>, %arg19: memref<16x64xf32, #tpu.memory_space<vmem>>) attributes {dimension_semantics = [#tpu.dimension_semantics<arbitrary>], iteration_bounds = array<i64: 2>, scalar_prefetch = 0 : i64, scratch_operands = 1 : i64, tpu.core_type = #tpu.core_type<tc>, window_params = [{pipeline_mode = #tpu.pipeline_mode<synchronous>, transform_indices = @transform_0, window_bounds = array<i64: 16, 64>}, {pipeline_mode = #tpu.pipeline_mode<synchronous>, transform_indices = @transform_1, window_bounds = array<i64: 16, 16>}, {transform_indices = @transform_2, window_bounds = array<i64: 1, 64, 128>}, {transform_indices = @transform_3, window_bounds = array<i64: 1, 1, 128>}, {transform_indices = @transform_4, window_bounds = array<i64: 1, 64, 512>}, {transform_indices = @transform_5, window_bounds = array<i64: 1, 1, 512>}, {transform_indices = @transform_6, window_bounds = array<i64: 1, 1, 64>}, {transform_indices = @transform_7, window_bounds = array<i64: 1, 1, 64>}, {transform_indices = @transform_8, window_bounds = array<i64: 1, 1, 64>}, {transform_indices = @transform_9, window_bounds = array<i64: 1, 64, 2048>}, {transform_indices = @transform_10, window_bounds = array<i64: 1, 1, 2048>}, {transform_indices = @transform_11, window_bounds = array<i64: 1, 2048, 64>}, {transform_indices = @transform_12, window_bounds = array<i64: 1, 1, 64>}, {transform_indices = @transform_13, window_bounds = array<i64: 1, 1, 64>}, {transform_indices = @transform_14, window_bounds = array<i64: 1, 1, 64>}, {pipeline_mode = #tpu.pipeline_mode<synchronous>, transform_indices = @transform_15, window_bounds = array<i64: 64, 1>}, {pipeline_mode = #tpu.pipeline_mode<synchronous>, transform_indices = @transform_16, window_bounds = array<i64: 1, 1>}, {pipeline_mode = #tpu.pipeline_mode<synchronous>, transform_indices = @transform_17, window_bounds = array<i64: 16, 1>}]} {
    %c0_i32 = arith.constant 0 : i32
    %0 = arith.cmpi eq, %arg0, %c0_i32 : i32
    %1 = arith.extui %0 : i1 to i32
    %c0_i32_0 = arith.constant 0 : i32
    %2 = arith.cmpi ne, %1, %c0_i32_0 : i32
    scf.if %2 {
      %c0_100 = arith.constant 0 : index
      %c0_101 = arith.constant 0 : index
      %264 = vector.load %arg1[%c0_100, %c0_101] : memref<16x64xf32, #tpu.memory_space<vmem>>, vector<16x64xf32>
      %c0_102 = arith.constant 0 : index
      %c0_103 = arith.constant 0 : index
      %265 = vector.load %arg19[%c0_102, %c0_103] : memref<16x64xf32, #tpu.memory_space<vmem>>, vector<16x64xf32>
      tpu.vector_store %arg19[%c0_102, %c0_103], %264 {strides = array<i32>} : memref<16x64xf32, #tpu.memory_space<vmem>>, vector<16x64xf32>,
    } else {
    }
    %c0 = arith.constant 0 : index
    %c0_1 = arith.constant 0 : index
    %3 = vector.load %arg19[%c0, %c0_1] : memref<16x64xf32, #tpu.memory_space<vmem>>, vector<16x64xf32>
    %4 = arith.truncf %3 : vector<16x64xf32> to vector<16x64xbf16>
    %c0_2 = arith.constant 0 : index
    %c0_3 = arith.constant 0 : index
    %5 = vector.load %arg2[%c0_2, %c0_3] : memref<16x16xf32, #tpu.memory_space<vmem>>, vector<16x16xf32>
    %c0_4 = arith.constant 0 : index
    %c0_5 = arith.constant 0 : index
    %c0_6 = arith.constant 0 : index
    %6 = vector.load %arg3[%c0_4, %c0_5, %c0_6] : memref<1x64x128xbf16, #tpu.memory_space<vmem>>, vector<1x64x128xbf16>
    %7 = vector.shape_cast %6 : vector<1x64x128xbf16> to vector<64x128xbf16>
    %cst = arith.constant dense<0.000000e+00> : vector<16x128xf32>
    %8 = tpu.matmul %4, %7, %cst {dimension_numbers = #tpu.dot_dimension_numbers<[1], [0], [0], [1], [0, 0, 1, 1], [], []>} : vector<16x64xbf16>, vector<64x128xbf16>, vector<16x128xf32> -> vector<16x128xf32>
    %c0_7 = arith.constant 0 : index
    %c0_8 = arith.constant 0 : index
    %c0_9 = arith.constant 0 : index
    %9 = vector.load %arg4[%c0_7, %c0_8, %c0_9] : memref<1x1x128xf32, #tpu.memory_space<vmem>>, vector<1x1x128xf32>
    %10 = vector.shape_cast %9 : vector<1x1x128xf32> to vector<1x128xf32>
    %11 = vector.broadcast %10 : vector<1x128xf32> to vector<16x128xf32>
    %12 = arith.addf %8, %11 : vector<16x128xf32>
    %c0_10 = arith.constant 0 : index
    %c0_11 = arith.constant 0 : index
    %c0_12 = arith.constant 0 : index
    %13 = vector.load %arg5[%c0_10, %c0_11, %c0_12] : memref<1x64x512xbf16, #tpu.memory_space<vmem>>, vector<1x64x512xbf16>
    %14 = vector.shape_cast %13 : vector<1x64x512xbf16> to vector<64x512xbf16>
    %cst_13 = arith.constant dense<0.000000e+00> : vector<16x512xf32>
    %15 = tpu.matmul %4, %14, %cst_13 {dimension_numbers = #tpu.dot_dimension_numbers<[1], [0], [0], [1], [0, 0, 1, 1], [], []>} : vector<16x64xbf16>, vector<64x512xbf16>, vector<16x512xf32> -> vector<16x512xf32>
    %c0_14 = arith.constant 0 : index
    %c0_15 = arith.constant 0 : index
    %c0_16 = arith.constant 0 : index
    %16 = vector.load %arg6[%c0_14, %c0_15, %c0_16] : memref<1x1x512xf32, #tpu.memory_space<vmem>>, vector<1x1x512xf32>
    %17 = vector.shape_cast %16 : vector<1x1x512xf32> to vector<1x512xf32>
    %18 = vector.broadcast %17 : vector<1x512xf32> to vector<16x512xf32>
    %19 = arith.addf %15, %18 : vector<16x512xf32>
    %c0_17 = arith.constant 0 : index
    %c0_18 = arith.constant 0 : index
    %c0_19 = arith.constant 0 : index
    %20 = vector.load %arg7[%c0_17, %c0_18, %c0_19] : memref<1x1x64xf32, #tpu.memory_space<vmem>>, vector<1x1x64xf32>
    %21 = vector.shape_cast %20 : vector<1x1x64xf32> to vector<1x64xf32>
    %22 = vector.shape_cast %21 : vector<1x64xf32> to vector<1x64xf32>
    %23 = vector.broadcast %22 : vector<1x64xf32> to vector<16x64xf32>
    %24 = vector.extract_strided_slice %12 {offsets = [0, 0], sizes = [16, 8], strides = [1, 1]} : vector<16x128xf32> to vector<16x8xf32>
    %25 = vector.extract_strided_slice %12 {offsets = [0, 64], sizes = [16, 8], strides = [1, 1]} : vector<16x128xf32> to vector<16x8xf32>
    %cst_20 = arith.constant dense<0.000000e+00> : vector<16x16xf32>
    %26 = tpu.matmul %24, %25, %cst_20 {dimension_numbers = #tpu.dot_dimension_numbers<[1], [1], [0], [0], [0, 0, 1, 0], [], []>} : vector<16x8xf32>, vector<16x8xf32>, vector<16x16xf32> -> vector<16x16xf32>
    %cst_21 = arith.constant 0.353553385 : f32
    %27 = vector.broadcast %cst_21 : f32 to vector<16x16xf32>
    %28 = arith.mulf %26, %27 : vector<16x16xf32>
    %29 = arith.addf %28, %5 : vector<16x16xf32>
    %cst_22 = arith.constant dense<0xFF800000> : vector<16xf32>
    %30 = vector.multi_reduction <maximumf>, %29, %cst_22 [1] : vector<16x16xf32> to vector<16xf32>
    %31 = vector.shape_cast %30 : vector<16xf32> to vector<16x1xf32>
    %32 = vector.broadcast %31 : vector<16x1xf32> to vector<16x16xf32>
    %33 = arith.subf %29, %32 : vector<16x16xf32>
    %34 = math.exp %33 : vector<16x16xf32>
    %cst_23 = arith.constant dense<0.000000e+00> : vector<16xf32>
    %35 = vector.multi_reduction <add>, %34, %cst_23 [1] : vector<16x16xf32> to vector<16xf32>
    %36 = vector.shape_cast %35 : vector<16xf32> to vector<16x1xf32>
    %37 = tpu.reciprocal %36 {approx = true} : vector<16x1xf32> -> vector<16x1xf32>
    %38 = vector.broadcast %37 : vector<16x1xf32> to vector<16x16xf32>
    %39 = arith.mulf %34, %38 : vector<16x16xf32>
    %40 = arith.truncf %39 : vector<16x16xf32> to vector<16x16xbf16>
    %41 = vector.extract_strided_slice %19 {offsets = [0, 0], sizes = [16, 64], strides = [1, 1]} : vector<16x512xf32> to vector<16x64xf32>
    %42 = arith.truncf %41 : vector<16x64xf32> to vector<16x64xbf16>
    %cst_24 = arith.constant dense<0.000000e+00> : vector<16x64xf32>
    %43 = tpu.matmul %40, %42, %cst_24 {dimension_numbers = #tpu.dot_dimension_numbers<[1], [0], [0], [1], [0, 0, 1, 1], [], []>} : vector<16x16xbf16>, vector<16x64xbf16>, vector<16x64xf32> -> vector<16x64xf32>
    %44 = arith.addf %23, %43 : vector<16x64xf32>
    %45 = vector.extract_strided_slice %12 {offsets = [0, 8], sizes = [16, 8], strides = [1, 1]} : vector<16x128xf32> to vector<16x8xf32>
    %46 = vector.extract_strided_slice %12 {offsets = [0, 72], sizes = [16, 8], strides = [1, 1]} : vector<16x128xf32> to vector<16x8xf32>
    %cst_25 = arith.constant dense<0.000000e+00> : vector<16x16xf32>
    %47 = tpu.matmul %45, %46, %cst_25 {dimension_numbers = #tpu.dot_dimension_numbers<[1], [1], [0], [0], [0, 0, 1, 0], [], []>} : vector<16x8xf32>, vector<16x8xf32>, vector<16x16xf32> -> vector<16x16xf32>
    %cst_26 = arith.constant 0.353553385 : f32
    %48 = vector.broadcast %cst_26 : f32 to vector<16x16xf32>
    %49 = arith.mulf %47, %48 : vector<16x16xf32>
    %50 = arith.addf %49, %5 : vector<16x16xf32>
    %cst_27 = arith.constant dense<0xFF800000> : vector<16xf32>
    %51 = vector.multi_reduction <maximumf>, %50, %cst_27 [1] : vector<16x16xf32> to vector<16xf32>
    %52 = vector.shape_cast %51 : vector<16xf32> to vector<16x1xf32>
    %53 = vector.broadcast %52 : vector<16x1xf32> to vector<16x16xf32>
    %54 = arith.subf %50, %53 : vector<16x16xf32>
    %55 = math.exp %54 : vector<16x16xf32>
    %cst_28 = arith.constant dense<0.000000e+00> : vector<16xf32>
    %56 = vector.multi_reduction <add>, %55, %cst_28 [1] : vector<16x16xf32> to vector<16xf32>
    %57 = vector.shape_cast %56 : vector<16xf32> to vector<16x1xf32>
    %58 = tpu.reciprocal %57 {approx = true} : vector<16x1xf32> -> vector<16x1xf32>
    %59 = vector.broadcast %58 : vector<16x1xf32> to vector<16x16xf32>
    %60 = arith.mulf %55, %59 : vector<16x16xf32>
    %61 = arith.truncf %60 : vector<16x16xf32> to vector<16x16xbf16>
    %62 = vector.extract_strided_slice %19 {offsets = [0, 64], sizes = [16, 64], strides = [1, 1]} : vector<16x512xf32> to vector<16x64xf32>
    %63 = arith.truncf %62 : vector<16x64xf32> to vector<16x64xbf16>
    %cst_29 = arith.constant dense<0.000000e+00> : vector<16x64xf32>
    %64 = tpu.matmul %61, %63, %cst_29 {dimension_numbers = #tpu.dot_dimension_numbers<[1], [0], [0], [1], [0, 0, 1, 1], [], []>} : vector<16x16xbf16>, vector<16x64xbf16>, vector<16x64xf32> -> vector<16x64xf32>
    %65 = arith.addf %44, %64 : vector<16x64xf32>
    %66 = vector.extract_strided_slice %12 {offsets = [0, 16], sizes = [16, 8], strides = [1, 1]} : vector<16x128xf32> to vector<16x8xf32>
    %67 = vector.extract_strided_slice %12 {offsets = [0, 80], sizes = [16, 8], strides = [1, 1]} : vector<16x128xf32> to vector<16x8xf32>
    %cst_30 = arith.constant dense<0.000000e+00> : vector<16x16xf32>
    %68 = tpu.matmul %66, %67, %cst_30 {dimension_numbers = #tpu.dot_dimension_numbers<[1], [1], [0], [0], [0, 0, 1, 0], [], []>} : vector<16x8xf32>, vector<16x8xf32>, vector<16x16xf32> -> vector<16x16xf32>
    %cst_31 = arith.constant 0.353553385 : f32
    %69 = vector.broadcast %cst_31 : f32 to vector<16x16xf32>
    %70 = arith.mulf %68, %69 : vector<16x16xf32>
    %71 = arith.addf %70, %5 : vector<16x16xf32>
    %cst_32 = arith.constant dense<0xFF800000> : vector<16xf32>
    %72 = vector.multi_reduction <maximumf>, %71, %cst_32 [1] : vector<16x16xf32> to vector<16xf32>
    %73 = vector.shape_cast %72 : vector<16xf32> to vector<16x1xf32>
    %74 = vector.broadcast %73 : vector<16x1xf32> to vector<16x16xf32>
    %75 = arith.subf %71, %74 : vector<16x16xf32>
    %76 = math.exp %75 : vector<16x16xf32>
    %cst_33 = arith.constant dense<0.000000e+00> : vector<16xf32>
    %77 = vector.multi_reduction <add>, %76, %cst_33 [1] : vector<16x16xf32> to vector<16xf32>
    %78 = vector.shape_cast %77 : vector<16xf32> to vector<16x1xf32>
    %79 = tpu.reciprocal %78 {approx = true} : vector<16x1xf32> -> vector<16x1xf32>
    %80 = vector.broadcast %79 : vector<16x1xf32> to vector<16x16xf32>
    %81 = arith.mulf %76, %80 : vector<16x16xf32>
    %82 = arith.truncf %81 : vector<16x16xf32> to vector<16x16xbf16>
    %83 = vector.extract_strided_slice %19 {offsets = [0, 128], sizes = [16, 64], strides = [1, 1]} : vector<16x512xf32> to vector<16x64xf32>
    %84 = arith.truncf %83 : vector<16x64xf32> to vector<16x64xbf16>
    %cst_34 = arith.constant dense<0.000000e+00> : vector<16x64xf32>
    %85 = tpu.matmul %82, %84, %cst_34 {dimension_numbers = #tpu.dot_dimension_numbers<[1], [0], [0], [1], [0, 0, 1, 1], [], []>} : vector<16x16xbf16>, vector<16x64xbf16>, vector<16x64xf32> -> vector<16x64xf32>
    %86 = arith.addf %65, %85 : vector<16x64xf32>
    %87 = vector.extract_strided_slice %12 {offsets = [0, 24], sizes = [16, 8], strides = [1, 1]} : vector<16x128xf32> to vector<16x8xf32>
    %88 = vector.extract_strided_slice %12 {offsets = [0, 88], sizes = [16, 8], strides = [1, 1]} : vector<16x128xf32> to vector<16x8xf32>
    %cst_35 = arith.constant dense<0.000000e+00> : vector<16x16xf32>
    %89 = tpu.matmul %87, %88, %cst_35 {dimension_numbers = #tpu.dot_dimension_numbers<[1], [1], [0], [0], [0, 0, 1, 0], [], []>} : vector<16x8xf32>, vector<16x8xf32>, vector<16x16xf32> -> vector<16x16xf32>
    %cst_36 = arith.constant 0.353553385 : f32
    %90 = vector.broadcast %cst_36 : f32 to vector<16x16xf32>
    %91 = arith.mulf %89, %90 : vector<16x16xf32>
    %92 = arith.addf %91, %5 : vector<16x16xf32>
    %cst_37 = arith.constant dense<0xFF800000> : vector<16xf32>
    %93 = vector.multi_reduction <maximumf>, %92, %cst_37 [1] : vector<16x16xf32> to vector<16xf32>
    %94 = vector.shape_cast %93 : vector<16xf32> to vector<16x1xf32>
    %95 = vector.broadcast %94 : vector<16x1xf32> to vector<16x16xf32>
    %96 = arith.subf %92, %95 : vector<16x16xf32>
    %97 = math.exp %96 : vector<16x16xf32>
    %cst_38 = arith.constant dense<0.000000e+00> : vector<16xf32>
    %98 = vector.multi_reduction <add>, %97, %cst_38 [1] : vector<16x16xf32> to vector<16xf32>
    %99 = vector.shape_cast %98 : vector<16xf32> to vector<16x1xf32>
    %100 = tpu.reciprocal %99 {approx = true} : vector<16x1xf32> -> vector<16x1xf32>
    %101 = vector.broadcast %100 : vector<16x1xf32> to vector<16x16xf32>
    %102 = arith.mulf %97, %101 : vector<16x16xf32>
    %103 = arith.truncf %102 : vector<16x16xf32> to vector<16x16xbf16>
    %104 = vector.extract_strided_slice %19 {offsets = [0, 192], sizes = [16, 64], strides = [1, 1]} : vector<16x512xf32> to vector<16x64xf32>
    %105 = arith.truncf %104 : vector<16x64xf32> to vector<16x64xbf16>
    %cst_39 = arith.constant dense<0.000000e+00> : vector<16x64xf32>
    %106 = tpu.matmul %103, %105, %cst_39 {dimension_numbers = #tpu.dot_dimension_numbers<[1], [0], [0], [1], [0, 0, 1, 1], [], []>} : vector<16x16xbf16>, vector<16x64xbf16>, vector<16x64xf32> -> vector<16x64xf32>
    %107 = arith.addf %86, %106 : vector<16x64xf32>
    %108 = vector.extract_strided_slice %12 {offsets = [0, 32], sizes = [16, 8], strides = [1, 1]} : vector<16x128xf32> to vector<16x8xf32>
    %109 = vector.extract_strided_slice %12 {offsets = [0, 96], sizes = [16, 8], strides = [1, 1]} : vector<16x128xf32> to vector<16x8xf32>
    %cst_40 = arith.constant dense<0.000000e+00> : vector<16x16xf32>
    %110 = tpu.matmul %108, %109, %cst_40 {dimension_numbers = #tpu.dot_dimension_numbers<[1], [1], [0], [0], [0, 0, 1, 0], [], []>} : vector<16x8xf32>, vector<16x8xf32>, vector<16x16xf32> -> vector<16x16xf32>
    %cst_41 = arith.constant 0.353553385 : f32
    %111 = vector.broadcast %cst_41 : f32 to vector<16x16xf32>
    %112 = arith.mulf %110, %111 : vector<16x16xf32>
    %113 = arith.addf %112, %5 : vector<16x16xf32>
    %cst_42 = arith.constant dense<0xFF800000> : vector<16xf32>
    %114 = vector.multi_reduction <maximumf>, %113, %cst_42 [1] : vector<16x16xf32> to vector<16xf32>
    %115 = vector.shape_cast %114 : vector<16xf32> to vector<16x1xf32>
    %116 = vector.broadcast %115 : vector<16x1xf32> to vector<16x16xf32>
    %117 = arith.subf %113, %116 : vector<16x16xf32>
    %118 = math.exp %117 : vector<16x16xf32>
    %cst_43 = arith.constant dense<0.000000e+00> : vector<16xf32>
    %119 = vector.multi_reduction <add>, %118, %cst_43 [1] : vector<16x16xf32> to vector<16xf32>
    %120 = vector.shape_cast %119 : vector<16xf32> to vector<16x1xf32>
    %121 = tpu.reciprocal %120 {approx = true} : vector<16x1xf32> -> vector<16x1xf32>
    %122 = vector.broadcast %121 : vector<16x1xf32> to vector<16x16xf32>
    %123 = arith.mulf %118, %122 : vector<16x16xf32>
    %124 = arith.truncf %123 : vector<16x16xf32> to vector<16x16xbf16>
    %125 = vector.extract_strided_slice %19 {offsets = [0, 256], sizes = [16, 64], strides = [1, 1]} : vector<16x512xf32> to vector<16x64xf32>
    %126 = arith.truncf %125 : vector<16x64xf32> to vector<16x64xbf16>
    %cst_44 = arith.constant dense<0.000000e+00> : vector<16x64xf32>
    %127 = tpu.matmul %124, %126, %cst_44 {dimension_numbers = #tpu.dot_dimension_numbers<[1], [0], [0], [1], [0, 0, 1, 1], [], []>} : vector<16x16xbf16>, vector<16x64xbf16>, vector<16x64xf32> -> vector<16x64xf32>
    %128 = arith.addf %107, %127 : vector<16x64xf32>
    %129 = vector.extract_strided_slice %12 {offsets = [0, 40], sizes = [16, 8], strides = [1, 1]} : vector<16x128xf32> to vector<16x8xf32>
    %130 = vector.extract_strided_slice %12 {offsets = [0, 104], sizes = [16, 8], strides = [1, 1]} : vector<16x128xf32> to vector<16x8xf32>
    %cst_45 = arith.constant dense<0.000000e+00> : vector<16x16xf32>
    %131 = tpu.matmul %129, %130, %cst_45 {dimension_numbers = #tpu.dot_dimension_numbers<[1], [1], [0], [0], [0, 0, 1, 0], [], []>} : vector<16x8xf32>, vector<16x8xf32>, vector<16x16xf32> -> vector<16x16xf32>
    %cst_46 = arith.constant 0.353553385 : f32
    %132 = vector.broadcast %cst_46 : f32 to vector<16x16xf32>
    %133 = arith.mulf %131, %132 : vector<16x16xf32>
    %134 = arith.addf %133, %5 : vector<16x16xf32>
    %cst_47 = arith.constant dense<0xFF800000> : vector<16xf32>
    %135 = vector.multi_reduction <maximumf>, %134, %cst_47 [1] : vector<16x16xf32> to vector<16xf32>
    %136 = vector.shape_cast %135 : vector<16xf32> to vector<16x1xf32>
    %137 = vector.broadcast %136 : vector<16x1xf32> to vector<16x16xf32>
    %138 = arith.subf %134, %137 : vector<16x16xf32>
    %139 = math.exp %138 : vector<16x16xf32>
    %cst_48 = arith.constant dense<0.000000e+00> : vector<16xf32>
    %140 = vector.multi_reduction <add>, %139, %cst_48 [1] : vector<16x16xf32> to vector<16xf32>
    %141 = vector.shape_cast %140 : vector<16xf32> to vector<16x1xf32>
    %142 = tpu.reciprocal %141 {approx = true} : vector<16x1xf32> -> vector<16x1xf32>
    %143 = vector.broadcast %142 : vector<16x1xf32> to vector<16x16xf32>
    %144 = arith.mulf %139, %143 : vector<16x16xf32>
    %145 = arith.truncf %144 : vector<16x16xf32> to vector<16x16xbf16>
    %146 = vector.extract_strided_slice %19 {offsets = [0, 320], sizes = [16, 64], strides = [1, 1]} : vector<16x512xf32> to vector<16x64xf32>
    %147 = arith.truncf %146 : vector<16x64xf32> to vector<16x64xbf16>
    %cst_49 = arith.constant dense<0.000000e+00> : vector<16x64xf32>
    %148 = tpu.matmul %145, %147, %cst_49 {dimension_numbers = #tpu.dot_dimension_numbers<[1], [0], [0], [1], [0, 0, 1, 1], [], []>} : vector<16x16xbf16>, vector<16x64xbf16>, vector<16x64xf32> -> vector<16x64xf32>
    %149 = arith.addf %128, %148 : vector<16x64xf32>
    %150 = vector.extract_strided_slice %12 {offsets = [0, 48], sizes = [16, 8], strides = [1, 1]} : vector<16x128xf32> to vector<16x8xf32>
    %151 = vector.extract_strided_slice %12 {offsets = [0, 112], sizes = [16, 8], strides = [1, 1]} : vector<16x128xf32> to vector<16x8xf32>
    %cst_50 = arith.constant dense<0.000000e+00> : vector<16x16xf32>
    %152 = tpu.matmul %150, %151, %cst_50 {dimension_numbers = #tpu.dot_dimension_numbers<[1], [1], [0], [0], [0, 0, 1, 0], [], []>} : vector<16x8xf32>, vector<16x8xf32>, vector<16x16xf32> -> vector<16x16xf32>
    %cst_51 = arith.constant 0.353553385 : f32
    %153 = vector.broadcast %cst_51 : f32 to vector<16x16xf32>
    %154 = arith.mulf %152, %153 : vector<16x16xf32>
    %155 = arith.addf %154, %5 : vector<16x16xf32>
    %cst_52 = arith.constant dense<0xFF800000> : vector<16xf32>
    %156 = vector.multi_reduction <maximumf>, %155, %cst_52 [1] : vector<16x16xf32> to vector<16xf32>
    %157 = vector.shape_cast %156 : vector<16xf32> to vector<16x1xf32>
    %158 = vector.broadcast %157 : vector<16x1xf32> to vector<16x16xf32>
    %159 = arith.subf %155, %158 : vector<16x16xf32>
    %160 = math.exp %159 : vector<16x16xf32>
    %cst_53 = arith.constant dense<0.000000e+00> : vector<16xf32>
    %161 = vector.multi_reduction <add>, %160, %cst_53 [1] : vector<16x16xf32> to vector<16xf32>
    %162 = vector.shape_cast %161 : vector<16xf32> to vector<16x1xf32>
    %163 = tpu.reciprocal %162 {approx = true} : vector<16x1xf32> -> vector<16x1xf32>
    %164 = vector.broadcast %163 : vector<16x1xf32> to vector<16x16xf32>
    %165 = arith.mulf %160, %164 : vector<16x16xf32>
    %166 = arith.truncf %165 : vector<16x16xf32> to vector<16x16xbf16>
    %167 = vector.extract_strided_slice %19 {offsets = [0, 384], sizes = [16, 64], strides = [1, 1]} : vector<16x512xf32> to vector<16x64xf32>
    %168 = arith.truncf %167 : vector<16x64xf32> to vector<16x64xbf16>
    %cst_54 = arith.constant dense<0.000000e+00> : vector<16x64xf32>
    %169 = tpu.matmul %166, %168, %cst_54 {dimension_numbers = #tpu.dot_dimension_numbers<[1], [0], [0], [1], [0, 0, 1, 1], [], []>} : vector<16x16xbf16>, vector<16x64xbf16>, vector<16x64xf32> -> vector<16x64xf32>
    %170 = arith.addf %149, %169 : vector<16x64xf32>
    %171 = vector.extract_strided_slice %12 {offsets = [0, 56], sizes = [16, 8], strides = [1, 1]} : vector<16x128xf32> to vector<16x8xf32>
    %172 = vector.extract_strided_slice %12 {offsets = [0, 120], sizes = [16, 8], strides = [1, 1]} : vector<16x128xf32> to vector<16x8xf32>
    %cst_55 = arith.constant dense<0.000000e+00> : vector<16x16xf32>
    %173 = tpu.matmul %171, %172, %cst_55 {dimension_numbers = #tpu.dot_dimension_numbers<[1], [1], [0], [0], [0, 0, 1, 0], [], []>} : vector<16x8xf32>, vector<16x8xf32>, vector<16x16xf32> -> vector<16x16xf32>
    %cst_56 = arith.constant 0.353553385 : f32
    %174 = vector.broadcast %cst_56 : f32 to vector<16x16xf32>
    %175 = arith.mulf %173, %174 : vector<16x16xf32>
    %176 = arith.addf %175, %5 : vector<16x16xf32>
    %cst_57 = arith.constant dense<0xFF800000> : vector<16xf32>
    %177 = vector.multi_reduction <maximumf>, %176, %cst_57 [1] : vector<16x16xf32> to vector<16xf32>
    %178 = vector.shape_cast %177 : vector<16xf32> to vector<16x1xf32>
    %179 = vector.broadcast %178 : vector<16x1xf32> to vector<16x16xf32>
    %180 = arith.subf %176, %179 : vector<16x16xf32>
    %181 = math.exp %180 : vector<16x16xf32>
    %cst_58 = arith.constant dense<0.000000e+00> : vector<16xf32>
    %182 = vector.multi_reduction <add>, %181, %cst_58 [1] : vector<16x16xf32> to vector<16xf32>
    %183 = vector.shape_cast %182 : vector<16xf32> to vector<16x1xf32>
    %184 = tpu.reciprocal %183 {approx = true} : vector<16x1xf32> -> vector<16x1xf32>
    %185 = vector.broadcast %184 : vector<16x1xf32> to vector<16x16xf32>
    %186 = arith.mulf %181, %185 : vector<16x16xf32>
    %187 = arith.truncf %186 : vector<16x16xf32> to vector<16x16xbf16>
    %188 = vector.extract_strided_slice %19 {offsets = [0, 448], sizes = [16, 64], strides = [1, 1]} : vector<16x512xf32> to vector<16x64xf32>
    %189 = arith.truncf %188 : vector<16x64xf32> to vector<16x64xbf16>
    %cst_59 = arith.constant dense<0.000000e+00> : vector<16x64xf32>
    %190 = tpu.matmul %187, %189, %cst_59 {dimension_numbers = #tpu.dot_dimension_numbers<[1], [0], [0], [1], [0, 0, 1, 1], [], []>} : vector<16x16xbf16>, vector<16x64xbf16>, vector<16x64xf32> -> vector<16x64xf32>
    %191 = arith.addf %170, %190 : vector<16x64xf32>
    %192 = arith.addf %3, %191 : vector<16x64xf32>
    %c0_60 = arith.constant 0 : index
    %c0_61 = arith.constant 0 : index
    %c0_62 = arith.constant 0 : index
    %193 = vector.load %arg8[%c0_60, %c0_61, %c0_62] : memref<1x1x64xf32, #tpu.memory_space<vmem>>, vector<1x1x64xf32>
    %194 = vector.shape_cast %193 : vector<1x1x64xf32> to vector<1x64xf32>
    %c0_63 = arith.constant 0 : index
    %c0_64 = arith.constant 0 : index
    %c0_65 = arith.constant 0 : index
    %195 = vector.load %arg9[%c0_63, %c0_64, %c0_65] : memref<1x1x64xf32, #tpu.memory_space<vmem>>, vector<1x1x64xf32>
    %196 = vector.shape_cast %195 : vector<1x1x64xf32> to vector<1x64xf32>
    %cst_66 = arith.constant dense<0.000000e+00> : vector<16xf32>
    %197 = vector.multi_reduction <add>, %192, %cst_66 [1] : vector<16x64xf32> to vector<16xf32>
    %198 = vector.shape_cast %197 : vector<16xf32> to vector<16x1xf32>
    %cst_67 = arith.constant 6.400000e+01 : f32
    %199 = vector.broadcast %cst_67 : f32 to vector<16x1xf32>
    %200 = arith.divf %198, %199 : vector<16x1xf32>
    %201 = vector.broadcast %200 : vector<16x1xf32> to vector<16x64xf32>
    %202 = arith.subf %192, %201 : vector<16x64xf32>
    %203 = arith.mulf %202, %202 : vector<16x64xf32>
    %cst_68 = arith.constant dense<0.000000e+00> : vector<16xf32>
    %204 = vector.multi_reduction <add>, %203, %cst_68 [1] : vector<16x64xf32> to vector<16xf32>
    %205 = vector.shape_cast %204 : vector<16xf32> to vector<16x1xf32>
    %cst_69 = arith.constant 6.400000e+01 : f32
    %206 = vector.broadcast %cst_69 : f32 to vector<16x1xf32>
    %207 = arith.divf %205, %206 : vector<16x1xf32>
    %cst_70 = arith.constant 9.99999974E-6 : f32
    %208 = vector.broadcast %cst_70 : f32 to vector<16x1xf32>
    %209 = arith.addf %207, %208 : vector<16x1xf32>
    %210 = math.rsqrt %209 : vector<16x1xf32>
    %211 = vector.broadcast %210 : vector<16x1xf32> to vector<16x64xf32>
    %212 = arith.mulf %202, %211 : vector<16x64xf32>
    %213 = vector.broadcast %194 : vector<1x64xf32> to vector<16x64xf32>
    %214 = arith.mulf %212, %213 : vector<16x64xf32>
    %215 = vector.broadcast %196 : vector<1x64xf32> to vector<16x64xf32>
    %216 = arith.addf %214, %215 : vector<16x64xf32>
    %217 = arith.truncf %216 : vector<16x64xf32> to vector<16x64xbf16>
    %c0_71 = arith.constant 0 : index
    %c0_72 = arith.constant 0 : index
    %c0_73 = arith.constant 0 : index
    %218 = vector.load %arg10[%c0_71, %c0_72, %c0_73] : memref<1x64x2048xbf16, #tpu.memory_space<vmem>>, vector<1x64x2048xbf16>
    %219 = vector.shape_cast %218 : vector<1x64x2048xbf16> to vector<64x2048xbf16>
    %cst_74 = arith.constant dense<0.000000e+00> : vector<16x2048xf32>
    %220 = tpu.matmul %217, %219, %cst_74 {dimension_numbers = #tpu.dot_dimension_numbers<[1], [0], [0], [1], [0, 0, 1, 1], [], []>} : vector<16x64xbf16>, vector<64x2048xbf16>, vector<16x2048xf32> -> vector<16x2048xf32>
    %c0_75 = arith.constant 0 : index
    %c0_76 = arith.constant 0 : index
    %c0_77 = arith.constant 0 : index
    %221 = vector.load %arg11[%c0_75, %c0_76, %c0_77] : memref<1x1x2048xf32, #tpu.memory_space<vmem>>, vector<1x1x2048xf32>
    %222 = vector.shape_cast %221 : vector<1x1x2048xf32> to vector<1x2048xf32>
    %223 = vector.broadcast %222 : vector<1x2048xf32> to vector<16x2048xf32>
    %224 = arith.addf %220, %223 : vector<16x2048xf32>
    %cst_78 = arith.constant 0.000000e+00 : f32
    %225 = vector.broadcast %cst_78 : f32 to vector<16x2048xf32>
    %226 = arith.maximumf %224, %225 : vector<16x2048xf32>
    %227 = arith.truncf %226 : vector<16x2048xf32> to vector<16x2048xbf16>
    %c0_79 = arith.constant 0 : index
    %c0_80 = arith.constant 0 : index
    %c0_81 = arith.constant 0 : index
    %228 = vector.load %arg12[%c0_79, %c0_80, %c0_81] : memref<1x2048x64xbf16, #tpu.memory_space<vmem>>, vector<1x2048x64xbf16>
    %229 = vector.shape_cast %228 : vector<1x2048x64xbf16> to vector<2048x64xbf16>
    %cst_82 = arith.constant dense<0.000000e+00> : vector<16x64xf32>
    %230 = tpu.matmul %227, %229, %cst_82 {dimension_numbers = #tpu.dot_dimension_numbers<[1], [0], [0], [1], [0, 0, 1, 1], [], []>} : vector<16x2048xbf16>, vector<2048x64xbf16>, vector<16x64xf32> -> vector<16x64xf32>
    %c0_83 = arith.constant 0 : index
    %c0_84 = arith.constant 0 : index
    %c0_85 = arith.constant 0 : index
    %231 = vector.load %arg13[%c0_83, %c0_84, %c0_85] : memref<1x1x64xf32, #tpu.memory_space<vmem>>, vector<1x1x64xf32>
    %232 = vector.shape_cast %231 : vector<1x1x64xf32> to vector<1x64xf32>
    %233 = vector.broadcast %232 : vector<1x64xf32> to vector<16x64xf32>
    %234 = arith.addf %230, %233 : vector<16x64xf32>
    %235 = arith.addf %216, %234 : vector<16x64xf32>
    %c0_86 = arith.constant 0 : index
    %c0_87 = arith.constant 0 : index
    %c0_88 = arith.constant 0 : index
    %236 = vector.load %arg14[%c0_86, %c0_87, %c0_88] : memref<1x1x64xf32, #tpu.memory_space<vmem>>, vector<1x1x64xf32>
    %237 = vector.shape_cast %236 : vector<1x1x64xf32> to vector<1x64xf32>
    %c0_89 = arith.constant 0 : index
    %c0_90 = arith.constant 0 : index
    %c0_91 = arith.constant 0 : index
    %238 = vector.load %arg15[%c0_89, %c0_90, %c0_91] : memref<1x1x64xf32, #tpu.memory_space<vmem>>, vector<1x1x64xf32>
    %239 = vector.shape_cast %238 : vector<1x1x64xf32> to vector<1x64xf32>
    %cst_92 = arith.constant dense<0.000000e+00> : vector<16xf32>
    %240 = vector.multi_reduction <add>, %235, %cst_92 [1] : vector<16x64xf32> to vector<16xf32>
    %241 = vector.shape_cast %240 : vector<16xf32> to vector<16x1xf32>
    %cst_93 = arith.constant 6.400000e+01 : f32
    %242 = vector.broadcast %cst_93 : f32 to vector<16x1xf32>
    %243 = arith.divf %241, %242 : vector<16x1xf32>
    %244 = vector.broadcast %243 : vector<16x1xf32> to vector<16x64xf32>
    %245 = arith.subf %235, %244 : vector<16x64xf32>
    %246 = arith.mulf %245, %245 : vector<16x64xf32>
    %cst_94 = arith.constant dense<0.000000e+00> : vector<16xf32>
    %247 = vector.multi_reduction <add>, %246, %cst_94 [1] : vector<16x64xf32> to vector<16xf32>
    %248 = vector.shape_cast %247 : vector<16xf32> to vector<16x1xf32>
    %cst_95 = arith.constant 6.400000e+01 : f32
    %249 = vector.broadcast %cst_95 : f32 to vector<16x1xf32>
    %250 = arith.divf %248, %249 : vector<16x1xf32>
    %cst_96 = arith.constant 9.99999974E-6 : f32
    %251 = vector.broadcast %cst_96 : f32 to vector<16x1xf32>
    %252 = arith.addf %250, %251 : vector<16x1xf32>
    %253 = math.rsqrt %252 : vector<16x1xf32>
    %254 = vector.broadcast %253 : vector<16x1xf32> to vector<16x64xf32>
    %255 = arith.mulf %245, %254 : vector<16x64xf32>
    %256 = vector.broadcast %237 : vector<1x64xf32> to vector<16x64xf32>
    %257 = arith.mulf %255, %256 : vector<16x64xf32>
    %258 = vector.broadcast %239 : vector<1x64xf32> to vector<16x64xf32>
    %259 = arith.addf %257, %258 : vector<16x64xf32>
    %c0_97 = arith.constant 0 : index
    %c0_98 = arith.constant 0 : index
    %260 = vector.load %arg19[%c0_97, %c0_98] : memref<16x64xf32, #tpu.memory_space<vmem>>, vector<16x64xf32>
    tpu.vector_store %arg19[%c0_97, %c0_98], %259 {strides = array<i32>} : memref<16x64xf32, #tpu.memory_space<vmem>>, vector<16x64xf32>,
    %c1_i32 = arith.constant 1 : i32
    %261 = arith.cmpi eq, %arg0, %c1_i32 : i32
    %262 = arith.extui %261 : i1 to i32
    %c0_i32_99 = arith.constant 0 : i32
    %263 = arith.cmpi ne, %262, %c0_i32_99 : i32
    scf.if %263 {
      %cst_100 = arith.constant 0.000000e+00 : f32
      %264 = vector.broadcast %cst_100 : f32 to vector<16x64xf32>
      %265 = arith.maximumf %259, %264 : vector<16x64xf32>
      %266 = arith.truncf %265 : vector<16x64xf32> to vector<16x64xbf16>
      %c0_101 = arith.constant 0 : index
      %c0_102 = arith.constant 0 : index
      %267 = vector.load %arg16[%c0_101, %c0_102] : memref<64x1xbf16, #tpu.memory_space<vmem>>, vector<64x1xbf16>
      %cst_103 = arith.constant dense<0.000000e+00> : vector<16x1xf32>
      %268 = tpu.matmul %266, %267, %cst_103 {dimension_numbers = #tpu.dot_dimension_numbers<[1], [0], [0], [1], [0, 0, 1, 1], [], []>} : vector<16x64xbf16>, vector<64x1xbf16>, vector<16x1xf32> -> vector<16x1xf32>
      %c0_104 = arith.constant 0 : index
      %c0_105 = arith.constant 0 : index
      %269 = vector.load %arg17[%c0_104, %c0_105] : memref<1x1xf32, #tpu.memory_space<vmem>>, vector<1x1xf32>
      %270 = vector.broadcast %269 : vector<1x1xf32> to vector<16x1xf32>
      %271 = arith.addf %268, %270 : vector<16x1xf32>
      %c0_106 = arith.constant 0 : index
      %c0_107 = arith.constant 0 : index
      %272 = vector.load %arg18[%c0_106, %c0_107] : memref<16x1xf32, #tpu.memory_space<vmem>>, vector<16x1xf32>
      tpu.vector_store %arg18[%c0_106, %c0_107], %271 {strides = array<i32>} : memref<16x1xf32, #tpu.memory_space<vmem>>, vector<16x1xf32>,
    } else {
    }
    return
  }
  func.func @transform_0(%arg0: i32) -> (i32, i32) {
    %c0_i32 = arith.constant 0 : i32
    %c0_i32_0 = arith.constant 0 : i32
    %c0_i32_1 = arith.constant 0 : i32
    return %c0_i32, %c0_i32_0 : i32, i32
  }
  func.func @transform_1(%arg0: i32) -> (i32, i32) {
    %c0_i32 = arith.constant 0 : i32
    %c0_i32_0 = arith.constant 0 : i32
    %c0_i32_1 = arith.constant 0 : i32
    return %c0_i32, %c0_i32_0 : i32, i32
  }
  func.func @transform_2(%arg0: i32) -> (i32, i32, i32) {
    %c0_i32 = arith.constant 0 : i32
    %c0_i32_0 = arith.constant 0 : i32
    %c0_i32_1 = arith.constant 0 : i32
    return %arg0, %c0_i32, %c0_i32_0 : i32, i32, i32
  }
  func.func @transform_3(%arg0: i32) -> (i32, i32, i32) {
    %c0_i32 = arith.constant 0 : i32
    %c0_i32_0 = arith.constant 0 : i32
    %c0_i32_1 = arith.constant 0 : i32
    return %arg0, %c0_i32, %c0_i32_0 : i32, i32, i32
  }
  func.func @transform_4(%arg0: i32) -> (i32, i32, i32) {
    %c0_i32 = arith.constant 0 : i32
    %c0_i32_0 = arith.constant 0 : i32
    %c0_i32_1 = arith.constant 0 : i32
    return %arg0, %c0_i32, %c0_i32_0 : i32, i32, i32
  }
  func.func @transform_5(%arg0: i32) -> (i32, i32, i32) {
    %c0_i32 = arith.constant 0 : i32
    %c0_i32_0 = arith.constant 0 : i32
    %c0_i32_1 = arith.constant 0 : i32
    return %arg0, %c0_i32, %c0_i32_0 : i32, i32, i32
  }
  func.func @transform_6(%arg0: i32) -> (i32, i32, i32) {
    %c0_i32 = arith.constant 0 : i32
    %c0_i32_0 = arith.constant 0 : i32
    %c0_i32_1 = arith.constant 0 : i32
    return %arg0, %c0_i32, %c0_i32_0 : i32, i32, i32
  }
  func.func @transform_7(%arg0: i32) -> (i32, i32, i32) {
    %c0_i32 = arith.constant 0 : i32
    %c0_i32_0 = arith.constant 0 : i32
    %c0_i32_1 = arith.constant 0 : i32
    return %arg0, %c0_i32, %c0_i32_0 : i32, i32, i32
  }
  func.func @transform_8(%arg0: i32) -> (i32, i32, i32) {
    %c0_i32 = arith.constant 0 : i32
    %c0_i32_0 = arith.constant 0 : i32
    %c0_i32_1 = arith.constant 0 : i32
    return %arg0, %c0_i32, %c0_i32_0 : i32, i32, i32
  }
  func.func @transform_9(%arg0: i32) -> (i32, i32, i32) {
    %c0_i32 = arith.constant 0 : i32
    %c0_i32_0 = arith.constant 0 : i32
    %c0_i32_1 = arith.constant 0 : i32
    return %arg0, %c0_i32, %c0_i32_0 : i32, i32, i32
  }
  func.func @transform_10(%arg0: i32) -> (i32, i32, i32) {
    %c0_i32 = arith.constant 0 : i32
    %c0_i32_0 = arith.constant 0 : i32
    %c0_i32_1 = arith.constant 0 : i32
    return %arg0, %c0_i32, %c0_i32_0 : i32, i32, i32
  }
  func.func @transform_11(%arg0: i32) -> (i32, i32, i32) {
    %c0_i32 = arith.constant 0 : i32
    %c0_i32_0 = arith.constant 0 : i32
    %c0_i32_1 = arith.constant 0 : i32
    return %arg0, %c0_i32, %c0_i32_0 : i32, i32, i32
  }
  func.func @transform_12(%arg0: i32) -> (i32, i32, i32) {
    %c0_i32 = arith.constant 0 : i32
    %c0_i32_0 = arith.constant 0 : i32
    %c0_i32_1 = arith.constant 0 : i32
    return %arg0, %c0_i32, %c0_i32_0 : i32, i32, i32
  }
  func.func @transform_13(%arg0: i32) -> (i32, i32, i32) {
    %c0_i32 = arith.constant 0 : i32
    %c0_i32_0 = arith.constant 0 : i32
    %c0_i32_1 = arith.constant 0 : i32
    return %arg0, %c0_i32, %c0_i32_0 : i32, i32, i32
  }
  func.func @transform_14(%arg0: i32) -> (i32, i32, i32) {
    %c0_i32 = arith.constant 0 : i32
    %c0_i32_0 = arith.constant 0 : i32
    %c0_i32_1 = arith.constant 0 : i32
    return %arg0, %c0_i32, %c0_i32_0 : i32, i32, i32
  }
  func.func @transform_15(%arg0: i32) -> (i32, i32) {
    %c0_i32 = arith.constant 0 : i32
    %c0_i32_0 = arith.constant 0 : i32
    %c0_i32_1 = arith.constant 0 : i32
    return %c0_i32, %c0_i32_0 : i32, i32
  }
  func.func @transform_16(%arg0: i32) -> (i32, i32) {
    %c0_i32 = arith.constant 0 : i32
    %c0_i32_0 = arith.constant 0 : i32
    %c0_i32_1 = arith.constant 0 : i32
    return %c0_i32, %c0_i32_0 : i32, i32
  }
  func.func @transform_17(%arg0: i32) -> (i32, i32) {
    %c0_i32 = arith.constant 0 : i32
    %c0_i32_0 = arith.constant 0 : i32
    %c0_i32_1 = arith.constant 0 : i32
    return %c0_i32, %c0_i32_0 : i32, i32
  }
}

</mosaic_0001>

<llo_original>
// kernel: mnist_trans_forward.2
$region0: #{mnist_trans_forward.2}
  #allocation0 [shape = 'u32[]', space=smem, size = 0x4, offset = 0x4, fixed_abs, tag = 'smem constant byte address 0x4 - core index']
  #allocation1 [shape = 'u32[144,128]{1,0:T(1,128)}', space=vmem, size = 0x12000, scoped, tag = 'internal scratch']
  #allocation2 [shape = 'bf16[16,512]{1,0:T(16,128)(2,1)}', space=vmem, size = 0x4000, scoped, tag = 'scratch operand']
  %s0 = inlined_call_operand.vmem [shape: bf16[256,81], index: 0, kind: input, shape index: {}]
  %s1 = inlined_call_operand.vmem [shape: bf16[81,288], index: 1, kind: input, shape index: {}]
  %s2 = inlined_call_operand.vmem [shape: f32[256,288], index: 2, kind: input, shape index: {}]
  %s3 = inlined_call_operand.vmem [shape: bf16[288,32], index: 3, kind: input, shape index: {}]
  %s4 = inlined_call_operand.vmem [shape: f32[1,32], index: 4, kind: input, shape index: {}]
  %s5 = inlined_call_operand.vmem [shape: bf16[512,64], index: 5, kind: input, shape index: {}]
  %s6 = inlined_call_operand.vmem [shape: f32[1,64], index: 6, kind: input, shape index: {}]
  %s7 = inlined_call_operand.vmem [shape: f32[16,64], index: 7, kind: output, shape index: {}]
  %s8 = sld [smem:[#allocation0]]
  $region38: #{mnist_trans_forward.2} parent=0
    _
  %s10 = ssub.s32 1, %s8
  %s11 = scalar_select 0, %s10, %s8
  // Predicated region
  $region2: #{mnist_trans_forward.2} parent=0 // pred_check
    _
  $region3: #{mnist_trans_forward.2} parent=0 // pred_check_branch
    %13 = sbr.rel (0) target = $region5
  $region4: #{mnist_trans_forward.2} parent=0 // pred_region
    _
  $region5: #{mnist_trans_forward.2} parent=0 // pred_fallthru
    _
  // Predicated region
  $region6: #{mnist_trans_forward.2} parent=0 // pred_check
    _
  $region7: #{mnist_trans_forward.2} parent=0 // pred_check_branch
    %15 = sbr.rel (0) target = $region9
  $region8: #{mnist_trans_forward.2} parent=0 // pred_region
    _
  $region9: #{mnist_trans_forward.2} parent=0 // pred_fallthru
    _
  // Predicated region
  $region10: #{mnist_trans_forward.2} parent=0 // pred_check
    _
  $region11: #{mnist_trans_forward.2} parent=0 // pred_check_branch
    %17 = sbr.rel (0) target = $region13
  $region12: #{mnist_trans_forward.2} parent=0 // pred_region
    _
  $region13: #{mnist_trans_forward.2} parent=0 // pred_fallthru
    _
  // Predicated region
  $region14: #{mnist_trans_forward.2} parent=0 // pred_check
    _
  $region15: #{mnist_trans_forward.2} parent=0 // pred_check_branch
    %19 = sbr.rel (0) target = $region17
  $region16: #{mnist_trans_forward.2} parent=0 // pred_region
    _
  $region17: #{mnist_trans_forward.2} parent=0 // pred_fallthru
    _
  // Predicated region
  $region18: #{mnist_trans_forward.2} parent=0 // pred_check
    _
  $region19: #{mnist_trans_forward.2} parent=0 // pred_check_branch
    %21 = sbr.rel (0) target = $region21
  $region20: #{mnist_trans_forward.2} parent=0 // pred_region
    _
  $region21: #{mnist_trans_forward.2} parent=0 // pred_fallthru
    _
  // Predicated region
  $region22: #{mnist_trans_forward.2} parent=0 // pred_check
    _
  $region23: #{mnist_trans_forward.2} parent=0 // pred_check_branch
    %23 = sbr.rel (0) target = $region25
  $region24: #{mnist_trans_forward.2} parent=0 // pred_region
    _
  $region25: #{mnist_trans_forward.2} parent=0 // pred_fallthru
    _
  // Predicated region
  $region26: #{mnist_trans_forward.2} parent=0 // pred_check
    _
  $region27: #{mnist_trans_forward.2} parent=0 // pred_check_branch
    %25 = sbr.rel (0) target = $region29
  $region28: #{mnist_trans_forward.2} parent=0 // pred_region
    _
  $region29: #{mnist_trans_forward.2} parent=0 // pred_fallthru
    _
  %v27 = vld [vmem:[%s0] sm:$0xf]
  %v28 = vld [vmem:[%s0 + $0x4] sm:$0xf]
  %v29 = vld [vmem:[%s0 + $0x8] sm:$0xf]
  %v30 = vld [vmem:[%s0 + $0xc] sm:$0xf]
  %v31 = vld [vmem:[%s0 + $0x10] sm:$0xf]
  %v32 = vld [vmem:[%s0 + $0x14] sm:$0xf]
  %v33 = vld [vmem:[%s0 + $0x18] sm:$0xf]
  %v34 = vld [vmem:[%s0 + $0x1c] sm:$0xf]
  %v35 = vld [vmem:[%s0 + $0x20] sm:$0xf]
  %v36 = vld [vmem:[%s0 + $0x24] sm:$0xf]
  %v37 = vld [vmem:[%s0 + $0x28] sm:$0xf]
  %v38 = vld [vmem:[%s0 + $0x2c] sm:$0xf]
  %v39 = vld [vmem:[%s0 + $0x30] sm:$0xf]
  %v40 = vld [vmem:[%s0 + $0x34] sm:$0xf]
  %v41 = vld [vmem:[%s0 + $0x38] sm:$0xf]
  %v42 = vld [vmem:[%s0 + $0x3c] sm:$0xf]
  %v43 = vld [vmem:[%s0 + $0x40] sm:$0xf]
  %v44 = vld [vmem:[%s0 + $0x44] sm:$0xf]
  %v45 = vld [vmem:[%s0 + $0x48] sm:$0xf]
  %v46 = vld [vmem:[%s0 + $0x4c] sm:$0xf]
  %v47 = vld [vmem:[%s0 + $0x50] sm:$0xf]
  %v48 = vld [vmem:[%s0 + $0x54] sm:$0xf]
  %v49 = vld [vmem:[%s0 + $0x58] sm:$0xf]
  %v50 = vld [vmem:[%s0 + $0x5c] sm:$0xf]
  %v51 = vld [vmem:[%s0 + $0x60] sm:$0xf]
  %v52 = vld [vmem:[%s0 + $0x64] sm:$0xf]
  %v53 = vld [vmem:[%s0 + $0x68] sm:$0xf]
  %v54 = vld [vmem:[%s0 + $0x6c] sm:$0xf]
  %v55 = vld [vmem:[%s0 + $0x70] sm:$0xf]
  %v56 = vld [vmem:[%s0 + $0x74] sm:$0xf]
  %v57 = vld [vmem:[%s0 + $0x78] sm:$0xf]
  %v58 = vld [vmem:[%s0 + $0x7c] sm:$0xf]
  %v59 = vld [vmem:[%s1] sm:$0xff]
  %v60 = vld [vmem:[%s1 + $0x8] sm:$0xf]
  %v61 = vld [vmem:[%s1 + $0xc] sm:$0xff]
  %v62 = vld [vmem:[%s1 + $0x14] sm:$0xf]
  %v63 = vld [vmem:[%s1 + $0x18] sm:$0xff]
  %v64 = vld [vmem:[%s1 + $0x20] sm:$0xf]
  %v65 = vld [vmem:[%s1 + $0x24] sm:$0xff]
  %v66 = vld [vmem:[%s1 + $0x2c] sm:$0xf]
  %v67 = vld [vmem:[%s1 + $0x30] sm:$0xff]
  %v68 = vld [vmem:[%s1 + $0x38] sm:$0xf]
  %v69 = vld [vmem:[%s1 + $0x3c] sm:$0xff]
  %v70 = vld [vmem:[%s1 + $0x44] sm:$0xf]
  %v71 = vld [vmem:[%s1 + $0x48] sm:$0xff]
  %v72 = vld [vmem:[%s1 + $0x50] sm:$0xf]
  %v73 = vld [vmem:[%s1 + $0x54] sm:$0xff]
  %v74 = vld [vmem:[%s1 + $0x5c] sm:$0xf]
  %v75 = vld [vmem:[%s1 + $0x60] sm:$0xff]
  %v76 = vld [vmem:[%s1 + $0x68] sm:$0xf]
  %v77 = vld [vmem:[%s1 + $0x6c] sm:$0xff]
  %v78 = vld [vmem:[%s1 + $0x74] sm:$0xf]
  %v79 = vld [vmem:[%s1 + $0x78] sm:$0x11]
  %v80 = vld [vmem:[%s1 + $0x80] sm:$0x1]
  %v81 = vld [vmem:[%s2] sm:$0xff]
  %v82 = vld [vmem:[%s2 + $0x8] sm:$0xff]
  %v83 = vld [vmem:[%s2 + $0x10] sm:$0xff]
  %v84 = vld [vmem:[%s2 + $0x18] sm:$0xff]
  %v85 = vld [vmem:[%s2 + $0x20] sm:$0xff]
  %v86 = vld [vmem:[%s2 + $0x28] sm:$0xff]
  %v87 = vld [vmem:[%s2 + $0x30] sm:$0xff]
  %v88 = vld [vmem:[%s2 + $0x38] sm:$0xff]
  %v89 = vld [vmem:[%s2 + $0x40] sm:$0xff]
  %v90 = vld [vmem:[%s2 + $0x48] sm:$0xff]
  %v91 = vld [vmem:[%s2 + $0x50] sm:$0xff]
  %v92 = vld [vmem:[%s2 + $0x58] sm:$0xff]
  %v93 = vld [vmem:[%s2 + $0x60] sm:$0xff]
  %v94 = vld [vmem:[%s2 + $0x68] sm:$0xff]
  %v95 = vld [vmem:[%s2 + $0x70] sm:$0xff]
  %v96 = vld [vmem:[%s2 + $0x78] sm:$0xff]
  %v97 = vld [vmem:[%s2 + $0x80] sm:$0xff]
  %v98 = vld [vmem:[%s2 + $0x88] sm:$0xff]
  %v99 = vld [vmem:[%s2 + $0x90] sm:$0xff]
  %v100 = vld [vmem:[%s2 + $0x98] sm:$0xff]
  %v101 = vld [vmem:[%s2 + $0xa0] sm:$0xff]
  %v102 = vld [vmem:[%s2 + $0xa8] sm:$0xff]
  %v103 = vld [vmem:[%s2 + $0xb0] sm:$0xff]
  %v104 = vld [vmem:[%s2 + $0xb8] sm:$0xff]
  %v105 = vld [vmem:[%s2 + $0xc0] sm:$0xff]
  %v106 = vld [vmem:[%s2 + $0xc8] sm:$0xff]
  %v107 = vld [vmem:[%s2 + $0xd0] sm:$0xff]
  %v108 = vld [vmem:[%s2 + $0xd8] sm:$0xff]
  %v109 = vld [vmem:[%s2 + $0xe0] sm:$0xff]
  %v110 = vld [vmem:[%s2 + $0xe8] sm:$0xff]
  %v111 = vld [vmem:[%s2 + $0xf0] sm:$0xff]
  %v112 = vld [vmem:[%s2 + $0xf8] sm:$0xff]
  %v113 = vld [vmem:[%s2 + $0x100] sm:$0xff]
  %v114 = vld [vmem:[%s2 + $0x108] sm:$0xff]
  %v115 = vld [vmem:[%s2 + $0x110] sm:$0xff]
  %v116 = vld [vmem:[%s2 + $0x118] sm:$0xff]
  %v117 = vld [vmem:[%s2 + $0x120] sm:$0xff]
  %v118 = vld [vmem:[%s2 + $0x128] sm:$0xff]
  %v119 = vld [vmem:[%s2 + $0x130] sm:$0xff]
  %v120 = vld [vmem:[%s2 + $0x138] sm:$0xff]
  %v121 = vld [vmem:[%s2 + $0x140] sm:$0xff]
  %v122 = vld [vmem:[%s2 + $0x148] sm:$0xff]
  %v123 = vld [vmem:[%s2 + $0x150] sm:$0xff]
  %v124 = vld [vmem:[%s2 + $0x158] sm:$0xff]
  %v125 = vld [vmem:[%s2 + $0x160] sm:$0xff]
  %v126 = vld [vmem:[%s2 + $0x168] sm:$0xff]
  %v127 = vld [vmem:[%s2 + $0x170] sm:$0xff]
  %v128 = vld [vmem:[%s2 + $0x178] sm:$0xff]
  %v129 = vld [vmem:[%s2 + $0x180] sm:$0xff]
  %v130 = vld [vmem:[%s2 + $0x188] sm:$0xff]
  %v131 = vld [vmem:[%s2 + $0x190] sm:$0xff]
  %v132 = vld [vmem:[%s2 + $0x198] sm:$0xff]
  %v133 = vld [vmem:[%s2 + $0x1a0] sm:$0xff]
  %v134 = vld [vmem:[%s2 + $0x1a8] sm:$0xff]
  %v135 = vld [vmem:[%s2 + $0x1b0] sm:$0xff]
  %v136 = vld [vmem:[%s2 + $0x1b8] sm:$0xff]
  %v137 = vld [vmem:[%s2 + $0x1c0] sm:$0xff]
  %v138 = vld [vmem:[%s2 + $0x1c8] sm:$0xff]
  %v139 = vld [vmem:[%s2 + $0x1d0] sm:$0xff]
  %v140 = vld [vmem:[%s2 + $0x1d8] sm:$0xff]
  %v141 = vld [vmem:[%s2 + $0x1e0] sm:$0xff]
  %v142 = vld [vmem:[%s2 + $0x1e8] sm:$0xff]
  %v143 = vld [vmem:[%s2 + $0x1f0] sm:$0xff]
  %v144 = vld [vmem:[%s2 + $0x1f8] sm:$0xff]
  %v145 = vld [vmem:[%s2 + $0x200] sm:$0xff]
  %v146 = vld [vmem:[%s2 + $0x208] sm:$0xff]
  %v147 = vld [vmem:[%s2 + $0x210] sm:$0xff]
  %v148 = vld [vmem:[%s2 + $0x218] sm:$0xff]
  %v149 = vld [vmem:[%s2 + $0x220] sm:$0xff]
  %v150 = vld [vmem:[%s2 + $0x228] sm:$0xff]
  %v151 = vld [vmem:[%s2 + $0x230] sm:$0xff]
  %v152 = vld [vmem:[%s2 + $0x238] sm:$0xff]
  %v153 = vld [vmem:[%s2 + $0x240] sm:$0xff]
  %v154 = vld [vmem:[%s2 + $0x248] sm:$0xff]
  %v155 = vld [vmem:[%s2 + $0x250] sm:$0xff]
  %v156 = vld [vmem:[%s2 + $0x258] sm:$0xff]
  %v157 = vld [vmem:[%s2 + $0x260] sm:$0xff]
  %v158 = vld [vmem:[%s2 + $0x268] sm:$0xff]
  %v159 = vld [vmem:[%s2 + $0x270] sm:$0xff]
  %v160 = vld [vmem:[%s2 + $0x278] sm:$0xff]
  %v161 = vld [vmem:[%s2 + $0x280] sm:$0xff]
  %v162 = vld [vmem:[%s2 + $0x288] sm:$0xff]
  %v163 = vld [vmem:[%s2 + $0x290] sm:$0xff]
  %v164 = vld [vmem:[%s2 + $0x298] sm:$0xff]
  %v165 = vld [vmem:[%s2 + $0x2a0] sm:$0xff]
  %v166 = vld [vmem:[%s2 + $0x2a8] sm:$0xff]
  %v167 = vld [vmem:[%s2 + $0x2b0] sm:$0xff]
  %v168 = vld [vmem:[%s2 + $0x2b8] sm:$0xff]
  %v169 = vld [vmem:[%s2 + $0x2c0] sm:$0xff]
  %v170 = vld [vmem:[%s2 + $0x2c8] sm:$0xff]
  %v171 = vld [vmem:[%s2 + $0x2d0] sm:$0xff]
  %v172 = vld [vmem:[%s2 + $0x2d8] sm:$0xff]
  %v173 = vld [vmem:[%s2 + $0x2e0] sm:$0xff]
  %v174 = vld [vmem:[%s2 + $0x2e8] sm:$0xff]
  %v175 = vld [vmem:[%s2 + $0x2f0] sm:$0xff]
  %v176 = vld [vmem:[%s2 + $0x2f8] sm:$0xff]
  %v209 = vunpack.c.l.b16 %v27
  %v210 = vunpack.c.l.b16 %v28
  %v211 = vunpack.c.l.b16 %v29
  %v212 = vunpack.c.l.b16 %v30
  %v213 = vunpack.c.l.b16 %v31
  %v214 = vunpack.c.l.b16 %v32
  %v215 = vunpack.c.l.b16 %v33
  %v216 = vunpack.c.l.b16 %v34
  %v217 = vunpack.c.l.b16 %v35
  %v218 = vunpack.c.l.b16 %v36
  %v219 = vunpack.c.l.b16 %v37
  %v220 = vunpack.c.l.b16 %v38
  %v221 = vunpack.c.l.b16 %v39
  %v222 = vunpack.c.l.b16 %v40
  %v223 = vunpack.c.l.b16 %v41
  %v224 = vunpack.c.l.b16 %v42
  %v225 = vunpack.c.l.b16 %v43
  %v226 = vunpack.c.l.b16 %v44
  %v227 = vunpack.c.l.b16 %v45
  %v228 = vunpack.c.l.b16 %v46
  %v229 = vunpack.c.l.b16 %v47
  %v230 = vunpack.c.l.b16 %v48
  %v231 = vunpack.c.l.b16 %v49
  %v232 = vunpack.c.l.b16 %v50
  %v233 = vunpack.c.l.b16 %v51
  %v234 = vunpack.c.l.b16 %v52
  %v235 = vunpack.c.l.b16 %v53
  %v236 = vunpack.c.l.b16 %v54
  %v237 = vunpack.c.l.b16 %v55
  %v238 = vunpack.c.l.b16 %v56
  %v239 = vunpack.c.l.b16 %v57
  %v240 = vunpack.c.l.b16 %v58
  %v241 = vpack.c.b16 %v210, %v209
  %v242 = vpack.c.b16 %v212, %v211
  %v243 = vpack.c.b16 %v214, %v213
  %v244 = vpack.c.b16 %v216, %v215
  %v245 = vpack.c.b16 %v218, %v217
  %v246 = vpack.c.b16 %v220, %v219
  %v247 = vpack.c.b16 %v222, %v221
  %v248 = vpack.c.b16 %v224, %v223
  %v249 = vpack.c.b16 %v226, %v225
  %v250 = vpack.c.b16 %v228, %v227
  %v251 = vpack.c.b16 %v230, %v229
  %v252 = vpack.c.b16 %v232, %v231
  %v253 = vpack.c.b16 %v234, %v233
  %v254 = vpack.c.b16 %v236, %v235
  %v255 = vpack.c.b16 %v238, %v237
  %v256 = vpack.c.b16 %v240, %v239
  %v279 = vunpack.c.l.b16 %v59
  %v280 = vunpack.c.h.b16 %v59
  %v281 = vunpack.c.l.b16 %v60
  %v282 = vunpack.c.l.b16 %v61
  %v283 = vunpack.c.h.b16 %v61
  %v284 = vunpack.c.l.b16 %v62
  %v285 = vunpack.c.l.b16 %v63
  %v286 = vunpack.c.h.b16 %v63
  %v287 = vunpack.c.l.b16 %v64
  %v288 = vunpack.c.l.b16 %v65
  %v289 = vunpack.c.h.b16 %v65
  %v290 = vunpack.c.l.b16 %v66
  %v291 = vunpack.c.l.b16 %v67
  %v292 = vunpack.c.h.b16 %v67
  %v293 = vunpack.c.l.b16 %v68
  %v294 = vunpack.c.l.b16 %v69
  %v295 = vunpack.c.h.b16 %v69
  %v296 = vunpack.c.l.b16 %v70
  %v297 = vunpack.c.l.b16 %v71
  %v298 = vunpack.c.h.b16 %v71
  %v299 = vunpack.c.l.b16 %v72
  %v300 = vunpack.c.l.b16 %v73
  %v301 = vunpack.c.h.b16 %v73
  %v302 = vunpack.c.l.b16 %v74
  %v303 = vunpack.c.l.b16 %v75
  %v304 = vunpack.c.h.b16 %v75
  %v305 = vunpack.c.l.b16 %v76
  %v306 = vunpack.c.l.b16 %v77
  %v307 = vunpack.c.h.b16 %v77
  %v308 = vunpack.c.l.b16 %v78
  %v309 = vunpack.c.l.b16 %v79
  %v310 = vunpack.c.h.b16 %v79
  %v311 = vunpack.c.l.b16 %v80
  %v312 = vpack.c.b16 %v282, %v279
  %v313 = vpack.c.b16 %v283, %v280
  %v314 = vpack.c.b16 %v284, %v281
  %v315 = vpack.c.b16 %v288, %v285
  %v316 = vpack.c.b16 %v289, %v286
  %v317 = vpack.c.b16 %v290, %v287
  %v318 = vpack.c.b16 %v294, %v291
  %v319 = vpack.c.b16 %v295, %v292
  %v320 = vpack.c.b16 %v296, %v293
  %v321 = vpack.c.b16 %v300, %v297
  %v322 = vpack.c.b16 %v301, %v298
  %v323 = vpack.c.b16 %v302, %v299
  %v324 = vpack.c.b16 %v306, %v303
  %v325 = vpack.c.b16 %v307, %v304
  %v326 = vpack.c.b16 %v308, %v305
  %v327 = vpack.c.b16 %v309, %v309
  %v328 = vpack.c.b16 %v310, %v310
  %v329 = vpack.c.b16 %v311, %v311
  %vm345 = vcmask 662528
  %v347 = vsel %vm345, %v241, 0
  %v350 = vsel %vm345, %v242, 0
  %v353 = vsel %vm345, %v243, 0
  %v356 = vsel %vm345, %v244, 0
  %v359 = vsel %vm345, %v245, 0
  %v362 = vsel %vm345, %v246, 0
  %v365 = vsel %vm345, %v247, 0
  %v368 = vsel %vm345, %v248, 0
  %v371 = vsel %vm345, %v249, 0
  %v374 = vsel %vm345, %v250, 0
  %v377 = vsel %vm345, %v251, 0
  %v380 = vsel %vm345, %v252, 0
  %v383 = vsel %vm345, %v253, 0
  %v386 = vsel %vm345, %v254, 0
  %v389 = vsel %vm345, %v255, 0
  %v392 = vsel %vm345, %v256, 0
  %vm394 = vcmask 1040384
  %v395 = vsel 0, 4294967295, 65535
  %v396 = vsel %vm394, %v395, 0
  %v398 = vand.u32 %v327, %v396
  %v401 = vand.u32 %v328, %v396
  %v404 = vand.u32 %v329, %v396
  %406 = vmatprep.subr.bf16.mxu0 %v313
  %407 = vmatpush1.bf16.msra.mxu0 %v312
  %408 = vmatprep.subr.bf16.mxu0 %v316
  %409 = vmatpush1.bf16.msra.mxu0 %v315
  %410 = vmatprep.subr.bf16.mxu0 %v319
  %411 = vmatpush1.bf16.msra.mxu0 %v318
  %412 = vmatprep.subr.bf16.mxu0 %v322
  %413 = vmatpush1.bf16.msra.mxu0 %v321
  %414 = vmatprep.subr.bf16.mxu0 %v325
  %415 = vmatpush1.bf16.msra.mxu0 %v324
  %416 = vmatprep.subr.bf16.mxu0 %v401
  %417 = vmatpush1.bf16.msra.mxu0 %v398
  %418 = vmatprep.subr.bf16.mxu0 0
  %419 = vmatpush1.bf16.msra.mxu0 0
  %420 = vmatprep.subr.bf16.mxu0 0
  %421 = vmatpush1.bf16.msra.mxu0 0
  %422 = vmatprep.subr.bf16.mxu0 0
  %423 = vmatpush1.bf16.msra.mxu0 0
  %424 = vmatprep.subr.bf16.mxu0 0
  %425 = vmatpush1.bf16.msra.mxu0 0
  %426 = vmatprep.subr.bf16.mxu0 0
  %427 = vmatpush1.bf16.msra.mxu0 0
  %428 = vmatprep.subr.bf16.mxu0 0
  %429 = vmatpush1.bf16.msra.mxu0 0
  %430 = vmatprep.subr.bf16.mxu0 0
  %431 = vmatpush1.bf16.msra.mxu0 0
  %432 = vmatprep.subr.bf16.mxu0 0
  %433 = vmatpush1.bf16.msra.mxu0 0
  %434 = vmatprep.subr.bf16.mxu0 0
  %435 = vmatpush1.bf16.msra.mxu0 0
  %436 = vmatprep.subr.bf16.mxu0 0
  %437 = vmatpush1.bf16.msra.mxu0 0
  %438 = vmatprep.mubr.bf16.mxu0 0
  %439 = vmatmul.mubr.bf16.gmra.mrb[0].mxu0 %v347
  %v440 = vpop.f32.mrb[0].mxu0
  %v441 = vadd.f32 %v81, %v440
  %v442 = vpop.f32.mrb[0].mxu0
  %v443 = vadd.f32 %v82, %v442
  %v444 = vpop.f32.mrb[0].mxu0
  %v445 = vadd.f32 %v84, %v444
  %v446 = vpop.f32.mrb[0].mxu0
  %v447 = vadd.f32 %v85, %v446
  %448 = vmatprep.mubr.bf16.mxu0 0
  %449 = vmatmul.mubr.bf16.gmra.mrb[0].mxu0 %v350
  %v450 = vpop.f32.mrb[0].mxu0
  %v451 = vadd.f32 %v87, %v450
  %v452 = vpop.f32.mrb[0].mxu0
  %v453 = vadd.f32 %v88, %v452
  %v454 = vpop.f32.mrb[0].mxu0
  %v455 = vadd.f32 %v90, %v454
  %v456 = vpop.f32.mrb[0].mxu0
  %v457 = vadd.f32 %v91, %v456
  %458 = vmatprep.mubr.bf16.mxu0 0
  %459 = vmatmul.mubr.bf16.gmra.mrb[0].mxu0 %v353
  %v460 = vpop.f32.mrb[0].mxu0
  %v461 = vadd.f32 %v93, %v460
  %v462 = vpop.f32.mrb[0].mxu0
  %v463 = vadd.f32 %v94, %v462
  %v464 = vpop.f32.mrb[0].mxu0
  %v465 = vadd.f32 %v96, %v464
  %v466 = vpop.f32.mrb[0].mxu0
  %v467 = vadd.f32 %v97, %v466
  %468 = vmatprep.mubr.bf16.mxu0 0
  %469 = vmatmul.mubr.bf16.gmra.mrb[0].mxu0 %v356
  %v470 = vpop.f32.mrb[0].mxu0
  %v471 = vadd.f32 %v99, %v470
  %v472 = vpop.f32.mrb[0].mxu0
  %v473 = vadd.f32 %v100, %v472
  %v474 = vpop.f32.mrb[0].mxu0
  %v475 = vadd.f32 %v102, %v474
  %v476 = vpop.f32.mrb[0].mxu0
  %v477 = vadd.f32 %v103, %v476
  %478 = vmatprep.mubr.bf16.mxu0 0
  %479 = vmatmul.mubr.bf16.gmra.mrb[0].mxu0 %v359
  %v480 = vpop.f32.mrb[0].mxu0
  %v481 = vadd.f32 %v105, %v480
  %v482 = vpop.f32.mrb[0].mxu0
  %v483 = vadd.f32 %v106, %v482
  %v484 = vpop.f32.mrb[0].mxu0
  %v485 = vadd.f32 %v108, %v484
  %v486 = vpop.f32.mrb[0].mxu0
  %v487 = vadd.f32 %v109, %v486
  %488 = vmatprep.mubr.bf16.mxu0 0
  %489 = vmatmul.mubr.bf16.gmra.mrb[0].mxu0 %v362
  %v490 = vpop.f32.mrb[0].mxu0
  %v491 = vadd.f32 %v111, %v490
  %v492 = vpop.f32.mrb[0].mxu0
  %v493 = vadd.f32 %v112, %v492
  %v494 = vpop.f32.mrb[0].mxu0
  %v495 = vadd.f32 %v114, %v494
  %v496 = vpop.f32.mrb[0].mxu0
  %v497 = vadd.f32 %v115, %v496
  %498 = vmatprep.mubr.bf16.mxu0 0
  %499 = vmatmul.mubr.bf16.gmra.mrb[0].mxu0 %v365
  %v500 = vpop.f32.mrb[0].mxu0
  %v501 = vadd.f32 %v117, %v500
  %v502 = vpop.f32.mrb[0].mxu0
  %v503 = vadd.f32 %v118, %v502
  %v504 = vpop.f32.mrb[0].mxu0
  %v505 = vadd.f32 %v120, %v504
  %v506 = vpop.f32.mrb[0].mxu0
  %v507 = vadd.f32 %v121, %v506
  %508 = vmatprep.mubr.bf16.mxu0 0
  %509 = vmatmul.mubr.bf16.gmra.mrb[0].mxu0 %v368
  %v510 = vpop.f32.mrb[0].mxu0
  %v511 = vadd.f32 %v123, %v510
  %v512 = vpop.f32.mrb[0].mxu0
  %v513 = vadd.f32 %v124, %v512
  %v514 = vpop.f32.mrb[0].mxu0
  %v515 = vadd.f32 %v126, %v514
  %v516 = vpop.f32.mrb[0].mxu0
  %v517 = vadd.f32 %v127, %v516
  %518 = vmatprep.mubr.bf16.mxu0 0
  %519 = vmatmul.mubr.bf16.gmra.mrb[0].mxu0 %v371
  %v520 = vpop.f32.mrb[0].mxu0
  %v521 = vadd.f32 %v129, %v520
  %v522 = vpop.f32.mrb[0].mxu0
  %v523 = vadd.f32 %v130, %v522
  %v524 = vpop.f32.mrb[0].mxu0
  %v525 = vadd.f32 %v132, %v524
  %v526 = vpop.f32.mrb[0].mxu0
  %v527 = vadd.f32 %v133, %v526
  %528 = vmatprep.mubr.bf16.mxu0 0
  %529 = vmatmul.mubr.bf16.gmra.mrb[0].mxu0 %v374
  %v530 = vpop.f32.mrb[0].mxu0
  %v531 = vadd.f32 %v135, %v530
  %v532 = vpop.f32.mrb[0].mxu0
  %v533 = vadd.f32 %v136, %v532
  %v534 = vpop.f32.mrb[0].mxu0
  %v535 = vadd.f32 %v138, %v534
  %v536 = vpop.f32.mrb[0].mxu0
  %v537 = vadd.f32 %v139, %v536
  %538 = vmatprep.mubr.bf16.mxu0 0
  %539 = vmatmul.mubr.bf16.gmra.mrb[0].mxu0 %v377
  %v540 = vpop.f32.mrb[0].mxu0
  %v541 = vadd.f32 %v141, %v540
  %v542 = vpop.f32.mrb[0].mxu0
  %v543 = vadd.f32 %v142, %v542
  %v544 = vpop.f32.mrb[0].mxu0
  %v545 = vadd.f32 %v144, %v544
  %v546 = vpop.f32.mrb[0].mxu0
  %v547 = vadd.f32 %v145, %v546
  %548 = vmatprep.mubr.bf16.mxu0 0
  %549 = vmatmul.mubr.bf16.gmra.mrb[0].mxu0 %v380
  %v550 = vpop.f32.mrb[0].mxu0
  %v551 = vadd.f32 %v147, %v550
  %v552 = vpop.f32.mrb[0].mxu0
  %v553 = vadd.f32 %v148, %v552
  %v554 = vpop.f32.mrb[0].mxu0
  %v555 = vadd.f32 %v150, %v554
  %v556 = vpop.f32.mrb[0].mxu0
  %v557 = vadd.f32 %v151, %v556
  %558 = vmatprep.mubr.bf16.mxu0 0
  %559 = vmatmul.mubr.bf16.gmra.mrb[0].mxu0 %v383
  %v560 = vpop.f32.mrb[0].mxu0
  %v561 = vadd.f32 %v153, %v560
  %v562 = vpop.f32.mrb[0].mxu0
  %v563 = vadd.f32 %v154, %v562
  %v564 = vpop.f32.mrb[0].mxu0
  %v565 = vadd.f32 %v156, %v564
  %v566 = vpop.f32.mrb[0].mxu0
  %v567 = vadd.f32 %v157, %v566
  %568 = vmatprep.mubr.bf16.mxu0 0
  %569 = vmatmul.mubr.bf16.gmra.mrb[0].mxu0 %v386
  %v570 = vpop.f32.mrb[0].mxu0
  %v571 = vadd.f32 %v159, %v570
  %v572 = vpop.f32.mrb[0].mxu0
  %v573 = vadd.f32 %v160, %v572
  %v574 = vpop.f32.mrb[0].mxu0
  %v575 = vadd.f32 %v162, %v574
  %v576 = vpop.f32.mrb[0].mxu0
  %v577 = vadd.f32 %v163, %v576
  %578 = vmatprep.mubr.bf16.mxu0 0
  %579 = vmatmul.mubr.bf16.gmra.mrb[0].mxu0 %v389
  %v580 = vpop.f32.mrb[0].mxu0
  %v581 = vadd.f32 %v165, %v580
  %v582 = vpop.f32.mrb[0].mxu0
  %v583 = vadd.f32 %v166, %v582
  %v584 = vpop.f32.mrb[0].mxu0
  %v585 = vadd.f32 %v168, %v584
  %v586 = vpop.f32.mrb[0].mxu0
  %v587 = vadd.f32 %v169, %v586
  %588 = vmatprep.mubr.bf16.mxu0 0
  %589 = vmatmul.mubr.bf16.gmra.mrb[0].mxu0 %v392
  %v590 = vpop.f32.mrb[0].mxu0
  %v591 = vadd.f32 %v171, %v590
  %v592 = vpop.f32.mrb[0].mxu0
  %v593 = vadd.f32 %v172, %v592
  %v594 = vpop.f32.mrb[0].mxu0
  %v595 = vadd.f32 %v174, %v594
  %v596 = vpop.f32.mrb[0].mxu0
  %v597 = vadd.f32 %v175, %v596
  %598 = vdwg.mxu0
  %599 = vmatprep.subr.bf16.mxu0 0
  %600 = vmatpush1.bf16.msra.mxu0 %v314
  %601 = vmatprep.subr.bf16.mxu0 0
  %602 = vmatpush1.bf16.msra.mxu0 %v317
  %603 = vmatprep.subr.bf16.mxu0 0
  %604 = vmatpush1.bf16.msra.mxu0 %v320
  %605 = vmatprep.subr.bf16.mxu0 0
  %606 = vmatpush1.bf16.msra.mxu0 %v323
  %607 = vmatprep.subr.bf16.mxu0 0
  %608 = vmatpush1.bf16.msra.mxu0 %v326
  %609 = vmatprep.subr.bf16.mxu0 0
  %610 = vmatpush1.bf16.msra.mxu0 %v404
  %611 = vmatprep.subr.bf16.mxu0 0
  %612 = vmatpush1.bf16.msra.mxu0 0
  %613 = vmatprep.subr.bf16.mxu0 0
  %614 = vmatpush1.bf16.msra.mxu0 0
  %615 = vmatprep.subr.bf16.mxu0 0
  %616 = vmatpush1.bf16.msra.mxu0 0
  %617 = vmatprep.subr.bf16.mxu0 0
  %618 = vmatpush1.bf16.msra.mxu0 0
  %619 = vmatprep.subr.bf16.mxu0 0
  %620 = vmatpush1.bf16.msra.mxu0 0
  %621 = vmatprep.subr.bf16.mxu0 0
  %622 = vmatpush1.bf16.msra.mxu0 0
  %623 = vmatprep.subr.bf16.mxu0 0
  %624 = vmatpush1.bf16.msra.mxu0 0
  %625 = vmatprep.subr.bf16.mxu0 0
  %626 = vmatpush1.bf16.msra.mxu0 0
  %627 = vmatprep.subr.bf16.mxu0 0
  %628 = vmatpush1.bf16.msra.mxu0 0
  %629 = vmatprep.subr.bf16.mxu0 0
  %630 = vmatpush1.bf16.msra.mxu0 0
  %631 = vmatprep.mubr.bf16.mxu0 0
  %632 = vmatmul.mubr.bf16.gmra.mrb[0].mxu0 %v347
  %v633 = vpop.f32.mrb[0].mxu0
  %v634 = vadd.f32 %v83, %v633
  %v635 = vpop.f32.mrb[0].mxu0
  %v636 = vpop.f32.mrb[0].mxu0
  %v637 = vadd.f32 %v86, %v636
  %v638 = vpop.f32.mrb[0].mxu0
  %639 = vmatprep.mubr.bf16.mxu0 0
  %640 = vmatmul.mubr.bf16.gmra.mrb[0].mxu0 %v350
  %v641 = vpop.f32.mrb[0].mxu0
  %v642 = vadd.f32 %v89, %v641
  %v643 = vpop.f32.mrb[0].mxu0
  %v644 = vpop.f32.mrb[0].mxu0
  %v645 = vadd.f32 %v92, %v644
  %v646 = vpop.f32.mrb[0].mxu0
  %647 = vmatprep.mubr.bf16.mxu0 0
  %648 = vmatmul.mubr.bf16.gmra.mrb[0].mxu0 %v353
  %v649 = vpop.f32.mrb[0].mxu0
  %v650 = vadd.f32 %v95, %v649
  %v651 = vpop.f32.mrb[0].mxu0
  %v652 = vpop.f32.mrb[0].mxu0
  %v653 = vadd.f32 %v98, %v652
  %v654 = vpop.f32.mrb[0].mxu0
  %655 = vmatprep.mubr.bf16.mxu0 0
  %656 = vmatmul.mubr.bf16.gmra.mrb[0].mxu0 %v356
  %v657 = vpop.f32.mrb[0].mxu0
  %v658 = vadd.f32 %v101, %v657
  %v659 = vpop.f32.mrb[0].mxu0
  %v660 = vpop.f32.mrb[0].mxu0
  %v661 = vadd.f32 %v104, %v660
  %v662 = vpop.f32.mrb[0].mxu0
  %663 = vmatprep.mubr.bf16.mxu0 0
  %664 = vmatmul.mubr.bf16.gmra.mrb[0].mxu0 %v359
  %v665 = vpop.f32.mrb[0].mxu0
  %v666 = vadd.f32 %v107, %v665
  %v667 = vpop.f32.mrb[0].mxu0
  %v668 = vpop.f32.mrb[0].mxu0
  %v669 = vadd.f32 %v110, %v668
  %v670 = vpop.f32.mrb[0].mxu0
  %671 = vmatprep.mubr.bf16.mxu0 0
  %672 = vmatmul.mubr.bf16.gmra.mrb[0].mxu0 %v362
  %v673 = vpop.f32.mrb[0].mxu0
  %v674 = vadd.f32 %v113, %v673
  %v675 = vpop.f32.mrb[0].mxu0
  %v676 = vpop.f32.mrb[0].mxu0
  %v677 = vadd.f32 %v116, %v676
  %v678 = vpop.f32.mrb[0].mxu0
  %679 = vmatprep.mubr.bf16.mxu0 0
  %680 = vmatmul.mubr.bf16.gmra.mrb[0].mxu0 %v365
  %v681 = vpop.f32.mrb[0].mxu0
  %v682 = vadd.f32 %v119, %v681
  %v683 = vpop.f32.mrb[0].mxu0
  %v684 = vpop.f32.mrb[0].mxu0
  %v685 = vadd.f32 %v122, %v684
  %v686 = vpop.f32.mrb[0].mxu0
  %687 = vmatprep.mubr.bf16.mxu0 0
  %688 = vmatmul.mubr.bf16.gmra.mrb[0].mxu0 %v368
  %v689 = vpop.f32.mrb[0].mxu0
  %v690 = vadd.f32 %v125, %v689
  %v691 = vpop.f32.mrb[0].mxu0
  %v692 = vpop.f32.mrb[0].mxu0
  %v693 = vadd.f32 %v128, %v692
  %v694 = vpop.f32.mrb[0].mxu0
  %695 = vmatprep.mubr.bf16.mxu0 0
  %696 = vmatmul.mubr.bf16.gmra.mrb[0].mxu0 %v371
  %v697 = vpop.f32.mrb[0].mxu0
  %v698 = vadd.f32 %v131, %v697
  %v699 = vpop.f32.mrb[0].mxu0
  %v700 = vpop.f32.mrb[0].mxu0
  %v701 = vadd.f32 %v134, %v700
  %v702 = vpop.f32.mrb[0].mxu0
  %703 = vmatprep.mubr.bf16.mxu0 0
  %704 = vmatmul.mubr.bf16.gmra.mrb[0].mxu0 %v374
  %v705 = vpop.f32.mrb[0].mxu0
  %v706 = vadd.f32 %v137, %v705
  %v707 = vpop.f32.mrb[0].mxu0
  %v708 = vpop.f32.mrb[0].mxu0
  %v709 = vadd.f32 %v140, %v708
  %v710 = vpop.f32.mrb[0].mxu0
  %711 = vmatprep.mubr.bf16.mxu0 0
  %712 = vmatmul.mubr.bf16.gmra.mrb[0].mxu0 %v377
  %v713 = vpop.f32.mrb[0].mxu0
  %v714 = vadd.f32 %v143, %v713
  %v715 = vpop.f32.mrb[0].mxu0
  %v716 = vpop.f32.mrb[0].mxu0
  %v717 = vadd.f32 %v146, %v716
  %v718 = vpop.f32.mrb[0].mxu0
  %719 = vmatprep.mubr.bf16.mxu0 0
  %720 = vmatmul.mubr.bf16.gmra.mrb[0].mxu0 %v380
  %v721 = vpop.f32.mrb[0].mxu0
  %v722 = vadd.f32 %v149, %v721
  %v723 = vpop.f32.mrb[0].mxu0
  %v724 = vpop.f32.mrb[0].mxu0
  %v725 = vadd.f32 %v152, %v724
  %v726 = vpop.f32.mrb[0].mxu0
  %727 = vmatprep.mubr.bf16.mxu0 0
  %728 = vmatmul.mubr.bf16.gmra.mrb[0].mxu0 %v383
  %v729 = vpop.f32.mrb[0].mxu0
  %v730 = vadd.f32 %v155, %v729
  %v731 = vpop.f32.mrb[0].mxu0
  %v732 = vpop.f32.mrb[0].mxu0
  %v733 = vadd.f32 %v158, %v732
  %v734 = vpop.f32.mrb[0].mxu0
  %735 = vmatprep.mubr.bf16.mxu0 0
  %736 = vmatmul.mubr.bf16.gmra.mrb[0].mxu0 %v386
  %v737 = vpop.f32.mrb[0].mxu0
  %v738 = vadd.f32 %v161, %v737
  %v739 = vpop.f32.mrb[0].mxu0
  %v740 = vpop.f32.mrb[0].mxu0
  %v741 = vadd.f32 %v164, %v740
  %v742 = vpop.f32.mrb[0].mxu0
  %743 = vmatprep.mubr.bf16.mxu0 0
  %744 = vmatmul.mubr.bf16.gmra.mrb[0].mxu0 %v389
  %v745 = vpop.f32.mrb[0].mxu0
  %v746 = vadd.f32 %v167, %v745
  %v747 = vpop.f32.mrb[0].mxu0
  %v748 = vpop.f32.mrb[0].mxu0
  %v749 = vadd.f32 %v170, %v748
  %v750 = vpop.f32.mrb[0].mxu0
  %751 = vmatprep.mubr.bf16.mxu0 0
  %752 = vmatmul.mubr.bf16.gmra.mrb[0].mxu0 %v392
  %v753 = vpop.f32.mrb[0].mxu0
  %v754 = vadd.f32 %v173, %v753
  %v755 = vpop.f32.mrb[0].mxu0
  %v756 = vpop.f32.mrb[0].mxu0
  %v757 = vadd.f32 %v176, %v756
  %v758 = vpop.f32.mrb[0].mxu0
  %759 = vdwg.mxu0
  %v760 = vmax.f32 %v441, 0.0
  %v761 = vmax.f32 %v443, 0.0
  %v762 = vmax.f32 %v634, 0.0
  %v763 = vmax.f32 %v445, 0.0
  %v764 = vmax.f32 %v447, 0.0
  %v765 = vmax.f32 %v637, 0.0
  %v766 = vmax.f32 %v451, 0.0
  %v767 = vmax.f32 %v453, 0.0
  %v768 = vmax.f32 %v642, 0.0
  %v769 = vmax.f32 %v455, 0.0
  %v770 = vmax.f32 %v457, 0.0
  %v771 = vmax.f32 %v645, 0.0
  %v772 = vmax.f32 %v461, 0.0
  %v773 = vmax.f32 %v463, 0.0
  %v774 = vmax.f32 %v650, 0.0
  %v775 = vmax.f32 %v465, 0.0
  %v776 = vmax.f32 %v467, 0.0
  %v777 = vmax.f32 %v653, 0.0
  %v778 = vmax.f32 %v471, 0.0
  %v779 = vmax.f32 %v473, 0.0
  %v780 = vmax.f32 %v658, 0.0
  %v781 = vmax.f32 %v475, 0.0
  %v782 = vmax.f32 %v477, 0.0
  %v783 = vmax.f32 %v661, 0.0
  %v784 = vmax.f32 %v481, 0.0
  %v785 = vmax.f32 %v483, 0.0
  %v786 = vmax.f32 %v666, 0.0
  %v787 = vmax.f32 %v485, 0.0
  %v788 = vmax.f32 %v487, 0.0
  %v789 = vmax.f32 %v669, 0.0
  %v790 = vmax.f32 %v491, 0.0
  %v791 = vmax.f32 %v493, 0.0
  %v792 = vmax.f32 %v674, 0.0
  %v793 = vmax.f32 %v495, 0.0
  %v794 = vmax.f32 %v497, 0.0
  %v795 = vmax.f32 %v677, 0.0
  %v796 = vmax.f32 %v501, 0.0
  %v797 = vmax.f32 %v503, 0.0
  %v798 = vmax.f32 %v682, 0.0
  %v799 = vmax.f32 %v505, 0.0
  %v800 = vmax.f32 %v507, 0.0
  %v801 = vmax.f32 %v685, 0.0
  %v802 = vmax.f32 %v511, 0.0
  %v803 = vmax.f32 %v513, 0.0
  %v804 = vmax.f32 %v690, 0.0
  %v805 = vmax.f32 %v515, 0.0
  %v806 = vmax.f32 %v517, 0.0
  %v807 = vmax.f32 %v693, 0.0
  %v808 = vmax.f32 %v521, 0.0
  %v809 = vmax.f32 %v523, 0.0
  %v810 = vmax.f32 %v698, 0.0
  %v811 = vmax.f32 %v525, 0.0
  %v812 = vmax.f32 %v527, 0.0
  %v813 = vmax.f32 %v701, 0.0
  %v814 = vmax.f32 %v531, 0.0
  %v815 = vmax.f32 %v533, 0.0
  %v816 = vmax.f32 %v706, 0.0
  %v817 = vmax.f32 %v535, 0.0
  %v818 = vmax.f32 %v537, 0.0
  %v819 = vmax.f32 %v709, 0.0
  %v820 = vmax.f32 %v541, 0.0
  %v821 = vmax.f32 %v543, 0.0
  %v822 = vmax.f32 %v714, 0.0
  %v823 = vmax.f32 %v545, 0.0
  %v824 = vmax.f32 %v547, 0.0
  %v825 = vmax.f32 %v717, 0.0
  %v826 = vmax.f32 %v551, 0.0
  %v827 = vmax.f32 %v553, 0.0
  %v828 = vmax.f32 %v722, 0.0
  %v829 = vmax.f32 %v555, 0.0
  %v830 = vmax.f32 %v557, 0.0
  %v831 = vmax.f32 %v725, 0.0
  %v832 = vmax.f32 %v561, 0.0
  %v833 = vmax.f32 %v563, 0.0
  %v834 = vmax.f32 %v730, 0.0
  %v835 = vmax.f32 %v565, 0.0
  %v836 = vmax.f32 %v567, 0.0
  %v837 = vmax.f32 %v733, 0.0
  %v838 = vmax.f32 %v571, 0.0
  %v839 = vmax.f32 %v573, 0.0
  %v840 = vmax.f32 %v738, 0.0
  %v841 = vmax.f32 %v575, 0.0
  %v842 = vmax.f32 %v577, 0.0
  %v843 = vmax.f32 %v741, 0.0
  %v844 = vmax.f32 %v581, 0.0
  %v845 = vmax.f32 %v583, 0.0
  %v846 = vmax.f32 %v746, 0.0
  %v847 = vmax.f32 %v585, 0.0
  %v848 = vmax.f32 %v587, 0.0
  %v849 = vmax.f32 %v749, 0.0
  %v850 = vmax.f32 %v591, 0.0
  %v851 = vmax.f32 %v593, 0.0
  %v852 = vmax.f32 %v754, 0.0
  %v853 = vmax.f32 %v595, 0.0
  %v854 = vmax.f32 %v597, 0.0
  %v855 = vmax.f32 %v757, 0.0
  %v856 = vpack.c.bf16 %v763, %v760
  %v857 = vpack.c.bf16 %v764, %v761
  %v858 = vpack.c.bf16 %v765, %v762
  %v859 = vpack.c.bf16 %v769, %v766
  %v860 = vpack.c.bf16 %v770, %v767
  %v861 = vpack.c.bf16 %v771, %v768
  %v862 = vpack.c.bf16 %v775, %v772
  %v863 = vpack.c.bf16 %v776, %v773
  %v864 = vpack.c.bf16 %v777, %v774
  %v865 = vpack.c.bf16 %v781, %v778
  %v866 = vpack.c.bf16 %v782, %v779
  %v867 = vpack.c.bf16 %v783, %v780
  %v868 = vpack.c.bf16 %v787, %v784
  %v869 = vpack.c.bf16 %v788, %v785
  %v870 = vpack.c.bf16 %v789, %v786
  %v871 = vpack.c.bf16 %v793, %v790
  %v872 = vpack.c.bf16 %v794, %v791
  %v873 = vpack.c.bf16 %v795, %v792
  %v874 = vpack.c.bf16 %v799, %v796
  %v875 = vpack.c.bf16 %v800, %v797
  %v876 = vpack.c.bf16 %v801, %v798
  %v877 = vpack.c.bf16 %v805, %v802
  %v878 = vpack.c.bf16 %v806, %v803
  %v879 = vpack.c.bf16 %v807, %v804
  %v880 = vpack.c.bf16 %v811, %v808
  %v881 = vpack.c.bf16 %v812, %v809
  %v882 = vpack.c.bf16 %v813, %v810
  %v883 = vpack.c.bf16 %v817, %v814
  %v884 = vpack.c.bf16 %v818, %v815
  %v885 = vpack.c.bf16 %v819, %v816
  %v886 = vpack.c.bf16 %v823, %v820
  %v887 = vpack.c.bf16 %v824, %v821
  %v888 = vpack.c.bf16 %v825, %v822
  %v889 = vpack.c.bf16 %v829, %v826
  %v890 = vpack.c.bf16 %v830, %v827
  %v891 = vpack.c.bf16 %v831, %v828
  %v892 = vpack.c.bf16 %v835, %v832
  %v893 = vpack.c.bf16 %v836, %v833
  %v894 = vpack.c.bf16 %v837, %v834
  %v895 = vpack.c.bf16 %v841, %v838
  %v896 = vpack.c.bf16 %v842, %v839
  %v897 = vpack.c.bf16 %v843, %v840
  %v898 = vpack.c.bf16 %v847, %v844
  %v899 = vpack.c.bf16 %v848, %v845
  %v900 = vpack.c.bf16 %v849, %v846
  %v901 = vpack.c.bf16 %v853, %v850
  %v902 = vpack.c.bf16 %v854, %v851
  %v903 = vpack.c.bf16 %v855, %v852
  %v904 = vld [vmem:[%s3] sm:$0xf]
  %v905 = vld [vmem:[%s3 + $0x4] sm:$0xf]
  %v906 = vld [vmem:[%s3 + $0x8] sm:$0xf]
  %v907 = vld [vmem:[%s3 + $0xc] sm:$0xf]
  %v908 = vld [vmem:[%s3 + $0x10] sm:$0xf]
  %v909 = vld [vmem:[%s3 + $0x14] sm:$0xf]
  %v910 = vld [vmem:[%s3 + $0x18] sm:$0xf]
  %v911 = vld [vmem:[%s3 + $0x1c] sm:$0xf]
  %v912 = vld [vmem:[%s3 + $0x20] sm:$0xf]
  %v913 = vld [vmem:[%s3 + $0x24] sm:$0xf]
  %v914 = vld [vmem:[%s3 + $0x28] sm:$0xf]
  %v915 = vld [vmem:[%s3 + $0x2c] sm:$0xf]
  %v916 = vld [vmem:[%s3 + $0x30] sm:$0xf]
  %v917 = vld [vmem:[%s3 + $0x34] sm:$0xf]
  %v918 = vld [vmem:[%s3 + $0x38] sm:$0xf]
  %v919 = vld [vmem:[%s3 + $0x3c] sm:$0xf]
  %v920 = vld [vmem:[%s3 + $0x40] sm:$0xf]
  %v921 = vld [vmem:[%s3 + $0x44] sm:$0xf]
  %v922 = vld [vmem:[%s3 + $0x48] sm:$0xf]
  %v923 = vld [vmem:[%s3 + $0x4c] sm:$0xf]
  %v924 = vld [vmem:[%s3 + $0x50] sm:$0xf]
  %v925 = vld [vmem:[%s3 + $0x54] sm:$0xf]
  %v926 = vld [vmem:[%s3 + $0x58] sm:$0xf]
  %v927 = vld [vmem:[%s3 + $0x5c] sm:$0xf]
  %v928 = vld [vmem:[%s3 + $0x60] sm:$0xf]
  %v929 = vld [vmem:[%s3 + $0x64] sm:$0xf]
  %v930 = vld [vmem:[%s3 + $0x68] sm:$0xf]
  %v931 = vld [vmem:[%s3 + $0x6c] sm:$0xf]
  %v932 = vld [vmem:[%s3 + $0x70] sm:$0xf]
  %v933 = vld [vmem:[%s3 + $0x74] sm:$0xf]
  %v934 = vld [vmem:[%s3 + $0x78] sm:$0xf]
  %v935 = vld [vmem:[%s3 + $0x7c] sm:$0xf]
  %v936 = vld [vmem:[%s3 + $0x80] sm:$0xf]
  %v937 = vld [vmem:[%s3 + $0x84] sm:$0xf]
  %v938 = vld [vmem:[%s3 + $0x88] sm:$0xf]
  %v939 = vld [vmem:[%s3 + $0x8c] sm:$0xf]
  %v940 = vld [vmem:[%s4] sm:$0x1]
  %v942 = vlaneseq
  %v943 = vshrl.u32 %v942, 7
  %v944 = vsub.s32 0, %v943
  %v945 = vrot.slane %v940, %v944
  %v983 = vunpack.c.l.b16 %v904
  %v984 = vunpack.c.l.b16 %v905
  %v985 = vunpack.c.l.b16 %v906
  %v986 = vunpack.c.l.b16 %v907
  %v987 = vunpack.c.l.b16 %v908
  %v988 = vunpack.c.l.b16 %v909
  %v989 = vunpack.c.l.b16 %v910
  %v990 = vunpack.c.l.b16 %v911
  %v991 = vunpack.c.l.b16 %v912
  %v992 = vunpack.c.l.b16 %v913
  %v993 = vunpack.c.l.b16 %v914
  %v994 = vunpack.c.l.b16 %v915
  %v995 = vunpack.c.l.b16 %v916
  %v996 = vunpack.c.l.b16 %v917
  %v997 = vunpack.c.l.b16 %v918
  %v998 = vunpack.c.l.b16 %v919
  %v999 = vunpack.c.l.b16 %v920
  %v1000 = vunpack.c.l.b16 %v921
  %v1001 = vunpack.c.l.b16 %v922
  %v1002 = vunpack.c.l.b16 %v923
  %v1003 = vunpack.c.l.b16 %v924
  %v1004 = vunpack.c.l.b16 %v925
  %v1005 = vunpack.c.l.b16 %v926
  %v1006 = vunpack.c.l.b16 %v927
  %v1007 = vunpack.c.l.b16 %v928
  %v1008 = vunpack.c.l.b16 %v929
  %v1009 = vunpack.c.l.b16 %v930
  %v1010 = vunpack.c.l.b16 %v931
  %v1011 = vunpack.c.l.b16 %v932
  %v1012 = vunpack.c.l.b16 %v933
  %v1013 = vunpack.c.l.b16 %v934
  %v1014 = vunpack.c.l.b16 %v935
  %v1015 = vunpack.c.l.b16 %v936
  %v1016 = vunpack.c.l.b16 %v937
  %v1017 = vunpack.c.l.b16 %v938
  %v1018 = vunpack.c.l.b16 %v939
  %v1019 = vpack.c.b16 %v984, %v983
  %v1020 = vpack.c.b16 %v986, %v985
  %v1021 = vpack.c.b16 %v988, %v987
  %v1022 = vpack.c.b16 %v990, %v989
  %v1023 = vpack.c.b16 %v992, %v991
  %v1024 = vpack.c.b16 %v994, %v993
  %v1025 = vpack.c.b16 %v996, %v995
  %v1026 = vpack.c.b16 %v998, %v997
  %v1027 = vpack.c.b16 %v1000, %v999
  %v1028 = vpack.c.b16 %v1002, %v1001
  %v1029 = vpack.c.b16 %v1004, %v1003
  %v1030 = vpack.c.b16 %v1006, %v1005
  %v1031 = vpack.c.b16 %v1008, %v1007
  %v1032 = vpack.c.b16 %v1010, %v1009
  %v1033 = vpack.c.b16 %v1012, %v1011
  %v1034 = vpack.c.b16 %v1014, %v1013
  %v1035 = vpack.c.b16 %v1016, %v1015
  %v1036 = vpack.c.b16 %v1018, %v1017
  %vm1055 = vcmask 261120
  %v1057 = vsel %vm1055, %v858, 0
  %v1060 = vsel %vm1055, %v861, 0
  %v1063 = vsel %vm1055, %v864, 0
  %v1066 = vsel %vm1055, %v867, 0
  %v1069 = vsel %vm1055, %v870, 0
  %v1072 = vsel %vm1055, %v873, 0
  %v1075 = vsel %vm1055, %v876, 0
  %v1078 = vsel %vm1055, %v879, 0
  %v1081 = vsel %vm1055, %v882, 0
  %v1084 = vsel %vm1055, %v885, 0
  %v1087 = vsel %vm1055, %v888, 0
  %v1090 = vsel %vm1055, %v891, 0
  %v1093 = vsel %vm1055, %v894, 0
  %v1096 = vsel %vm1055, %v897, 0
  %v1099 = vsel %vm1055, %v900, 0
  %v1102 = vsel %vm1055, %v903, 0
  %1104 = vmatprep.subr.bf16.mxu0 0
  %1105 = vmatpush1.bf16.msra.mxu0 %v1019
  %1106 = vmatprep.subr.bf16.mxu0 0
  %1107 = vmatpush1.bf16.msra.mxu0 %v1020
  %1108 = vmatprep.subr.bf16.mxu0 0
  %1109 = vmatpush1.bf16.msra.mxu0 %v1021
  %1110 = vmatprep.subr.bf16.mxu0 0
  %1111 = vmatpush1.bf16.msra.mxu0 %v1022
  %1112 = vmatprep.subr.bf16.mxu0 0
  %1113 = vmatpush1.bf16.msra.mxu0 %v1023
  %1114 = vmatprep.subr.bf16.mxu0 0
  %1115 = vmatpush1.bf16.msra.mxu0 %v1024
  %1116 = vmatprep.subr.bf16.mxu0 0
  %1117 = vmatpush1.bf16.msra.mxu0 %v1025
  %1118 = vmatprep.subr.bf16.mxu0 0
  %1119 = vmatpush1.bf16.msra.mxu0 %v1026
  %1120 = vmatprep.subr.bf16.mxu0 0
  %1121 = vmatpush1.bf16.msra.mxu0 %v1027
  %1122 = vmatprep.subr.bf16.mxu0 0
  %1123 = vmatpush1.bf16.msra.mxu0 %v1028
  %1124 = vmatprep.subr.bf16.mxu0 0
  %1125 = vmatpush1.bf16.msra.mxu0 %v1029
  %1126 = vmatprep.subr.bf16.mxu0 0
  %1127 = vmatpush1.bf16.msra.mxu0 %v1030
  %1128 = vmatprep.subr.bf16.mxu0 0
  %1129 = vmatpush1.bf16.msra.mxu0 %v1031
  %1130 = vmatprep.subr.bf16.mxu0 0
  %1131 = vmatpush1.bf16.msra.mxu0 %v1032
  %1132 = vmatprep.subr.bf16.mxu0 0
  %1133 = vmatpush1.bf16.msra.mxu0 %v1033
  %1134 = vmatprep.subr.bf16.mxu0 0
  %1135 = vmatpush1.bf16.msra.mxu0 %v1034
  %1136 = vmatprep.mubr.bf16.mxu0 %v857
  %1137 = vmatmul.mubr.bf16.gmra.mrb[0].mxu0 %v856
  %v1138 = vpop.f32.mrb[0].mxu0
  %v1139 = vadd.f32 %v945, %v1138
  %v1140 = vpop.f32.mrb[0].mxu0
  %v1141 = vpop.f32.mrb[0].mxu0
  %v1142 = vadd.f32 %v945, %v1141
  %v1143 = vpop.f32.mrb[0].mxu0
  %1144 = vmatprep.mubr.bf16.mxu0 %v860
  %1145 = vmatmul.mubr.bf16.gmra.mrb[0].mxu0 %v859
  %v1146 = vpop.f32.mrb[0].mxu0
  %v1147 = vadd.f32 %v945, %v1146
  %v1148 = vpop.f32.mrb[0].mxu0
  %v1149 = vpop.f32.mrb[0].mxu0
  %v1150 = vadd.f32 %v945, %v1149
  %v1151 = vpop.f32.mrb[0].mxu0
  %1152 = vmatprep.mubr.bf16.mxu0 %v863
  %1153 = vmatmul.mubr.bf16.gmra.mrb[0].mxu0 %v862
  %v1154 = vpop.f32.mrb[0].mxu0
  %v1155 = vadd.f32 %v945, %v1154
  %v1156 = vpop.f32.mrb[0].mxu0
  %v1157 = vpop.f32.mrb[0].mxu0
  %v1158 = vadd.f32 %v945, %v1157
  %v1159 = vpop.f32.mrb[0].mxu0
  %1160 = vmatprep.mubr.bf16.mxu0 %v866
  %1161 = vmatmul.mubr.bf16.gmra.mrb[0].mxu0 %v865
  %v1162 = vpop.f32.mrb[0].mxu0
  %v1163 = vadd.f32 %v945, %v1162
  %v1164 = vpop.f32.mrb[0].mxu0
  %v1165 = vpop.f32.mrb[0].mxu0
  %v1166 = vadd.f32 %v945, %v1165
  %v1167 = vpop.f32.mrb[0].mxu0
  %1168 = vmatprep.mubr.bf16.mxu0 %v869
  %1169 = vmatmul.mubr.bf16.gmra.mrb[0].mxu0 %v868
  %v1170 = vpop.f32.mrb[0].mxu0
  %v1171 = vadd.f32 %v945, %v1170
  %v1172 = vpop.f32.mrb[0].mxu0
  %v1173 = vpop.f32.mrb[0].mxu0
  %v1174 = vadd.f32 %v945, %v1173
  %v1175 = vpop.f32.mrb[0].mxu0
  %1176 = vmatprep.mubr.bf16.mxu0 %v872
  %1177 = vmatmul.mubr.bf16.gmra.mrb[0].mxu0 %v871
  %v1178 = vpop.f32.mrb[0].mxu0
  %v1179 = vadd.f32 %v945, %v1178
  %v1180 = vpop.f32.mrb[0].mxu0
  %v1181 = vpop.f32.mrb[0].mxu0
  %v1182 = vadd.f32 %v945, %v1181
  %v1183 = vpop.f32.mrb[0].mxu0
  %1184 = vmatprep.mubr.bf16.mxu0 %v875
  %1185 = vmatmul.mubr.bf16.gmra.mrb[0].mxu0 %v874
  %v1186 = vpop.f32.mrb[0].mxu0
  %v1187 = vadd.f32 %v945, %v1186
  %v1188 = vpop.f32.mrb[0].mxu0
  %v1189 = vpop.f32.mrb[0].mxu0
  %v1190 = vadd.f32 %v945, %v1189
  %v1191 = vpop.f32.mrb[0].mxu0
  %1192 = vmatprep.mubr.bf16.mxu0 %v878
  %1193 = vmatmul.mubr.bf16.gmra.mrb[0].mxu0 %v877
  %v1194 = vpop.f32.mrb[0].mxu0
  %v1195 = vadd.f32 %v945, %v1194
  %v1196 = vpop.f32.mrb[0].mxu0
  %v1197 = vpop.f32.mrb[0].mxu0
  %v1198 = vadd.f32 %v945, %v1197
  %v1199 = vpop.f32.mrb[0].mxu0
  %1200 = vmatprep.mubr.bf16.mxu0 %v881
  %1201 = vmatmul.mubr.bf16.gmra.mrb[0].mxu0 %v880
  %v1202 = vpop.f32.mrb[0].mxu0
  %v1203 = vadd.f32 %v945, %v1202
  %v1204 = vpop.f32.mrb[0].mxu0
  %v1205 = vpop.f32.mrb[0].mxu0
  %v1206 = vadd.f32 %v945, %v1205
  %v1207 = vpop.f32.mrb[0].mxu0
  %1208 = vmatprep.mubr.bf16.mxu0 %v884
  %1209 = vmatmul.mubr.bf16.gmra.mrb[0].mxu0 %v883
  %v1210 = vpop.f32.mrb[0].mxu0
  %v1211 = vadd.f32 %v945, %v1210
  %v1212 = vpop.f32.mrb[0].mxu0
  %v1213 = vpop.f32.mrb[0].mxu0
  %v1214 = vadd.f32 %v945, %v1213
  %v1215 = vpop.f32.mrb[0].mxu0
  %1216 = vmatprep.mubr.bf16.mxu0 %v887
  %1217 = vmatmul.mubr.bf16.gmra.mrb[0].mxu0 %v886
  %v1218 = vpop.f32.mrb[0].mxu0
  %v1219 = vadd.f32 %v945, %v1218
  %v1220 = vpop.f32.mrb[0].mxu0
  %v1221 = vpop.f32.mrb[0].mxu0
  %v1222 = vadd.f32 %v945, %v1221
  %v1223 = vpop.f32.mrb[0].mxu0
  %1224 = vmatprep.mubr.bf16.mxu0 %v890
  %1225 = vmatmul.mubr.bf16.gmra.mrb[0].mxu0 %v889
  %v1226 = vpop.f32.mrb[0].mxu0
  %v1227 = vadd.f32 %v945, %v1226
  %v1228 = vpop.f32.mrb[0].mxu0
  %v1229 = vpop.f32.mrb[0].mxu0
  %v1230 = vadd.f32 %v945, %v1229
  %v1231 = vpop.f32.mrb[0].mxu0
  %1232 = vmatprep.mubr.bf16.mxu0 %v893
  %1233 = vmatmul.mubr.bf16.gmra.mrb[0].mxu0 %v892
  %v1234 = vpop.f32.mrb[0].mxu0
  %v1235 = vadd.f32 %v945, %v1234
  %v1236 = vpop.f32.mrb[0].mxu0
  %v1237 = vpop.f32.mrb[0].mxu0
  %v1238 = vadd.f32 %v945, %v1237
  %v1239 = vpop.f32.mrb[0].mxu0
  %1240 = vmatprep.mubr.bf16.mxu0 %v896
  %1241 = vmatmul.mubr.bf16.gmra.mrb[0].mxu0 %v895
  %v1242 = vpop.f32.mrb[0].mxu0
  %v1243 = vadd.f32 %v945, %v1242
  %v1244 = vpop.f32.mrb[0].mxu0
  %v1245 = vpop.f32.mrb[0].mxu0
  %v1246 = vadd.f32 %v945, %v1245
  %v1247 = vpop.f32.mrb[0].mxu0
  %1248 = vmatprep.mubr.bf16.mxu0 %v899
  %1249 = vmatmul.mubr.bf16.gmra.mrb[0].mxu0 %v898
  %v1250 = vpop.f32.mrb[0].mxu0
  %v1251 = vadd.f32 %v945, %v1250
  %v1252 = vpop.f32.mrb[0].mxu0
  %v1253 = vpop.f32.mrb[0].mxu0
  %v1254 = vadd.f32 %v945, %v1253
  %v1255 = vpop.f32.mrb[0].mxu0
  %1256 = vmatprep.mubr.bf16.mxu0 %v902
  %1257 = vmatmul.mubr.bf16.gmra.mrb[0].mxu0 %v901
  %v1258 = vpop.f32.mrb[0].mxu0
  %v1259 = vadd.f32 %v945, %v1258
  %v1260 = vpop.f32.mrb[0].mxu0
  %v1261 = vpop.f32.mrb[0].mxu0
  %v1262 = vadd.f32 %v945, %v1261
  %v1263 = vpop.f32.mrb[0].mxu0
  %1264 = vdwg.mxu0
  %1265 = vmatprep.subr.bf16.mxu0 0
  %1266 = vmatpush1.bf16.msra.mxu0 %v1035
  %1267 = vmatprep.subr.bf16.mxu0 0
  %1268 = vmatpush1.bf16.msra.mxu0 %v1036
  %1269 = vmatprep.subr.bf16.mxu0 0
  %1270 = vmatpush1.bf16.msra.mxu0 0
  %1271 = vmatprep.subr.bf16.mxu0 0
  %1272 = vmatpush1.bf16.msra.mxu0 0
  %1273 = vmatprep.subr.bf16.mxu0 0
  %1274 = vmatpush1.bf16.msra.mxu0 0
  %1275 = vmatprep.subr.bf16.mxu0 0
  %1276 = vmatpush1.bf16.msra.mxu0 0
  %1277 = vmatprep.subr.bf16.mxu0 0
  %1278 = vmatpush1.bf16.msra.mxu0 0
  %1279 = vmatprep.subr.bf16.mxu0 0
  %1280 = vmatpush1.bf16.msra.mxu0 0
  %1281 = vmatprep.subr.bf16.mxu0 0
  %1282 = vmatpush1.bf16.msra.mxu0 0
  %1283 = vmatprep.subr.bf16.mxu0 0
  %1284 = vmatpush1.bf16.msra.mxu0 0
  %1285 = vmatprep.subr.bf16.mxu0 0
  %1286 = vmatpush1.bf16.msra.mxu0 0
  %1287 = vmatprep.subr.bf16.mxu0 0
  %1288 = vmatpush1.bf16.msra.mxu0 0
  %1289 = vmatprep.subr.bf16.mxu0 0
  %1290 = vmatpush1.bf16.msra.mxu0 0
  %1291 = vmatprep.subr.bf16.mxu0 0
  %1292 = vmatpush1.bf16.msra.mxu0 0
  %1293 = vmatprep.subr.bf16.mxu0 0
  %1294 = vmatpush1.bf16.msra.mxu0 0
  %1295 = vmatprep.subr.bf16.mxu0 0
  %1296 = vmatpush1.bf16.msra.mxu0 0
  %1297 = vmatprep.mubr.bf16.mxu0 0
  %1298 = vmatmul.mubr.bf16.gmra.mrb[0].mxu0 %v1057
  %v1299 = vpop.f32.mrb[0].mxu0
  %v1300 = vadd.f32 %v1139, %v1299
  %v1301 = vpop.f32.mrb[0].mxu0
  %v1302 = vpop.f32.mrb[0].mxu0
  %v1303 = vadd.f32 %v1142, %v1302
  %v1304 = vpop.f32.mrb[0].mxu0
  %1305 = vmatprep.mubr.bf16.mxu0 0
  %1306 = vmatmul.mubr.bf16.gmra.mrb[0].mxu0 %v1060
  %v1307 = vpop.f32.mrb[0].mxu0
  %v1308 = vadd.f32 %v1147, %v1307
  %v1309 = vpop.f32.mrb[0].mxu0
  %v1310 = vpop.f32.mrb[0].mxu0
  %v1311 = vadd.f32 %v1150, %v1310
  %v1312 = vpop.f32.mrb[0].mxu0
  %1313 = vmatprep.mubr.bf16.mxu0 0
  %1314 = vmatmul.mubr.bf16.gmra.mrb[0].mxu0 %v1063
  %v1315 = vpop.f32.mrb[0].mxu0
  %v1316 = vadd.f32 %v1155, %v1315
  %v1317 = vpop.f32.mrb[0].mxu0
  %v1318 = vpop.f32.mrb[0].mxu0
  %v1319 = vadd.f32 %v1158, %v1318
  %v1320 = vpop.f32.mrb[0].mxu0
  %1321 = vmatprep.mubr.bf16.mxu0 0
  %1322 = vmatmul.mubr.bf16.gmra.mrb[0].mxu0 %v1066
  %v1323 = vpop.f32.mrb[0].mxu0
  %v1324 = vadd.f32 %v1163, %v1323
  %v1325 = vpop.f32.mrb[0].mxu0
  %v1326 = vpop.f32.mrb[0].mxu0
  %v1327 = vadd.f32 %v1166, %v1326
  %v1328 = vpop.f32.mrb[0].mxu0
  %1329 = vmatprep.mubr.bf16.mxu0 0
  %1330 = vmatmul.mubr.bf16.gmra.mrb[0].mxu0 %v1069
  %v1331 = vpop.f32.mrb[0].mxu0
  %v1332 = vadd.f32 %v1171, %v1331
  %v1333 = vpop.f32.mrb[0].mxu0
  %v1334 = vpop.f32.mrb[0].mxu0
  %v1335 = vadd.f32 %v1174, %v1334
  %v1336 = vpop.f32.mrb[0].mxu0
  %1337 = vmatprep.mubr.bf16.mxu0 0
  %1338 = vmatmul.mubr.bf16.gmra.mrb[0].mxu0 %v1072
  %v1339 = vpop.f32.mrb[0].mxu0
  %v1340 = vadd.f32 %v1179, %v1339
  %v1341 = vpop.f32.mrb[0].mxu0
  %v1342 = vpop.f32.mrb[0].mxu0
  %v1343 = vadd.f32 %v1182, %v1342
  %v1344 = vpop.f32.mrb[0].mxu0
  %1345 = vmatprep.mubr.bf16.mxu0 0
  %1346 = vmatmul.mubr.bf16.gmra.mrb[0].mxu0 %v1075
  %v1347 = vpop.f32.mrb[0].mxu0
  %v1348 = vadd.f32 %v1187, %v1347
  %v1349 = vpop.f32.mrb[0].mxu0
  %v1350 = vpop.f32.mrb[0].mxu0
  %v1351 = vadd.f32 %v1190, %v1350
  %v1352 = vpop.f32.mrb[0].mxu0
  %1353 = vmatprep.mubr.bf16.mxu0 0
  %1354 = vmatmul.mubr.bf16.gmra.mrb[0].mxu0 %v1078
  %v1355 = vpop.f32.mrb[0].mxu0
  %v1356 = vadd.f32 %v1195, %v1355
  %v1357 = vpop.f32.mrb[0].mxu0
  %v1358 = vpop.f32.mrb[0].mxu0
  %v1359 = vadd.f32 %v1198, %v1358
  %v1360 = vpop.f32.mrb[0].mxu0
  %1361 = vmatprep.mubr.bf16.mxu0 0
  %1362 = vmatmul.mubr.bf16.gmra.mrb[0].mxu0 %v1081
  %v1363 = vpop.f32.mrb[0].mxu0
  %v1364 = vadd.f32 %v1203, %v1363
  %v1365 = vpop.f32.mrb[0].mxu0
  %v1366 = vpop.f32.mrb[0].mxu0
  %v1367 = vadd.f32 %v1206, %v1366
  %v1368 = vpop.f32.mrb[0].mxu0
  %1369 = vmatprep.mubr.bf16.mxu0 0
  %1370 = vmatmul.mubr.bf16.gmra.mrb[0].mxu0 %v1084
  %v1371 = vpop.f32.mrb[0].mxu0
  %v1372 = vadd.f32 %v1211, %v1371
  %v1373 = vpop.f32.mrb[0].mxu0
  %v1374 = vpop.f32.mrb[0].mxu0
  %v1375 = vadd.f32 %v1214, %v1374
  %v1376 = vpop.f32.mrb[0].mxu0
  %1377 = vmatprep.mubr.bf16.mxu0 0
  %1378 = vmatmul.mubr.bf16.gmra.mrb[0].mxu0 %v1087
  %v1379 = vpop.f32.mrb[0].mxu0
  %v1380 = vadd.f32 %v1219, %v1379
  %v1381 = vpop.f32.mrb[0].mxu0
  %v1382 = vpop.f32.mrb[0].mxu0
  %v1383 = vadd.f32 %v1222, %v1382
  %v1384 = vpop.f32.mrb[0].mxu0
  %1385 = vmatprep.mubr.bf16.mxu0 0
  %1386 = vmatmul.mubr.bf16.gmra.mrb[0].mxu0 %v1090
  %v1387 = vpop.f32.mrb[0].mxu0
  %v1388 = vadd.f32 %v1227, %v1387
  %v1389 = vpop.f32.mrb[0].mxu0
  %v1390 = vpop.f32.mrb[0].mxu0
  %v1391 = vadd.f32 %v1230, %v1390
  %v1392 = vpop.f32.mrb[0].mxu0
  %1393 = vmatprep.mubr.bf16.mxu0 0
  %1394 = vmatmul.mubr.bf16.gmra.mrb[0].mxu0 %v1093
  %v1395 = vpop.f32.mrb[0].mxu0
  %v1396 = vadd.f32 %v1235, %v1395
  %v1397 = vpop.f32.mrb[0].mxu0
  %v1398 = vpop.f32.mrb[0].mxu0
  %v1399 = vadd.f32 %v1238, %v1398
  %v1400 = vpop.f32.mrb[0].mxu0
  %1401 = vmatprep.mubr.bf16.mxu0 0
  %1402 = vmatmul.mubr.bf16.gmra.mrb[0].mxu0 %v1096
  %v1403 = vpop.f32.mrb[0].mxu0
  %v1404 = vadd.f32 %v1243, %v1403
  %v1405 = vpop.f32.mrb[0].mxu0
  %v1406 = vpop.f32.mrb[0].mxu0
  %v1407 = vadd.f32 %v1246, %v1406
  %v1408 = vpop.f32.mrb[0].mxu0
  %1409 = vmatprep.mubr.bf16.mxu0 0
  %1410 = vmatmul.mubr.bf16.gmra.mrb[0].mxu0 %v1099
  %v1411 = vpop.f32.mrb[0].mxu0
  %v1412 = vadd.f32 %v1251, %v1411
  %v1413 = vpop.f32.mrb[0].mxu0
  %v1414 = vpop.f32.mrb[0].mxu0
  %v1415 = vadd.f32 %v1254, %v1414
  %v1416 = vpop.f32.mrb[0].mxu0
  %1417 = vmatprep.mubr.bf16.mxu0 0
  %1418 = vmatmul.mubr.bf16.gmra.mrb[0].mxu0 %v1102
  %v1419 = vpop.f32.mrb[0].mxu0
  %v1420 = vadd.f32 %v1259, %v1419
  %v1421 = vpop.f32.mrb[0].mxu0
  %v1422 = vpop.f32.mrb[0].mxu0
  %v1423 = vadd.f32 %v1262, %v1422
  %v1424 = vpop.f32.mrb[0].mxu0
  %1425 = vdwg.mxu0
  %v1426 = vmax.f32 %v1300, 0.0
  %v1427 = vmax.f32 %v1303, 0.0
  %v1428 = vmax.f32 %v1308, 0.0
  %v1429 = vmax.f32 %v1311, 0.0
  %v1430 = vmax.f32 %v1316, 0.0
  %v1431 = vmax.f32 %v1319, 0.0
  %v1432 = vmax.f32 %v1324, 0.0
  %v1433 = vmax.f32 %v1327, 0.0
  %v1434 = vmax.f32 %v1332, 0.0
  %v1435 = vmax.f32 %v1335, 0.0
  %v1436 = vmax.f32 %v1340, 0.0
  %v1437 = vmax.f32 %v1343, 0.0
  %v1438 = vmax.f32 %v1348, 0.0
  %v1439 = vmax.f32 %v1351, 0.0
  %v1440 = vmax.f32 %v1356, 0.0
  %v1441 = vmax.f32 %v1359, 0.0
  %v1442 = vmax.f32 %v1364, 0.0
  %v1443 = vmax.f32 %v1367, 0.0
  %v1444 = vmax.f32 %v1372, 0.0
  %v1445 = vmax.f32 %v1375, 0.0
  %v1446 = vmax.f32 %v1380, 0.0
  %v1447 = vmax.f32 %v1383, 0.0
  %v1448 = vmax.f32 %v1388, 0.0
  %v1449 = vmax.f32 %v1391, 0.0
  %v1450 = vmax.f32 %v1396, 0.0
  %v1451 = vmax.f32 %v1399, 0.0
  %v1452 = vmax.f32 %v1404, 0.0
  %v1453 = vmax.f32 %v1407, 0.0
  %v1454 = vmax.f32 %v1412, 0.0
  %v1455 = vmax.f32 %v1415, 0.0
  %v1456 = vmax.f32 %v1420, 0.0
  %v1457 = vmax.f32 %v1423, 0.0
  %v1458 = vpack.c.bf16 %v1427, %v1426
  %1459 = vst.msk [vmem:[#allocation2] sm:$0xff] %vm1055, %v1458
  %v1460 = vpack.c.bf16 %v1429, %v1428
  %1462 = vrot.lane.b32.xlu0 %v1460, 32
  %v1463 = vpop.permute.xlu0 %1462
  %vm1465 = vcmask 523520
  %1466 = vst.msk [vmem:[#allocation2] sm:$0xff] %vm1465, %v1463
  %v1467 = vpack.c.bf16 %v1431, %v1430
  %1469 = vrot.lane.b32.xlu0 %v1467, 64
  %v1470 = vpop.permute.xlu0 %1469
  %vm1472 = vcmask 785920
  %1473 = vst.msk [vmem:[#allocation2] sm:$0xff] %vm1472, %v1470
  %v1474 = vpack.c.bf16 %v1433, %v1432
  %1476 = vrot.lane.b32.xlu0 %v1474, 96
  %v1477 = vpop.permute.xlu0 %1476
  %vm1479 = vcmask 1048320
  %1480 = vst.msk [vmem:[#allocation2] sm:$0xff] %vm1479, %v1477
  %v1481 = vpack.c.bf16 %v1435, %v1434
  %1482 = vst.msk [vmem:[#allocation2 + $0x8] sm:$0xff] %vm1055, %v1481
  %v1483 = vpack.c.bf16 %v1437, %v1436
  %1485 = vrot.lane.b32.xlu0 %v1483, 32
  %v1486 = vpop.permute.xlu0 %1485
  %1488 = vst.msk [vmem:[#allocation2 + $0x8] sm:$0xff] %vm1465, %v1486
  %v1489 = vpack.c.bf16 %v1439, %v1438
  %1491 = vrot.lane.b32.xlu0 %v1489, 64
  %v1492 = vpop.permute.xlu0 %1491
  %1494 = vst.msk [vmem:[#allocation2 + $0x8] sm:$0xff] %vm1472, %v1492
  %v1495 = vpack.c.bf16 %v1441, %v1440
  %1497 = vrot.lane.b32.xlu0 %v1495, 96
  %v1498 = vpop.permute.xlu0 %1497
  %1500 = vst.msk [vmem:[#allocation2 + $0x8] sm:$0xff] %vm1479, %v1498
  %v1501 = vpack.c.bf16 %v1443, %v1442
  %1502 = vst.msk [vmem:[#allocation2 + $0x10] sm:$0xff] %vm1055, %v1501
  %v1503 = vpack.c.bf16 %v1445, %v1444
  %1505 = vrot.lane.b32.xlu0 %v1503, 32
  %v1506 = vpop.permute.xlu0 %1505
  %1508 = vst.msk [vmem:[#allocation2 + $0x10] sm:$0xff] %vm1465, %v1506
  %v1509 = vpack.c.bf16 %v1447, %v1446
  %1511 = vrot.lane.b32.xlu0 %v1509, 64
  %v1512 = vpop.permute.xlu0 %1511
  %1514 = vst.msk [vmem:[#allocation2 + $0x10] sm:$0xff] %vm1472, %v1512
  %v1515 = vpack.c.bf16 %v1449, %v1448
  %1517 = vrot.lane.b32.xlu0 %v1515, 96
  %v1518 = vpop.permute.xlu0 %1517
  %1520 = vst.msk [vmem:[#allocation2 + $0x10] sm:$0xff] %vm1479, %v1518
  %v1521 = vpack.c.bf16 %v1451, %v1450
  %1522 = vst.msk [vmem:[#allocation2 + $0x18] sm:$0xff] %vm1055, %v1521
  %v1523 = vpack.c.bf16 %v1453, %v1452
  %1525 = vrot.lane.b32.xlu0 %v1523, 32
  %v1526 = vpop.permute.xlu0 %1525
  %1528 = vst.msk [vmem:[#allocation2 + $0x18] sm:$0xff] %vm1465, %v1526
  %v1529 = vpack.c.bf16 %v1455, %v1454
  %1531 = vrot.lane.b32.xlu0 %v1529, 64
  %v1532 = vpop.permute.xlu0 %1531
  %1534 = vst.msk [vmem:[#allocation2 + $0x18] sm:$0xff] %vm1472, %v1532
  %v1535 = vpack.c.bf16 %v1457, %v1456
  %1537 = vrot.lane.b32.xlu0 %v1535, 96
  %v1538 = vpop.permute.xlu0 %1537
  %1540 = vst.msk [vmem:[#allocation2 + $0x18] sm:$0xff] %vm1479, %v1538
  %v1541 = vld [vmem:[#allocation2] sm:$0xff]
  %v1542 = vld [vmem:[#allocation2 + $0x8] sm:$0xff]
  %v1543 = vld [vmem:[#allocation2 + $0x10] sm:$0xff]
  %v1544 = vld [vmem:[#allocation2 + $0x18] sm:$0xff]
  %v1545 = vld [vmem:[%s5] sm:$0xf]
  %v1546 = vld [vmem:[%s5 + $0x4] sm:$0xf]
  %v1547 = vld [vmem:[%s5 + $0x8] sm:$0xf]
  %v1548 = vld [vmem:[%s5 + $0xc] sm:$0xf]
  %v1549 = vld [vmem:[%s5 + $0x10] sm:$0xf]
  %v1550 = vld [vmem:[%s5 + $0x14] sm:$0xf]
  %v1551 = vld [vmem:[%s5 + $0x18] sm:$0xf]
  %v1552 = vld [vmem:[%s5 + $0x1c] sm:$0xf]
  %v1553 = vld [vmem:[%s5 + $0x20] sm:$0xf]
  %v1554 = vld [vmem:[%s5 + $0x24] sm:$0xf]
  %v1555 = vld [vmem:[%s5 + $0x28] sm:$0xf]
  %v1556 = vld [vmem:[%s5 + $0x2c] sm:$0xf]
  %v1557 = vld [vmem:[%s5 + $0x30] sm:$0xf]
  %v1558 = vld [vmem:[%s5 + $0x34] sm:$0xf]
  %v1559 = vld [vmem:[%s5 + $0x38] sm:$0xf]
  %v1560 = vld [vmem:[%s5 + $0x3c] sm:$0xf]
  %v1561 = vld [vmem:[%s5 + $0x40] sm:$0xf]
  %v1562 = vld [vmem:[%s5 + $0x44] sm:$0xf]
  %v1563 = vld [vmem:[%s5 + $0x48] sm:$0xf]
  %v1564 = vld [vmem:[%s5 + $0x4c] sm:$0xf]
  %v1565 = vld [vmem:[%s5 + $0x50] sm:$0xf]
  %v1566 = vld [vmem:[%s5 + $0x54] sm:$0xf]
  %v1567 = vld [vmem:[%s5 + $0x58] sm:$0xf]
  %v1568 = vld [vmem:[%s5 + $0x5c] sm:$0xf]
  %v1569 = vld [vmem:[%s5 + $0x60] sm:$0xf]
  %v1570 = vld [vmem:[%s5 + $0x64] sm:$0xf]
  %v1571 = vld [vmem:[%s5 + $0x68] sm:$0xf]
  %v1572 = vld [vmem:[%s5 + $0x6c] sm:$0xf]
  %v1573 = vld [vmem:[%s5 + $0x70] sm:$0xf]
  %v1574 = vld [vmem:[%s5 + $0x74] sm:$0xf]
  %v1575 = vld [vmem:[%s5 + $0x78] sm:$0xf]
  %v1576 = vld [vmem:[%s5 + $0x7c] sm:$0xf]
  %v1577 = vld [vmem:[%s5 + $0x80] sm:$0xf]
  %v1578 = vld [vmem:[%s5 + $0x84] sm:$0xf]
  %v1579 = vld [vmem:[%s5 + $0x88] sm:$0xf]
  %v1580 = vld [vmem:[%s5 + $0x8c] sm:$0xf]
  %v1581 = vld [vmem:[%s5 + $0x90] sm:$0xf]
  %v1582 = vld [vmem:[%s5 + $0x94] sm:$0xf]
  %v1583 = vld [vmem:[%s5 + $0x98] sm:$0xf]
  %v1584 = vld [vmem:[%s5 + $0x9c] sm:$0xf]
  %v1585 = vld [vmem:[%s5 + $0xa0] sm:$0xf]
  %v1586 = vld [vmem:[%s5 + $0xa4] sm:$0xf]
  %v1587 = vld [vmem:[%s5 + $0xa8] sm:$0xf]
  %v1588 = vld [vmem:[%s5 + $0xac] sm:$0xf]
  %v1589 = vld [vmem:[%s5 + $0xb0] sm:$0xf]
  %v1590 = vld [vmem:[%s5 + $0xb4] sm:$0xf]
  %v1591 = vld [vmem:[%s5 + $0xb8] sm:$0xf]
  %v1592 = vld [vmem:[%s5 + $0xbc] sm:$0xf]
  %v1593 = vld [vmem:[%s5 + $0xc0] sm:$0xf]
  %v1594 = vld [vmem:[%s5 + $0xc4] sm:$0xf]
  %v1595 = vld [vmem:[%s5 + $0xc8] sm:$0xf]
  %v1596 = vld [vmem:[%s5 + $0xcc] sm:$0xf]
  %v1597 = vld [vmem:[%s5 + $0xd0] sm:$0xf]
  %v1598 = vld [vmem:[%s5 + $0xd4] sm:$0xf]
  %v1599 = vld [vmem:[%s5 + $0xd8] sm:$0xf]
  %v1600 = vld [vmem:[%s5 + $0xdc] sm:$0xf]
  %v1601 = vld [vmem:[%s5 + $0xe0] sm:$0xf]
  %v1602 = vld [vmem:[%s5 + $0xe4] sm:$0xf]
  %v1603 = vld [vmem:[%s5 + $0xe8] sm:$0xf]
  %v1604 = vld [vmem:[%s5 + $0xec] sm:$0xf]
  %v1605 = vld [vmem:[%s5 + $0xf0] sm:$0xf]
  %v1606 = vld [vmem:[%s5 + $0xf4] sm:$0xf]
  %v1607 = vld [vmem:[%s5 + $0xf8] sm:$0xf]
  %v1608 = vld [vmem:[%s5 + $0xfc] sm:$0xf]
  %v1609 = vld [vmem:[%s6] sm:$0x1]
  %v1611 = vlaneseq
  %v1612 = vshrl.u32 %v1611, 7
  %v1613 = vsub.s32 0, %v1612
  %v1614 = vrot.slane %v1609, %v1613
  %v1680 = vunpack.c.l.b16 %v1545
  %v1681 = vunpack.c.l.b16 %v1546
  %v1682 = vunpack.c.l.b16 %v1547
  %v1683 = vunpack.c.l.b16 %v1548
  %v1684 = vunpack.c.l.b16 %v1549
  %v1685 = vunpack.c.l.b16 %v1550
  %v1686 = vunpack.c.l.b16 %v1551
  %v1687 = vunpack.c.l.b16 %v1552
  %v1688 = vunpack.c.l.b16 %v1553
  %v1689 = vunpack.c.l.b16 %v1554
  %v1690 = vunpack.c.l.b16 %v1555
  %v1691 = vunpack.c.l.b16 %v1556
  %v1692 = vunpack.c.l.b16 %v1557
  %v1693 = vunpack.c.l.b16 %v1558
  %v1694 = vunpack.c.l.b16 %v1559
  %v1695 = vunpack.c.l.b16 %v1560
  %v1696 = vunpack.c.l.b16 %v1561
  %v1697 = vunpack.c.l.b16 %v1562
  %v1698 = vunpack.c.l.b16 %v1563
  %v1699 = vunpack.c.l.b16 %v1564
  %v1700 = vunpack.c.l.b16 %v1565
  %v1701 = vunpack.c.l.b16 %v1566
  %v1702 = vunpack.c.l.b16 %v1567
  %v1703 = vunpack.c.l.b16 %v1568
  %v1704 = vunpack.c.l.b16 %v1569
  %v1705 = vunpack.c.l.b16 %v1570
  %v1706 = vunpack.c.l.b16 %v1571
  %v1707 = vunpack.c.l.b16 %v1572
  %v1708 = vunpack.c.l.b16 %v1573
  %v1709 = vunpack.c.l.b16 %v1574
  %v1710 = vunpack.c.l.b16 %v1575
  %v1711 = vunpack.c.l.b16 %v1576
  %v1712 = vunpack.c.l.b16 %v1577
  %v1713 = vunpack.c.l.b16 %v1578
  %v1714 = vunpack.c.l.b16 %v1579
  %v1715 = vunpack.c.l.b16 %v1580
  %v1716 = vunpack.c.l.b16 %v1581
  %v1717 = vunpack.c.l.b16 %v1582
  %v1718 = vunpack.c.l.b16 %v1583
  %v1719 = vunpack.c.l.b16 %v1584
  %v1720 = vunpack.c.l.b16 %v1585
  %v1721 = vunpack.c.l.b16 %v1586
  %v1722 = vunpack.c.l.b16 %v1587
  %v1723 = vunpack.c.l.b16 %v1588
  %v1724 = vunpack.c.l.b16 %v1589
  %v1725 = vunpack.c.l.b16 %v1590
  %v1726 = vunpack.c.l.b16 %v1591
  %v1727 = vunpack.c.l.b16 %v1592
  %v1728 = vunpack.c.l.b16 %v1593
  %v1729 = vunpack.c.l.b16 %v1594
  %v1730 = vunpack.c.l.b16 %v1595
  %v1731 = vunpack.c.l.b16 %v1596
  %v1732 = vunpack.c.l.b16 %v1597
  %v1733 = vunpack.c.l.b16 %v1598
  %v1734 = vunpack.c.l.b16 %v1599
  %v1735 = vunpack.c.l.b16 %v1600
  %v1736 = vunpack.c.l.b16 %v1601
  %v1737 = vunpack.c.l.b16 %v1602
  %v1738 = vunpack.c.l.b16 %v1603
  %v1739 = vunpack.c.l.b16 %v1604
  %v1740 = vunpack.c.l.b16 %v1605
  %v1741 = vunpack.c.l.b16 %v1606
  %v1742 = vunpack.c.l.b16 %v1607
  %v1743 = vunpack.c.l.b16 %v1608
  %v1744 = vpack.c.b16 %v1681, %v1680
  %v1745 = vpack.c.b16 %v1683, %v1682
  %v1746 = vpack.c.b16 %v1685, %v1684
  %v1747 = vpack.c.b16 %v1687, %v1686
  %v1748 = vpack.c.b16 %v1689, %v1688
  %v1749 = vpack.c.b16 %v1691, %v1690
  %v1750 = vpack.c.b16 %v1693, %v1692
  %v1751 = vpack.c.b16 %v1695, %v1694
  %v1752 = vpack.c.b16 %v1697, %v1696
  %v1753 = vpack.c.b16 %v1699, %v1698
  %v1754 = vpack.c.b16 %v1701, %v1700
  %v1755 = vpack.c.b16 %v1703, %v1702
  %v1756 = vpack.c.b16 %v1705, %v1704
  %v1757 = vpack.c.b16 %v1707, %v1706
  %v1758 = vpack.c.b16 %v1709, %v1708
  %v1759 = vpack.c.b16 %v1711, %v1710
  %v1760 = vpack.c.b16 %v1713, %v1712
  %v1761 = vpack.c.b16 %v1715, %v1714
  %v1762 = vpack.c.b16 %v1717, %v1716
  %v1763 = vpack.c.b16 %v1719, %v1718
  %v1764 = vpack.c.b16 %v1721, %v1720
  %v1765 = vpack.c.b16 %v1723, %v1722
  %v1766 = vpack.c.b16 %v1725, %v1724
  %v1767 = vpack.c.b16 %v1727, %v1726
  %v1768 = vpack.c.b16 %v1729, %v1728
  %v1769 = vpack.c.b16 %v1731, %v1730
  %v1770 = vpack.c.b16 %v1733, %v1732
  %v1771 = vpack.c.b16 %v1735, %v1734
  %v1772 = vpack.c.b16 %v1737, %v1736
  %v1773 = vpack.c.b16 %v1739, %v1738
  %v1774 = vpack.c.b16 %v1741, %v1740
  %v1775 = vpack.c.b16 %v1743, %v1742
  %1808 = vmatprep.subr.bf16.mxu0 0
  %1809 = vmatpush1.bf16.msra.mxu0 %v1744
  %1810 = vmatprep.subr.bf16.mxu0 0
  %1811 = vmatpush1.bf16.msra.mxu0 %v1745
  %1812 = vmatprep.subr.bf16.mxu0 0
  %1813 = vmatpush1.bf16.msra.mxu0 %v1746
  %1814 = vmatprep.subr.bf16.mxu0 0
  %1815 = vmatpush1.bf16.msra.mxu0 %v1747
  %1816 = vmatprep.subr.bf16.mxu0 0
  %1817 = vmatpush1.bf16.msra.mxu0 %v1748
  %1818 = vmatprep.subr.bf16.mxu0 0
  %1819 = vmatpush1.bf16.msra.mxu0 %v1749
  %1820 = vmatprep.subr.bf16.mxu0 0
  %1821 = vmatpush1.bf16.msra.mxu0 %v1750
  %1822 = vmatprep.subr.bf16.mxu0 0
  %1823 = vmatpush1.bf16.msra.mxu0 %v1751
  %1824 = vmatprep.subr.bf16.mxu0 0
  %1825 = vmatpush1.bf16.msra.mxu0 %v1752
  %1826 = vmatprep.subr.bf16.mxu0 0
  %1827 = vmatpush1.bf16.msra.mxu0 %v1753
  %1828 = vmatprep.subr.bf16.mxu0 0
  %1829 = vmatpush1.bf16.msra.mxu0 %v1754
  %1830 = vmatprep.subr.bf16.mxu0 0
  %1831 = vmatpush1.bf16.msra.mxu0 %v1755
  %1832 = vmatprep.subr.bf16.mxu0 0
  %1833 = vmatpush1.bf16.msra.mxu0 %v1756
  %1834 = vmatprep.subr.bf16.mxu0 0
  %1835 = vmatpush1.bf16.msra.mxu0 %v1757
  %1836 = vmatprep.subr.bf16.mxu0 0
  %1837 = vmatpush1.bf16.msra.mxu0 %v1758
  %1838 = vmatprep.subr.bf16.mxu0 0
  %1839 = vmatpush1.bf16.msra.mxu0 %v1759
  %1840 = vmatprep.mubr.bf16.mxu0 %v1542
  %1841 = vmatmul.mubr.bf16.gmra.mrb[0].mxu0 %v1541
  %v1842 = vpop.f32.mrb[0].mxu0
  %v1843 = vadd.f32 %v1614, %v1842
  %v1844 = vpop.f32.mrb[0].mxu0
  %v1845 = vpop.f32.mrb[0].mxu0
  %v1846 = vadd.f32 %v1614, %v1845
  %v1847 = vpop.f32.mrb[0].mxu0
  %1848 = vdwg.mxu0
  %1849 = vmatprep.subr.bf16.mxu0 0
  %1850 = vmatpush1.bf16.msra.mxu0 %v1760
  %1851 = vmatprep.subr.bf16.mxu0 0
  %1852 = vmatpush1.bf16.msra.mxu0 %v1761
  %1853 = vmatprep.subr.bf16.mxu0 0
  %1854 = vmatpush1.bf16.msra.mxu0 %v1762
  %1855 = vmatprep.subr.bf16.mxu0 0
  %1856 = vmatpush1.bf16.msra.mxu0 %v1763
  %1857 = vmatprep.subr.bf16.mxu0 0
  %1858 = vmatpush1.bf16.msra.mxu0 %v1764
  %1859 = vmatprep.subr.bf16.mxu0 0
  %1860 = vmatpush1.bf16.msra.mxu0 %v1765
  %1861 = vmatprep.subr.bf16.mxu0 0
  %1862 = vmatpush1.bf16.msra.mxu0 %v1766
  %1863 = vmatprep.subr.bf16.mxu0 0
  %1864 = vmatpush1.bf16.msra.mxu0 %v1767
  %1865 = vmatprep.subr.bf16.mxu0 0
  %1866 = vmatpush1.bf16.msra.mxu0 %v1768
  %1867 = vmatprep.subr.bf16.mxu0 0
  %1868 = vmatpush1.bf16.msra.mxu0 %v1769
  %1869 = vmatprep.subr.bf16.mxu0 0
  %1870 = vmatpush1.bf16.msra.mxu0 %v1770
  %1871 = vmatprep.subr.bf16.mxu0 0
  %1872 = vmatpush1.bf16.msra.mxu0 %v1771
  %1873 = vmatprep.subr.bf16.mxu0 0
  %1874 = vmatpush1.bf16.msra.mxu0 %v1772
  %1875 = vmatprep.subr.bf16.mxu0 0
  %1876 = vmatpush1.bf16.msra.mxu0 %v1773
  %1877 = vmatprep.subr.bf16.mxu0 0
  %1878 = vmatpush1.bf16.msra.mxu0 %v1774
  %1879 = vmatprep.subr.bf16.mxu0 0
  %1880 = vmatpush1.bf16.msra.mxu0 %v1775
  %1881 = vmatprep.mubr.bf16.mxu0 %v1544
  %1882 = vmatmul.mubr.bf16.gmra.mrb[0].mxu0 %v1543
  %v1883 = vpop.f32.mrb[0].mxu0
  %v1884 = vadd.f32 %v1843, %v1883
  %v1885 = vpop.f32.mrb[0].mxu0
  %v1886 = vpop.f32.mrb[0].mxu0
  %v1887 = vadd.f32 %v1846, %v1886
  %v1888 = vpop.f32.mrb[0].mxu0
  %1889 = vdwg.mxu0
  %vm1890 = vcmask 523264
  %1891 = vst.msk [vmem:[%s7] sm:$0xff] %vm1890, %v1884
  %1892 = vst.msk [vmem:[%s7 + $0x8] sm:$0xff] %vm1890, %v1887
  // Predicated region
  $region30: #{mnist_trans_forward.2} parent=0 // pred_check
    _
  $region31: #{mnist_trans_forward.2} parent=0 // pred_check_branch
    %1894 = sbr.rel (0) target = $region33
  $region32: #{mnist_trans_forward.2} parent=0 // pred_region
    _
  $region33: #{mnist_trans_forward.2} parent=0 // pred_fallthru
    _
  // Predicated region
  $region34: #{mnist_trans_forward.2} parent=0 // pred_check
    _
  $region35: #{mnist_trans_forward.2} parent=0 // pred_check_branch
    %1896 = sbr.rel (0) target = $region37
  $region36: #{mnist_trans_forward.2} parent=0 // pred_region
    _
  $region37: #{mnist_trans_forward.2} parent=0 // pred_fallthru
    _

// kernel: mnist_trans_forward.3
$region0: #{mnist_trans_forward.3}
  #allocation0 [shape = 'u32[]', space=smem, size = 0x4, offset = 0x4, fixed_abs, tag = 'smem constant byte address 0x4 - core index']
  #allocation1 [shape = 'u32[144,128]{1,0:T(1,128)}', space=vmem, size = 0x12000, scoped, tag = 'internal scratch']
  #allocation2 [shape = 'f32[16,64]{1,0:T(8,128)}', space=vmem, size = 0x2000, scoped, tag = 'scratch operand']
  #allocation3 [shape = 'f32[1,1]{1,0:T(1,128)S(1)}', space=vmem, size = 0x200, scoped, tag = 'scoped memory for mnist_trans_forward.3']
  %s0 = inlined_call_operand.vmem [shape: f32[16,64], index: 0, kind: input, shape index: {}]
  %s1 = inlined_call_operand.vmem [shape: f32[16,16], index: 1, kind: input, shape index: {}]
  %s2 = inlined_call_operand.vmem [shape: bf16[2,64,128], index: 2, kind: input, shape index: {}]
  %s3 = inlined_call_operand.vmem [shape: f32[2,1,128], index: 3, kind: input, shape index: {}]
  %s4 = inlined_call_operand.vmem [shape: bf16[2,64,512], index: 4, kind: input, shape index: {}]
  %s5 = inlined_call_operand.vmem [shape: f32[2,1,512], index: 5, kind: input, shape index: {}]
  %s6 = inlined_call_operand.vmem [shape: f32[2,1,64], index: 6, kind: input, shape index: {}]
  %s7 = inlined_call_operand.vmem [shape: f32[2,1,64], index: 7, kind: input, shape index: {}]
  %s8 = inlined_call_operand.vmem [shape: f32[2,1,64], index: 8, kind: input, shape index: {}]
  %s9 = inlined_call_operand.vmem [shape: bf16[2,64,2048], index: 9, kind: input, shape index: {}]
  %s10 = inlined_call_operand.vmem [shape: f32[2,1,2048], index: 10, kind: input, shape index: {}]
  %s11 = inlined_call_operand.vmem [shape: bf16[2,2048,64], index: 11, kind: input, shape index: {}]
  %s12 = inlined_call_operand.vmem [shape: f32[2,1,64], index: 12, kind: input, shape index: {}]
  %s13 = inlined_call_operand.vmem [shape: f32[2,1,64], index: 13, kind: input, shape index: {}]
  %s14 = inlined_call_operand.vmem [shape: f32[2,1,64], index: 14, kind: input, shape index: {}]
  %s15 = inlined_call_operand.vmem [shape: bf16[64,1], index: 15, kind: input, shape index: {}]
  %s16 = inlined_call_operand.<no memory space> [shape: f32[1,1], index: 16, kind: input, shape index: {}]
  %s17 = inlined_call_operand.vmem [shape: f32[16,1], index: 17, kind: output, shape index: {}]
  %s18 = sld [smem:[#allocation0]]
  $region109: #{mnist_trans_forward.3} parent=0
    _
  %s20 = ssub.s32 1, %s18
  %s21 = scalar_select 0, %s20, %s18
  %v22 = vstv %s16
  %23 = vst [vmem:[#allocation3] sm:$0x1] %v22
  loop: start=0, step=1, limit=4
  $region2: #{mnist_trans_forward.3} parent=0 // loop_pre_header
    _
  $region3: #{mnist_trans_forward.3} parent=0 // loop_header
    %s25 = sphi 0, %s29
    %p26 = scmp.ge.s32.totalorder %s25, 4
    %s33 = sphi 0, %s33
    %s35 = sphi 0, %s33
    %s36 = sphi 0, %s35
    %s50 = sphi 0, %s36
    %s54 = sphi 0, %s54
    %s56 = sphi 0, %s54
    %s57 = sphi 0, %s56
    %s71 = sphi 0, %s57
    %s77 = sphi 0, %s79
    %s80 = sphi 0, %s77
    %s81 = sphi 0, %s80
    %s97 = sphi 0, %s81
    %s103 = sphi 0, %s105
    %s106 = sphi 0, %s103
    %s107 = sphi 0, %s106
    %s123 = sphi 0, %s107
    %s129 = sphi 0, %s131
    %s132 = sphi 0, %s129
    %s133 = sphi 0, %s132
    %s149 = sphi 0, %s133
    %s155 = sphi 0, %s157
    %s158 = sphi 0, %s155
    %s159 = sphi 0, %s158
    %s175 = sphi 0, %s159
    %s181 = sphi 0, %s183
    %s184 = sphi 0, %s181
    %s185 = sphi 0, %s184
    %s201 = sphi 0, %s185
    %s207 = sphi 0, %s209
    %s210 = sphi 0, %s207
    %s211 = sphi 0, %s210
    %s227 = sphi 0, %s211
    %s233 = sphi 0, %s235
    %s236 = sphi 0, %s233
    %s237 = sphi 0, %s236
    %s253 = sphi 0, %s237
    %s259 = sphi 0, %s261
    %s262 = sphi 0, %s259
    %s263 = sphi 0, %s262
    %s279 = sphi 0, %s263
    %s285 = sphi 0, %s287
    %s288 = sphi 0, %s285
    %s289 = sphi 0, %s288
    %s305 = sphi 0, %s289
    %s311 = sphi 0, %s313
    %s314 = sphi 0, %s311
    %s315 = sphi 0, %s314
    %s331 = sphi 0, %s315
    %s337 = sphi 0, %s339
    %s340 = sphi 0, %s337
    %s341 = sphi 0, %s340
    %s357 = sphi 0, %s341
    %s363 = sphi 0, %s365
    %s366 = sphi 0, %s363
    %s367 = sphi 0, %s366
    %s383 = sphi 0, %s367
    %s389 = sphi 0, %s391
    %s392 = sphi 0, %s389
    %s393 = sphi 0, %s392
    %s409 = sphi 0, %s393
    %s413 = sphi 0, %s413
    %s415 = sphi 0, %s413
    %s416 = sphi 0, %s415
    %s430 = sphi 0, %s416
    %s434 = sphi 0, %s434
    %s436 = sphi 0, %s434
    %s437 = sphi 0, %s436
    %s451 = sphi 0, %s437
    %s455 = sphi 0, %s455
    %s457 = sphi 0, %s455
    %s458 = sphi 0, %s457
    %s472 = sphi 0, %s458
  $region4: #{mnist_trans_forward.3} parent=0 // loop_header_branch
    %28 = sbr.rel (%p26) target = $region8
  $region5: #{mnist_trans_forward.3} parent=0 // loop_body
    %s30 = ssub.s32 %s25, 1
    %s31 = ssub.s32 %s25, 2
    %s32 = sadd.s32 %s25, 1
    %s34 = sadd.s32 %s33, 1
    %p37 = scmp.eq.s32.totalorder %s25, 1
    %p38 = scmp.ne.s32.totalorder %s33, %s35
    %p39 = scmp.eq.s32.totalorder %s25, 0
    %p40 = por %p38, %p39
    %p41 = scmp.ne.s32.totalorder %s33, %s35
    %p42 = scmp.eq.s32.totalorder %s30, 1
    %p43 = por %p41, %p42
    %p44 = scmp.ne.s32.totalorder %s35, %s36
    %p45 = scmp.eq.s32.totalorder %s30, 0
    %p46 = por %p44, %p45
    %p47 = scmp.ne.s32.totalorder %s35, %s36
    %p48 = scmp.eq.s32.totalorder %s31, 1
    %p49 = por %p47, %p48
    %p51 = scmp.ne.s32.totalorder %s36, %s50
    %p52 = scmp.eq.s32.totalorder %s31, 0
    %p53 = por %p51, %p52
    %s55 = sadd.s32 %s54, 1
    %p58 = scmp.eq.s32.totalorder %s25, 1
    %p59 = scmp.ne.s32.totalorder %s54, %s56
    %p60 = scmp.eq.s32.totalorder %s25, 0
    %p61 = por %p59, %p60
    %p62 = scmp.ne.s32.totalorder %s54, %s56
    %p63 = scmp.eq.s32.totalorder %s30, 1
    %p64 = por %p62, %p63
    %p65 = scmp.ne.s32.totalorder %s56, %s57
    %p66 = scmp.eq.s32.totalorder %s30, 0
    %p67 = por %p65, %p66
    %p68 = scmp.ne.s32.totalorder %s56, %s57
    %p69 = scmp.eq.s32.totalorder %s31, 1
    %p70 = por %p68, %p69
    %p72 = scmp.ne.s32.totalorder %s57, %s71
    %p73 = scmp.eq.s32.totalorder %s31, 0
    %p74 = por %p72, %p73
    %s75 = ssub.s32 %s25, %s32
    %p76 = scmp.eq.s32.totalorder %s75, 0
    %s78 = sadd.s32 %s77, 1
    %s79 = scalar_select %p76, %s77, %s78
    %p82 = pneg %p76
    %p83 = scmp.eq.s32.totalorder %s25, 1
    %p84 = por %p82, %p83
    %p85 = scmp.ne.s32.totalorder %s77, %s80
    %p86 = scmp.eq.s32.totalorder %s25, 0
    %p87 = por %p85, %p86
    %p88 = scmp.ne.s32.totalorder %s77, %s80
    %p89 = scmp.eq.s32.totalorder %s30, 1
    %p90 = por %p88, %p89
    %p91 = scmp.ne.s32.totalorder %s80, %s81
    %p92 = scmp.eq.s32.totalorder %s30, 0
    %p93 = por %p91, %p92
    %p94 = scmp.ne.s32.totalorder %s80, %s81
    %p95 = scmp.eq.s32.totalorder %s31, 1
    %p96 = por %p94, %p95
    %p98 = scmp.ne.s32.totalorder %s81, %s97
    %p99 = scmp.eq.s32.totalorder %s31, 0
    %p100 = por %p98, %p99
    %s101 = ssub.s32 %s25, %s32
    %p102 = scmp.eq.s32.totalorder %s101, 0
    %s104 = sadd.s32 %s103, 1
    %s105 = scalar_select %p102, %s103, %s104
    %p108 = pneg %p102
    %p109 = scmp.eq.s32.totalorder %s25, 1
    %p110 = por %p108, %p109
    %p111 = scmp.ne.s32.totalorder %s103, %s106
    %p112 = scmp.eq.s32.totalorder %s25, 0
    %p113 = por %p111, %p112
    %p114 = scmp.ne.s32.totalorder %s103, %s106
    %p115 = scmp.eq.s32.totalorder %s30, 1
    %p116 = por %p114, %p115
    %p117 = scmp.ne.s32.totalorder %s106, %s107
    %p118 = scmp.eq.s32.totalorder %s30, 0
    %p119 = por %p117, %p118
    %p120 = scmp.ne.s32.totalorder %s106, %s107
    %p121 = scmp.eq.s32.totalorder %s31, 1
    %p122 = por %p120, %p121
    %p124 = scmp.ne.s32.totalorder %s107, %s123
    %p125 = scmp.eq.s32.totalorder %s31, 0
    %p126 = por %p124, %p125
    %s127 = ssub.s32 %s25, %s32
    %p128 = scmp.eq.s32.totalorder %s127, 0
    %s130 = sadd.s32 %s129, 1
    %s131 = scalar_select %p128, %s129, %s130
    %p134 = pneg %p128
    %p135 = scmp.eq.s32.totalorder %s25, 1
    %p136 = por %p134, %p135
    %p137 = scmp.ne.s32.totalorder %s129, %s132
    %p138 = scmp.eq.s32.totalorder %s25, 0
    %p139 = por %p137, %p138
    %p140 = scmp.ne.s32.totalorder %s129, %s132
    %p141 = scmp.eq.s32.totalorder %s30, 1
    %p142 = por %p140, %p141
    %p143 = scmp.ne.s32.totalorder %s132, %s133
    %p144 = scmp.eq.s32.totalorder %s30, 0
    %p145 = por %p143, %p144
    %p146 = scmp.ne.s32.totalorder %s132, %s133
    %p147 = scmp.eq.s32.totalorder %s31, 1
    %p148 = por %p146, %p147
    %p150 = scmp.ne.s32.totalorder %s133, %s149
    %p151 = scmp.eq.s32.totalorder %s31, 0
    %p152 = por %p150, %p151
    %s153 = ssub.s32 %s25, %s32
    %p154 = scmp.eq.s32.totalorder %s153, 0
    %s156 = sadd.s32 %s155, 1
    %s157 = scalar_select %p154, %s155, %s156
    %p160 = pneg %p154
    %p161 = scmp.eq.s32.totalorder %s25, 1
    %p162 = por %p160, %p161
    %p163 = scmp.ne.s32.totalorder %s155, %s158
    %p164 = scmp.eq.s32.totalorder %s25, 0
    %p165 = por %p163, %p164
    %p166 = scmp.ne.s32.totalorder %s155, %s158
    %p167 = scmp.eq.s32.totalorder %s30, 1
    %p168 = por %p166, %p167
    %p169 = scmp.ne.s32.totalorder %s158, %s159
    %p170 = scmp.eq.s32.totalorder %s30, 0
    %p171 = por %p169, %p170
    %p172 = scmp.ne.s32.totalorder %s158, %s159
    %p173 = scmp.eq.s32.totalorder %s31, 1
    %p174 = por %p172, %p173
    %p176 = scmp.ne.s32.totalorder %s159, %s175
    %p177 = scmp.eq.s32.totalorder %s31, 0
    %p178 = por %p176, %p177
    %s179 = ssub.s32 %s25, %s32
    %p180 = scmp.eq.s32.totalorder %s179, 0
    %s182 = sadd.s32 %s181, 1
    %s183 = scalar_select %p180, %s181, %s182
    %p186 = pneg %p180
    %p187 = scmp.eq.s32.totalorder %s25, 1
    %p188 = por %p186, %p187
    %p189 = scmp.ne.s32.totalorder %s181, %s184
    %p190 = scmp.eq.s32.totalorder %s25, 0
    %p191 = por %p189, %p190
    %p192 = scmp.ne.s32.totalorder %s181, %s184
    %p193 = scmp.eq.s32.totalorder %s30, 1
    %p194 = por %p192, %p193
    %p195 = scmp.ne.s32.totalorder %s184, %s185
    %p196 = scmp.eq.s32.totalorder %s30, 0
    %p197 = por %p195, %p196
    %p198 = scmp.ne.s32.totalorder %s184, %s185
    %p199 = scmp.eq.s32.totalorder %s31, 1
    %p200 = por %p198, %p199
    %p202 = scmp.ne.s32.totalorder %s185, %s201
    %p203 = scmp.eq.s32.totalorder %s31, 0
    %p204 = por %p202, %p203
    %s205 = ssub.s32 %s25, %s32
    %p206 = scmp.eq.s32.totalorder %s205, 0
    %s208 = sadd.s32 %s207, 1
    %s209 = scalar_select %p206, %s207, %s208
    %p212 = pneg %p206
    %p213 = scmp.eq.s32.totalorder %s25, 1
    %p214 = por %p212, %p213
    %p215 = scmp.ne.s32.totalorder %s207, %s210
    %p216 = scmp.eq.s32.totalorder %s25, 0
    %p217 = por %p215, %p216
    %p218 = scmp.ne.s32.totalorder %s207, %s210
    %p219 = scmp.eq.s32.totalorder %s30, 1
    %p220 = por %p218, %p219
    %p221 = scmp.ne.s32.totalorder %s210, %s211
    %p222 = scmp.eq.s32.totalorder %s30, 0
    %p223 = por %p221, %p222
    %p224 = scmp.ne.s32.totalorder %s210, %s211
    %p225 = scmp.eq.s32.totalorder %s31, 1
    %p226 = por %p224, %p225
    %p228 = scmp.ne.s32.totalorder %s211, %s227
    %p229 = scmp.eq.s32.totalorder %s31, 0
    %p230 = por %p228, %p229
    %s231 = ssub.s32 %s25, %s32
    %p232 = scmp.eq.s32.totalorder %s231, 0
    %s234 = sadd.s32 %s233, 1
    %s235 = scalar_select %p232, %s233, %s234
    %p238 = pneg %p232
    %p239 = scmp.eq.s32.totalorder %s25, 1
    %p240 = por %p238, %p239
    %p241 = scmp.ne.s32.totalorder %s233, %s236
    %p242 = scmp.eq.s32.totalorder %s25, 0
    %p243 = por %p241, %p242
    %p244 = scmp.ne.s32.totalorder %s233, %s236
    %p245 = scmp.eq.s32.totalorder %s30, 1
    %p246 = por %p244, %p245
    %p247 = scmp.ne.s32.totalorder %s236, %s237
    %p248 = scmp.eq.s32.totalorder %s30, 0
    %p249 = por %p247, %p248
    %p250 = scmp.ne.s32.totalorder %s236, %s237
    %p251 = scmp.eq.s32.totalorder %s31, 1
    %p252 = por %p250, %p251
    %p254 = scmp.ne.s32.totalorder %s237, %s253
    %p255 = scmp.eq.s32.totalorder %s31, 0
    %p256 = por %p254, %p255
    %s257 = ssub.s32 %s25, %s32
    %p258 = scmp.eq.s32.totalorder %s257, 0
    %s260 = sadd.s32 %s259, 1
    %s261 = scalar_select %p258, %s259, %s260
    %p264 = pneg %p258
    %p265 = scmp.eq.s32.totalorder %s25, 1
    %p266 = por %p264, %p265
    %p267 = scmp.ne.s32.totalorder %s259, %s262
    %p268 = scmp.eq.s32.totalorder %s25, 0
    %p269 = por %p267, %p268
    %p270 = scmp.ne.s32.totalorder %s259, %s262
    %p271 = scmp.eq.s32.totalorder %s30, 1
    %p272 = por %p270, %p271
    %p273 = scmp.ne.s32.totalorder %s262, %s263
    %p274 = scmp.eq.s32.totalorder %s30, 0
    %p275 = por %p273, %p274
    %p276 = scmp.ne.s32.totalorder %s262, %s263
    %p277 = scmp.eq.s32.totalorder %s31, 1
    %p278 = por %p276, %p277
    %p280 = scmp.ne.s32.totalorder %s263, %s279
    %p281 = scmp.eq.s32.totalorder %s31, 0
    %p282 = por %p280, %p281
    %s283 = ssub.s32 %s25, %s32
    %p284 = scmp.eq.s32.totalorder %s283, 0
    %s286 = sadd.s32 %s285, 1
    %s287 = scalar_select %p284, %s285, %s286
    %p290 = pneg %p284
    %p291 = scmp.eq.s32.totalorder %s25, 1
    %p292 = por %p290, %p291
    %p293 = scmp.ne.s32.totalorder %s285, %s288
    %p294 = scmp.eq.s32.totalorder %s25, 0
    %p295 = por %p293, %p294
    %p296 = scmp.ne.s32.totalorder %s285, %s288
    %p297 = scmp.eq.s32.totalorder %s30, 1
    %p298 = por %p296, %p297
    %p299 = scmp.ne.s32.totalorder %s288, %s289
    %p300 = scmp.eq.s32.totalorder %s30, 0
    %p301 = por %p299, %p300
    %p302 = scmp.ne.s32.totalorder %s288, %s289
    %p303 = scmp.eq.s32.totalorder %s31, 1
    %p304 = por %p302, %p303
    %p306 = scmp.ne.s32.totalorder %s289, %s305
    %p307 = scmp.eq.s32.totalorder %s31, 0
    %p308 = por %p306, %p307
    %s309 = ssub.s32 %s25, %s32
    %p310 = scmp.eq.s32.totalorder %s309, 0
    %s312 = sadd.s32 %s311, 1
    %s313 = scalar_select %p310, %s311, %s312
    %p316 = pneg %p310
    %p317 = scmp.eq.s32.totalorder %s25, 1
    %p318 = por %p316, %p317
    %p319 = scmp.ne.s32.totalorder %s311, %s314
    %p320 = scmp.eq.s32.totalorder %s25, 0
    %p321 = por %p319, %p320
    %p322 = scmp.ne.s32.totalorder %s311, %s314
    %p323 = scmp.eq.s32.totalorder %s30, 1
    %p324 = por %p322, %p323
    %p325 = scmp.ne.s32.totalorder %s314, %s315
    %p326 = scmp.eq.s32.totalorder %s30, 0
    %p327 = por %p325, %p326
    %p328 = scmp.ne.s32.totalorder %s314, %s315
    %p329 = scmp.eq.s32.totalorder %s31, 1
    %p330 = por %p328, %p329
    %p332 = scmp.ne.s32.totalorder %s315, %s331
    %p333 = scmp.eq.s32.totalorder %s31, 0
    %p334 = por %p332, %p333
    %s335 = ssub.s32 %s25, %s32
    %p336 = scmp.eq.s32.totalorder %s335, 0
    %s338 = sadd.s32 %s337, 1
    %s339 = scalar_select %p336, %s337, %s338
    %p342 = pneg %p336
    %p343 = scmp.eq.s32.totalorder %s25, 1
    %p344 = por %p342, %p343
    %p345 = scmp.ne.s32.totalorder %s337, %s340
    %p346 = scmp.eq.s32.totalorder %s25, 0
    %p347 = por %p345, %p346
    %p348 = scmp.ne.s32.totalorder %s337, %s340
    %p349 = scmp.eq.s32.totalorder %s30, 1
    %p350 = por %p348, %p349
    %p351 = scmp.ne.s32.totalorder %s340, %s341
    %p352 = scmp.eq.s32.totalorder %s30, 0
    %p353 = por %p351, %p352
    %p354 = scmp.ne.s32.totalorder %s340, %s341
    %p355 = scmp.eq.s32.totalorder %s31, 1
    %p356 = por %p354, %p355
    %p358 = scmp.ne.s32.totalorder %s341, %s357
    %p359 = scmp.eq.s32.totalorder %s31, 0
    %p360 = por %p358, %p359
    %s361 = ssub.s32 %s25, %s32
    %p362 = scmp.eq.s32.totalorder %s361, 0
    %s364 = sadd.s32 %s363, 1
    %s365 = scalar_select %p362, %s363, %s364
    %p368 = pneg %p362
    %p369 = scmp.eq.s32.totalorder %s25, 1
    %p370 = por %p368, %p369
    %p371 = scmp.ne.s32.totalorder %s363, %s366
    %p372 = scmp.eq.s32.totalorder %s25, 0
    %p373 = por %p371, %p372
    %p374 = scmp.ne.s32.totalorder %s363, %s366
    %p375 = scmp.eq.s32.totalorder %s30, 1
    %p376 = por %p374, %p375
    %p377 = scmp.ne.s32.totalorder %s366, %s367
    %p378 = scmp.eq.s32.totalorder %s30, 0
    %p379 = por %p377, %p378
    %p380 = scmp.ne.s32.totalorder %s366, %s367
    %p381 = scmp.eq.s32.totalorder %s31, 1
    %p382 = por %p380, %p381
    %p384 = scmp.ne.s32.totalorder %s367, %s383
    %p385 = scmp.eq.s32.totalorder %s31, 0
    %p386 = por %p384, %p385
    %s387 = ssub.s32 %s25, %s32
    %p388 = scmp.eq.s32.totalorder %s387, 0
    %s390 = sadd.s32 %s389, 1
    %s391 = scalar_select %p388, %s389, %s390
    %p394 = pneg %p388
    %p395 = scmp.eq.s32.totalorder %s25, 1
    %p396 = por %p394, %p395
    %p397 = scmp.ne.s32.totalorder %s389, %s392
    %p398 = scmp.eq.s32.totalorder %s25, 0
    %p399 = por %p397, %p398
    %p400 = scmp.ne.s32.totalorder %s389, %s392
    %p401 = scmp.eq.s32.totalorder %s30, 1
    %p402 = por %p400, %p401
    %p403 = scmp.ne.s32.totalorder %s392, %s393
    %p404 = scmp.eq.s32.totalorder %s30, 0
    %p405 = por %p403, %p404
    %p406 = scmp.ne.s32.totalorder %s392, %s393
    %p407 = scmp.eq.s32.totalorder %s31, 1
    %p408 = por %p406, %p407
    %p410 = scmp.ne.s32.totalorder %s393, %s409
    %p411 = scmp.eq.s32.totalorder %s31, 0
    %p412 = por %p410, %p411
    %s414 = sadd.s32 %s413, 1
    %p417 = scmp.eq.s32.totalorder %s25, 1
    %p418 = scmp.ne.s32.totalorder %s413, %s415
    %p419 = scmp.eq.s32.totalorder %s25, 0
    %p420 = por %p418, %p419
    %p421 = scmp.ne.s32.totalorder %s413, %s415
    %p422 = scmp.eq.s32.totalorder %s30, 1
    %p423 = por %p421, %p422
    %p424 = scmp.ne.s32.totalorder %s415, %s416
    %p425 = scmp.eq.s32.totalorder %s30, 0
    %p426 = por %p424, %p425
    %p427 = scmp.ne.s32.totalorder %s415, %s416
    %p428 = scmp.eq.s32.totalorder %s31, 1
    %p429 = por %p427, %p428
    %p431 = scmp.ne.s32.totalorder %s416, %s430
    %p432 = scmp.eq.s32.totalorder %s31, 0
    %p433 = por %p431, %p432
    %s435 = sadd.s32 %s434, 1
    %p438 = scmp.eq.s32.totalorder %s25, 1
    %p439 = scmp.ne.s32.totalorder %s434, %s436
    %p440 = scmp.eq.s32.totalorder %s25, 0
    %p441 = por %p439, %p440
    %p442 = scmp.ne.s32.totalorder %s434, %s436
    %p443 = scmp.eq.s32.totalorder %s30, 1
    %p444 = por %p442, %p443
    %p445 = scmp.ne.s32.totalorder %s436, %s437
    %p446 = scmp.eq.s32.totalorder %s30, 0
    %p447 = por %p445, %p446
    %p448 = scmp.ne.s32.totalorder %s436, %s437
    %p449 = scmp.eq.s32.totalorder %s31, 1
    %p450 = por %p448, %p449
    %p452 = scmp.ne.s32.totalorder %s437, %s451
    %p453 = scmp.eq.s32.totalorder %s31, 0
    %p454 = por %p452, %p453
    %s456 = sadd.s32 %s455, 1
    %p459 = scmp.eq.s32.totalorder %s25, 1
    %p460 = scmp.ne.s32.totalorder %s455, %s457
    %p461 = scmp.eq.s32.totalorder %s25, 0
    %p462 = por %p460, %p461
    %p463 = scmp.ne.s32.totalorder %s455, %s457
    %p464 = scmp.eq.s32.totalorder %s30, 1
    %p465 = por %p463, %p464
    %p466 = scmp.ne.s32.totalorder %s457, %s458
    %p467 = scmp.eq.s32.totalorder %s30, 0
    %p468 = por %p466, %p467
    %p469 = scmp.ne.s32.totalorder %s457, %s458
    %p470 = scmp.eq.s32.totalorder %s31, 1
    %p471 = por %p469, %p470
    %p473 = scmp.ne.s32.totalorder %s458, %s472
    %p474 = scmp.eq.s32.totalorder %s31, 0
    %p475 = por %p473, %p474
    %p476 = scmp.le.s32.totalorder 1, %s25
    %p477 = scmp.lt.s32.totalorder %s25, 3
    %p478 = pnand %p476, %p477
    %p479 = pneg %p478
    // Predicated region
    $region9: #{mnist_trans_forward.3} parent=5 // pred_check
      _
    $region10: #{mnist_trans_forward.3} parent=5 // pred_check_branch
      %481 = sbr.rel (%p478) target = $region12
    $region11: #{mnist_trans_forward.3} parent=5 // pred_region
      %s482 = ssub.s32 %s25, 1
      // Predicated region
      $region13: #{mnist_trans_forward.3} parent=11 // pred_check
        %p483 = pneg %p46
      $region14: #{mnist_trans_forward.3} parent=11 // pred_check_branch
        %485 = sbr.rel (%p483) target = $region16
      $region15: #{mnist_trans_forward.3} parent=11 // pred_region
        _
      $region16: #{mnist_trans_forward.3} parent=11 // pred_fallthru
        _
      // Predicated region
      $region17: #{mnist_trans_forward.3} parent=11 // pred_check
        %p486 = pneg %p67
      $region18: #{mnist_trans_forward.3} parent=11 // pred_check_branch
        %488 = sbr.rel (%p486) target = $region20
      $region19: #{mnist_trans_forward.3} parent=11 // pred_region
        _
      $region20: #{mnist_trans_forward.3} parent=11 // pred_fallthru
        _
      // Predicated region
      $region21: #{mnist_trans_forward.3} parent=11 // pred_check
        %p489 = pneg %p426
      $region22: #{mnist_trans_forward.3} parent=11 // pred_check_branch
        %491 = sbr.rel (%p489) target = $region24
      $region23: #{mnist_trans_forward.3} parent=11 // pred_region
        _
      $region24: #{mnist_trans_forward.3} parent=11 // pred_fallthru
        _
      // Predicated region
      $region25: #{mnist_trans_forward.3} parent=11 // pred_check
        %p492 = pneg %p447
      $region26: #{mnist_trans_forward.3} parent=11 // pred_check_branch
        %494 = sbr.rel (%p492) target = $region28
      $region27: #{mnist_trans_forward.3} parent=11 // pred_region
        _
      $region28: #{mnist_trans_forward.3} parent=11 // pred_fallthru
        _
    $region12: #{mnist_trans_forward.3} parent=5 // pred_fallthru
      _
    %p495 = scmp.lt.s32.totalorder %s25, 2
    // Predicated region
    $region29: #{mnist_trans_forward.3} parent=5 // pred_check
      %p496 = pneg %p495
    $region30: #{mnist_trans_forward.3} parent=5 // pred_check_branch
      %498 = sbr.rel (%p496) target = $region32
    $region31: #{mnist_trans_forward.3} parent=5 // pred_region
      // Predicated region
      $region33: #{mnist_trans_forward.3} parent=31 // pred_check
        %p499 = pneg %p87
      $region34: #{mnist_trans_forward.3} parent=31 // pred_check_branch
        %501 = sbr.rel (%p499) target = $region36
      $region35: #{mnist_trans_forward.3} parent=31 // pred_region
        %p502 = scmp.lt.s32.totalorder %s25, 1
        %s503 = scalar_select %p502, %s25, 1
        %s504 = smul.addr %s503, 8
        %s505 = smul.addr %s504, 4
        %s506 = scalar_lea.vmem %s2, %s505
      $region36: #{mnist_trans_forward.3} parent=31 // pred_fallthru
        _
      // Predicated region
      $region37: #{mnist_trans_forward.3} parent=31 // pred_check
        %p507 = pneg %p113
      $region38: #{mnist_trans_forward.3} parent=31 // pred_check_branch
        %509 = sbr.rel (%p507) target = $region40
      $region39: #{mnist_trans_forward.3} parent=31 // pred_region
        %p510 = scmp.lt.s32.totalorder %s25, 1
        %s511 = scalar_select %p510, %s25, 1
        %s512 = scalar_lea.vmem %s3, %s511
      $region40: #{mnist_trans_forward.3} parent=31 // pred_fallthru
        _
      // Predicated region
      $region41: #{mnist_trans_forward.3} parent=31 // pred_check
        %p513 = pneg %p139
      $region42: #{mnist_trans_forward.3} parent=31 // pred_check_branch
        %515 = sbr.rel (%p513) target = $region44
      $region43: #{mnist_trans_forward.3} parent=31 // pred_region
        %p516 = scmp.lt.s32.totalorder %s25, 1
        %s517 = scalar_select %p516, %s25, 1
        %s518 = smul.addr %s517, 32
        %s519 = smul.addr %s518, 4
        %s520 = scalar_lea.vmem %s4, %s519
      $region44: #{mnist_trans_forward.3} parent=31 // pred_fallthru
        _
      // Predicated region
      $region45: #{mnist_trans_forward.3} parent=31 // pred_check
        %p521 = pneg %p165
      $region46: #{mnist_trans_forward.3} parent=31 // pred_check_branch
        %523 = sbr.rel (%p521) target = $region48
      $region47: #{mnist_trans_forward.3} parent=31 // pred_region
        %p524 = scmp.lt.s32.totalorder %s25, 1
        %s525 = scalar_select %p524, %s25, 1
        %s526 = smul.addr %s525, 4
        %s527 = scalar_lea.vmem %s5, %s526
      $region48: #{mnist_trans_forward.3} parent=31 // pred_fallthru
        _
      // Predicated region
      $region49: #{mnist_trans_forward.3} parent=31 // pred_check
        %p528 = pneg %p191
      $region50: #{mnist_trans_forward.3} parent=31 // pred_check_branch
        %530 = sbr.rel (%p528) target = $region52
      $region51: #{mnist_trans_forward.3} parent=31 // pred_region
        %p531 = scmp.lt.s32.totalorder %s25, 1
        %s532 = scalar_select %p531, %s25, 1
        %s533 = scalar_lea.vmem %s6, %s532
      $region52: #{mnist_trans_forward.3} parent=31 // pred_fallthru
        _
      // Predicated region
      $region53: #{mnist_trans_forward.3} parent=31 // pred_check
        %p534 = pneg %p217
      $region54: #{mnist_trans_forward.3} parent=31 // pred_check_branch
        %536 = sbr.rel (%p534) target = $region56
      $region55: #{mnist_trans_forward.3} parent=31 // pred_region
        %p537 = scmp.lt.s32.totalorder %s25, 1
        %s538 = scalar_select %p537, %s25, 1
        %s539 = scalar_lea.vmem %s7, %s538
      $region56: #{mnist_trans_forward.3} parent=31 // pred_fallthru
        _
      // Predicated region
      $region57: #{mnist_trans_forward.3} parent=31 // pred_check
        %p540 = pneg %p243
      $region58: #{mnist_trans_forward.3} parent=31 // pred_check_branch
        %542 = sbr.rel (%p540) target = $region60
      $region59: #{mnist_trans_forward.3} parent=31 // pred_region
        %p543 = scmp.lt.s32.totalorder %s25, 1
        %s544 = scalar_select %p543, %s25, 1
        %s545 = scalar_lea.vmem %s8, %s544
      $region60: #{mnist_trans_forward.3} parent=31 // pred_fallthru
        _
      // Predicated region
      $region61: #{mnist_trans_forward.3} parent=31 // pred_check
        %p546 = pneg %p269
      $region62: #{mnist_trans_forward.3} parent=31 // pred_check_branch
        %548 = sbr.rel (%p546) target = $region64
      $region63: #{mnist_trans_forward.3} parent=31 // pred_region
        %p549 = scmp.lt.s32.totalorder %s25, 1
        %s550 = scalar_select %p549, %s25, 1
        %s551 = smul.addr %s550, 128
        %s552 = smul.addr %s551, 4
        %s553 = scalar_lea.vmem %s9, %s552
      $region64: #{mnist_trans_forward.3} parent=31 // pred_fallthru
        _
      // Predicated region
      $region65: #{mnist_trans_forward.3} parent=31 // pred_check
        %p554 = pneg %p295
      $region66: #{mnist_trans_forward.3} parent=31 // pred_check_branch
        %556 = sbr.rel (%p554) target = $region68
      $region67: #{mnist_trans_forward.3} parent=31 // pred_region
        %p557 = scmp.lt.s32.totalorder %s25, 1
        %s558 = scalar_select %p557, %s25, 1
        %s559 = smul.addr %s558, 16
        %s560 = scalar_lea.vmem %s10, %s559
      $region68: #{mnist_trans_forward.3} parent=31 // pred_fallthru
        _
      // Predicated region
      $region69: #{mnist_trans_forward.3} parent=31 // pred_check
        %p561 = pneg %p321
      $region70: #{mnist_trans_forward.3} parent=31 // pred_check_branch
        %563 = sbr.rel (%p561) target = $region72
      $region71: #{mnist_trans_forward.3} parent=31 // pred_region
        %p564 = scmp.lt.s32.totalorder %s25, 1
        %s565 = scalar_select %p564, %s25, 1
        %s566 = smul.addr %s565, 256
        %s567 = smul.addr %s566, 4
        %s568 = scalar_lea.vmem %s11, %s567
      $region72: #{mnist_trans_forward.3} parent=31 // pred_fallthru
        _
      // Predicated region
      $region73: #{mnist_trans_forward.3} parent=31 // pred_check
        %p569 = pneg %p347
      $region74: #{mnist_trans_forward.3} parent=31 // pred_check_branch
        %571 = sbr.rel (%p569) target = $region76
      $region75: #{mnist_trans_forward.3} parent=31 // pred_region
        %p572 = scmp.lt.s32.totalorder %s25, 1
        %s573 = scalar_select %p572, %s25, 1
        %s574 = scalar_lea.vmem %s12, %s573
      $region76: #{mnist_trans_forward.3} parent=31 // pred_fallthru
        _
      // Predicated region
      $region77: #{mnist_trans_forward.3} parent=31 // pred_check
        %p575 = pneg %p373
      $region78: #{mnist_trans_forward.3} parent=31 // pred_check_branch
        %577 = sbr.rel (%p575) target = $region80
      $region79: #{mnist_trans_forward.3} parent=31 // pred_region
        %p578 = scmp.lt.s32.totalorder %s25, 1
        %s579 = scalar_select %p578, %s25, 1
        %s580 = scalar_lea.vmem %s13, %s579
      $region80: #{mnist_trans_forward.3} parent=31 // pred_fallthru
        _
      // Predicated region
      $region81: #{mnist_trans_forward.3} parent=31 // pred_check
        %p581 = pneg %p399
      $region82: #{mnist_trans_forward.3} parent=31 // pred_check_branch
        %583 = sbr.rel (%p581) target = $region84
      $region83: #{mnist_trans_forward.3} parent=31 // pred_region
        %p584 = scmp.lt.s32.totalorder %s25, 1
        %s585 = scalar_select %p584, %s25, 1
        %s586 = scalar_lea.vmem %s14, %s585
      $region84: #{mnist_trans_forward.3} parent=31 // pred_fallthru
        _
    $region32: #{mnist_trans_forward.3} parent=5 // pred_fallthru
      _
    %p587 = scmp.le.s32.totalorder 1, %s25
    %p588 = scmp.lt.s32.totalorder %s25, 3
    %p589 = pnand %p587, %p588
    %p590 = pneg %p589
    // Predicated region
    $region85: #{mnist_trans_forward.3} parent=5 // pred_check
      _
    $region86: #{mnist_trans_forward.3} parent=5 // pred_check_branch
      %592 = sbr.rel (%p589) target = $region88
    $region87: #{mnist_trans_forward.3} parent=5 // pred_region
      %s593 = ssub.s32 %s25, 1
      %p594 = pneg %p46
      %p595 = pneg %p43
      %p596 = pneg %p67
      %p597 = pneg %p64
      %p598 = scmp.lt.s32.totalorder %s30, 1
      %s599 = scalar_select %p598, %s30, 1
      %s600 = smul.addr %s599, 8
      %s601 = smul.addr %s600, 4
      %s602 = scalar_lea.vmem %s2, %s601
      %p603 = pneg %p93
      %p604 = pneg %p90
      %p605 = scmp.lt.s32.totalorder %s30, 1
      %s606 = scalar_select %p605, %s30, 1
      %s607 = scalar_lea.vmem %s3, %s606
      %p608 = pneg %p119
      %p609 = pneg %p116
      %p610 = scmp.lt.s32.totalorder %s30, 1
      %s611 = scalar_select %p610, %s30, 1
      %s612 = smul.addr %s611, 32
      %s613 = smul.addr %s612, 4
      %s614 = scalar_lea.vmem %s4, %s613
      %p615 = pneg %p145
      %p616 = pneg %p142
      %p617 = scmp.lt.s32.totalorder %s30, 1
      %s618 = scalar_select %p617, %s30, 1
      %s619 = smul.addr %s618, 4
      %s620 = scalar_lea.vmem %s5, %s619
      %p621 = pneg %p171
      %p622 = pneg %p168
      %p623 = scmp.lt.s32.totalorder %s30, 1
      %s624 = scalar_select %p623, %s30, 1
      %s625 = scalar_lea.vmem %s6, %s624
      %p626 = pneg %p197
      %p627 = pneg %p194
      %p628 = scmp.lt.s32.totalorder %s30, 1
      %s629 = scalar_select %p628, %s30, 1
      %s630 = scalar_lea.vmem %s7, %s629
      %p631 = pneg %p223
      %p632 = pneg %p220
      %p633 = scmp.lt.s32.totalorder %s30, 1
      %s634 = scalar_select %p633, %s30, 1
      %s635 = scalar_lea.vmem %s8, %s634
      %p636 = pneg %p249
      %p637 = pneg %p246
      %p638 = scmp.lt.s32.totalorder %s30, 1
      %s639 = scalar_select %p638, %s30, 1
      %s640 = smul.addr %s639, 128
      %s641 = smul.addr %s640, 4
      %s642 = scalar_lea.vmem %s9, %s641
      %p643 = pneg %p275
      %p644 = pneg %p272
      %p645 = scmp.lt.s32.totalorder %s30, 1
      %s646 = scalar_select %p645, %s30, 1
      %s647 = smul.addr %s646, 16
      %s648 = scalar_lea.vmem %s10, %s647
      %p649 = pneg %p301
      %p650 = pneg %p298
      %p651 = scmp.lt.s32.totalorder %s30, 1
      %s652 = scalar_select %p651, %s30, 1
      %s653 = smul.addr %s652, 256
      %s654 = smul.addr %s653, 4
      %s655 = scalar_lea.vmem %s11, %s654
      %p656 = pneg %p327
      %p657 = pneg %p324
      %p658 = scmp.lt.s32.totalorder %s30, 1
      %s659 = scalar_select %p658, %s30, 1
      %s660 = scalar_lea.vmem %s12, %s659
      %p661 = pneg %p353
      %p662 = pneg %p350
      %p663 = scmp.lt.s32.totalorder %s30, 1
      %s664 = scalar_select %p663, %s30, 1
      %s665 = scalar_lea.vmem %s13, %s664
      %p666 = pneg %p379
      %p667 = pneg %p376
      %p668 = scmp.lt.s32.totalorder %s30, 1
      %s669 = scalar_select %p668, %s30, 1
      %s670 = scalar_lea.vmem %s14, %s669
      %p671 = pneg %p405
      %p672 = pneg %p402
      %p673 = pneg %p426
      %p674 = pneg %p423
      %p675 = pneg %p447
      %p676 = pneg %p444
      %p677 = pneg %p468
      %p678 = pneg %p465
      %p679 = scmp.lt.s32.totalorder %s30, 1
      %s680 = scalar_select %p679, %s30, 1
      %s681 = smul.addr %s680, 8
      %s682 = smul.addr %s681, 4
      %s683 = scalar_lea.vmem %s2, %s682
      %p684 = scmp.lt.s32.totalorder %s30, 1
      %s685 = scalar_select %p684, %s30, 1
      %s686 = scalar_lea.vmem %s3, %s685
      %p687 = scmp.lt.s32.totalorder %s30, 1
      %s688 = scalar_select %p687, %s30, 1
      %s689 = smul.addr %s688, 32
      %s690 = smul.addr %s689, 4
      %s691 = scalar_lea.vmem %s4, %s690
      %p692 = scmp.lt.s32.totalorder %s30, 1
      %s693 = scalar_select %p692, %s30, 1
      %s694 = smul.addr %s693, 4
      %s695 = scalar_lea.vmem %s5, %s694
      %p696 = scmp.lt.s32.totalorder %s30, 1
      %s697 = scalar_select %p696, %s30, 1
      %s698 = scalar_lea.vmem %s6, %s697
      %p699 = scmp.lt.s32.totalorder %s30, 1
      %s700 = scalar_select %p699, %s30, 1
      %s701 = scalar_lea.vmem %s7, %s700
      %p702 = scmp.lt.s32.totalorder %s30, 1
      %s703 = scalar_select %p702, %s30, 1
      %s704 = scalar_lea.vmem %s8, %s703
      %p705 = scmp.lt.s32.totalorder %s30, 1
      %s706 = scalar_select %p705, %s30, 1
      %s707 = smul.addr %s706, 128
      %s708 = smul.addr %s707, 4
      %s709 = scalar_lea.vmem %s9, %s708
      %p710 = scmp.lt.s32.totalorder %s30, 1
      %s711 = scalar_select %p710, %s30, 1
      %s712 = smul.addr %s711, 16
      %s713 = scalar_lea.vmem %s10, %s712
      %p714 = scmp.lt.s32.totalorder %s30, 1
      %s715 = scalar_select %p714, %s30, 1
      %s716 = smul.addr %s715, 256
      %s717 = smul.addr %s716, 4
      %s718 = scalar_lea.vmem %s11, %s717
      %p719 = scmp.lt.s32.totalorder %s30, 1
      %s720 = scalar_select %p719, %s30, 1
      %s721 = scalar_lea.vmem %s12, %s720
      %p722 = scmp.lt.s32.totalorder %s30, 1
      %s723 = scalar_select %p722, %s30, 1
      %s724 = scalar_lea.vmem %s13, %s723
      %p725 = scmp.lt.s32.totalorder %s30, 1
      %s726 = scalar_select %p725, %s30, 1
      %s727 = scalar_lea.vmem %s14, %s726
      %p729 = scmp.eq.s32.totalorder %s30, 0
      // Predicated region
      $region89: #{mnist_trans_forward.3} parent=87 // pred_check
        %p730 = pneg %p729
      $region90: #{mnist_trans_forward.3} parent=87 // pred_check_branch
        %732 = sbr.rel (%p730) target = $region92
      $region91: #{mnist_trans_forward.3} parent=87 // pred_region
        %v733 = vld [vmem:[%s0] sm:$0xff]
        %v734 = vld [vmem:[%s0 + $0x8] sm:$0xff]
        %vm735 = vcmask 523264
        %736 = vst.msk [vmem:[#allocation2] sm:$0xff] %vm735, %v733
        %737 = vst.msk [vmem:[#allocation2 + $0x8] sm:$0xff] %vm735, %v734
      $region92: #{mnist_trans_forward.3} parent=87 // pred_fallthru
        _
      %v738 = vld [vmem:[#allocation2] sm:$0xff]
      %v739 = vld [vmem:[#allocation2 + $0x8] sm:$0xff]
      %v740 = vpack.c.bf16 %v739, %v738
      %v741 = vld [vmem:[%s1] sm:$0xff]
      %v742 = vld [vmem:[%s1 + $0x8] sm:$0xff]
      %v743 = vld [vmem:[%s683] sm:$0xf]
      %v744 = vld [vmem:[%s683 + $0x4] sm:$0xf]
      %v745 = vld [vmem:[%s683 + $0x8] sm:$0xf]
      %v746 = vld [vmem:[%s683 + $0xc] sm:$0xf]
      %v747 = vld [vmem:[%s683 + $0x10] sm:$0xf]
      %v748 = vld [vmem:[%s683 + $0x14] sm:$0xf]
      %v749 = vld [vmem:[%s683 + $0x18] sm:$0xf]
      %v750 = vld [vmem:[%s683 + $0x1c] sm:$0xf]
      %v751 = vld [vmem:[%s686] sm:$0x1]
      %v753 = vlaneseq
      %v754 = vshrl.u32 %v753, 7
      %v755 = vsub.s32 0, %v754
      %v756 = vrot.slane %v751, %v755
      %v766 = vunpack.c.l.b16 %v743
      %v767 = vunpack.c.l.b16 %v744
      %v768 = vunpack.c.l.b16 %v745
      %v769 = vunpack.c.l.b16 %v746
      %v770 = vunpack.c.l.b16 %v747
      %v771 = vunpack.c.l.b16 %v748
      %v772 = vunpack.c.l.b16 %v749
      %v773 = vunpack.c.l.b16 %v750
      %v774 = vpack.c.b16 %v767, %v766
      %v775 = vpack.c.b16 %v769, %v768
      %v776 = vpack.c.b16 %v771, %v770
      %v777 = vpack.c.b16 %v773, %v772
      %vm782 = vcmask 523264
      %v784 = vsel %vm782, %v740, 0
      %786 = vmatprep.subr.bf16.mxu0 0
      %787 = vmatpush1.bf16.msra.mxu0 %v774
      %788 = vmatprep.subr.bf16.mxu0 0
      %789 = vmatpush1.bf16.msra.mxu0 %v775
      %790 = vmatprep.subr.bf16.mxu0 0
      %791 = vmatpush1.bf16.msra.mxu0 %v776
      %792 = vmatprep.subr.bf16.mxu0 0
      %793 = vmatpush1.bf16.msra.mxu0 %v777
      %794 = vmatprep.subr.bf16.mxu0 0
      %795 = vmatpush1.bf16.msra.mxu0 0
      %796 = vmatprep.subr.bf16.mxu0 0
      %797 = vmatpush1.bf16.msra.mxu0 0
      %798 = vmatprep.subr.bf16.mxu0 0
      %799 = vmatpush1.bf16.msra.mxu0 0
      %800 = vmatprep.subr.bf16.mxu0 0
      %801 = vmatpush1.bf16.msra.mxu0 0
      %802 = vmatprep.subr.bf16.mxu0 0
      %803 = vmatpush1.bf16.msra.mxu0 0
      %804 = vmatprep.subr.bf16.mxu0 0
      %805 = vmatpush1.bf16.msra.mxu0 0
      %806 = vmatprep.subr.bf16.mxu0 0
      %807 = vmatpush1.bf16.msra.mxu0 0
      %808 = vmatprep.subr.bf16.mxu0 0
      %809 = vmatpush1.bf16.msra.mxu0 0
      %810 = vmatprep.subr.bf16.mxu0 0
      %811 = vmatpush1.bf16.msra.mxu0 0
      %812 = vmatprep.subr.bf16.mxu0 0
      %813 = vmatpush1.bf16.msra.mxu0 0
      %814 = vmatprep.subr.bf16.mxu0 0
      %815 = vmatpush1.bf16.msra.mxu0 0
      %816 = vmatprep.subr.bf16.mxu0 0
      %817 = vmatpush1.bf16.msra.mxu0 0
      %818 = vmatprep.mubr.bf16.mxu0 0
      %819 = vmatmul.mubr.bf16.gmra.mrb[0].mxu0 %v784
      %v820 = vpop.f32.mrb[0].mxu0
      %v821 = vadd.f32 %v756, %v820
      %v822 = vpop.f32.mrb[0].mxu0
      %v823 = vpop.f32.mrb[0].mxu0
      %v824 = vadd.f32 %v756, %v823
      %v825 = vpop.f32.mrb[0].mxu0
      %826 = vdwg.mxu0
      %v827 = vld [vmem:[%s691] sm:$0xff]
      %v828 = vld [vmem:[%s691 + $0x8] sm:$0xff]
      %v829 = vld [vmem:[%s691 + $0x10] sm:$0xff]
      %v830 = vld [vmem:[%s691 + $0x18] sm:$0xff]
      %v831 = vld [vmem:[%s691 + $0x20] sm:$0xff]
      %v832 = vld [vmem:[%s691 + $0x28] sm:$0xff]
      %v833 = vld [vmem:[%s691 + $0x30] sm:$0xff]
      %v834 = vld [vmem:[%s691 + $0x38] sm:$0xff]
      %v835 = vld [vmem:[%s691 + $0x40] sm:$0xff]
      %v836 = vld [vmem:[%s691 + $0x48] sm:$0xff]
      %v837 = vld [vmem:[%s691 + $0x50] sm:$0xff]
      %v838 = vld [vmem:[%s691 + $0x58] sm:$0xff]
      %v839 = vld [vmem:[%s691 + $0x60] sm:$0xff]
      %v840 = vld [vmem:[%s691 + $0x68] sm:$0xff]
      %v841 = vld [vmem:[%s691 + $0x70] sm:$0xff]
      %v842 = vld [vmem:[%s691 + $0x78] sm:$0xff]
      %v843 = vld [vmem:[%s695] sm:$0xf]
      %v845 = vlaneseq
      %v846 = vshrl.u32 %v845, 7
      %v847 = vsub.s32 0, %v846
      %v848 = vrot.slane %v843, %v847
      %v849 = vlaneseq
      %v850 = vshrl.u32 %v849, 7
      %v851 = vsub.s32 1, %v850
      %v852 = vrot.slane %v843, %v851
      %v853 = vlaneseq
      %v854 = vshrl.u32 %v853, 7
      %v855 = vsub.s32 2, %v854
      %v856 = vrot.slane %v843, %v855
      %v857 = vlaneseq
      %v858 = vshrl.u32 %v857, 7
      %v859 = vsub.s32 3, %v858
      %v860 = vrot.slane %v843, %v859
      %v881 = vunpack.c.l.b16 %v827
      %v882 = vunpack.c.h.b16 %v827
      %v883 = vunpack.c.l.b16 %v828
      %v884 = vunpack.c.h.b16 %v828
      %v885 = vunpack.c.l.b16 %v829
      %v886 = vunpack.c.h.b16 %v829
      %v887 = vunpack.c.l.b16 %v830
      %v888 = vunpack.c.h.b16 %v830
      %v889 = vunpack.c.l.b16 %v831
      %v890 = vunpack.c.h.b16 %v831
      %v891 = vunpack.c.l.b16 %v832
      %v892 = vunpack.c.h.b16 %v832
      %v893 = vunpack.c.l.b16 %v833
      %v894 = vunpack.c.h.b16 %v833
      %v895 = vunpack.c.l.b16 %v834
      %v896 = vunpack.c.h.b16 %v834
      %v897 = vunpack.c.l.b16 %v835
      %v898 = vunpack.c.h.b16 %v835
      %v899 = vunpack.c.l.b16 %v836
      %v900 = vunpack.c.h.b16 %v836
      %v901 = vunpack.c.l.b16 %v837
      %v902 = vunpack.c.h.b16 %v837
      %v903 = vunpack.c.l.b16 %v838
      %v904 = vunpack.c.h.b16 %v838
      %v905 = vunpack.c.l.b16 %v839
      %v906 = vunpack.c.h.b16 %v839
      %v907 = vunpack.c.l.b16 %v840
      %v908 = vunpack.c.h.b16 %v840
      %v909 = vunpack.c.l.b16 %v841
      %v910 = vunpack.c.h.b16 %v841
      %v911 = vunpack.c.l.b16 %v842
      %v912 = vunpack.c.h.b16 %v842
      %v913 = vpack.c.b16 %v885, %v881
      %v914 = vpack.c.b16 %v886, %v882
      %v915 = vpack.c.b16 %v887, %v883
      %v916 = vpack.c.b16 %v888, %v884
      %v917 = vpack.c.b16 %v893, %v889
      %v918 = vpack.c.b16 %v894, %v890
      %v919 = vpack.c.b16 %v895, %v891
      %v920 = vpack.c.b16 %v896, %v892
      %v921 = vpack.c.b16 %v901, %v897
      %v922 = vpack.c.b16 %v902, %v898
      %v923 = vpack.c.b16 %v903, %v899
      %v924 = vpack.c.b16 %v904, %v900
      %v925 = vpack.c.b16 %v909, %v905
      %v926 = vpack.c.b16 %v910, %v906
      %v927 = vpack.c.b16 %v911, %v907
      %v928 = vpack.c.b16 %v912, %v908
      %945 = vmatprep.subr.bf16.mxu0 %v914
      %946 = vmatpush1.bf16.msra.mxu0 %v913
      %947 = vmatprep.subr.bf16.mxu0 %v918
      %948 = vmatpush1.bf16.msra.mxu0 %v917
      %949 = vmatprep.subr.bf16.mxu0 %v922
      %950 = vmatpush1.bf16.msra.mxu0 %v921
      %951 = vmatprep.subr.bf16.mxu0 %v926
      %952 = vmatpush1.bf16.msra.mxu0 %v925
      %953 = vmatprep.subr.bf16.mxu0 0
      %954 = vmatpush1.bf16.msra.mxu0 0
      %955 = vmatprep.subr.bf16.mxu0 0
      %956 = vmatpush1.bf16.msra.mxu0 0
      %957 = vmatprep.subr.bf16.mxu0 0
      %958 = vmatpush1.bf16.msra.mxu0 0
      %959 = vmatprep.subr.bf16.mxu0 0
      %960 = vmatpush1.bf16.msra.mxu0 0
      %961 = vmatprep.subr.bf16.mxu0 0
      %962 = vmatpush1.bf16.msra.mxu0 0
      %963 = vmatprep.subr.bf16.mxu0 0
      %964 = vmatpush1.bf16.msra.mxu0 0
      %965 = vmatprep.subr.bf16.mxu0 0
      %966 = vmatpush1.bf16.msra.mxu0 0
      %967 = vmatprep.subr.bf16.mxu0 0
      %968 = vmatpush1.bf16.msra.mxu0 0
      %969 = vmatprep.subr.bf16.mxu0 0
      %970 = vmatpush1.bf16.msra.mxu0 0
      %971 = vmatprep.subr.bf16.mxu0 0
      %972 = vmatpush1.bf16.msra.mxu0 0
      %973 = vmatprep.subr.bf16.mxu0 0
      %974 = vmatpush1.bf16.msra.mxu0 0
      %975 = vmatprep.subr.bf16.mxu0 0
      %976 = vmatpush1.bf16.msra.mxu0 0
      %977 = vmatprep.mubr.bf16.mxu0 0
      %978 = vmatmul.mubr.bf16.gmra.mrb[0].mxu0 %v784
      %v979 = vpop.f32.mrb[0].mxu0
      %v980 = vadd.f32 %v848, %v979
      %v981 = vpop.f32.mrb[0].mxu0
      %v982 = vadd.f32 %v852, %v981
      %v983 = vpop.f32.mrb[0].mxu0
      %v984 = vadd.f32 %v848, %v983
      %v985 = vpop.f32.mrb[0].mxu0
      %v986 = vadd.f32 %v852, %v985
      %987 = vdwg.mxu0
      %988 = vmatprep.subr.bf16.mxu0 %v916
      %989 = vmatpush1.bf16.msra.mxu0 %v915
      %990 = vmatprep.subr.bf16.mxu0 %v920
      %991 = vmatpush1.bf16.msra.mxu0 %v919
      %992 = vmatprep.subr.bf16.mxu0 %v924
      %993 = vmatpush1.bf16.msra.mxu0 %v923
      %994 = vmatprep.subr.bf16.mxu0 %v928
      %995 = vmatpush1.bf16.msra.mxu0 %v927
      %996 = vmatprep.subr.bf16.mxu0 0
      %997 = vmatpush1.bf16.msra.mxu0 0
      %998 = vmatprep.subr.bf16.mxu0 0
      %999 = vmatpush1.bf16.msra.mxu0 0
      %1000 = vmatprep.subr.bf16.mxu0 0
      %1001 = vmatpush1.bf16.msra.mxu0 0
      %1002 = vmatprep.subr.bf16.mxu0 0
      %1003 = vmatpush1.bf16.msra.mxu0 0
      %1004 = vmatprep.subr.bf16.mxu0 0
      %1005 = vmatpush1.bf16.msra.mxu0 0
      %1006 = vmatprep.subr.bf16.mxu0 0
      %1007 = vmatpush1.bf16.msra.mxu0 0
      %1008 = vmatprep.subr.bf16.mxu0 0
      %1009 = vmatpush1.bf16.msra.mxu0 0
      %1010 = vmatprep.subr.bf16.mxu0 0
      %1011 = vmatpush1.bf16.msra.mxu0 0
      %1012 = vmatprep.subr.bf16.mxu0 0
      %1013 = vmatpush1.bf16.msra.mxu0 0
      %1014 = vmatprep.subr.bf16.mxu0 0
      %1015 = vmatpush1.bf16.msra.mxu0 0
      %1016 = vmatprep.subr.bf16.mxu0 0
      %1017 = vmatpush1.bf16.msra.mxu0 0
      %1018 = vmatprep.subr.bf16.mxu0 0
      %1019 = vmatpush1.bf16.msra.mxu0 0
      %1020 = vmatprep.mubr.bf16.mxu0 0
      %1021 = vmatmul.mubr.bf16.gmra.mrb[0].mxu0 %v784
      %v1022 = vpop.f32.mrb[0].mxu0
      %v1023 = vadd.f32 %v856, %v1022
      %v1024 = vpop.f32.mrb[0].mxu0
      %v1025 = vadd.f32 %v860, %v1024
      %v1026 = vpop.f32.mrb[0].mxu0
      %v1027 = vadd.f32 %v856, %v1026
      %v1028 = vpop.f32.mrb[0].mxu0
      %v1029 = vadd.f32 %v860, %v1028
      %1030 = vdwg.mxu0
      %v1031 = vld [vmem:[%s698] sm:$0x1]
      %v1033 = vlaneseq
      %v1034 = vshrl.u32 %v1033, 7
      %v1035 = vsub.s32 0, %v1034
      %v1036 = vrot.slane %v1031, %v1035
      %1040 = vrot.lane.b32.xlu0 %v821, 64
      %v1041 = vpop.permute.xlu0 %1040
      %1042 = vrot.lane.b32.xlu0 %v824, 64
      %v1043 = vpop.permute.xlu0 %1042
      %vm1044 = vcmask 64512
      %v1045 = vsel %vm1044, %v821, 0
      %v1047 = vsel %vm1044, %v824, 0
      %v1049 = vsel %vm1044, %v1041, 0
      %v1051 = vsel %vm1044, %v1043, 0
      %1053 = vmatprep.subr.mxu0 0.0
      %1054 = vmatpush1.xpose.msra.mxu0 %v1049
      %1055 = vmatprep.subr.mxu0 0.0
      %1056 = vmatpush1.xpose.msra.mxu0 %v1051
      %1057 = vmatprep.subr.mxu0 0.0
      %1058 = vmatpush1.xpose.msra.mxu0 0.0
      %1059 = vmatprep.subr.mxu0 0.0
      %1060 = vmatpush1.xpose.msra.mxu0 0.0
      %1061 = vmatprep.subr.mxu0 0.0
      %1062 = vmatpush1.xpose.msra.mxu0 0.0
      %1063 = vmatprep.subr.mxu0 0.0
      %1064 = vmatpush1.xpose.msra.mxu0 0.0
      %1065 = vmatprep.subr.mxu0 0.0
      %1066 = vmatpush1.xpose.msra.mxu0 0.0
      %1067 = vmatprep.subr.mxu0 0.0
      %1068 = vmatpush1.xpose.msra.mxu0 0.0
      %1069 = vmatprep.subr.mxu0 0.0
      %1070 = vmatpush1.xpose.msra.mxu0 0.0
      %1071 = vmatprep.subr.mxu0 0.0
      %1072 = vmatpush1.xpose.msra.mxu0 0.0
      %1073 = vmatprep.subr.mxu0 0.0
      %1074 = vmatpush1.xpose.msra.mxu0 0.0
      %1075 = vmatprep.subr.mxu0 0.0
      %1076 = vmatpush1.xpose.msra.mxu0 0.0
      %1077 = vmatprep.subr.mxu0 0.0
      %1078 = vmatpush1.xpose.msra.mxu0 0.0
      %1079 = vmatprep.subr.mxu0 0.0
      %1080 = vmatpush1.xpose.msra.mxu0 0.0
      %1081 = vmatprep.subr.mxu0 0.0
      %1082 = vmatpush1.xpose.msra.mxu0 0.0
      %1083 = vmatprep.subr.mxu0 0.0
      %1084 = vmatpush1.xpose.msra.mxu0 0.0
      %1085 = vmatprep.subr.mxu0 0.0
      %1086 = vmatpush1.xpose.msra.mxu0 0.0
      %1087 = vmatprep.subr.mxu0 0.0
      %1088 = vmatpush1.xpose.msra.mxu0 0.0
      %1089 = vmatprep.subr.mxu0 0.0
      %1090 = vmatpush1.xpose.msra.mxu0 0.0
      %1091 = vmatprep.subr.mxu0 0.0
      %1092 = vmatpush1.xpose.msra.mxu0 0.0
      %1093 = vmatprep.subr.mxu0 0.0
      %1094 = vmatpush1.xpose.msra.mxu0 0.0
      %1095 = vmatprep.subr.mxu0 0.0
      %1096 = vmatpush1.xpose.msra.mxu0 0.0
      %1097 = vmatprep.subr.mxu0 0.0
      %1098 = vmatpush1.xpose.msra.mxu0 0.0
      %1099 = vmatprep.subr.mxu0 0.0
      %1100 = vmatpush1.xpose.msra.mxu0 0.0
      %1101 = vmatprep.subr.mxu0 0.0
      %1102 = vmatpush1.xpose.msra.mxu0 0.0
      %1103 = vmatprep.subr.mxu0 0.0
      %1104 = vmatpush1.xpose.msra.mxu0 0.0
      %1105 = vmatprep.subr.mxu0 0.0
      %1106 = vmatpush1.xpose.msra.mxu0 0.0
      %1107 = vmatprep.subr.mxu0 0.0
      %1108 = vmatpush1.xpose.msra.mxu0 0.0
      %1109 = vmatprep.subr.mxu0 0.0
      %1110 = vmatpush1.xpose.msra.mxu0 0.0
      %1111 = vmatprep.subr.mxu0 0.0
      %1112 = vmatpush1.xpose.msra.mxu0 0.0
      %1113 = vmatprep.subr.mxu0 0.0
      %1114 = vmatpush1.xpose.msra.mxu0 0.0
      %1115 = vmatprep.subr.mxu0 0.0
      %1116 = vmatpush1.xpose.msra.mxu0 0.0
      %1117 = vmatprep.mubr.f32.mxu0 0.0
      %1118 = vmatmul.mubr.f32.gmra.mrb[0].mxu0 %v1045
      %v1119 = vpop.f32.mrb[0].mxu0
      %v1120 = vadd.f32 0.0, %v1119
      %v1121 = vpop.f32.mrb[0].mxu0
      %1122 = vmatprep.mubr.f32.mxu0 0.0
      %1123 = vmatmul.mubr.f32.gmra.mrb[0].mxu0 %v1047
      %v1124 = vpop.f32.mrb[0].mxu0
      %v1125 = vadd.f32 0.0, %v1124
      %v1126 = vpop.f32.mrb[0].mxu0
      %1127 = vdwg.mxu0
      %v1128 = vmul.f32 %v1120, 0.35355338
      %v1129 = vmul.f32 %v1125, 0.35355338
      %v1130 = vadd.f32 %v1128, %v741
      %v1131 = vadd.f32 %v1129, %v742
      %vm1132 = vcmask 130048
      %v1133 = vsel %vm1132, %v1130, -inf
      %1134 = vmax.xlane.f32.xlu0 %v1133
      %v1135 = vpop.xlane.xlu0 %1134
      %v1136 = vsel %vm1132, %v1131, -inf
      %1137 = vmax.xlane.f32.xlu0 %v1136
      %v1138 = vpop.xlane.xlu0 %1137
      %v1139 = vsub.f32 %v1130, %v1135
      %v1140 = vsub.f32 %v1131, %v1138
      %v1141 = vmul.f32 %v1139, 1.442695
      %v1142 = vpow.pop %v1141
      %v1143 = vmul.f32 %v1140, 1.442695
      %v1144 = vpow.pop %v1143
      %v1145 = vsel %vm1132, %v1142, 0.0
      %1146 = vadd.xlane.f32.xlu0 %v1145
      %v1147 = vpop.xlane.xlu0 %1146
      %v1148 = vsel %vm1132, %v1144, 0.0
      %1149 = vadd.xlane.f32.xlu0 %v1148
      %v1150 = vpop.xlane.xlu0 %1149
      %v1151 = vrcp.pop %v1147
      %v1152 = vrcp.pop %v1150
      %v1153 = vmul.f32 %v1142, %v1151
      %v1154 = vmul.f32 %v1144, %v1152
      %v1155 = vpack.c.bf16 %v1154, %v1153
      %v1156 = vpack.c.bf16 %v984, %v980
      %v1158 = vsel %vm1132, %v1155, 0
      %1160 = vmatprep.subr.bf16.mxu0 0
      %1161 = vmatpush1.bf16.msra.mxu0 %v1156
      %1162 = vmatprep.subr.bf16.mxu0 0
      %1163 = vmatpush1.bf16.msra.mxu0 0
      %1164 = vmatprep.subr.bf16.mxu0 0
      %1165 = vmatpush1.bf16.msra.mxu0 0
      %1166 = vmatprep.subr.bf16.mxu0 0
      %1167 = vmatpush1.bf16.msra.mxu0 0
      %1168 = vmatprep.subr.bf16.mxu0 0
      %1169 = vmatpush1.bf16.msra.mxu0 0
      %1170 = vmatprep.subr.bf16.mxu0 0
      %1171 = vmatpush1.bf16.msra.mxu0 0
      %1172 = vmatprep.subr.bf16.mxu0 0
      %1173 = vmatpush1.bf16.msra.mxu0 0
      %1174 = vmatprep.subr.bf16.mxu0 0
      %1175 = vmatpush1.bf16.msra.mxu0 0
      %1176 = vmatprep.subr.bf16.mxu0 0
      %1177 = vmatpush1.bf16.msra.mxu0 0
      %1178 = vmatprep.subr.bf16.mxu0 0
      %1179 = vmatpush1.bf16.msra.mxu0 0
      %1180 = vmatprep.subr.bf16.mxu0 0
      %1181 = vmatpush1.bf16.msra.mxu0 0
      %1182 = vmatprep.subr.bf16.mxu0 0
      %1183 = vmatpush1.bf16.msra.mxu0 0
      %1184 = vmatprep.subr.bf16.mxu0 0
      %1185 = vmatpush1.bf16.msra.mxu0 0
      %1186 = vmatprep.subr.bf16.mxu0 0
      %1187 = vmatpush1.bf16.msra.mxu0 0
      %1188 = vmatprep.subr.bf16.mxu0 0
      %1189 = vmatpush1.bf16.msra.mxu0 0
      %1190 = vmatprep.subr.bf16.mxu0 0
      %1191 = vmatpush1.bf16.msra.mxu0 0
      %1192 = vmatprep.mubr.bf16.mxu0 0
      %1193 = vmatmul.mubr.bf16.gmra.mrb[0].mxu0 %v1158
      %v1194 = vpop.f32.mrb[0].mxu0
      %v1195 = vadd.f32 0.0, %v1194
      %v1196 = vpop.f32.mrb[0].mxu0
      %v1197 = vpop.f32.mrb[0].mxu0
      %v1198 = vadd.f32 0.0, %v1197
      %v1199 = vpop.f32.mrb[0].mxu0
      %1200 = vdwg.mxu0
      %v1201 = vadd.f32 %v1036, %v1195
      %v1202 = vadd.f32 %v1036, %v1198
      %1203 = vrot.lane.b32.xlu0 %v821, 120
      %v1204 = vpop.permute.xlu0 %1203
      %1205 = vrot.lane.b32.xlu0 %v824, 120
      %v1206 = vpop.permute.xlu0 %1205
      %1207 = vrot.lane.b32.xlu0 %v821, 56
      %v1208 = vpop.permute.xlu0 %1207
      %1209 = vrot.lane.b32.xlu0 %v824, 56
      %v1210 = vpop.permute.xlu0 %1209
      %v1211 = vsel %vm1044, %v1204, 0
      %v1213 = vsel %vm1044, %v1206, 0
      %v1215 = vsel %vm1044, %v1208, 0
      %v1217 = vsel %vm1044, %v1210, 0
      %1219 = vmatprep.subr.mxu0 0.0
      %1220 = vmatpush1.xpose.msra.mxu0 %v1215
      %1221 = vmatprep.subr.mxu0 0.0
      %1222 = vmatpush1.xpose.msra.mxu0 %v1217
      %1223 = vmatprep.subr.mxu0 0.0
      %1224 = vmatpush1.xpose.msra.mxu0 0.0
      %1225 = vmatprep.subr.mxu0 0.0
      %1226 = vmatpush1.xpose.msra.mxu0 0.0
      %1227 = vmatprep.subr.mxu0 0.0
      %1228 = vmatpush1.xpose.msra.mxu0 0.0
      %1229 = vmatprep.subr.mxu0 0.0
      %1230 = vmatpush1.xpose.msra.mxu0 0.0
      %1231 = vmatprep.subr.mxu0 0.0
      %1232 = vmatpush1.xpose.msra.mxu0 0.0
      %1233 = vmatprep.subr.mxu0 0.0
      %1234 = vmatpush1.xpose.msra.mxu0 0.0
      %1235 = vmatprep.subr.mxu0 0.0
      %1236 = vmatpush1.xpose.msra.mxu0 0.0
      %1237 = vmatprep.subr.mxu0 0.0
      %1238 = vmatpush1.xpose.msra.mxu0 0.0
      %1239 = vmatprep.subr.mxu0 0.0
      %1240 = vmatpush1.xpose.msra.mxu0 0.0
      %1241 = vmatprep.subr.mxu0 0.0
      %1242 = vmatpush1.xpose.msra.mxu0 0.0
      %1243 = vmatprep.subr.mxu0 0.0
      %1244 = vmatpush1.xpose.msra.mxu0 0.0
      %1245 = vmatprep.subr.mxu0 0.0
      %1246 = vmatpush1.xpose.msra.mxu0 0.0
      %1247 = vmatprep.subr.mxu0 0.0
      %1248 = vmatpush1.xpose.msra.mxu0 0.0
      %1249 = vmatprep.subr.mxu0 0.0
      %1250 = vmatpush1.xpose.msra.mxu0 0.0
      %1251 = vmatprep.subr.mxu0 0.0
      %1252 = vmatpush1.xpose.msra.mxu0 0.0
      %1253 = vmatprep.subr.mxu0 0.0
      %1254 = vmatpush1.xpose.msra.mxu0 0.0
      %1255 = vmatprep.subr.mxu0 0.0
      %1256 = vmatpush1.xpose.msra.mxu0 0.0
      %1257 = vmatprep.subr.mxu0 0.0
      %1258 = vmatpush1.xpose.msra.mxu0 0.0
      %1259 = vmatprep.subr.mxu0 0.0
      %1260 = vmatpush1.xpose.msra.mxu0 0.0
      %1261 = vmatprep.subr.mxu0 0.0
      %1262 = vmatpush1.xpose.msra.mxu0 0.0
      %1263 = vmatprep.subr.mxu0 0.0
      %1264 = vmatpush1.xpose.msra.mxu0 0.0
      %1265 = vmatprep.subr.mxu0 0.0
      %1266 = vmatpush1.xpose.msra.mxu0 0.0
      %1267 = vmatprep.subr.mxu0 0.0
      %1268 = vmatpush1.xpose.msra.mxu0 0.0
      %1269 = vmatprep.subr.mxu0 0.0
      %1270 = vmatpush1.xpose.msra.mxu0 0.0
      %1271 = vmatprep.subr.mxu0 0.0
      %1272 = vmatpush1.xpose.msra.mxu0 0.0
      %1273 = vmatprep.subr.mxu0 0.0
      %1274 = vmatpush1.xpose.msra.mxu0 0.0
      %1275 = vmatprep.subr.mxu0 0.0
      %1276 = vmatpush1.xpose.msra.mxu0 0.0
      %1277 = vmatprep.subr.mxu0 0.0
      %1278 = vmatpush1.xpose.msra.mxu0 0.0
      %1279 = vmatprep.subr.mxu0 0.0
      %1280 = vmatpush1.xpose.msra.mxu0 0.0
      %1281 = vmatprep.subr.mxu0 0.0
      %1282 = vmatpush1.xpose.msra.mxu0 0.0
      %1283 = vmatprep.mubr.f32.mxu0 0.0
      %1284 = vmatmul.mubr.f32.gmra.mrb[0].mxu0 %v1211
      %v1285 = vpop.f32.mrb[0].mxu0
      %v1286 = vadd.f32 0.0, %v1285
      %v1287 = vpop.f32.mrb[0].mxu0
      %1288 = vmatprep.mubr.f32.mxu0 0.0
      %1289 = vmatmul.mubr.f32.gmra.mrb[0].mxu0 %v1213
      %v1290 = vpop.f32.mrb[0].mxu0
      %v1291 = vadd.f32 0.0, %v1290
      %v1292 = vpop.f32.mrb[0].mxu0
      %1293 = vdwg.mxu0
      %v1294 = vmul.f32 %v1286, 0.35355338
      %v1295 = vmul.f32 %v1291, 0.35355338
      %v1296 = vadd.f32 %v1294, %v741
      %v1297 = vadd.f32 %v1295, %v742
      %v1298 = vsel %vm1132, %v1296, -inf
      %1299 = vmax.xlane.f32.xlu0 %v1298
      %v1300 = vpop.xlane.xlu0 %1299
      %v1301 = vsel %vm1132, %v1297, -inf
      %1302 = vmax.xlane.f32.xlu0 %v1301
      %v1303 = vpop.xlane.xlu0 %1302
      %v1304 = vsub.f32 %v1296, %v1300
      %v1305 = vsub.f32 %v1297, %v1303
      %v1306 = vmul.f32 %v1304, 1.442695
      %v1307 = vpow.pop %v1306
      %v1308 = vmul.f32 %v1305, 1.442695
      %v1309 = vpow.pop %v1308
      %v1310 = vsel %vm1132, %v1307, 0.0
      %1311 = vadd.xlane.f32.xlu0 %v1310
      %v1312 = vpop.xlane.xlu0 %1311
      %v1313 = vsel %vm1132, %v1309, 0.0
      %1314 = vadd.xlane.f32.xlu0 %v1313
      %v1315 = vpop.xlane.xlu0 %1314
      %v1316 = vrcp.pop %v1312
      %v1317 = vrcp.pop %v1315
      %v1318 = vmul.f32 %v1307, %v1316
      %v1319 = vmul.f32 %v1309, %v1317
      %v1320 = vpack.c.bf16 %v1319, %v1318
      %1322 = vrot.lane.b32.xlu0 %v1156, 64
      %v1323 = vpop.permute.xlu0 %1322
      %v1326 = vsel %vm1132, %v1320, 0
      %1328 = vmatprep.subr.bf16.mxu0 0
      %1329 = vmatpush1.bf16.msra.mxu0 %v1323
      %1330 = vmatprep.subr.bf16.mxu0 0
      %1331 = vmatpush1.bf16.msra.mxu0 0
      %1332 = vmatprep.subr.bf16.mxu0 0
      %1333 = vmatpush1.bf16.msra.mxu0 0
      %1334 = vmatprep.subr.bf16.mxu0 0
      %1335 = vmatpush1.bf16.msra.mxu0 0
      %1336 = vmatprep.subr.bf16.mxu0 0
      %1337 = vmatpush1.bf16.msra.mxu0 0
      %1338 = vmatprep.subr.bf16.mxu0 0
      %1339 = vmatpush1.bf16.msra.mxu0 0
      %1340 = vmatprep.subr.bf16.mxu0 0
      %1341 = vmatpush1.bf16.msra.mxu0 0
      %1342 = vmatprep.subr.bf16.mxu0 0
      %1343 = vmatpush1.bf16.msra.mxu0 0
      %1344 = vmatprep.subr.bf16.mxu0 0
      %1345 = vmatpush1.bf16.msra.mxu0 0
      %1346 = vmatprep.subr.bf16.mxu0 0
      %1347 = vmatpush1.bf16.msra.mxu0 0
      %1348 = vmatprep.subr.bf16.mxu0 0
      %1349 = vmatpush1.bf16.msra.mxu0 0
      %1350 = vmatprep.subr.bf16.mxu0 0
      %1351 = vmatpush1.bf16.msra.mxu0 0
      %1352 = vmatprep.subr.bf16.mxu0 0
      %1353 = vmatpush1.bf16.msra.mxu0 0
      %1354 = vmatprep.subr.bf16.mxu0 0
      %1355 = vmatpush1.bf16.msra.mxu0 0
      %1356 = vmatprep.subr.bf16.mxu0 0
      %1357 = vmatpush1.bf16.msra.mxu0 0
      %1358 = vmatprep.subr.bf16.mxu0 0
      %1359 = vmatpush1.bf16.msra.mxu0 0
      %1360 = vmatprep.mubr.bf16.mxu0 0
      %1361 = vmatmul.mubr.bf16.gmra.mrb[0].mxu0 %v1326
      %v1362 = vpop.f32.mrb[0].mxu0
      %v1363 = vadd.f32 0.0, %v1362
      %v1364 = vpop.f32.mrb[0].mxu0
      %v1365 = vpop.f32.mrb[0].mxu0
      %v1366 = vadd.f32 0.0, %v1365
      %v1367 = vpop.f32.mrb[0].mxu0
      %1368 = vdwg.mxu0
      %v1369 = vadd.f32 %v1201, %v1363
      %v1370 = vadd.f32 %v1202, %v1366
      %1371 = vrot.lane.b32.xlu0 %v821, 112
      %v1372 = vpop.permute.xlu0 %1371
      %1373 = vrot.lane.b32.xlu0 %v824, 112
      %v1374 = vpop.permute.xlu0 %1373
      %1375 = vrot.lane.b32.xlu0 %v821, 48
      %v1376 = vpop.permute.xlu0 %1375
      %1377 = vrot.lane.b32.xlu0 %v824, 48
      %v1378 = vpop.permute.xlu0 %1377
      %v1379 = vsel %vm1044, %v1372, 0
      %v1381 = vsel %vm1044, %v1374, 0
      %v1383 = vsel %vm1044, %v1376, 0
      %v1385 = vsel %vm1044, %v1378, 0
      %1387 = vmatprep.subr.mxu0 0.0
      %1388 = vmatpush1.xpose.msra.mxu0 %v1383
      %1389 = vmatprep.subr.mxu0 0.0
      %1390 = vmatpush1.xpose.msra.mxu0 %v1385
      %1391 = vmatprep.subr.mxu0 0.0
      %1392 = vmatpush1.xpose.msra.mxu0 0.0
      %1393 = vmatprep.subr.mxu0 0.0
      %1394 = vmatpush1.xpose.msra.mxu0 0.0
      %1395 = vmatprep.subr.mxu0 0.0
      %1396 = vmatpush1.xpose.msra.mxu0 0.0
      %1397 = vmatprep.subr.mxu0 0.0
      %1398 = vmatpush1.xpose.msra.mxu0 0.0
      %1399 = vmatprep.subr.mxu0 0.0
      %1400 = vmatpush1.xpose.msra.mxu0 0.0
      %1401 = vmatprep.subr.mxu0 0.0
      %1402 = vmatpush1.xpose.msra.mxu0 0.0
      %1403 = vmatprep.subr.mxu0 0.0
      %1404 = vmatpush1.xpose.msra.mxu0 0.0
      %1405 = vmatprep.subr.mxu0 0.0
      %1406 = vmatpush1.xpose.msra.mxu0 0.0
      %1407 = vmatprep.subr.mxu0 0.0
      %1408 = vmatpush1.xpose.msra.mxu0 0.0
      %1409 = vmatprep.subr.mxu0 0.0
      %1410 = vmatpush1.xpose.msra.mxu0 0.0
      %1411 = vmatprep.subr.mxu0 0.0
      %1412 = vmatpush1.xpose.msra.mxu0 0.0
      %1413 = vmatprep.subr.mxu0 0.0
      %1414 = vmatpush1.xpose.msra.mxu0 0.0
      %1415 = vmatprep.subr.mxu0 0.0
      %1416 = vmatpush1.xpose.msra.mxu0 0.0
      %1417 = vmatprep.subr.mxu0 0.0
      %1418 = vmatpush1.xpose.msra.mxu0 0.0
      %1419 = vmatprep.subr.mxu0 0.0
      %1420 = vmatpush1.xpose.msra.mxu0 0.0
      %1421 = vmatprep.subr.mxu0 0.0
      %1422 = vmatpush1.xpose.msra.mxu0 0.0
      %1423 = vmatprep.subr.mxu0 0.0
      %1424 = vmatpush1.xpose.msra.mxu0 0.0
      %1425 = vmatprep.subr.mxu0 0.0
      %1426 = vmatpush1.xpose.msra.mxu0 0.0
      %1427 = vmatprep.subr.mxu0 0.0
      %1428 = vmatpush1.xpose.msra.mxu0 0.0
      %1429 = vmatprep.subr.mxu0 0.0
      %1430 = vmatpush1.xpose.msra.mxu0 0.0
      %1431 = vmatprep.subr.mxu0 0.0
      %1432 = vmatpush1.xpose.msra.mxu0 0.0
      %1433 = vmatprep.subr.mxu0 0.0
      %1434 = vmatpush1.xpose.msra.mxu0 0.0
      %1435 = vmatprep.subr.mxu0 0.0
      %1436 = vmatpush1.xpose.msra.mxu0 0.0
      %1437 = vmatprep.subr.mxu0 0.0
      %1438 = vmatpush1.xpose.msra.mxu0 0.0
      %1439 = vmatprep.subr.mxu0 0.0
      %1440 = vmatpush1.xpose.msra.mxu0 0.0
      %1441 = vmatprep.subr.mxu0 0.0
      %1442 = vmatpush1.xpose.msra.mxu0 0.0
      %1443 = vmatprep.subr.mxu0 0.0
      %1444 = vmatpush1.xpose.msra.mxu0 0.0
      %1445 = vmatprep.subr.mxu0 0.0
      %1446 = vmatpush1.xpose.msra.mxu0 0.0
      %1447 = vmatprep.subr.mxu0 0.0
      %1448 = vmatpush1.xpose.msra.mxu0 0.0
      %1449 = vmatprep.subr.mxu0 0.0
      %1450 = vmatpush1.xpose.msra.mxu0 0.0
      %1451 = vmatprep.mubr.f32.mxu0 0.0
      %1452 = vmatmul.mubr.f32.gmra.mrb[0].mxu0 %v1379
      %v1453 = vpop.f32.mrb[0].mxu0
      %v1454 = vadd.f32 0.0, %v1453
      %v1455 = vpop.f32.mrb[0].mxu0
      %1456 = vmatprep.mubr.f32.mxu0 0.0
      %1457 = vmatmul.mubr.f32.gmra.mrb[0].mxu0 %v1381
      %v1458 = vpop.f32.mrb[0].mxu0
      %v1459 = vadd.f32 0.0, %v1458
      %v1460 = vpop.f32.mrb[0].mxu0
      %1461 = vdwg.mxu0
      %v1462 = vmul.f32 %v1454, 0.35355338
      %v1463 = vmul.f32 %v1459, 0.35355338
      %v1464 = vadd.f32 %v1462, %v741
      %v1465 = vadd.f32 %v1463, %v742
      %v1466 = vsel %vm1132, %v1464, -inf
      %1467 = vmax.xlane.f32.xlu0 %v1466
      %v1468 = vpop.xlane.xlu0 %1467
      %v1469 = vsel %vm1132, %v1465, -inf
      %1470 = vmax.xlane.f32.xlu0 %v1469
      %v1471 = vpop.xlane.xlu0 %1470
      %v1472 = vsub.f32 %v1464, %v1468
      %v1473 = vsub.f32 %v1465, %v1471
      %v1474 = vmul.f32 %v1472, 1.442695
      %v1475 = vpow.pop %v1474
      %v1476 = vmul.f32 %v1473, 1.442695
      %v1477 = vpow.pop %v1476
      %v1478 = vsel %vm1132, %v1475, 0.0
      %1479 = vadd.xlane.f32.xlu0 %v1478
      %v1480 = vpop.xlane.xlu0 %1479
      %v1481 = vsel %vm1132, %v1477, 0.0
      %1482 = vadd.xlane.f32.xlu0 %v1481
      %v1483 = vpop.xlane.xlu0 %1482
      %v1484 = vrcp.pop %v1480
      %v1485 = vrcp.pop %v1483
      %v1486 = vmul.f32 %v1475, %v1484
      %v1487 = vmul.f32 %v1477, %v1485
      %v1488 = vpack.c.bf16 %v1487, %v1486
      %v1489 = vpack.c.bf16 %v986, %v982
      %v1491 = vsel %vm1132, %v1488, 0
      %1493 = vmatprep.subr.bf16.mxu0 0
      %1494 = vmatpush1.bf16.msra.mxu0 %v1489
      %1495 = vmatprep.subr.bf16.mxu0 0
      %1496 = vmatpush1.bf16.msra.mxu0 0
      %1497 = vmatprep.subr.bf16.mxu0 0
      %1498 = vmatpush1.bf16.msra.mxu0 0
      %1499 = vmatprep.subr.bf16.mxu0 0
      %1500 = vmatpush1.bf16.msra.mxu0 0
      %1501 = vmatprep.subr.bf16.mxu0 0
      %1502 = vmatpush1.bf16.msra.mxu0 0
      %1503 = vmatprep.subr.bf16.mxu0 0
      %1504 = vmatpush1.bf16.msra.mxu0 0
      %1505 = vmatprep.subr.bf16.mxu0 0
      %1506 = vmatpush1.bf16.msra.mxu0 0
      %1507 = vmatprep.subr.bf16.mxu0 0
      %1508 = vmatpush1.bf16.msra.mxu0 0
      %1509 = vmatprep.subr.bf16.mxu0 0
      %1510 = vmatpush1.bf16.msra.mxu0 0
      %1511 = vmatprep.subr.bf16.mxu0 0
      %1512 = vmatpush1.bf16.msra.mxu0 0
      %1513 = vmatprep.subr.bf16.mxu0 0
      %1514 = vmatpush1.bf16.msra.mxu0 0
      %1515 = vmatprep.subr.bf16.mxu0 0
      %1516 = vmatpush1.bf16.msra.mxu0 0
      %1517 = vmatprep.subr.bf16.mxu0 0
      %1518 = vmatpush1.bf16.msra.mxu0 0
      %1519 = vmatprep.subr.bf16.mxu0 0
      %1520 = vmatpush1.bf16.msra.mxu0 0
      %1521 = vmatprep.subr.bf16.mxu0 0
      %1522 = vmatpush1.bf16.msra.mxu0 0
      %1523 = vmatprep.subr.bf16.mxu0 0
      %1524 = vmatpush1.bf16.msra.mxu0 0
      %1525 = vmatprep.mubr.bf16.mxu0 0
      %1526 = vmatmul.mubr.bf16.gmra.mrb[0].mxu0 %v1491
      %v1527 = vpop.f32.mrb[0].mxu0
      %v1528 = vadd.f32 0.0, %v1527
      %v1529 = vpop.f32.mrb[0].mxu0
      %v1530 = vpop.f32.mrb[0].mxu0
      %v1531 = vadd.f32 0.0, %v1530
      %v1532 = vpop.f32.mrb[0].mxu0
      %1533 = vdwg.mxu0
      %v1534 = vadd.f32 %v1369, %v1528
      %v1535 = vadd.f32 %v1370, %v1531
      %1536 = vrot.lane.b32.xlu0 %v821, 104
      %v1537 = vpop.permute.xlu0 %1536
      %1538 = vrot.lane.b32.xlu0 %v824, 104
      %v1539 = vpop.permute.xlu0 %1538
      %1540 = vrot.lane.b32.xlu0 %v821, 40
      %v1541 = vpop.permute.xlu0 %1540
      %1542 = vrot.lane.b32.xlu0 %v824, 40
      %v1543 = vpop.permute.xlu0 %1542
      %v1544 = vsel %vm1044, %v1537, 0
      %v1546 = vsel %vm1044, %v1539, 0
      %v1548 = vsel %vm1044, %v1541, 0
      %v1550 = vsel %vm1044, %v1543, 0
      %1552 = vmatprep.subr.mxu0 0.0
      %1553 = vmatpush1.xpose.msra.mxu0 %v1548
      %1554 = vmatprep.subr.mxu0 0.0
      %1555 = vmatpush1.xpose.msra.mxu0 %v1550
      %1556 = vmatprep.subr.mxu0 0.0
      %1557 = vmatpush1.xpose.msra.mxu0 0.0
      %1558 = vmatprep.subr.mxu0 0.0
      %1559 = vmatpush1.xpose.msra.mxu0 0.0
      %1560 = vmatprep.subr.mxu0 0.0
      %1561 = vmatpush1.xpose.msra.mxu0 0.0
      %1562 = vmatprep.subr.mxu0 0.0
      %1563 = vmatpush1.xpose.msra.mxu0 0.0
      %1564 = vmatprep.subr.mxu0 0.0
      %1565 = vmatpush1.xpose.msra.mxu0 0.0
      %1566 = vmatprep.subr.mxu0 0.0
      %1567 = vmatpush1.xpose.msra.mxu0 0.0
      %1568 = vmatprep.subr.mxu0 0.0
      %1569 = vmatpush1.xpose.msra.mxu0 0.0
      %1570 = vmatprep.subr.mxu0 0.0
      %1571 = vmatpush1.xpose.msra.mxu0 0.0
      %1572 = vmatprep.subr.mxu0 0.0
      %1573 = vmatpush1.xpose.msra.mxu0 0.0
      %1574 = vmatprep.subr.mxu0 0.0
      %1575 = vmatpush1.xpose.msra.mxu0 0.0
      %1576 = vmatprep.subr.mxu0 0.0
      %1577 = vmatpush1.xpose.msra.mxu0 0.0
      %1578 = vmatprep.subr.mxu0 0.0
      %1579 = vmatpush1.xpose.msra.mxu0 0.0
      %1580 = vmatprep.subr.mxu0 0.0
      %1581 = vmatpush1.xpose.msra.mxu0 0.0
      %1582 = vmatprep.subr.mxu0 0.0
      %1583 = vmatpush1.xpose.msra.mxu0 0.0
      %1584 = vmatprep.subr.mxu0 0.0
      %1585 = vmatpush1.xpose.msra.mxu0 0.0
      %1586 = vmatprep.subr.mxu0 0.0
      %1587 = vmatpush1.xpose.msra.mxu0 0.0
      %1588 = vmatprep.subr.mxu0 0.0
      %1589 = vmatpush1.xpose.msra.mxu0 0.0
      %1590 = vmatprep.subr.mxu0 0.0
      %1591 = vmatpush1.xpose.msra.mxu0 0.0
      %1592 = vmatprep.subr.mxu0 0.0
      %1593 = vmatpush1.xpose.msra.mxu0 0.0
      %1594 = vmatprep.subr.mxu0 0.0
      %1595 = vmatpush1.xpose.msra.mxu0 0.0
      %1596 = vmatprep.subr.mxu0 0.0
      %1597 = vmatpush1.xpose.msra.mxu0 0.0
      %1598 = vmatprep.subr.mxu0 0.0
      %1599 = vmatpush1.xpose.msra.mxu0 0.0
      %1600 = vmatprep.subr.mxu0 0.0
      %1601 = vmatpush1.xpose.msra.mxu0 0.0
      %1602 = vmatprep.subr.mxu0 0.0
      %1603 = vmatpush1.xpose.msra.mxu0 0.0
      %1604 = vmatprep.subr.mxu0 0.0
      %1605 = vmatpush1.xpose.msra.mxu0 0.0
      %1606 = vmatprep.subr.mxu0 0.0
      %1607 = vmatpush1.xpose.msra.mxu0 0.0
      %1608 = vmatprep.subr.mxu0 0.0
      %1609 = vmatpush1.xpose.msra.mxu0 0.0
      %1610 = vmatprep.subr.mxu0 0.0
      %1611 = vmatpush1.xpose.msra.mxu0 0.0
      %1612 = vmatprep.subr.mxu0 0.0
      %1613 = vmatpush1.xpose.msra.mxu0 0.0
      %1614 = vmatprep.subr.mxu0 0.0
      %1615 = vmatpush1.xpose.msra.mxu0 0.0
      %1616 = vmatprep.mubr.f32.mxu0 0.0
      %1617 = vmatmul.mubr.f32.gmra.mrb[0].mxu0 %v1544
      %v1618 = vpop.f32.mrb[0].mxu0
      %v1619 = vadd.f32 0.0, %v1618
      %v1620 = vpop.f32.mrb[0].mxu0
      %1621 = vmatprep.mubr.f32.mxu0 0.0
      %1622 = vmatmul.mubr.f32.gmra.mrb[0].mxu0 %v1546
      %v1623 = vpop.f32.mrb[0].mxu0
      %v1624 = vadd.f32 0.0, %v1623
      %v1625 = vpop.f32.mrb[0].mxu0
      %1626 = vdwg.mxu0
      %v1627 = vmul.f32 %v1619, 0.35355338
      %v1628 = vmul.f32 %v1624, 0.35355338
      %v1629 = vadd.f32 %v1627, %v741
      %v1630 = vadd.f32 %v1628, %v742
      %v1631 = vsel %vm1132, %v1629, -inf
      %1632 = vmax.xlane.f32.xlu0 %v1631
      %v1633 = vpop.xlane.xlu0 %1632
      %v1634 = vsel %vm1132, %v1630, -inf
      %1635 = vmax.xlane.f32.xlu0 %v1634
      %v1636 = vpop.xlane.xlu0 %1635
      %v1637 = vsub.f32 %v1629, %v1633
      %v1638 = vsub.f32 %v1630, %v1636
      %v1639 = vmul.f32 %v1637, 1.442695
      %v1640 = vpow.pop %v1639
      %v1641 = vmul.f32 %v1638, 1.442695
      %v1642 = vpow.pop %v1641
      %v1643 = vsel %vm1132, %v1640, 0.0
      %1644 = vadd.xlane.f32.xlu0 %v1643
      %v1645 = vpop.xlane.xlu0 %1644
      %v1646 = vsel %vm1132, %v1642, 0.0
      %1647 = vadd.xlane.f32.xlu0 %v1646
      %v1648 = vpop.xlane.xlu0 %1647
      %v1649 = vrcp.pop %v1645
      %v1650 = vrcp.pop %v1648
      %v1651 = vmul.f32 %v1640, %v1649
      %v1652 = vmul.f32 %v1642, %v1650
      %v1653 = vpack.c.bf16 %v1652, %v1651
      %1655 = vrot.lane.b32.xlu0 %v1489, 64
      %v1656 = vpop.permute.xlu0 %1655
      %v1659 = vsel %vm1132, %v1653, 0
      %1661 = vmatprep.subr.bf16.mxu0 0
      %1662 = vmatpush1.bf16.msra.mxu0 %v1656
      %1663 = vmatprep.subr.bf16.mxu0 0
      %1664 = vmatpush1.bf16.msra.mxu0 0
      %1665 = vmatprep.subr.bf16.mxu0 0
      %1666 = vmatpush1.bf16.msra.mxu0 0
      %1667 = vmatprep.subr.bf16.mxu0 0
      %1668 = vmatpush1.bf16.msra.mxu0 0
      %1669 = vmatprep.subr.bf16.mxu0 0
      %1670 = vmatpush1.bf16.msra.mxu0 0
      %1671 = vmatprep.subr.bf16.mxu0 0
      %1672 = vmatpush1.bf16.msra.mxu0 0
      %1673 = vmatprep.subr.bf16.mxu0 0
      %1674 = vmatpush1.bf16.msra.mxu0 0
      %1675 = vmatprep.subr.bf16.mxu0 0
      %1676 = vmatpush1.bf16.msra.mxu0 0
      %1677 = vmatprep.subr.bf16.mxu0 0
      %1678 = vmatpush1.bf16.msra.mxu0 0
      %1679 = vmatprep.subr.bf16.mxu0 0
      %1680 = vmatpush1.bf16.msra.mxu0 0
      %1681 = vmatprep.subr.bf16.mxu0 0
      %1682 = vmatpush1.bf16.msra.mxu0 0
      %1683 = vmatprep.subr.bf16.mxu0 0
      %1684 = vmatpush1.bf16.msra.mxu0 0
      %1685 = vmatprep.subr.bf16.mxu0 0
      %1686 = vmatpush1.bf16.msra.mxu0 0
      %1687 = vmatprep.subr.bf16.mxu0 0
      %1688 = vmatpush1.bf16.msra.mxu0 0
      %1689 = vmatprep.subr.bf16.mxu0 0
      %1690 = vmatpush1.bf16.msra.mxu0 0
      %1691 = vmatprep.subr.bf16.mxu0 0
      %1692 = vmatpush1.bf16.msra.mxu0 0
      %1693 = vmatprep.mubr.bf16.mxu0 0
      %1694 = vmatmul.mubr.bf16.gmra.mrb[0].mxu0 %v1659
      %v1695 = vpop.f32.mrb[0].mxu0
      %v1696 = vadd.f32 0.0, %v1695
      %v1697 = vpop.f32.mrb[0].mxu0
      %v1698 = vpop.f32.mrb[0].mxu0
      %v1699 = vadd.f32 0.0, %v1698
      %v1700 = vpop.f32.mrb[0].mxu0
      %1701 = vdwg.mxu0
      %v1702 = vadd.f32 %v1534, %v1696
      %v1703 = vadd.f32 %v1535, %v1699
      %1704 = vrot.lane.b32.xlu0 %v821, 96
      %v1705 = vpop.permute.xlu0 %1704
      %1706 = vrot.lane.b32.xlu0 %v824, 96
      %v1707 = vpop.permute.xlu0 %1706
      %1708 = vrot.lane.b32.xlu0 %v821, 32
      %v1709 = vpop.permute.xlu0 %1708
      %1710 = vrot.lane.b32.xlu0 %v824, 32
      %v1711 = vpop.permute.xlu0 %1710
      %v1712 = vsel %vm1044, %v1705, 0
      %v1714 = vsel %vm1044, %v1707, 0
      %v1716 = vsel %vm1044, %v1709, 0
      %v1718 = vsel %vm1044, %v1711, 0
      %1720 = vmatprep.subr.mxu0 0.0
      %1721 = vmatpush1.xpose.msra.mxu0 %v1716
      %1722 = vmatprep.subr.mxu0 0.0
      %1723 = vmatpush1.xpose.msra.mxu0 %v1718
      %1724 = vmatprep.subr.mxu0 0.0
      %1725 = vmatpush1.xpose.msra.mxu0 0.0
      %1726 = vmatprep.subr.mxu0 0.0
      %1727 = vmatpush1.xpose.msra.mxu0 0.0
      %1728 = vmatprep.subr.mxu0 0.0
      %1729 = vmatpush1.xpose.msra.mxu0 0.0
      %1730 = vmatprep.subr.mxu0 0.0
      %1731 = vmatpush1.xpose.msra.mxu0 0.0
      %1732 = vmatprep.subr.mxu0 0.0
      %1733 = vmatpush1.xpose.msra.mxu0 0.0
      %1734 = vmatprep.subr.mxu0 0.0
      %1735 = vmatpush1.xpose.msra.mxu0 0.0
      %1736 = vmatprep.subr.mxu0 0.0
      %1737 = vmatpush1.xpose.msra.mxu0 0.0
      %1738 = vmatprep.subr.mxu0 0.0
      %1739 = vmatpush1.xpose.msra.mxu0 0.0
      %1740 = vmatprep.subr.mxu0 0.0
      %1741 = vmatpush1.xpose.msra.mxu0 0.0
      %1742 = vmatprep.subr.mxu0 0.0
      %1743 = vmatpush1.xpose.msra.mxu0 0.0
      %1744 = vmatprep.subr.mxu0 0.0
      %1745 = vmatpush1.xpose.msra.mxu0 0.0
      %1746 = vmatprep.subr.mxu0 0.0
      %1747 = vmatpush1.xpose.msra.mxu0 0.0
      %1748 = vmatprep.subr.mxu0 0.0
      %1749 = vmatpush1.xpose.msra.mxu0 0.0
      %1750 = vmatprep.subr.mxu0 0.0
      %1751 = vmatpush1.xpose.msra.mxu0 0.0
      %1752 = vmatprep.subr.mxu0 0.0
      %1753 = vmatpush1.xpose.msra.mxu0 0.0
      %1754 = vmatprep.subr.mxu0 0.0
      %1755 = vmatpush1.xpose.msra.mxu0 0.0
      %1756 = vmatprep.subr.mxu0 0.0
      %1757 = vmatpush1.xpose.msra.mxu0 0.0
      %1758 = vmatprep.subr.mxu0 0.0
      %1759 = vmatpush1.xpose.msra.mxu0 0.0
      %1760 = vmatprep.subr.mxu0 0.0
      %1761 = vmatpush1.xpose.msra.mxu0 0.0
      %1762 = vmatprep.subr.mxu0 0.0
      %1763 = vmatpush1.xpose.msra.mxu0 0.0
      %1764 = vmatprep.subr.mxu0 0.0
      %1765 = vmatpush1.xpose.msra.mxu0 0.0
      %1766 = vmatprep.subr.mxu0 0.0
      %1767 = vmatpush1.xpose.msra.mxu0 0.0
      %1768 = vmatprep.subr.mxu0 0.0
      %1769 = vmatpush1.xpose.msra.mxu0 0.0
      %1770 = vmatprep.subr.mxu0 0.0
      %1771 = vmatpush1.xpose.msra.mxu0 0.0
      %1772 = vmatprep.subr.mxu0 0.0
      %1773 = vmatpush1.xpose.msra.mxu0 0.0
      %1774 = vmatprep.subr.mxu0 0.0
      %1775 = vmatpush1.xpose.msra.mxu0 0.0
      %1776 = vmatprep.subr.mxu0 0.0
      %1777 = vmatpush1.xpose.msra.mxu0 0.0
      %1778 = vmatprep.subr.mxu0 0.0
      %1779 = vmatpush1.xpose.msra.mxu0 0.0
      %1780 = vmatprep.subr.mxu0 0.0
      %1781 = vmatpush1.xpose.msra.mxu0 0.0
      %1782 = vmatprep.subr.mxu0 0.0
      %1783 = vmatpush1.xpose.msra.mxu0 0.0
      %1784 = vmatprep.mubr.f32.mxu0 0.0
      %1785 = vmatmul.mubr.f32.gmra.mrb[0].mxu0 %v1712
      %v1786 = vpop.f32.mrb[0].mxu0
      %v1787 = vadd.f32 0.0, %v1786
      %v1788 = vpop.f32.mrb[0].mxu0
      %1789 = vmatprep.mubr.f32.mxu0 0.0
      %1790 = vmatmul.mubr.f32.gmra.mrb[0].mxu0 %v1714
      %v1791 = vpop.f32.mrb[0].mxu0
      %v1792 = vadd.f32 0.0, %v1791
      %v1793 = vpop.f32.mrb[0].mxu0
      %1794 = vdwg.mxu0
      %v1795 = vmul.f32 %v1787, 0.35355338
      %v1796 = vmul.f32 %v1792, 0.35355338
      %v1797 = vadd.f32 %v1795, %v741
      %v1798 = vadd.f32 %v1796, %v742
      %v1799 = vsel %vm1132, %v1797, -inf
      %1800 = vmax.xlane.f32.xlu0 %v1799
      %v1801 = vpop.xlane.xlu0 %1800
      %v1802 = vsel %vm1132, %v1798, -inf
      %1803 = vmax.xlane.f32.xlu0 %v1802
      %v1804 = vpop.xlane.xlu0 %1803
      %v1805 = vsub.f32 %v1797, %v1801
      %v1806 = vsub.f32 %v1798, %v1804
      %v1807 = vmul.f32 %v1805, 1.442695
      %v1808 = vpow.pop %v1807
      %v1809 = vmul.f32 %v1806, 1.442695
      %v1810 = vpow.pop %v1809
      %v1811 = vsel %vm1132, %v1808, 0.0
      %1812 = vadd.xlane.f32.xlu0 %v1811
      %v1813 = vpop.xlane.xlu0 %1812
      %v1814 = vsel %vm1132, %v1810, 0.0
      %1815 = vadd.xlane.f32.xlu0 %v1814
      %v1816 = vpop.xlane.xlu0 %1815
      %v1817 = vrcp.pop %v1813
      %v1818 = vrcp.pop %v1816
      %v1819 = vmul.f32 %v1808, %v1817
      %v1820 = vmul.f32 %v1810, %v1818
      %v1821 = vpack.c.bf16 %v1820, %v1819
      %v1822 = vpack.c.bf16 %v1027, %v1023
      %v1824 = vsel %vm1132, %v1821, 0
      %1826 = vmatprep.subr.bf16.mxu0 0
      %1827 = vmatpush1.bf16.msra.mxu0 %v1822
      %1828 = vmatprep.subr.bf16.mxu0 0
      %1829 = vmatpush1.bf16.msra.mxu0 0
      %1830 = vmatprep.subr.bf16.mxu0 0
      %1831 = vmatpush1.bf16.msra.mxu0 0
      %1832 = vmatprep.subr.bf16.mxu0 0
      %1833 = vmatpush1.bf16.msra.mxu0 0
      %1834 = vmatprep.subr.bf16.mxu0 0
      %1835 = vmatpush1.bf16.msra.mxu0 0
      %1836 = vmatprep.subr.bf16.mxu0 0
      %1837 = vmatpush1.bf16.msra.mxu0 0
      %1838 = vmatprep.subr.bf16.mxu0 0
      %1839 = vmatpush1.bf16.msra.mxu0 0
      %1840 = vmatprep.subr.bf16.mxu0 0
      %1841 = vmatpush1.bf16.msra.mxu0 0
      %1842 = vmatprep.subr.bf16.mxu0 0
      %1843 = vmatpush1.bf16.msra.mxu0 0
      %1844 = vmatprep.subr.bf16.mxu0 0
      %1845 = vmatpush1.bf16.msra.mxu0 0
      %1846 = vmatprep.subr.bf16.mxu0 0
      %1847 = vmatpush1.bf16.msra.mxu0 0
      %1848 = vmatprep.subr.bf16.mxu0 0
      %1849 = vmatpush1.bf16.msra.mxu0 0
      %1850 = vmatprep.subr.bf16.mxu0 0
      %1851 = vmatpush1.bf16.msra.mxu0 0
      %1852 = vmatprep.subr.bf16.mxu0 0
      %1853 = vmatpush1.bf16.msra.mxu0 0
      %1854 = vmatprep.subr.bf16.mxu0 0
      %1855 = vmatpush1.bf16.msra.mxu0 0
      %1856 = vmatprep.subr.bf16.mxu0 0
      %1857 = vmatpush1.bf16.msra.mxu0 0
      %1858 = vmatprep.mubr.bf16.mxu0 0
      %1859 = vmatmul.mubr.bf16.gmra.mrb[0].mxu0 %v1824
      %v1860 = vpop.f32.mrb[0].mxu0
      %v1861 = vadd.f32 0.0, %v1860
      %v1862 = vpop.f32.mrb[0].mxu0
      %v1863 = vpop.f32.mrb[0].mxu0
      %v1864 = vadd.f32 0.0, %v1863
      %v1865 = vpop.f32.mrb[0].mxu0
      %1866 = vdwg.mxu0
      %v1867 = vadd.f32 %v1702, %v1861
      %v1868 = vadd.f32 %v1703, %v1864
      %1869 = vrot.lane.b32.xlu0 %v821, 88
      %v1870 = vpop.permute.xlu0 %1869
      %1871 = vrot.lane.b32.xlu0 %v824, 88
      %v1872 = vpop.permute.xlu0 %1871
      %1873 = vrot.lane.b32.xlu0 %v821, 24
      %v1874 = vpop.permute.xlu0 %1873
      %1875 = vrot.lane.b32.xlu0 %v824, 24
      %v1876 = vpop.permute.xlu0 %1875
      %v1877 = vsel %vm1044, %v1870, 0
      %v1879 = vsel %vm1044, %v1872, 0
      %v1881 = vsel %vm1044, %v1874, 0
      %v1883 = vsel %vm1044, %v1876, 0
      %1885 = vmatprep.subr.mxu0 0.0
      %1886 = vmatpush1.xpose.msra.mxu0 %v1881
      %1887 = vmatprep.subr.mxu0 0.0
      %1888 = vmatpush1.xpose.msra.mxu0 %v1883
      %1889 = vmatprep.subr.mxu0 0.0
      %1890 = vmatpush1.xpose.msra.mxu0 0.0
      %1891 = vmatprep.subr.mxu0 0.0
      %1892 = vmatpush1.xpose.msra.mxu0 0.0
      %1893 = vmatprep.subr.mxu0 0.0
      %1894 = vmatpush1.xpose.msra.mxu0 0.0
      %1895 = vmatprep.subr.mxu0 0.0
      %1896 = vmatpush1.xpose.msra.mxu0 0.0
      %1897 = vmatprep.subr.mxu0 0.0
      %1898 = vmatpush1.xpose.msra.mxu0 0.0
      %1899 = vmatprep.subr.mxu0 0.0
      %1900 = vmatpush1.xpose.msra.mxu0 0.0
      %1901 = vmatprep.subr.mxu0 0.0
      %1902 = vmatpush1.xpose.msra.mxu0 0.0
      %1903 = vmatprep.subr.mxu0 0.0
      %1904 = vmatpush1.xpose.msra.mxu0 0.0
      %1905 = vmatprep.subr.mxu0 0.0
      %1906 = vmatpush1.xpose.msra.mxu0 0.0
      %1907 = vmatprep.subr.mxu0 0.0
      %1908 = vmatpush1.xpose.msra.mxu0 0.0
      %1909 = vmatprep.subr.mxu0 0.0
      %1910 = vmatpush1.xpose.msra.mxu0 0.0
      %1911 = vmatprep.subr.mxu0 0.0
      %1912 = vmatpush1.xpose.msra.mxu0 0.0
      %1913 = vmatprep.subr.mxu0 0.0
      %1914 = vmatpush1.xpose.msra.mxu0 0.0
      %1915 = vmatprep.subr.mxu0 0.0
      %1916 = vmatpush1.xpose.msra.mxu0 0.0
      %1917 = vmatprep.subr.mxu0 0.0
      %1918 = vmatpush1.xpose.msra.mxu0 0.0
      %1919 = vmatprep.subr.mxu0 0.0
      %1920 = vmatpush1.xpose.msra.mxu0 0.0
      %1921 = vmatprep.subr.mxu0 0.0
      %1922 = vmatpush1.xpose.msra.mxu0 0.0
      %1923 = vmatprep.subr.mxu0 0.0
      %1924 = vmatpush1.xpose.msra.mxu0 0.0
      %1925 = vmatprep.subr.mxu0 0.0
      %1926 = vmatpush1.xpose.msra.mxu0 0.0
      %1927 = vmatprep.subr.mxu0 0.0
      %1928 = vmatpush1.xpose.msra.mxu0 0.0
      %1929 = vmatprep.subr.mxu0 0.0
      %1930 = vmatpush1.xpose.msra.mxu0 0.0
      %1931 = vmatprep.subr.mxu0 0.0
      %1932 = vmatpush1.xpose.msra.mxu0 0.0
      %1933 = vmatprep.subr.mxu0 0.0
      %1934 = vmatpush1.xpose.msra.mxu0 0.0
      %1935 = vmatprep.subr.mxu0 0.0
      %1936 = vmatpush1.xpose.msra.mxu0 0.0
      %1937 = vmatprep.subr.mxu0 0.0
      %1938 = vmatpush1.xpose.msra.mxu0 0.0
      %1939 = vmatprep.subr.mxu0 0.0
      %1940 = vmatpush1.xpose.msra.mxu0 0.0
      %1941 = vmatprep.subr.mxu0 0.0
      %1942 = vmatpush1.xpose.msra.mxu0 0.0
      %1943 = vmatprep.subr.mxu0 0.0
      %1944 = vmatpush1.xpose.msra.mxu0 0.0
      %1945 = vmatprep.subr.mxu0 0.0
      %1946 = vmatpush1.xpose.msra.mxu0 0.0
      %1947 = vmatprep.subr.mxu0 0.0
      %1948 = vmatpush1.xpose.msra.mxu0 0.0
      %1949 = vmatprep.mubr.f32.mxu0 0.0
      %1950 = vmatmul.mubr.f32.gmra.mrb[0].mxu0 %v1877
      %v1951 = vpop.f32.mrb[0].mxu0
      %v1952 = vadd.f32 0.0, %v1951
      %v1953 = vpop.f32.mrb[0].mxu0
      %1954 = vmatprep.mubr.f32.mxu0 0.0
      %1955 = vmatmul.mubr.f32.gmra.mrb[0].mxu0 %v1879
      %v1956 = vpop.f32.mrb[0].mxu0
      %v1957 = vadd.f32 0.0, %v1956
      %v1958 = vpop.f32.mrb[0].mxu0
      %1959 = vdwg.mxu0
      %v1960 = vmul.f32 %v1952, 0.35355338
      %v1961 = vmul.f32 %v1957, 0.35355338
      %v1962 = vadd.f32 %v1960, %v741
      %v1963 = vadd.f32 %v1961, %v742
      %v1964 = vsel %vm1132, %v1962, -inf
      %1965 = vmax.xlane.f32.xlu0 %v1964
      %v1966 = vpop.xlane.xlu0 %1965
      %v1967 = vsel %vm1132, %v1963, -inf
      %1968 = vmax.xlane.f32.xlu0 %v1967
      %v1969 = vpop.xlane.xlu0 %1968
      %v1970 = vsub.f32 %v1962, %v1966
      %v1971 = vsub.f32 %v1963, %v1969
      %v1972 = vmul.f32 %v1970, 1.442695
      %v1973 = vpow.pop %v1972
      %v1974 = vmul.f32 %v1971, 1.442695
      %v1975 = vpow.pop %v1974
      %v1976 = vsel %vm1132, %v1973, 0.0
      %1977 = vadd.xlane.f32.xlu0 %v1976
      %v1978 = vpop.xlane.xlu0 %1977
      %v1979 = vsel %vm1132, %v1975, 0.0
      %1980 = vadd.xlane.f32.xlu0 %v1979
      %v1981 = vpop.xlane.xlu0 %1980
      %v1982 = vrcp.pop %v1978
      %v1983 = vrcp.pop %v1981
      %v1984 = vmul.f32 %v1973, %v1982
      %v1985 = vmul.f32 %v1975, %v1983
      %v1986 = vpack.c.bf16 %v1985, %v1984
      %1988 = vrot.lane.b32.xlu0 %v1822, 64
      %v1989 = vpop.permute.xlu0 %1988
      %v1992 = vsel %vm1132, %v1986, 0
      %1994 = vmatprep.subr.bf16.mxu0 0
      %1995 = vmatpush1.bf16.msra.mxu0 %v1989
      %1996 = vmatprep.subr.bf16.mxu0 0
      %1997 = vmatpush1.bf16.msra.mxu0 0
      %1998 = vmatprep.subr.bf16.mxu0 0
      %1999 = vmatpush1.bf16.msra.mxu0 0
      %2000 = vmatprep.subr.bf16.mxu0 0
      %2001 = vmatpush1.bf16.msra.mxu0 0
      %2002 = vmatprep.subr.bf16.mxu0 0
      %2003 = vmatpush1.bf16.msra.mxu0 0
      %2004 = vmatprep.subr.bf16.mxu0 0
      %2005 = vmatpush1.bf16.msra.mxu0 0
      %2006 = vmatprep.subr.bf16.mxu0 0
      %2007 = vmatpush1.bf16.msra.mxu0 0
      %2008 = vmatprep.subr.bf16.mxu0 0
      %2009 = vmatpush1.bf16.msra.mxu0 0
      %2010 = vmatprep.subr.bf16.mxu0 0
      %2011 = vmatpush1.bf16.msra.mxu0 0
      %2012 = vmatprep.subr.bf16.mxu0 0
      %2013 = vmatpush1.bf16.msra.mxu0 0
      %2014 = vmatprep.subr.bf16.mxu0 0
      %2015 = vmatpush1.bf16.msra.mxu0 0
      %2016 = vmatprep.subr.bf16.mxu0 0
      %2017 = vmatpush1.bf16.msra.mxu0 0
      %2018 = vmatprep.subr.bf16.mxu0 0
      %2019 = vmatpush1.bf16.msra.mxu0 0
      %2020 = vmatprep.subr.bf16.mxu0 0
      %2021 = vmatpush1.bf16.msra.mxu0 0
      %2022 = vmatprep.subr.bf16.mxu0 0
      %2023 = vmatpush1.bf16.msra.mxu0 0
      %2024 = vmatprep.subr.bf16.mxu0 0
      %2025 = vmatpush1.bf16.msra.mxu0 0
      %2026 = vmatprep.mubr.bf16.mxu0 0
      %2027 = vmatmul.mubr.bf16.gmra.mrb[0].mxu0 %v1992
      %v2028 = vpop.f32.mrb[0].mxu0
      %v2029 = vadd.f32 0.0, %v2028
      %v2030 = vpop.f32.mrb[0].mxu0
      %v2031 = vpop.f32.mrb[0].mxu0
      %v2032 = vadd.f32 0.0, %v2031
      %v2033 = vpop.f32.mrb[0].mxu0
      %2034 = vdwg.mxu0
      %v2035 = vadd.f32 %v1867, %v2029
      %v2036 = vadd.f32 %v1868, %v2032
      %2037 = vrot.lane.b32.xlu0 %v821, 80
      %v2038 = vpop.permute.xlu0 %2037
      %2039 = vrot.lane.b32.xlu0 %v824, 80
      %v2040 = vpop.permute.xlu0 %2039
      %2041 = vrot.lane.b32.xlu0 %v821, 16
      %v2042 = vpop.permute.xlu0 %2041
      %2043 = vrot.lane.b32.xlu0 %v824, 16
      %v2044 = vpop.permute.xlu0 %2043
      %v2045 = vsel %vm1044, %v2038, 0
      %v2047 = vsel %vm1044, %v2040, 0
      %v2049 = vsel %vm1044, %v2042, 0
      %v2051 = vsel %vm1044, %v2044, 0
      %2053 = vmatprep.subr.mxu0 0.0
      %2054 = vmatpush1.xpose.msra.mxu0 %v2049
      %2055 = vmatprep.subr.mxu0 0.0
      %2056 = vmatpush1.xpose.msra.mxu0 %v2051
      %2057 = vmatprep.subr.mxu0 0.0
      %2058 = vmatpush1.xpose.msra.mxu0 0.0
      %2059 = vmatprep.subr.mxu0 0.0
      %2060 = vmatpush1.xpose.msra.mxu0 0.0
      %2061 = vmatprep.subr.mxu0 0.0
      %2062 = vmatpush1.xpose.msra.mxu0 0.0
      %2063 = vmatprep.subr.mxu0 0.0
      %2064 = vmatpush1.xpose.msra.mxu0 0.0
      %2065 = vmatprep.subr.mxu0 0.0
      %2066 = vmatpush1.xpose.msra.mxu0 0.0
      %2067 = vmatprep.subr.mxu0 0.0
      %2068 = vmatpush1.xpose.msra.mxu0 0.0
      %2069 = vmatprep.subr.mxu0 0.0
      %2070 = vmatpush1.xpose.msra.mxu0 0.0
      %2071 = vmatprep.subr.mxu0 0.0
      %2072 = vmatpush1.xpose.msra.mxu0 0.0
      %2073 = vmatprep.subr.mxu0 0.0
      %2074 = vmatpush1.xpose.msra.mxu0 0.0
      %2075 = vmatprep.subr.mxu0 0.0
      %2076 = vmatpush1.xpose.msra.mxu0 0.0
      %2077 = vmatprep.subr.mxu0 0.0
      %2078 = vmatpush1.xpose.msra.mxu0 0.0
      %2079 = vmatprep.subr.mxu0 0.0
      %2080 = vmatpush1.xpose.msra.mxu0 0.0
      %2081 = vmatprep.subr.mxu0 0.0
      %2082 = vmatpush1.xpose.msra.mxu0 0.0
      %2083 = vmatprep.subr.mxu0 0.0
      %2084 = vmatpush1.xpose.msra.mxu0 0.0
      %2085 = vmatprep.subr.mxu0 0.0
      %2086 = vmatpush1.xpose.msra.mxu0 0.0
      %2087 = vmatprep.subr.mxu0 0.0
      %2088 = vmatpush1.xpose.msra.mxu0 0.0
      %2089 = vmatprep.subr.mxu0 0.0
      %2090 = vmatpush1.xpose.msra.mxu0 0.0
      %2091 = vmatprep.subr.mxu0 0.0
      %2092 = vmatpush1.xpose.msra.mxu0 0.0
      %2093 = vmatprep.subr.mxu0 0.0
      %2094 = vmatpush1.xpose.msra.mxu0 0.0
      %2095 = vmatprep.subr.mxu0 0.0
      %2096 = vmatpush1.xpose.msra.mxu0 0.0
      %2097 = vmatprep.subr.mxu0 0.0
      %2098 = vmatpush1.xpose.msra.mxu0 0.0
      %2099 = vmatprep.subr.mxu0 0.0
      %2100 = vmatpush1.xpose.msra.mxu0 0.0
      %2101 = vmatprep.subr.mxu0 0.0
      %2102 = vmatpush1.xpose.msra.mxu0 0.0
      %2103 = vmatprep.subr.mxu0 0.0
      %2104 = vmatpush1.xpose.msra.mxu0 0.0
      %2105 = vmatprep.subr.mxu0 0.0
      %2106 = vmatpush1.xpose.msra.mxu0 0.0
      %2107 = vmatprep.subr.mxu0 0.0
      %2108 = vmatpush1.xpose.msra.mxu0 0.0
      %2109 = vmatprep.subr.mxu0 0.0
      %2110 = vmatpush1.xpose.msra.mxu0 0.0
      %2111 = vmatprep.subr.mxu0 0.0
      %2112 = vmatpush1.xpose.msra.mxu0 0.0
      %2113 = vmatprep.subr.mxu0 0.0
      %2114 = vmatpush1.xpose.msra.mxu0 0.0
      %2115 = vmatprep.subr.mxu0 0.0
      %2116 = vmatpush1.xpose.msra.mxu0 0.0
      %2117 = vmatprep.mubr.f32.mxu0 0.0
      %2118 = vmatmul.mubr.f32.gmra.mrb[0].mxu0 %v2045
      %v2119 = vpop.f32.mrb[0].mxu0
      %v2120 = vadd.f32 0.0, %v2119
      %v2121 = vpop.f32.mrb[0].mxu0
      %2122 = vmatprep.mubr.f32.mxu0 0.0
      %2123 = vmatmul.mubr.f32.gmra.mrb[0].mxu0 %v2047
      %v2124 = vpop.f32.mrb[0].mxu0
      %v2125 = vadd.f32 0.0, %v2124
      %v2126 = vpop.f32.mrb[0].mxu0
      %2127 = vdwg.mxu0
      %v2128 = vmul.f32 %v2120, 0.35355338
      %v2129 = vmul.f32 %v2125, 0.35355338
      %v2130 = vadd.f32 %v2128, %v741
      %v2131 = vadd.f32 %v2129, %v742
      %v2132 = vsel %vm1132, %v2130, -inf
      %2133 = vmax.xlane.f32.xlu0 %v2132
      %v2134 = vpop.xlane.xlu0 %2133
      %v2135 = vsel %vm1132, %v2131, -inf
      %2136 = vmax.xlane.f32.xlu0 %v2135
      %v2137 = vpop.xlane.xlu0 %2136
      %v2138 = vsub.f32 %v2130, %v2134
      %v2139 = vsub.f32 %v2131, %v2137
      %v2140 = vmul.f32 %v2138, 1.442695
      %v2141 = vpow.pop %v2140
      %v2142 = vmul.f32 %v2139, 1.442695
      %v2143 = vpow.pop %v2142
      %v2144 = vsel %vm1132, %v2141, 0.0
      %2145 = vadd.xlane.f32.xlu0 %v2144
      %v2146 = vpop.xlane.xlu0 %2145
      %v2147 = vsel %vm1132, %v2143, 0.0
      %2148 = vadd.xlane.f32.xlu0 %v2147
      %v2149 = vpop.xlane.xlu0 %2148
      %v2150 = vrcp.pop %v2146
      %v2151 = vrcp.pop %v2149
      %v2152 = vmul.f32 %v2141, %v2150
      %v2153 = vmul.f32 %v2143, %v2151
      %v2154 = vpack.c.bf16 %v2153, %v2152
      %v2155 = vpack.c.bf16 %v1029, %v1025
      %v2157 = vsel %vm1132, %v2154, 0
      %2159 = vmatprep.subr.bf16.mxu0 0
      %2160 = vmatpush1.bf16.msra.mxu0 %v2155
      %2161 = vmatprep.subr.bf16.mxu0 0
      %2162 = vmatpush1.bf16.msra.mxu0 0
      %2163 = vmatprep.subr.bf16.mxu0 0
      %2164 = vmatpush1.bf16.msra.mxu0 0
      %2165 = vmatprep.subr.bf16.mxu0 0
      %2166 = vmatpush1.bf16.msra.mxu0 0
      %2167 = vmatprep.subr.bf16.mxu0 0
      %2168 = vmatpush1.bf16.msra.mxu0 0
      %2169 = vmatprep.subr.bf16.mxu0 0
      %2170 = vmatpush1.bf16.msra.mxu0 0
      %2171 = vmatprep.subr.bf16.mxu0 0
      %2172 = vmatpush1.bf16.msra.mxu0 0
      %2173 = vmatprep.subr.bf16.mxu0 0
      %2174 = vmatpush1.bf16.msra.mxu0 0
      %2175 = vmatprep.subr.bf16.mxu0 0
      %2176 = vmatpush1.bf16.msra.mxu0 0
      %2177 = vmatprep.subr.bf16.mxu0 0
      %2178 = vmatpush1.bf16.msra.mxu0 0
      %2179 = vmatprep.subr.bf16.mxu0 0
      %2180 = vmatpush1.bf16.msra.mxu0 0
      %2181 = vmatprep.subr.bf16.mxu0 0
      %2182 = vmatpush1.bf16.msra.mxu0 0
      %2183 = vmatprep.subr.bf16.mxu0 0
      %2184 = vmatpush1.bf16.msra.mxu0 0
      %2185 = vmatprep.subr.bf16.mxu0 0
      %2186 = vmatpush1.bf16.msra.mxu0 0
      %2187 = vmatprep.subr.bf16.mxu0 0
      %2188 = vmatpush1.bf16.msra.mxu0 0
      %2189 = vmatprep.subr.bf16.mxu0 0
      %2190 = vmatpush1.bf16.msra.mxu0 0
      %2191 = vmatprep.mubr.bf16.mxu0 0
      %2192 = vmatmul.mubr.bf16.gmra.mrb[0].mxu0 %v2157
      %v2193 = vpop.f32.mrb[0].mxu0
      %v2194 = vadd.f32 0.0, %v2193
      %v2195 = vpop.f32.mrb[0].mxu0
      %v2196 = vpop.f32.mrb[0].mxu0
      %v2197 = vadd.f32 0.0, %v2196
      %v2198 = vpop.f32.mrb[0].mxu0
      %2199 = vdwg.mxu0
      %v2200 = vadd.f32 %v2035, %v2194
      %v2201 = vadd.f32 %v2036, %v2197
      %2202 = vrot.lane.b32.xlu0 %v821, 72
      %v2203 = vpop.permute.xlu0 %2202
      %2204 = vrot.lane.b32.xlu0 %v824, 72
      %v2205 = vpop.permute.xlu0 %2204
      %2206 = vrot.lane.b32.xlu0 %v821, 8
      %v2207 = vpop.permute.xlu0 %2206
      %2208 = vrot.lane.b32.xlu0 %v824, 8
      %v2209 = vpop.permute.xlu0 %2208
      %v2210 = vsel %vm1044, %v2203, 0
      %v2212 = vsel %vm1044, %v2205, 0
      %v2214 = vsel %vm1044, %v2207, 0
      %v2216 = vsel %vm1044, %v2209, 0
      %2218 = vmatprep.subr.mxu0 0.0
      %2219 = vmatpush1.xpose.msra.mxu0 %v2214
      %2220 = vmatprep.subr.mxu0 0.0
      %2221 = vmatpush1.xpose.msra.mxu0 %v2216
      %2222 = vmatprep.subr.mxu0 0.0
      %2223 = vmatpush1.xpose.msra.mxu0 0.0
      %2224 = vmatprep.subr.mxu0 0.0
      %2225 = vmatpush1.xpose.msra.mxu0 0.0
      %2226 = vmatprep.subr.mxu0 0.0
      %2227 = vmatpush1.xpose.msra.mxu0 0.0
      %2228 = vmatprep.subr.mxu0 0.0
      %2229 = vmatpush1.xpose.msra.mxu0 0.0
      %2230 = vmatprep.subr.mxu0 0.0
      %2231 = vmatpush1.xpose.msra.mxu0 0.0
      %2232 = vmatprep.subr.mxu0 0.0
      %2233 = vmatpush1.xpose.msra.mxu0 0.0
      %2234 = vmatprep.subr.mxu0 0.0
      %2235 = vmatpush1.xpose.msra.mxu0 0.0
      %2236 = vmatprep.subr.mxu0 0.0
      %2237 = vmatpush1.xpose.msra.mxu0 0.0
      %2238 = vmatprep.subr.mxu0 0.0
      %2239 = vmatpush1.xpose.msra.mxu0 0.0
      %2240 = vmatprep.subr.mxu0 0.0
      %2241 = vmatpush1.xpose.msra.mxu0 0.0
      %2242 = vmatprep.subr.mxu0 0.0
      %2243 = vmatpush1.xpose.msra.mxu0 0.0
      %2244 = vmatprep.subr.mxu0 0.0
      %2245 = vmatpush1.xpose.msra.mxu0 0.0
      %2246 = vmatprep.subr.mxu0 0.0
      %2247 = vmatpush1.xpose.msra.mxu0 0.0
      %2248 = vmatprep.subr.mxu0 0.0
      %2249 = vmatpush1.xpose.msra.mxu0 0.0
      %2250 = vmatprep.subr.mxu0 0.0
      %2251 = vmatpush1.xpose.msra.mxu0 0.0
      %2252 = vmatprep.subr.mxu0 0.0
      %2253 = vmatpush1.xpose.msra.mxu0 0.0
      %2254 = vmatprep.subr.mxu0 0.0
      %2255 = vmatpush1.xpose.msra.mxu0 0.0
      %2256 = vmatprep.subr.mxu0 0.0
      %2257 = vmatpush1.xpose.msra.mxu0 0.0
      %2258 = vmatprep.subr.mxu0 0.0
      %2259 = vmatpush1.xpose.msra.mxu0 0.0
      %2260 = vmatprep.subr.mxu0 0.0
      %2261 = vmatpush1.xpose.msra.mxu0 0.0
      %2262 = vmatprep.subr.mxu0 0.0
      %2263 = vmatpush1.xpose.msra.mxu0 0.0
      %2264 = vmatprep.subr.mxu0 0.0
      %2265 = vmatpush1.xpose.msra.mxu0 0.0
      %2266 = vmatprep.subr.mxu0 0.0
      %2267 = vmatpush1.xpose.msra.mxu0 0.0
      %2268 = vmatprep.subr.mxu0 0.0
      %2269 = vmatpush1.xpose.msra.mxu0 0.0
      %2270 = vmatprep.subr.mxu0 0.0
      %2271 = vmatpush1.xpose.msra.mxu0 0.0
      %2272 = vmatprep.subr.mxu0 0.0
      %2273 = vmatpush1.xpose.msra.mxu0 0.0
      %2274 = vmatprep.subr.mxu0 0.0
      %2275 = vmatpush1.xpose.msra.mxu0 0.0
      %2276 = vmatprep.subr.mxu0 0.0
      %2277 = vmatpush1.xpose.msra.mxu0 0.0
      %2278 = vmatprep.subr.mxu0 0.0
      %2279 = vmatpush1.xpose.msra.mxu0 0.0
      %2280 = vmatprep.subr.mxu0 0.0
      %2281 = vmatpush1.xpose.msra.mxu0 0.0
      %2282 = vmatprep.mubr.f32.mxu0 0.0
      %2283 = vmatmul.mubr.f32.gmra.mrb[0].mxu0 %v2210
      %v2284 = vpop.f32.mrb[0].mxu0
      %v2285 = vadd.f32 0.0, %v2284
      %v2286 = vpop.f32.mrb[0].mxu0
      %2287 = vmatprep.mubr.f32.mxu0 0.0
      %2288 = vmatmul.mubr.f32.gmra.mrb[0].mxu0 %v2212
      %v2289 = vpop.f32.mrb[0].mxu0
      %v2290 = vadd.f32 0.0, %v2289
      %v2291 = vpop.f32.mrb[0].mxu0
      %2292 = vdwg.mxu0
      %v2293 = vmul.f32 %v2285, 0.35355338
      %v2294 = vmul.f32 %v2290, 0.35355338
      %v2295 = vadd.f32 %v2293, %v741
      %v2296 = vadd.f32 %v2294, %v742
      %v2297 = vsel %vm1132, %v2295, -inf
      %2298 = vmax.xlane.f32.xlu0 %v2297
      %v2299 = vpop.xlane.xlu0 %2298
      %v2300 = vsel %vm1132, %v2296, -inf
      %2301 = vmax.xlane.f32.xlu0 %v2300
      %v2302 = vpop.xlane.xlu0 %2301
      %v2303 = vsub.f32 %v2295, %v2299
      %v2304 = vsub.f32 %v2296, %v2302
      %v2305 = vmul.f32 %v2303, 1.442695
      %v2306 = vpow.pop %v2305
      %v2307 = vmul.f32 %v2304, 1.442695
      %v2308 = vpow.pop %v2307
      %v2309 = vsel %vm1132, %v2306, 0.0
      %2310 = vadd.xlane.f32.xlu0 %v2309
      %v2311 = vpop.xlane.xlu0 %2310
      %v2312 = vsel %vm1132, %v2308, 0.0
      %2313 = vadd.xlane.f32.xlu0 %v2312
      %v2314 = vpop.xlane.xlu0 %2313
      %v2315 = vrcp.pop %v2311
      %v2316 = vrcp.pop %v2314
      %v2317 = vmul.f32 %v2306, %v2315
      %v2318 = vmul.f32 %v2308, %v2316
      %v2319 = vpack.c.bf16 %v2318, %v2317
      %2321 = vrot.lane.b32.xlu0 %v2155, 64
      %v2322 = vpop.permute.xlu0 %2321
      %v2325 = vsel %vm1132, %v2319, 0
      %2327 = vmatprep.subr.bf16.mxu0 0
      %2328 = vmatpush1.bf16.msra.mxu0 %v2322
      %2329 = vmatprep.subr.bf16.mxu0 0
      %2330 = vmatpush1.bf16.msra.mxu0 0
      %2331 = vmatprep.subr.bf16.mxu0 0
      %2332 = vmatpush1.bf16.msra.mxu0 0
      %2333 = vmatprep.subr.bf16.mxu0 0
      %2334 = vmatpush1.bf16.msra.mxu0 0
      %2335 = vmatprep.subr.bf16.mxu0 0
      %2336 = vmatpush1.bf16.msra.mxu0 0
      %2337 = vmatprep.subr.bf16.mxu0 0
      %2338 = vmatpush1.bf16.msra.mxu0 0
      %2339 = vmatprep.subr.bf16.mxu0 0
      %2340 = vmatpush1.bf16.msra.mxu0 0
      %2341 = vmatprep.subr.bf16.mxu0 0
      %2342 = vmatpush1.bf16.msra.mxu0 0
      %2343 = vmatprep.subr.bf16.mxu0 0
      %2344 = vmatpush1.bf16.msra.mxu0 0
      %2345 = vmatprep.subr.bf16.mxu0 0
      %2346 = vmatpush1.bf16.msra.mxu0 0
      %2347 = vmatprep.subr.bf16.mxu0 0
      %2348 = vmatpush1.bf16.msra.mxu0 0
      %2349 = vmatprep.subr.bf16.mxu0 0
      %2350 = vmatpush1.bf16.msra.mxu0 0
      %2351 = vmatprep.subr.bf16.mxu0 0
      %2352 = vmatpush1.bf16.msra.mxu0 0
      %2353 = vmatprep.subr.bf16.mxu0 0
      %2354 = vmatpush1.bf16.msra.mxu0 0
      %2355 = vmatprep.subr.bf16.mxu0 0
      %2356 = vmatpush1.bf16.msra.mxu0 0
      %2357 = vmatprep.subr.bf16.mxu0 0
      %2358 = vmatpush1.bf16.msra.mxu0 0
      %2359 = vmatprep.mubr.bf16.mxu0 0
      %2360 = vmatmul.mubr.bf16.gmra.mrb[0].mxu0 %v2325
      %v2361 = vpop.f32.mrb[0].mxu0
      %v2362 = vadd.f32 0.0, %v2361
      %v2363 = vpop.f32.mrb[0].mxu0
      %v2364 = vpop.f32.mrb[0].mxu0
      %v2365 = vadd.f32 0.0, %v2364
      %v2366 = vpop.f32.mrb[0].mxu0
      %2367 = vdwg.mxu0
      %v2368 = vadd.f32 %v2200, %v2362
      %v2369 = vadd.f32 %v2201, %v2365
      %v2370 = vadd.f32 %v738, %v2368
      %v2371 = vadd.f32 %v739, %v2369
      %v2372 = vld [vmem:[%s701] sm:$0x1]
      %v2373 = vld [vmem:[%s704] sm:$0x1]
      %v2374 = vsel %vm782, %v2370, 0.0
      %2375 = vadd.xlane.f32.xlu0 %v2374
      %v2376 = vpop.xlane.xlu0 %2375
      %v2377 = vsel %vm782, %v2371, 0.0
      %2378 = vadd.xlane.f32.xlu0 %v2377
      %v2379 = vpop.xlane.xlu0 %2378
      %v2380 = vrcp.pop 64.0
      %v2381 = vmul.f32 %v2376, %v2380
      %v2382 = vmul.f32 %v2379, %v2380
      %v2383 = vsub.f32 %v2370, %v2381
      %v2384 = vsub.f32 %v2371, %v2382
      %v2385 = vmul.f32 %v2383, %v2383
      %v2386 = vmul.f32 %v2384, %v2384
      %v2387 = vsel %vm782, %v2385, 0.0
      %2388 = vadd.xlane.f32.xlu0 %v2387
      %v2389 = vpop.xlane.xlu0 %2388
      %v2390 = vsel %vm782, %v2386, 0.0
      %2391 = vadd.xlane.f32.xlu0 %v2390
      %v2392 = vpop.xlane.xlu0 %2391
      %v2393 = vmul.f32 %v2389, %v2380
      %v2394 = vmul.f32 %v2392, %v2380
      %v2395 = vadd.f32 %v2393, 1e-05
      %v2396 = vadd.f32 %v2394, 1e-05
      %v2397 = vrsqrt.pop %v2395
      %v2398 = vrsqrt.pop %v2396
      %v2399 = vmul.f32 %v2383, %v2397
      %v2400 = vmul.f32 %v2384, %v2398
      %v2402 = vlaneseq
      %v2403 = vshrl.u32 %v2402, 7
      %v2404 = vsub.s32 0, %v2403
      %v2405 = vrot.slane %v2372, %v2404
      %v2407 = vmul.f32 %v2399, %v2405
      %v2408 = vmul.f32 %v2400, %v2405
      %v2410 = vlaneseq
      %v2411 = vshrl.u32 %v2410, 7
      %v2412 = vsub.s32 0, %v2411
      %v2413 = vrot.slane %v2373, %v2412
      %v2415 = vadd.f32 %v2407, %v2413
      %v2416 = vadd.f32 %v2408, %v2413
      %v2417 = vpack.c.bf16 %v2416, %v2415
      %v2418 = vld [vmem:[%s709] sm:$0xff]
      %v2419 = vld [vmem:[%s709 + $0x8] sm:$0xff]
      %v2420 = vld [vmem:[%s709 + $0x10] sm:$0xff]
      %v2421 = vld [vmem:[%s709 + $0x18] sm:$0xff]
      %v2422 = vld [vmem:[%s709 + $0x20] sm:$0xff]
      %v2423 = vld [vmem:[%s709 + $0x28] sm:$0xff]
      %v2424 = vld [vmem:[%s709 + $0x30] sm:$0xff]
      %v2425 = vld [vmem:[%s709 + $0x38] sm:$0xff]
      %v2426 = vld [vmem:[%s709 + $0x40] sm:$0xff]
      %v2427 = vld [vmem:[%s709 + $0x48] sm:$0xff]
      %v2428 = vld [vmem:[%s709 + $0x50] sm:$0xff]
      %v2429 = vld [vmem:[%s709 + $0x58] sm:$0xff]
      %v2430 = vld [vmem:[%s709 + $0x60] sm:$0xff]
      %v2431 = vld [vmem:[%s709 + $0x68] sm:$0xff]
      %v2432 = vld [vmem:[%s709 + $0x70] sm:$0xff]
      %v2433 = vld [vmem:[%s709 + $0x78] sm:$0xff]
      %v2434 = vld [vmem:[%s709 + $0x80] sm:$0xff]
      %v2435 = vld [vmem:[%s709 + $0x88] sm:$0xff]
      %v2436 = vld [vmem:[%s709 + $0x90] sm:$0xff]
      %v2437 = vld [vmem:[%s709 + $0x98] sm:$0xff]
      %v2438 = vld [vmem:[%s709 + $0xa0] sm:$0xff]
      %v2439 = vld [vmem:[%s709 + $0xa8] sm:$0xff]
      %v2440 = vld [vmem:[%s709 + $0xb0] sm:$0xff]
      %v2441 = vld [vmem:[%s709 + $0xb8] sm:$0xff]
      %v2442 = vld [vmem:[%s709 + $0xc0] sm:$0xff]
      %v2443 = vld [vmem:[%s709 + $0xc8] sm:$0xff]
      %v2444 = vld [vmem:[%s709 + $0xd0] sm:$0xff]
      %v2445 = vld [vmem:[%s709 + $0xd8] sm:$0xff]
      %v2446 = vld [vmem:[%s709 + $0xe0] sm:$0xff]
      %v2447 = vld [vmem:[%s709 + $0xe8] sm:$0xff]
      %v2448 = vld [vmem:[%s709 + $0xf0] sm:$0xff]
      %v2449 = vld [vmem:[%s709 + $0xf8] sm:$0xff]
      %v2450 = vld [vmem:[%s709 + $0x100] sm:$0xff]
      %v2451 = vld [vmem:[%s709 + $0x108] sm:$0xff]
      %v2452 = vld [vmem:[%s709 + $0x110] sm:$0xff]
      %v2453 = vld [vmem:[%s709 + $0x118] sm:$0xff]
      %v2454 = vld [vmem:[%s709 + $0x120] sm:$0xff]
      %v2455 = vld [vmem:[%s709 + $0x128] sm:$0xff]
      %v2456 = vld [vmem:[%s709 + $0x130] sm:$0xff]
      %v2457 = vld [vmem:[%s709 + $0x138] sm:$0xff]
      %v2458 = vld [vmem:[%s709 + $0x140] sm:$0xff]
      %v2459 = vld [vmem:[%s709 + $0x148] sm:$0xff]
      %v2460 = vld [vmem:[%s709 + $0x150] sm:$0xff]
      %v2461 = vld [vmem:[%s709 + $0x158] sm:$0xff]
      %v2462 = vld [vmem:[%s709 + $0x160] sm:$0xff]
      %v2463 = vld [vmem:[%s709 + $0x168] sm:$0xff]
      %v2464 = vld [vmem:[%s709 + $0x170] sm:$0xff]
      %v2465 = vld [vmem:[%s709 + $0x178] sm:$0xff]
      %v2466 = vld [vmem:[%s709 + $0x180] sm:$0xff]
      %v2467 = vld [vmem:[%s709 + $0x188] sm:$0xff]
      %v2468 = vld [vmem:[%s709 + $0x190] sm:$0xff]
      %v2469 = vld [vmem:[%s709 + $0x198] sm:$0xff]
      %v2470 = vld [vmem:[%s709 + $0x1a0] sm:$0xff]
      %v2471 = vld [vmem:[%s709 + $0x1a8] sm:$0xff]
      %v2472 = vld [vmem:[%s709 + $0x1b0] sm:$0xff]
      %v2473 = vld [vmem:[%s709 + $0x1b8] sm:$0xff]
      %v2474 = vld [vmem:[%s709 + $0x1c0] sm:$0xff]
      %v2475 = vld [vmem:[%s709 + $0x1c8] sm:$0xff]
      %v2476 = vld [vmem:[%s709 + $0x1d0] sm:$0xff]
      %v2477 = vld [vmem:[%s709 + $0x1d8] sm:$0xff]
      %v2478 = vld [vmem:[%s709 + $0x1e0] sm:$0xff]
      %v2479 = vld [vmem:[%s709 + $0x1e8] sm:$0xff]
      %v2480 = vld [vmem:[%s709 + $0x1f0] sm:$0xff]
      %v2481 = vld [vmem:[%s709 + $0x1f8] sm:$0xff]
      %v2482 = vld [vmem:[%s713] sm:$0xff]
      %v2483 = vld [vmem:[%s713 + $0x8] sm:$0xff]
      %v2486 = vlaneseq
      %v2487 = vshrl.u32 %v2486, 7
      %v2488 = vsub.s32 0, %v2487
      %v2489 = vrot.slane %v2482, %v2488
      %v2490 = vlaneseq
      %v2491 = vshrl.u32 %v2490, 7
      %v2492 = vsub.s32 1, %v2491
      %v2493 = vrot.slane %v2482, %v2492
      %v2494 = vlaneseq
      %v2495 = vshrl.u32 %v2494, 7
      %v2496 = vsub.s32 2, %v2495
      %v2497 = vrot.slane %v2482, %v2496
      %v2498 = vlaneseq
      %v2499 = vshrl.u32 %v2498, 7
      %v2500 = vsub.s32 3, %v2499
      %v2501 = vrot.slane %v2482, %v2500
      %v2502 = vlaneseq
      %v2503 = vshrl.u32 %v2502, 7
      %v2504 = vsub.s32 4, %v2503
      %v2505 = vrot.slane %v2482, %v2504
      %v2506 = vlaneseq
      %v2507 = vshrl.u32 %v2506, 7
      %v2508 = vsub.s32 5, %v2507
      %v2509 = vrot.slane %v2482, %v2508
      %v2510 = vlaneseq
      %v2511 = vshrl.u32 %v2510, 7
      %v2512 = vsub.s32 6, %v2511
      %v2513 = vrot.slane %v2482, %v2512
      %v2514 = vlaneseq
      %v2515 = vshrl.u32 %v2514, 7
      %v2516 = vsub.s32 7, %v2515
      %v2517 = vrot.slane %v2482, %v2516
      %v2518 = vlaneseq
      %v2519 = vshrl.u32 %v2518, 7
      %v2520 = vsub.s32 0, %v2519
      %v2521 = vrot.slane %v2483, %v2520
      %v2522 = vlaneseq
      %v2523 = vshrl.u32 %v2522, 7
      %v2524 = vsub.s32 1, %v2523
      %v2525 = vrot.slane %v2483, %v2524
      %v2526 = vlaneseq
      %v2527 = vshrl.u32 %v2526, 7
      %v2528 = vsub.s32 2, %v2527
      %v2529 = vrot.slane %v2483, %v2528
      %v2530 = vlaneseq
      %v2531 = vshrl.u32 %v2530, 7
      %v2532 = vsub.s32 3, %v2531
      %v2533 = vrot.slane %v2483, %v2532
      %v2534 = vlaneseq
      %v2535 = vshrl.u32 %v2534, 7
      %v2536 = vsub.s32 4, %v2535
      %v2537 = vrot.slane %v2483, %v2536
      %v2538 = vlaneseq
      %v2539 = vshrl.u32 %v2538, 7
      %v2540 = vsub.s32 5, %v2539
      %v2541 = vrot.slane %v2483, %v2540
      %v2542 = vlaneseq
      %v2543 = vshrl.u32 %v2542, 7
      %v2544 = vsub.s32 6, %v2543
      %v2545 = vrot.slane %v2483, %v2544
      %v2546 = vlaneseq
      %v2547 = vshrl.u32 %v2546, 7
      %v2548 = vsub.s32 7, %v2547
      %v2549 = vrot.slane %v2483, %v2548
      %v2630 = vunpack.c.l.b16 %v2418
      %v2631 = vunpack.c.h.b16 %v2418
      %v2632 = vunpack.c.l.b16 %v2419
      %v2633 = vunpack.c.h.b16 %v2419
      %v2634 = vunpack.c.l.b16 %v2420
      %v2635 = vunpack.c.h.b16 %v2420
      %v2636 = vunpack.c.l.b16 %v2421
      %v2637 = vunpack.c.h.b16 %v2421
      %v2638 = vunpack.c.l.b16 %v2422
      %v2639 = vunpack.c.h.b16 %v2422
      %v2640 = vunpack.c.l.b16 %v2423
      %v2641 = vunpack.c.h.b16 %v2423
      %v2642 = vunpack.c.l.b16 %v2424
      %v2643 = vunpack.c.h.b16 %v2424
      %v2644 = vunpack.c.l.b16 %v2425
      %v2645 = vunpack.c.h.b16 %v2425
      %v2646 = vunpack.c.l.b16 %v2426
      %v2647 = vunpack.c.h.b16 %v2426
      %v2648 = vunpack.c.l.b16 %v2427
      %v2649 = vunpack.c.h.b16 %v2427
      %v2650 = vunpack.c.l.b16 %v2428
      %v2651 = vunpack.c.h.b16 %v2428
      %v2652 = vunpack.c.l.b16 %v2429
      %v2653 = vunpack.c.h.b16 %v2429
      %v2654 = vunpack.c.l.b16 %v2430
      %v2655 = vunpack.c.h.b16 %v2430
      %v2656 = vunpack.c.l.b16 %v2431
      %v2657 = vunpack.c.h.b16 %v2431
      %v2658 = vunpack.c.l.b16 %v2432
      %v2659 = vunpack.c.h.b16 %v2432
      %v2660 = vunpack.c.l.b16 %v2433
      %v2661 = vunpack.c.h.b16 %v2433
      %v2662 = vunpack.c.l.b16 %v2434
      %v2663 = vunpack.c.h.b16 %v2434
      %v2664 = vunpack.c.l.b16 %v2435
      %v2665 = vunpack.c.h.b16 %v2435
      %v2666 = vunpack.c.l.b16 %v2436
      %v2667 = vunpack.c.h.b16 %v2436
      %v2668 = vunpack.c.l.b16 %v2437
      %v2669 = vunpack.c.h.b16 %v2437
      %v2670 = vunpack.c.l.b16 %v2438
      %v2671 = vunpack.c.h.b16 %v2438
      %v2672 = vunpack.c.l.b16 %v2439
      %v2673 = vunpack.c.h.b16 %v2439
      %v2674 = vunpack.c.l.b16 %v2440
      %v2675 = vunpack.c.h.b16 %v2440
      %v2676 = vunpack.c.l.b16 %v2441
      %v2677 = vunpack.c.h.b16 %v2441
      %v2678 = vunpack.c.l.b16 %v2442
      %v2679 = vunpack.c.h.b16 %v2442
      %v2680 = vunpack.c.l.b16 %v2443
      %v2681 = vunpack.c.h.b16 %v2443
      %v2682 = vunpack.c.l.b16 %v2444
      %v2683 = vunpack.c.h.b16 %v2444
      %v2684 = vunpack.c.l.b16 %v2445
      %v2685 = vunpack.c.h.b16 %v2445
      %v2686 = vunpack.c.l.b16 %v2446
      %v2687 = vunpack.c.h.b16 %v2446
      %v2688 = vunpack.c.l.b16 %v2447
      %v2689 = vunpack.c.h.b16 %v2447
      %v2690 = vunpack.c.l.b16 %v2448
      %v2691 = vunpack.c.h.b16 %v2448
      %v2692 = vunpack.c.l.b16 %v2449
      %v2693 = vunpack.c.h.b16 %v2449
      %v2694 = vunpack.c.l.b16 %v2450
      %v2695 = vunpack.c.h.b16 %v2450
      %v2696 = vunpack.c.l.b16 %v2451
      %v2697 = vunpack.c.h.b16 %v2451
      %v2698 = vunpack.c.l.b16 %v2452
      %v2699 = vunpack.c.h.b16 %v2452
      %v2700 = vunpack.c.l.b16 %v2453
      %v2701 = vunpack.c.h.b16 %v2453
      %v2702 = vunpack.c.l.b16 %v2454
      %v2703 = vunpack.c.h.b16 %v2454
      %v2704 = vunpack.c.l.b16 %v2455
      %v2705 = vunpack.c.h.b16 %v2455
      %v2706 = vunpack.c.l.b16 %v2456
      %v2707 = vunpack.c.h.b16 %v2456
      %v2708 = vunpack.c.l.b16 %v2457
      %v2709 = vunpack.c.h.b16 %v2457
      %v2710 = vunpack.c.l.b16 %v2458
      %v2711 = vunpack.c.h.b16 %v2458
      %v2712 = vunpack.c.l.b16 %v2459
      %v2713 = vunpack.c.h.b16 %v2459
      %v2714 = vunpack.c.l.b16 %v2460
      %v2715 = vunpack.c.h.b16 %v2460
      %v2716 = vunpack.c.l.b16 %v2461
      %v2717 = vunpack.c.h.b16 %v2461
      %v2718 = vunpack.c.l.b16 %v2462
      %v2719 = vunpack.c.h.b16 %v2462
      %v2720 = vunpack.c.l.b16 %v2463
      %v2721 = vunpack.c.h.b16 %v2463
      %v2722 = vunpack.c.l.b16 %v2464
      %v2723 = vunpack.c.h.b16 %v2464
      %v2724 = vunpack.c.l.b16 %v2465
      %v2725 = vunpack.c.h.b16 %v2465
      %v2726 = vunpack.c.l.b16 %v2466
      %v2727 = vunpack.c.h.b16 %v2466
      %v2728 = vunpack.c.l.b16 %v2467
      %v2729 = vunpack.c.h.b16 %v2467
      %v2730 = vunpack.c.l.b16 %v2468
      %v2731 = vunpack.c.h.b16 %v2468
      %v2732 = vunpack.c.l.b16 %v2469
      %v2733 = vunpack.c.h.b16 %v2469
      %v2734 = vunpack.c.l.b16 %v2470
      %v2735 = vunpack.c.h.b16 %v2470
      %v2736 = vunpack.c.l.b16 %v2471
      %v2737 = vunpack.c.h.b16 %v2471
      %v2738 = vunpack.c.l.b16 %v2472
      %v2739 = vunpack.c.h.b16 %v2472
      %v2740 = vunpack.c.l.b16 %v2473
      %v2741 = vunpack.c.h.b16 %v2473
      %v2742 = vunpack.c.l.b16 %v2474
      %v2743 = vunpack.c.h.b16 %v2474
      %v2744 = vunpack.c.l.b16 %v2475
      %v2745 = vunpack.c.h.b16 %v2475
      %v2746 = vunpack.c.l.b16 %v2476
      %v2747 = vunpack.c.h.b16 %v2476
      %v2748 = vunpack.c.l.b16 %v2477
      %v2749 = vunpack.c.h.b16 %v2477
      %v2750 = vunpack.c.l.b16 %v2478
      %v2751 = vunpack.c.h.b16 %v2478
      %v2752 = vunpack.c.l.b16 %v2479
      %v2753 = vunpack.c.h.b16 %v2479
      %v2754 = vunpack.c.l.b16 %v2480
      %v2755 = vunpack.c.h.b16 %v2480
      %v2756 = vunpack.c.l.b16 %v2481
      %v2757 = vunpack.c.h.b16 %v2481
      %v2758 = vpack.c.b16 %v2646, %v2630
      %v2759 = vpack.c.b16 %v2647, %v2631
      %v2760 = vpack.c.b16 %v2648, %v2632
      %v2761 = vpack.c.b16 %v2649, %v2633
      %v2762 = vpack.c.b16 %v2650, %v2634
      %v2763 = vpack.c.b16 %v2651, %v2635
      %v2764 = vpack.c.b16 %v2652, %v2636
      %v2765 = vpack.c.b16 %v2653, %v2637
      %v2766 = vpack.c.b16 %v2654, %v2638
      %v2767 = vpack.c.b16 %v2655, %v2639
      %v2768 = vpack.c.b16 %v2656, %v2640
      %v2769 = vpack.c.b16 %v2657, %v2641
      %v2770 = vpack.c.b16 %v2658, %v2642
      %v2771 = vpack.c.b16 %v2659, %v2643
      %v2772 = vpack.c.b16 %v2660, %v2644
      %v2773 = vpack.c.b16 %v2661, %v2645
      %v2774 = vpack.c.b16 %v2678, %v2662
      %v2775 = vpack.c.b16 %v2679, %v2663
      %v2776 = vpack.c.b16 %v2680, %v2664
      %v2777 = vpack.c.b16 %v2681, %v2665
      %v2778 = vpack.c.b16 %v2682, %v2666
      %v2779 = vpack.c.b16 %v2683, %v2667
      %v2780 = vpack.c.b16 %v2684, %v2668
      %v2781 = vpack.c.b16 %v2685, %v2669
      %v2782 = vpack.c.b16 %v2686, %v2670
      %v2783 = vpack.c.b16 %v2687, %v2671
      %v2784 = vpack.c.b16 %v2688, %v2672
      %v2785 = vpack.c.b16 %v2689, %v2673
      %v2786 = vpack.c.b16 %v2690, %v2674
      %v2787 = vpack.c.b16 %v2691, %v2675
      %v2788 = vpack.c.b16 %v2692, %v2676
      %v2789 = vpack.c.b16 %v2693, %v2677
      %v2790 = vpack.c.b16 %v2710, %v2694
      %v2791 = vpack.c.b16 %v2711, %v2695
      %v2792 = vpack.c.b16 %v2712, %v2696
      %v2793 = vpack.c.b16 %v2713, %v2697
      %v2794 = vpack.c.b16 %v2714, %v2698
      %v2795 = vpack.c.b16 %v2715, %v2699
      %v2796 = vpack.c.b16 %v2716, %v2700
      %v2797 = vpack.c.b16 %v2717, %v2701
      %v2798 = vpack.c.b16 %v2718, %v2702
      %v2799 = vpack.c.b16 %v2719, %v2703
      %v2800 = vpack.c.b16 %v2720, %v2704
      %v2801 = vpack.c.b16 %v2721, %v2705
      %v2802 = vpack.c.b16 %v2722, %v2706
      %v2803 = vpack.c.b16 %v2723, %v2707
      %v2804 = vpack.c.b16 %v2724, %v2708
      %v2805 = vpack.c.b16 %v2725, %v2709
      %v2806 = vpack.c.b16 %v2742, %v2726
      %v2807 = vpack.c.b16 %v2743, %v2727
      %v2808 = vpack.c.b16 %v2744, %v2728
      %v2809 = vpack.c.b16 %v2745, %v2729
      %v2810 = vpack.c.b16 %v2746, %v2730
      %v2811 = vpack.c.b16 %v2747, %v2731
      %v2812 = vpack.c.b16 %v2748, %v2732
      %v2813 = vpack.c.b16 %v2749, %v2733
      %v2814 = vpack.c.b16 %v2750, %v2734
      %v2815 = vpack.c.b16 %v2751, %v2735
      %v2816 = vpack.c.b16 %v2752, %v2736
      %v2817 = vpack.c.b16 %v2753, %v2737
      %v2818 = vpack.c.b16 %v2754, %v2738
      %v2819 = vpack.c.b16 %v2755, %v2739
      %v2820 = vpack.c.b16 %v2756, %v2740
      %v2821 = vpack.c.b16 %v2757, %v2741
      %v2887 = vsel %vm782, %v2417, 0
      %2889 = vmatprep.subr.bf16.mxu0 %v2759
      %2890 = vmatpush1.bf16.msra.mxu0 %v2758
      %2891 = vmatprep.subr.bf16.mxu0 %v2775
      %2892 = vmatpush1.bf16.msra.mxu0 %v2774
      %2893 = vmatprep.subr.bf16.mxu0 %v2791
      %2894 = vmatpush1.bf16.msra.mxu0 %v2790
      %2895 = vmatprep.subr.bf16.mxu0 %v2807
      %2896 = vmatpush1.bf16.msra.mxu0 %v2806
      %2897 = vmatprep.subr.bf16.mxu0 0
      %2898 = vmatpush1.bf16.msra.mxu0 0
      %2899 = vmatprep.subr.bf16.mxu0 0
      %2900 = vmatpush1.bf16.msra.mxu0 0
      %2901 = vmatprep.subr.bf16.mxu0 0
      %2902 = vmatpush1.bf16.msra.mxu0 0
      %2903 = vmatprep.subr.bf16.mxu0 0
      %2904 = vmatpush1.bf16.msra.mxu0 0
      %2905 = vmatprep.subr.bf16.mxu0 0
      %2906 = vmatpush1.bf16.msra.mxu0 0
      %2907 = vmatprep.subr.bf16.mxu0 0
      %2908 = vmatpush1.bf16.msra.mxu0 0
      %2909 = vmatprep.subr.bf16.mxu0 0
      %2910 = vmatpush1.bf16.msra.mxu0 0
      %2911 = vmatprep.subr.bf16.mxu0 0
      %2912 = vmatpush1.bf16.msra.mxu0 0
      %2913 = vmatprep.subr.bf16.mxu0 0
      %2914 = vmatpush1.bf16.msra.mxu0 0
      %2915 = vmatprep.subr.bf16.mxu0 0
      %2916 = vmatpush1.bf16.msra.mxu0 0
      %2917 = vmatprep.subr.bf16.mxu0 0
      %2918 = vmatpush1.bf16.msra.mxu0 0
      %2919 = vmatprep.subr.bf16.mxu0 0
      %2920 = vmatpush1.bf16.msra.mxu0 0
      %2921 = vmatprep.mubr.bf16.mxu0 0
      %2922 = vmatmul.mubr.bf16.gmra.mrb[0].mxu0 %v2887
      %v2923 = vpop.f32.mrb[0].mxu0
      %v2924 = vadd.f32 %v2489, %v2923
      %v2925 = vpop.f32.mrb[0].mxu0
      %v2926 = vadd.f32 %v2493, %v2925
      %v2927 = vpop.f32.mrb[0].mxu0
      %v2928 = vadd.f32 %v2489, %v2927
      %v2929 = vpop.f32.mrb[0].mxu0
      %v2930 = vadd.f32 %v2493, %v2929
      %2931 = vdwg.mxu0
      %2932 = vmatprep.subr.bf16.mxu0 %v2761
      %2933 = vmatpush1.bf16.msra.mxu0 %v2760
      %2934 = vmatprep.subr.bf16.mxu0 %v2777
      %2935 = vmatpush1.bf16.msra.mxu0 %v2776
      %2936 = vmatprep.subr.bf16.mxu0 %v2793
      %2937 = vmatpush1.bf16.msra.mxu0 %v2792
      %2938 = vmatprep.subr.bf16.mxu0 %v2809
      %2939 = vmatpush1.bf16.msra.mxu0 %v2808
      %2940 = vmatprep.subr.bf16.mxu0 0
      %2941 = vmatpush1.bf16.msra.mxu0 0
      %2942 = vmatprep.subr.bf16.mxu0 0
      %2943 = vmatpush1.bf16.msra.mxu0 0
      %2944 = vmatprep.subr.bf16.mxu0 0
      %2945 = vmatpush1.bf16.msra.mxu0 0
      %2946 = vmatprep.subr.bf16.mxu0 0
      %2947 = vmatpush1.bf16.msra.mxu0 0
      %2948 = vmatprep.subr.bf16.mxu0 0
      %2949 = vmatpush1.bf16.msra.mxu0 0
      %2950 = vmatprep.subr.bf16.mxu0 0
      %2951 = vmatpush1.bf16.msra.mxu0 0
      %2952 = vmatprep.subr.bf16.mxu0 0
      %2953 = vmatpush1.bf16.msra.mxu0 0
      %2954 = vmatprep.subr.bf16.mxu0 0
      %2955 = vmatpush1.bf16.msra.mxu0 0
      %2956 = vmatprep.subr.bf16.mxu0 0
      %2957 = vmatpush1.bf16.msra.mxu0 0
      %2958 = vmatprep.subr.bf16.mxu0 0
      %2959 = vmatpush1.bf16.msra.mxu0 0
      %2960 = vmatprep.subr.bf16.mxu0 0
      %2961 = vmatpush1.bf16.msra.mxu0 0
      %2962 = vmatprep.subr.bf16.mxu0 0
      %2963 = vmatpush1.bf16.msra.mxu0 0
      %2964 = vmatprep.mubr.bf16.mxu0 0
      %2965 = vmatmul.mubr.bf16.gmra.mrb[0].mxu0 %v2887
      %v2966 = vpop.f32.mrb[0].mxu0
      %v2967 = vadd.f32 %v2497, %v2966
      %v2968 = vpop.f32.mrb[0].mxu0
      %v2969 = vadd.f32 %v2501, %v2968
      %v2970 = vpop.f32.mrb[0].mxu0
      %v2971 = vadd.f32 %v2497, %v2970
      %v2972 = vpop.f32.mrb[0].mxu0
      %v2973 = vadd.f32 %v2501, %v2972
      %2974 = vdwg.mxu0
      %2975 = vmatprep.subr.bf16.mxu0 %v2763
      %2976 = vmatpush1.bf16.msra.mxu0 %v2762
      %2977 = vmatprep.subr.bf16.mxu0 %v2779
      %2978 = vmatpush1.bf16.msra.mxu0 %v2778
      %2979 = vmatprep.subr.bf16.mxu0 %v2795
      %2980 = vmatpush1.bf16.msra.mxu0 %v2794
      %2981 = vmatprep.subr.bf16.mxu0 %v2811
      %2982 = vmatpush1.bf16.msra.mxu0 %v2810
      %2983 = vmatprep.subr.bf16.mxu0 0
      %2984 = vmatpush1.bf16.msra.mxu0 0
      %2985 = vmatprep.subr.bf16.mxu0 0
      %2986 = vmatpush1.bf16.msra.mxu0 0
      %2987 = vmatprep.subr.bf16.mxu0 0
      %2988 = vmatpush1.bf16.msra.mxu0 0
      %2989 = vmatprep.subr.bf16.mxu0 0
      %2990 = vmatpush1.bf16.msra.mxu0 0
      %2991 = vmatprep.subr.bf16.mxu0 0
      %2992 = vmatpush1.bf16.msra.mxu0 0
      %2993 = vmatprep.subr.bf16.mxu0 0
      %2994 = vmatpush1.bf16.msra.mxu0 0
      %2995 = vmatprep.subr.bf16.mxu0 0
      %2996 = vmatpush1.bf16.msra.mxu0 0
      %2997 = vmatprep.subr.bf16.mxu0 0
      %2998 = vmatpush1.bf16.msra.mxu0 0
      %2999 = vmatprep.subr.bf16.mxu0 0
      %3000 = vmatpush1.bf16.msra.mxu0 0
      %3001 = vmatprep.subr.bf16.mxu0 0
      %3002 = vmatpush1.bf16.msra.mxu0 0
      %3003 = vmatprep.subr.bf16.mxu0 0
      %3004 = vmatpush1.bf16.msra.mxu0 0
      %3005 = vmatprep.subr.bf16.mxu0 0
      %3006 = vmatpush1.bf16.msra.mxu0 0
      %3007 = vmatprep.mubr.bf16.mxu0 0
      %3008 = vmatmul.mubr.bf16.gmra.mrb[0].mxu0 %v2887
      %v3009 = vpop.f32.mrb[0].mxu0
      %v3010 = vadd.f32 %v2505, %v3009
      %v3011 = vpop.f32.mrb[0].mxu0
      %v3012 = vadd.f32 %v2509, %v3011
      %v3013 = vpop.f32.mrb[0].mxu0
      %v3014 = vadd.f32 %v2505, %v3013
      %v3015 = vpop.f32.mrb[0].mxu0
      %v3016 = vadd.f32 %v2509, %v3015
      %3017 = vdwg.mxu0
      %3018 = vmatprep.subr.bf16.mxu0 %v2765
      %3019 = vmatpush1.bf16.msra.mxu0 %v2764
      %3020 = vmatprep.subr.bf16.mxu0 %v2781
      %3021 = vmatpush1.bf16.msra.mxu0 %v2780
      %3022 = vmatprep.subr.bf16.mxu0 %v2797
      %3023 = vmatpush1.bf16.msra.mxu0 %v2796
      %3024 = vmatprep.subr.bf16.mxu0 %v2813
      %3025 = vmatpush1.bf16.msra.mxu0 %v2812
      %3026 = vmatprep.subr.bf16.mxu0 0
      %3027 = vmatpush1.bf16.msra.mxu0 0
      %3028 = vmatprep.subr.bf16.mxu0 0
      %3029 = vmatpush1.bf16.msra.mxu0 0
      %3030 = vmatprep.subr.bf16.mxu0 0
      %3031 = vmatpush1.bf16.msra.mxu0 0
      %3032 = vmatprep.subr.bf16.mxu0 0
      %3033 = vmatpush1.bf16.msra.mxu0 0
      %3034 = vmatprep.subr.bf16.mxu0 0
      %3035 = vmatpush1.bf16.msra.mxu0 0
      %3036 = vmatprep.subr.bf16.mxu0 0
      %3037 = vmatpush1.bf16.msra.mxu0 0
      %3038 = vmatprep.subr.bf16.mxu0 0
      %3039 = vmatpush1.bf16.msra.mxu0 0
      %3040 = vmatprep.subr.bf16.mxu0 0
      %3041 = vmatpush1.bf16.msra.mxu0 0
      %3042 = vmatprep.subr.bf16.mxu0 0
      %3043 = vmatpush1.bf16.msra.mxu0 0
      %3044 = vmatprep.subr.bf16.mxu0 0
      %3045 = vmatpush1.bf16.msra.mxu0 0
      %3046 = vmatprep.subr.bf16.mxu0 0
      %3047 = vmatpush1.bf16.msra.mxu0 0
      %3048 = vmatprep.subr.bf16.mxu0 0
      %3049 = vmatpush1.bf16.msra.mxu0 0
      %3050 = vmatprep.mubr.bf16.mxu0 0
      %3051 = vmatmul.mubr.bf16.gmra.mrb[0].mxu0 %v2887
      %v3052 = vpop.f32.mrb[0].mxu0
      %v3053 = vadd.f32 %v2513, %v3052
      %v3054 = vpop.f32.mrb[0].mxu0
      %v3055 = vadd.f32 %v2517, %v3054
      %v3056 = vpop.f32.mrb[0].mxu0
      %v3057 = vadd.f32 %v2513, %v3056
      %v3058 = vpop.f32.mrb[0].mxu0
      %v3059 = vadd.f32 %v2517, %v3058
      %3060 = vdwg.mxu0
      %3061 = vmatprep.subr.bf16.mxu0 %v2767
      %3062 = vmatpush1.bf16.msra.mxu0 %v2766
      %3063 = vmatprep.subr.bf16.mxu0 %v2783
      %3064 = vmatpush1.bf16.msra.mxu0 %v2782
      %3065 = vmatprep.subr.bf16.mxu0 %v2799
      %3066 = vmatpush1.bf16.msra.mxu0 %v2798
      %3067 = vmatprep.subr.bf16.mxu0 %v2815
      %3068 = vmatpush1.bf16.msra.mxu0 %v2814
      %3069 = vmatprep.subr.bf16.mxu0 0
      %3070 = vmatpush1.bf16.msra.mxu0 0
      %3071 = vmatprep.subr.bf16.mxu0 0
      %3072 = vmatpush1.bf16.msra.mxu0 0
      %3073 = vmatprep.subr.bf16.mxu0 0
      %3074 = vmatpush1.bf16.msra.mxu0 0
      %3075 = vmatprep.subr.bf16.mxu0 0
      %3076 = vmatpush1.bf16.msra.mxu0 0
      %3077 = vmatprep.subr.bf16.mxu0 0
      %3078 = vmatpush1.bf16.msra.mxu0 0
      %3079 = vmatprep.subr.bf16.mxu0 0
      %3080 = vmatpush1.bf16.msra.mxu0 0
      %3081 = vmatprep.subr.bf16.mxu0 0
      %3082 = vmatpush1.bf16.msra.mxu0 0
      %3083 = vmatprep.subr.bf16.mxu0 0
      %3084 = vmatpush1.bf16.msra.mxu0 0
      %3085 = vmatprep.subr.bf16.mxu0 0
      %3086 = vmatpush1.bf16.msra.mxu0 0
      %3087 = vmatprep.subr.bf16.mxu0 0
      %3088 = vmatpush1.bf16.msra.mxu0 0
      %3089 = vmatprep.subr.bf16.mxu0 0
      %3090 = vmatpush1.bf16.msra.mxu0 0
      %3091 = vmatprep.subr.bf16.mxu0 0
      %3092 = vmatpush1.bf16.msra.mxu0 0
      %3093 = vmatprep.mubr.bf16.mxu0 0
      %3094 = vmatmul.mubr.bf16.gmra.mrb[0].mxu0 %v2887
      %v3095 = vpop.f32.mrb[0].mxu0
      %v3096 = vadd.f32 %v2521, %v3095
      %v3097 = vpop.f32.mrb[0].mxu0
      %v3098 = vadd.f32 %v2525, %v3097
      %v3099 = vpop.f32.mrb[0].mxu0
      %v3100 = vadd.f32 %v2521, %v3099
      %v3101 = vpop.f32.mrb[0].mxu0
      %v3102 = vadd.f32 %v2525, %v3101
      %3103 = vdwg.mxu0
      %3104 = vmatprep.subr.bf16.mxu0 %v2769
      %3105 = vmatpush1.bf16.msra.mxu0 %v2768
      %3106 = vmatprep.subr.bf16.mxu0 %v2785
      %3107 = vmatpush1.bf16.msra.mxu0 %v2784
      %3108 = vmatprep.subr.bf16.mxu0 %v2801
      %3109 = vmatpush1.bf16.msra.mxu0 %v2800
      %3110 = vmatprep.subr.bf16.mxu0 %v2817
      %3111 = vmatpush1.bf16.msra.mxu0 %v2816
      %3112 = vmatprep.subr.bf16.mxu0 0
      %3113 = vmatpush1.bf16.msra.mxu0 0
      %3114 = vmatprep.subr.bf16.mxu0 0
      %3115 = vmatpush1.bf16.msra.mxu0 0
      %3116 = vmatprep.subr.bf16.mxu0 0
      %3117 = vmatpush1.bf16.msra.mxu0 0
      %3118 = vmatprep.subr.bf16.mxu0 0
      %3119 = vmatpush1.bf16.msra.mxu0 0
      %3120 = vmatprep.subr.bf16.mxu0 0
      %3121 = vmatpush1.bf16.msra.mxu0 0
      %3122 = vmatprep.subr.bf16.mxu0 0
      %3123 = vmatpush1.bf16.msra.mxu0 0
      %3124 = vmatprep.subr.bf16.mxu0 0
      %3125 = vmatpush1.bf16.msra.mxu0 0
      %3126 = vmatprep.subr.bf16.mxu0 0
      %3127 = vmatpush1.bf16.msra.mxu0 0
      %3128 = vmatprep.subr.bf16.mxu0 0
      %3129 = vmatpush1.bf16.msra.mxu0 0
      %3130 = vmatprep.subr.bf16.mxu0 0
      %3131 = vmatpush1.bf16.msra.mxu0 0
      %3132 = vmatprep.subr.bf16.mxu0 0
      %3133 = vmatpush1.bf16.msra.mxu0 0
      %3134 = vmatprep.subr.bf16.mxu0 0
      %3135 = vmatpush1.bf16.msra.mxu0 0
      %3136 = vmatprep.mubr.bf16.mxu0 0
      %3137 = vmatmul.mubr.bf16.gmra.mrb[0].mxu0 %v2887
      %v3138 = vpop.f32.mrb[0].mxu0
      %v3139 = vadd.f32 %v2529, %v3138
      %v3140 = vpop.f32.mrb[0].mxu0
      %v3141 = vadd.f32 %v2533, %v3140
      %v3142 = vpop.f32.mrb[0].mxu0
      %v3143 = vadd.f32 %v2529, %v3142
      %v3144 = vpop.f32.mrb[0].mxu0
      %v3145 = vadd.f32 %v2533, %v3144
      %3146 = vdwg.mxu0
      %3147 = vmatprep.subr.bf16.mxu0 %v2771
      %3148 = vmatpush1.bf16.msra.mxu0 %v2770
      %3149 = vmatprep.subr.bf16.mxu0 %v2787
      %3150 = vmatpush1.bf16.msra.mxu0 %v2786
      %3151 = vmatprep.subr.bf16.mxu0 %v2803
      %3152 = vmatpush1.bf16.msra.mxu0 %v2802
      %3153 = vmatprep.subr.bf16.mxu0 %v2819
      %3154 = vmatpush1.bf16.msra.mxu0 %v2818
      %3155 = vmatprep.subr.bf16.mxu0 0
      %3156 = vmatpush1.bf16.msra.mxu0 0
      %3157 = vmatprep.subr.bf16.mxu0 0
      %3158 = vmatpush1.bf16.msra.mxu0 0
      %3159 = vmatprep.subr.bf16.mxu0 0
      %3160 = vmatpush1.bf16.msra.mxu0 0
      %3161 = vmatprep.subr.bf16.mxu0 0
      %3162 = vmatpush1.bf16.msra.mxu0 0
      %3163 = vmatprep.subr.bf16.mxu0 0
      %3164 = vmatpush1.bf16.msra.mxu0 0
      %3165 = vmatprep.subr.bf16.mxu0 0
      %3166 = vmatpush1.bf16.msra.mxu0 0
      %3167 = vmatprep.subr.bf16.mxu0 0
      %3168 = vmatpush1.bf16.msra.mxu0 0
      %3169 = vmatprep.subr.bf16.mxu0 0
      %3170 = vmatpush1.bf16.msra.mxu0 0
      %3171 = vmatprep.subr.bf16.mxu0 0
      %3172 = vmatpush1.bf16.msra.mxu0 0
      %3173 = vmatprep.subr.bf16.mxu0 0
      %3174 = vmatpush1.bf16.msra.mxu0 0
      %3175 = vmatprep.subr.bf16.mxu0 0
      %3176 = vmatpush1.bf16.msra.mxu0 0
      %3177 = vmatprep.subr.bf16.mxu0 0
      %3178 = vmatpush1.bf16.msra.mxu0 0
      %3179 = vmatprep.mubr.bf16.mxu0 0
      %3180 = vmatmul.mubr.bf16.gmra.mrb[0].mxu0 %v2887
      %v3181 = vpop.f32.mrb[0].mxu0
      %v3182 = vadd.f32 %v2537, %v3181
      %v3183 = vpop.f32.mrb[0].mxu0
      %v3184 = vadd.f32 %v2541, %v3183
      %v3185 = vpop.f32.mrb[0].mxu0
      %v3186 = vadd.f32 %v2537, %v3185
      %v3187 = vpop.f32.mrb[0].mxu0
      %v3188 = vadd.f32 %v2541, %v3187
      %3189 = vdwg.mxu0
      %3190 = vmatprep.subr.bf16.mxu0 %v2773
      %3191 = vmatpush1.bf16.msra.mxu0 %v2772
      %3192 = vmatprep.subr.bf16.mxu0 %v2789
      %3193 = vmatpush1.bf16.msra.mxu0 %v2788
      %3194 = vmatprep.subr.bf16.mxu0 %v2805
      %3195 = vmatpush1.bf16.msra.mxu0 %v2804
      %3196 = vmatprep.subr.bf16.mxu0 %v2821
      %3197 = vmatpush1.bf16.msra.mxu0 %v2820
      %3198 = vmatprep.subr.bf16.mxu0 0
      %3199 = vmatpush1.bf16.msra.mxu0 0
      %3200 = vmatprep.subr.bf16.mxu0 0
      %3201 = vmatpush1.bf16.msra.mxu0 0
      %3202 = vmatprep.subr.bf16.mxu0 0
      %3203 = vmatpush1.bf16.msra.mxu0 0
      %3204 = vmatprep.subr.bf16.mxu0 0
      %3205 = vmatpush1.bf16.msra.mxu0 0
      %3206 = vmatprep.subr.bf16.mxu0 0
      %3207 = vmatpush1.bf16.msra.mxu0 0
      %3208 = vmatprep.subr.bf16.mxu0 0
      %3209 = vmatpush1.bf16.msra.mxu0 0
      %3210 = vmatprep.subr.bf16.mxu0 0
      %3211 = vmatpush1.bf16.msra.mxu0 0
      %3212 = vmatprep.subr.bf16.mxu0 0
      %3213 = vmatpush1.bf16.msra.mxu0 0
      %3214 = vmatprep.subr.bf16.mxu0 0
      %3215 = vmatpush1.bf16.msra.mxu0 0
      %3216 = vmatprep.subr.bf16.mxu0 0
      %3217 = vmatpush1.bf16.msra.mxu0 0
      %3218 = vmatprep.subr.bf16.mxu0 0
      %3219 = vmatpush1.bf16.msra.mxu0 0
      %3220 = vmatprep.subr.bf16.mxu0 0
      %3221 = vmatpush1.bf16.msra.mxu0 0
      %3222 = vmatprep.mubr.bf16.mxu0 0
      %3223 = vmatmul.mubr.bf16.gmra.mrb[0].mxu0 %v2887
      %v3224 = vpop.f32.mrb[0].mxu0
      %v3225 = vadd.f32 %v2545, %v3224
      %v3226 = vpop.f32.mrb[0].mxu0
      %v3227 = vadd.f32 %v2549, %v3226
      %v3228 = vpop.f32.mrb[0].mxu0
      %v3229 = vadd.f32 %v2545, %v3228
      %v3230 = vpop.f32.mrb[0].mxu0
      %v3231 = vadd.f32 %v2549, %v3230
      %3232 = vdwg.mxu0
      %v3233 = vmax.f32 %v2924, 0.0
      %v3234 = vmax.f32 %v2926, 0.0
      %v3235 = vmax.f32 %v2967, 0.0
      %v3236 = vmax.f32 %v2969, 0.0
      %v3237 = vmax.f32 %v3010, 0.0
      %v3238 = vmax.f32 %v3012, 0.0
      %v3239 = vmax.f32 %v3053, 0.0
      %v3240 = vmax.f32 %v3055, 0.0
      %v3241 = vmax.f32 %v3096, 0.0
      %v3242 = vmax.f32 %v3098, 0.0
      %v3243 = vmax.f32 %v3139, 0.0
      %v3244 = vmax.f32 %v3141, 0.0
      %v3245 = vmax.f32 %v3182, 0.0
      %v3246 = vmax.f32 %v3184, 0.0
      %v3247 = vmax.f32 %v3225, 0.0
      %v3248 = vmax.f32 %v3227, 0.0
      %v3249 = vmax.f32 %v2928, 0.0
      %v3250 = vmax.f32 %v2930, 0.0
      %v3251 = vmax.f32 %v2971, 0.0
      %v3252 = vmax.f32 %v2973, 0.0
      %v3253 = vmax.f32 %v3014, 0.0
      %v3254 = vmax.f32 %v3016, 0.0
      %v3255 = vmax.f32 %v3057, 0.0
      %v3256 = vmax.f32 %v3059, 0.0
      %v3257 = vmax.f32 %v3100, 0.0
      %v3258 = vmax.f32 %v3102, 0.0
      %v3259 = vmax.f32 %v3143, 0.0
      %v3260 = vmax.f32 %v3145, 0.0
      %v3261 = vmax.f32 %v3186, 0.0
      %v3262 = vmax.f32 %v3188, 0.0
      %v3263 = vmax.f32 %v3229, 0.0
      %v3264 = vmax.f32 %v3231, 0.0
      %v3265 = vpack.c.bf16 %v3249, %v3233
      %v3266 = vpack.c.bf16 %v3250, %v3234
      %v3267 = vpack.c.bf16 %v3251, %v3235
      %v3268 = vpack.c.bf16 %v3252, %v3236
      %v3269 = vpack.c.bf16 %v3253, %v3237
      %v3270 = vpack.c.bf16 %v3254, %v3238
      %v3271 = vpack.c.bf16 %v3255, %v3239
      %v3272 = vpack.c.bf16 %v3256, %v3240
      %v3273 = vpack.c.bf16 %v3257, %v3241
      %v3274 = vpack.c.bf16 %v3258, %v3242
      %v3275 = vpack.c.bf16 %v3259, %v3243
      %v3276 = vpack.c.bf16 %v3260, %v3244
      %v3277 = vpack.c.bf16 %v3261, %v3245
      %v3278 = vpack.c.bf16 %v3262, %v3246
      %v3279 = vpack.c.bf16 %v3263, %v3247
      %v3280 = vpack.c.bf16 %v3264, %v3248
      %v3281 = vld [vmem:[%s718] sm:$0xf]
      %v3282 = vld [vmem:[%s718 + $0x4] sm:$0xf]
      %v3283 = vld [vmem:[%s718 + $0x8] sm:$0xf]
      %v3284 = vld [vmem:[%s718 + $0xc] sm:$0xf]
      %v3285 = vld [vmem:[%s718 + $0x10] sm:$0xf]
      %v3286 = vld [vmem:[%s718 + $0x14] sm:$0xf]
      %v3287 = vld [vmem:[%s718 + $0x18] sm:$0xf]
      %v3288 = vld [vmem:[%s718 + $0x1c] sm:$0xf]
      %v3289 = vld [vmem:[%s718 + $0x20] sm:$0xf]
      %v3290 = vld [vmem:[%s718 + $0x24] sm:$0xf]
      %v3291 = vld [vmem:[%s718 + $0x28] sm:$0xf]
      %v3292 = vld [vmem:[%s718 + $0x2c] sm:$0xf]
      %v3293 = vld [vmem:[%s718 + $0x30] sm:$0xf]
      %v3294 = vld [vmem:[%s718 + $0x34] sm:$0xf]
      %v3295 = vld [vmem:[%s718 + $0x38] sm:$0xf]
      %v3296 = vld [vmem:[%s718 + $0x3c] sm:$0xf]
      %v3297 = vld [vmem:[%s718 + $0x40] sm:$0xf]
      %v3298 = vld [vmem:[%s718 + $0x44] sm:$0xf]
      %v3299 = vld [vmem:[%s718 + $0x48] sm:$0xf]
      %v3300 = vld [vmem:[%s718 + $0x4c] sm:$0xf]
      %v3301 = vld [vmem:[%s718 + $0x50] sm:$0xf]
      %v3302 = vld [vmem:[%s718 + $0x54] sm:$0xf]
      %v3303 = vld [vmem:[%s718 + $0x58] sm:$0xf]
      %v3304 = vld [vmem:[%s718 + $0x5c] sm:$0xf]
      %v3305 = vld [vmem:[%s718 + $0x60] sm:$0xf]
      %v3306 = vld [vmem:[%s718 + $0x64] sm:$0xf]
      %v3307 = vld [vmem:[%s718 + $0x68] sm:$0xf]
      %v3308 = vld [vmem:[%s718 + $0x6c] sm:$0xf]
      %v3309 = vld [vmem:[%s718 + $0x70] sm:$0xf]
      %v3310 = vld [vmem:[%s718 + $0x74] sm:$0xf]
      %v3311 = vld [vmem:[%s718 + $0x78] sm:$0xf]
      %v3312 = vld [vmem:[%s718 + $0x7c] sm:$0xf]
      %v3313 = vld [vmem:[%s718 + $0x80] sm:$0xf]
      %v3314 = vld [vmem:[%s718 + $0x84] sm:$0xf]
      %v3315 = vld [vmem:[%s718 + $0x88] sm:$0xf]
      %v3316 = vld [vmem:[%s718 + $0x8c] sm:$0xf]
      %v3317 = vld [vmem:[%s718 + $0x90] sm:$0xf]
      %v3318 = vld [vmem:[%s718 + $0x94] sm:$0xf]
      %v3319 = vld [vmem:[%s718 + $0x98] sm:$0xf]
      %v3320 = vld [vmem:[%s718 + $0x9c] sm:$0xf]
      %v3321 = vld [vmem:[%s718 + $0xa0] sm:$0xf]
      %v3322 = vld [vmem:[%s718 + $0xa4] sm:$0xf]
      %v3323 = vld [vmem:[%s718 + $0xa8] sm:$0xf]
      %v3324 = vld [vmem:[%s718 + $0xac] sm:$0xf]
      %v3325 = vld [vmem:[%s718 + $0xb0] sm:$0xf]
      %v3326 = vld [vmem:[%s718 + $0xb4] sm:$0xf]
      %v3327 = vld [vmem:[%s718 + $0xb8] sm:$0xf]
      %v3328 = vld [vmem:[%s718 + $0xbc] sm:$0xf]
      %v3329 = vld [vmem:[%s718 + $0xc0] sm:$0xf]
      %v3330 = vld [vmem:[%s718 + $0xc4] sm:$0xf]
      %v3331 = vld [vmem:[%s718 + $0xc8] sm:$0xf]
      %v3332 = vld [vmem:[%s718 + $0xcc] sm:$0xf]
      %v3333 = vld [vmem:[%s718 + $0xd0] sm:$0xf]
      %v3334 = vld [vmem:[%s718 + $0xd4] sm:$0xf]
      %v3335 = vld [vmem:[%s718 + $0xd8] sm:$0xf]
      %v3336 = vld [vmem:[%s718 + $0xdc] sm:$0xf]
      %v3337 = vld [vmem:[%s718 + $0xe0] sm:$0xf]
      %v3338 = vld [vmem:[%s718 + $0xe4] sm:$0xf]
      %v3339 = vld [vmem:[%s718 + $0xe8] sm:$0xf]
      %v3340 = vld [vmem:[%s718 + $0xec] sm:$0xf]
      %v3341 = vld [vmem:[%s718 + $0xf0] sm:$0xf]
      %v3342 = vld [vmem:[%s718 + $0xf4] sm:$0xf]
      %v3343 = vld [vmem:[%s718 + $0xf8] sm:$0xf]
      %v3344 = vld [vmem:[%s718 + $0xfc] sm:$0xf]
      %v3345 = vld [vmem:[%s718 + $0x100] sm:$0xf]
      %v3346 = vld [vmem:[%s718 + $0x104] sm:$0xf]
      %v3347 = vld [vmem:[%s718 + $0x108] sm:$0xf]
      %v3348 = vld [vmem:[%s718 + $0x10c] sm:$0xf]
      %v3349 = vld [vmem:[%s718 + $0x110] sm:$0xf]
      %v3350 = vld [vmem:[%s718 + $0x114] sm:$0xf]
      %v3351 = vld [vmem:[%s718 + $0x118] sm:$0xf]
      %v3352 = vld [vmem:[%s718 + $0x11c] sm:$0xf]
      %v3353 = vld [vmem:[%s718 + $0x120] sm:$0xf]
      %v3354 = vld [vmem:[%s718 + $0x124] sm:$0xf]
      %v3355 = vld [vmem:[%s718 + $0x128] sm:$0xf]
      %v3356 = vld [vmem:[%s718 + $0x12c] sm:$0xf]
      %v3357 = vld [vmem:[%s718 + $0x130] sm:$0xf]
      %v3358 = vld [vmem:[%s718 + $0x134] sm:$0xf]
      %v3359 = vld [vmem:[%s718 + $0x138] sm:$0xf]
      %v3360 = vld [vmem:[%s718 + $0x13c] sm:$0xf]
      %v3361 = vld [vmem:[%s718 + $0x140] sm:$0xf]
      %v3362 = vld [vmem:[%s718 + $0x144] sm:$0xf]
      %v3363 = vld [vmem:[%s718 + $0x148] sm:$0xf]
      %v3364 = vld [vmem:[%s718 + $0x14c] sm:$0xf]
      %v3365 = vld [vmem:[%s718 + $0x150] sm:$0xf]
      %v3366 = vld [vmem:[%s718 + $0x154] sm:$0xf]
      %v3367 = vld [vmem:[%s718 + $0x158] sm:$0xf]
      %v3368 = vld [vmem:[%s718 + $0x15c] sm:$0xf]
      %v3369 = vld [vmem:[%s718 + $0x160] sm:$0xf]
      %v3370 = vld [vmem:[%s718 + $0x164] sm:$0xf]
      %v3371 = vld [vmem:[%s718 + $0x168] sm:$0xf]
      %v3372 = vld [vmem:[%s718 + $0x16c] sm:$0xf]
      %v3373 = vld [vmem:[%s718 + $0x170] sm:$0xf]
      %v3374 = vld [vmem:[%s718 + $0x174] sm:$0xf]
      %v3375 = vld [vmem:[%s718 + $0x178] sm:$0xf]
      %v3376 = vld [vmem:[%s718 + $0x17c] sm:$0xf]
      %v3377 = vld [vmem:[%s718 + $0x180] sm:$0xf]
      %v3378 = vld [vmem:[%s718 + $0x184] sm:$0xf]
      %v3379 = vld [vmem:[%s718 + $0x188] sm:$0xf]
      %v3380 = vld [vmem:[%s718 + $0x18c] sm:$0xf]
      %v3381 = vld [vmem:[%s718 + $0x190] sm:$0xf]
      %v3382 = vld [vmem:[%s718 + $0x194] sm:$0xf]
      %v3383 = vld [vmem:[%s718 + $0x198] sm:$0xf]
      %v3384 = vld [vmem:[%s718 + $0x19c] sm:$0xf]
      %v3385 = vld [vmem:[%s718 + $0x1a0] sm:$0xf]
      %v3386 = vld [vmem:[%s718 + $0x1a4] sm:$0xf]
      %v3387 = vld [vmem:[%s718 + $0x1a8] sm:$0xf]
      %v3388 = vld [vmem:[%s718 + $0x1ac] sm:$0xf]
      %v3389 = vld [vmem:[%s718 + $0x1b0] sm:$0xf]
      %v3390 = vld [vmem:[%s718 + $0x1b4] sm:$0xf]
      %v3391 = vld [vmem:[%s718 + $0x1b8] sm:$0xf]
      %v3392 = vld [vmem:[%s718 + $0x1bc] sm:$0xf]
      %v3393 = vld [vmem:[%s718 + $0x1c0] sm:$0xf]
      %v3394 = vld [vmem:[%s718 + $0x1c4] sm:$0xf]
      %v3395 = vld [vmem:[%s718 + $0x1c8] sm:$0xf]
      %v3396 = vld [vmem:[%s718 + $0x1cc] sm:$0xf]
      %v3397 = vld [vmem:[%s718 + $0x1d0] sm:$0xf]
      %v3398 = vld [vmem:[%s718 + $0x1d4] sm:$0xf]
      %v3399 = vld [vmem:[%s718 + $0x1d8] sm:$0xf]
      %v3400 = vld [vmem:[%s718 + $0x1dc] sm:$0xf]
      %v3401 = vld [vmem:[%s718 + $0x1e0] sm:$0xf]
      %v3402 = vld [vmem:[%s718 + $0x1e4] sm:$0xf]
      %v3403 = vld [vmem:[%s718 + $0x1e8] sm:$0xf]
      %v3404 = vld [vmem:[%s718 + $0x1ec] sm:$0xf]
      %v3405 = vld [vmem:[%s718 + $0x1f0] sm:$0xf]
      %v3406 = vld [vmem:[%s718 + $0x1f4] sm:$0xf]
      %v3407 = vld [vmem:[%s718 + $0x1f8] sm:$0xf]
      %v3408 = vld [vmem:[%s718 + $0x1fc] sm:$0xf]
      %v3409 = vld [vmem:[%s718 + $0x200] sm:$0xf]
      %v3410 = vld [vmem:[%s718 + $0x204] sm:$0xf]
      %v3411 = vld [vmem:[%s718 + $0x208] sm:$0xf]
      %v3412 = vld [vmem:[%s718 + $0x20c] sm:$0xf]
      %v3413 = vld [vmem:[%s718 + $0x210] sm:$0xf]
      %v3414 = vld [vmem:[%s718 + $0x214] sm:$0xf]
      %v3415 = vld [vmem:[%s718 + $0x218] sm:$0xf]
      %v3416 = vld [vmem:[%s718 + $0x21c] sm:$0xf]
      %v3417 = vld [vmem:[%s718 + $0x220] sm:$0xf]
      %v3418 = vld [vmem:[%s718 + $0x224] sm:$0xf]
      %v3419 = vld [vmem:[%s718 + $0x228] sm:$0xf]
      %v3420 = vld [vmem:[%s718 + $0x22c] sm:$0xf]
      %v3421 = vld [vmem:[%s718 + $0x230] sm:$0xf]
      %v3422 = vld [vmem:[%s718 + $0x234] sm:$0xf]
      %v3423 = vld [vmem:[%s718 + $0x238] sm:$0xf]
      %v3424 = vld [vmem:[%s718 + $0x23c] sm:$0xf]
      %v3425 = vld [vmem:[%s718 + $0x240] sm:$0xf]
      %v3426 = vld [vmem:[%s718 + $0x244] sm:$0xf]
      %v3427 = vld [vmem:[%s718 + $0x248] sm:$0xf]
      %v3428 = vld [vmem:[%s718 + $0x24c] sm:$0xf]
      %v3429 = vld [vmem:[%s718 + $0x250] sm:$0xf]
      %v3430 = vld [vmem:[%s718 + $0x254] sm:$0xf]
      %v3431 = vld [vmem:[%s718 + $0x258] sm:$0xf]
      %v3432 = vld [vmem:[%s718 + $0x25c] sm:$0xf]
      %v3433 = vld [vmem:[%s718 + $0x260] sm:$0xf]
      %v3434 = vld [vmem:[%s718 + $0x264] sm:$0xf]
      %v3435 = vld [vmem:[%s718 + $0x268] sm:$0xf]
      %v3436 = vld [vmem:[%s718 + $0x26c] sm:$0xf]
      %v3437 = vld [vmem:[%s718 + $0x270] sm:$0xf]
      %v3438 = vld [vmem:[%s718 + $0x274] sm:$0xf]
      %v3439 = vld [vmem:[%s718 + $0x278] sm:$0xf]
      %v3440 = vld [vmem:[%s718 + $0x27c] sm:$0xf]
      %v3441 = vld [vmem:[%s718 + $0x280] sm:$0xf]
      %v3442 = vld [vmem:[%s718 + $0x284] sm:$0xf]
      %v3443 = vld [vmem:[%s718 + $0x288] sm:$0xf]
      %v3444 = vld [vmem:[%s718 + $0x28c] sm:$0xf]
      %v3445 = vld [vmem:[%s718 + $0x290] sm:$0xf]
      %v3446 = vld [vmem:[%s718 + $0x294] sm:$0xf]
      %v3447 = vld [vmem:[%s718 + $0x298] sm:$0xf]
      %v3448 = vld [vmem:[%s718 + $0x29c] sm:$0xf]
      %v3449 = vld [vmem:[%s718 + $0x2a0] sm:$0xf]
      %v3450 = vld [vmem:[%s718 + $0x2a4] sm:$0xf]
      %v3451 = vld [vmem:[%s718 + $0x2a8] sm:$0xf]
      %v3452 = vld [vmem:[%s718 + $0x2ac] sm:$0xf]
      %v3453 = vld [vmem:[%s718 + $0x2b0] sm:$0xf]
      %v3454 = vld [vmem:[%s718 + $0x2b4] sm:$0xf]
      %v3455 = vld [vmem:[%s718 + $0x2b8] sm:$0xf]
      %v3456 = vld [vmem:[%s718 + $0x2bc] sm:$0xf]
      %v3457 = vld [vmem:[%s718 + $0x2c0] sm:$0xf]
      %v3458 = vld [vmem:[%s718 + $0x2c4] sm:$0xf]
      %v3459 = vld [vmem:[%s718 + $0x2c8] sm:$0xf]
      %v3460 = vld [vmem:[%s718 + $0x2cc] sm:$0xf]
      %v3461 = vld [vmem:[%s718 + $0x2d0] sm:$0xf]
      %v3462 = vld [vmem:[%s718 + $0x2d4] sm:$0xf]
      %v3463 = vld [vmem:[%s718 + $0x2d8] sm:$0xf]
      %v3464 = vld [vmem:[%s718 + $0x2dc] sm:$0xf]
      %v3465 = vld [vmem:[%s718 + $0x2e0] sm:$0xf]
      %v3466 = vld [vmem:[%s718 + $0x2e4] sm:$0xf]
      %v3467 = vld [vmem:[%s718 + $0x2e8] sm:$0xf]
      %v3468 = vld [vmem:[%s718 + $0x2ec] sm:$0xf]
      %v3469 = vld [vmem:[%s718 + $0x2f0] sm:$0xf]
      %v3470 = vld [vmem:[%s718 + $0x2f4] sm:$0xf]
      %v3471 = vld [vmem:[%s718 + $0x2f8] sm:$0xf]
      %v3472 = vld [vmem:[%s718 + $0x2fc] sm:$0xf]
      %v3473 = vld [vmem:[%s718 + $0x300] sm:$0xf]
      %v3474 = vld [vmem:[%s718 + $0x304] sm:$0xf]
      %v3475 = vld [vmem:[%s718 + $0x308] sm:$0xf]
      %v3476 = vld [vmem:[%s718 + $0x30c] sm:$0xf]
      %v3477 = vld [vmem:[%s718 + $0x310] sm:$0xf]
      %v3478 = vld [vmem:[%s718 + $0x314] sm:$0xf]
      %v3479 = vld [vmem:[%s718 + $0x318] sm:$0xf]
      %v3480 = vld [vmem:[%s718 + $0x31c] sm:$0xf]
      %v3481 = vld [vmem:[%s718 + $0x320] sm:$0xf]
      %v3482 = vld [vmem:[%s718 + $0x324] sm:$0xf]
      %v3483 = vld [vmem:[%s718 + $0x328] sm:$0xf]
      %v3484 = vld [vmem:[%s718 + $0x32c] sm:$0xf]
      %v3485 = vld [vmem:[%s718 + $0x330] sm:$0xf]
      %v3486 = vld [vmem:[%s718 + $0x334] sm:$0xf]
      %v3487 = vld [vmem:[%s718 + $0x338] sm:$0xf]
      %v3488 = vld [vmem:[%s718 + $0x33c] sm:$0xf]
      %v3489 = vld [vmem:[%s718 + $0x340] sm:$0xf]
      %v3490 = vld [vmem:[%s718 + $0x344] sm:$0xf]
      %v3491 = vld [vmem:[%s718 + $0x348] sm:$0xf]
      %v3492 = vld [vmem:[%s718 + $0x34c] sm:$0xf]
      %v3493 = vld [vmem:[%s718 + $0x350] sm:$0xf]
      %v3494 = vld [vmem:[%s718 + $0x354] sm:$0xf]
      %v3495 = vld [vmem:[%s718 + $0x358] sm:$0xf]
      %v3496 = vld [vmem:[%s718 + $0x35c] sm:$0xf]
      %v3497 = vld [vmem:[%s718 + $0x360] sm:$0xf]
      %v3498 = vld [vmem:[%s718 + $0x364] sm:$0xf]
      %v3499 = vld [vmem:[%s718 + $0x368] sm:$0xf]
      %v3500 = vld [vmem:[%s718 + $0x36c] sm:$0xf]
      %v3501 = vld [vmem:[%s718 + $0x370] sm:$0xf]
      %v3502 = vld [vmem:[%s718 + $0x374] sm:$0xf]
      %v3503 = vld [vmem:[%s718 + $0x378] sm:$0xf]
      %v3504 = vld [vmem:[%s718 + $0x37c] sm:$0xf]
      %v3505 = vld [vmem:[%s718 + $0x380] sm:$0xf]
      %v3506 = vld [vmem:[%s718 + $0x384] sm:$0xf]
      %v3507 = vld [vmem:[%s718 + $0x388] sm:$0xf]
      %v3508 = vld [vmem:[%s718 + $0x38c] sm:$0xf]
      %v3509 = vld [vmem:[%s718 + $0x390] sm:$0xf]
      %v3510 = vld [vmem:[%s718 + $0x394] sm:$0xf]
      %v3511 = vld [vmem:[%s718 + $0x398] sm:$0xf]
      %v3512 = vld [vmem:[%s718 + $0x39c] sm:$0xf]
      %v3513 = vld [vmem:[%s718 + $0x3a0] sm:$0xf]
      %v3514 = vld [vmem:[%s718 + $0x3a4] sm:$0xf]
      %v3515 = vld [vmem:[%s718 + $0x3a8] sm:$0xf]
      %v3516 = vld [vmem:[%s718 + $0x3ac] sm:$0xf]
      %v3517 = vld [vmem:[%s718 + $0x3b0] sm:$0xf]
      %v3518 = vld [vmem:[%s718 + $0x3b4] sm:$0xf]
      %v3519 = vld [vmem:[%s718 + $0x3b8] sm:$0xf]
      %v3520 = vld [vmem:[%s718 + $0x3bc] sm:$0xf]
      %v3521 = vld [vmem:[%s718 + $0x3c0] sm:$0xf]
      %v3522 = vld [vmem:[%s718 + $0x3c4] sm:$0xf]
      %v3523 = vld [vmem:[%s718 + $0x3c8] sm:$0xf]
      %v3524 = vld [vmem:[%s718 + $0x3cc] sm:$0xf]
      %v3525 = vld [vmem:[%s718 + $0x3d0] sm:$0xf]
      %v3526 = vld [vmem:[%s718 + $0x3d4] sm:$0xf]
      %v3527 = vld [vmem:[%s718 + $0x3d8] sm:$0xf]
      %v3528 = vld [vmem:[%s718 + $0x3dc] sm:$0xf]
      %v3529 = vld [vmem:[%s718 + $0x3e0] sm:$0xf]
      %v3530 = vld [vmem:[%s718 + $0x3e4] sm:$0xf]
      %v3531 = vld [vmem:[%s718 + $0x3e8] sm:$0xf]
      %v3532 = vld [vmem:[%s718 + $0x3ec] sm:$0xf]
      %v3533 = vld [vmem:[%s718 + $0x3f0] sm:$0xf]
      %v3534 = vld [vmem:[%s718 + $0x3f4] sm:$0xf]
      %v3535 = vld [vmem:[%s718 + $0x3f8] sm:$0xf]
      %v3536 = vld [vmem:[%s718 + $0x3fc] sm:$0xf]
      %v3537 = vld [vmem:[%s721] sm:$0x1]
      %v3539 = vlaneseq
      %v3540 = vshrl.u32 %v3539, 7
      %v3541 = vsub.s32 0, %v3540
      %v3542 = vrot.slane %v3537, %v3541
      %v3800 = vunpack.c.l.b16 %v3281
      %v3801 = vunpack.c.l.b16 %v3282
      %v3802 = vunpack.c.l.b16 %v3283
      %v3803 = vunpack.c.l.b16 %v3284
      %v3804 = vunpack.c.l.b16 %v3285
      %v3805 = vunpack.c.l.b16 %v3286
      %v3806 = vunpack.c.l.b16 %v3287
      %v3807 = vunpack.c.l.b16 %v3288
      %v3808 = vunpack.c.l.b16 %v3289
      %v3809 = vunpack.c.l.b16 %v3290
      %v3810 = vunpack.c.l.b16 %v3291
      %v3811 = vunpack.c.l.b16 %v3292
      %v3812 = vunpack.c.l.b16 %v3293
      %v3813 = vunpack.c.l.b16 %v3294
      %v3814 = vunpack.c.l.b16 %v3295
      %v3815 = vunpack.c.l.b16 %v3296
      %v3816 = vunpack.c.l.b16 %v3297
      %v3817 = vunpack.c.l.b16 %v3298
      %v3818 = vunpack.c.l.b16 %v3299
      %v3819 = vunpack.c.l.b16 %v3300
      %v3820 = vunpack.c.l.b16 %v3301
      %v3821 = vunpack.c.l.b16 %v3302
      %v3822 = vunpack.c.l.b16 %v3303
      %v3823 = vunpack.c.l.b16 %v3304
      %v3824 = vunpack.c.l.b16 %v3305
      %v3825 = vunpack.c.l.b16 %v3306
      %v3826 = vunpack.c.l.b16 %v3307
      %v3827 = vunpack.c.l.b16 %v3308
      %v3828 = vunpack.c.l.b16 %v3309
      %v3829 = vunpack.c.l.b16 %v3310
      %v3830 = vunpack.c.l.b16 %v3311
      %v3831 = vunpack.c.l.b16 %v3312
      %v3832 = vunpack.c.l.b16 %v3313
      %v3833 = vunpack.c.l.b16 %v3314
      %v3834 = vunpack.c.l.b16 %v3315
      %v3835 = vunpack.c.l.b16 %v3316
      %v3836 = vunpack.c.l.b16 %v3317
      %v3837 = vunpack.c.l.b16 %v3318
      %v3838 = vunpack.c.l.b16 %v3319
      %v3839 = vunpack.c.l.b16 %v3320
      %v3840 = vunpack.c.l.b16 %v3321
      %v3841 = vunpack.c.l.b16 %v3322
      %v3842 = vunpack.c.l.b16 %v3323
      %v3843 = vunpack.c.l.b16 %v3324
      %v3844 = vunpack.c.l.b16 %v3325
      %v3845 = vunpack.c.l.b16 %v3326
      %v3846 = vunpack.c.l.b16 %v3327
      %v3847 = vunpack.c.l.b16 %v3328
      %v3848 = vunpack.c.l.b16 %v3329
      %v3849 = vunpack.c.l.b16 %v3330
      %v3850 = vunpack.c.l.b16 %v3331
      %v3851 = vunpack.c.l.b16 %v3332
      %v3852 = vunpack.c.l.b16 %v3333
      %v3853 = vunpack.c.l.b16 %v3334
      %v3854 = vunpack.c.l.b16 %v3335
      %v3855 = vunpack.c.l.b16 %v3336
      %v3856 = vunpack.c.l.b16 %v3337
      %v3857 = vunpack.c.l.b16 %v3338
      %v3858 = vunpack.c.l.b16 %v3339
      %v3859 = vunpack.c.l.b16 %v3340
      %v3860 = vunpack.c.l.b16 %v3341
      %v3861 = vunpack.c.l.b16 %v3342
      %v3862 = vunpack.c.l.b16 %v3343
      %v3863 = vunpack.c.l.b16 %v3344
      %v3864 = vunpack.c.l.b16 %v3345
      %v3865 = vunpack.c.l.b16 %v3346
      %v3866 = vunpack.c.l.b16 %v3347
      %v3867 = vunpack.c.l.b16 %v3348
      %v3868 = vunpack.c.l.b16 %v3349
      %v3869 = vunpack.c.l.b16 %v3350
      %v3870 = vunpack.c.l.b16 %v3351
      %v3871 = vunpack.c.l.b16 %v3352
      %v3872 = vunpack.c.l.b16 %v3353
      %v3873 = vunpack.c.l.b16 %v3354
      %v3874 = vunpack.c.l.b16 %v3355
      %v3875 = vunpack.c.l.b16 %v3356
      %v3876 = vunpack.c.l.b16 %v3357
      %v3877 = vunpack.c.l.b16 %v3358
      %v3878 = vunpack.c.l.b16 %v3359
      %v3879 = vunpack.c.l.b16 %v3360
      %v3880 = vunpack.c.l.b16 %v3361
      %v3881 = vunpack.c.l.b16 %v3362
      %v3882 = vunpack.c.l.b16 %v3363
      %v3883 = vunpack.c.l.b16 %v3364
      %v3884 = vunpack.c.l.b16 %v3365
      %v3885 = vunpack.c.l.b16 %v3366
      %v3886 = vunpack.c.l.b16 %v3367
      %v3887 = vunpack.c.l.b16 %v3368
      %v3888 = vunpack.c.l.b16 %v3369
      %v3889 = vunpack.c.l.b16 %v3370
      %v3890 = vunpack.c.l.b16 %v3371
      %v3891 = vunpack.c.l.b16 %v3372
      %v3892 = vunpack.c.l.b16 %v3373
      %v3893 = vunpack.c.l.b16 %v3374
      %v3894 = vunpack.c.l.b16 %v3375
      %v3895 = vunpack.c.l.b16 %v3376
      %v3896 = vunpack.c.l.b16 %v3377
      %v3897 = vunpack.c.l.b16 %v3378
      %v3898 = vunpack.c.l.b16 %v3379
      %v3899 = vunpack.c.l.b16 %v3380
      %v3900 = vunpack.c.l.b16 %v3381
      %v3901 = vunpack.c.l.b16 %v3382
      %v3902 = vunpack.c.l.b16 %v3383
      %v3903 = vunpack.c.l.b16 %v3384
      %v3904 = vunpack.c.l.b16 %v3385
      %v3905 = vunpack.c.l.b16 %v3386
      %v3906 = vunpack.c.l.b16 %v3387
      %v3907 = vunpack.c.l.b16 %v3388
      %v3908 = vunpack.c.l.b16 %v3389
      %v3909 = vunpack.c.l.b16 %v3390
      %v3910 = vunpack.c.l.b16 %v3391
      %v3911 = vunpack.c.l.b16 %v3392
      %v3912 = vunpack.c.l.b16 %v3393
      %v3913 = vunpack.c.l.b16 %v3394
      %v3914 = vunpack.c.l.b16 %v3395
      %v3915 = vunpack.c.l.b16 %v3396
      %v3916 = vunpack.c.l.b16 %v3397
      %v3917 = vunpack.c.l.b16 %v3398
      %v3918 = vunpack.c.l.b16 %v3399
      %v3919 = vunpack.c.l.b16 %v3400
      %v3920 = vunpack.c.l.b16 %v3401
      %v3921 = vunpack.c.l.b16 %v3402
      %v3922 = vunpack.c.l.b16 %v3403
      %v3923 = vunpack.c.l.b16 %v3404
      %v3924 = vunpack.c.l.b16 %v3405
      %v3925 = vunpack.c.l.b16 %v3406
      %v3926 = vunpack.c.l.b16 %v3407
      %v3927 = vunpack.c.l.b16 %v3408
      %v3928 = vunpack.c.l.b16 %v3409
      %v3929 = vunpack.c.l.b16 %v3410
      %v3930 = vunpack.c.l.b16 %v3411
      %v3931 = vunpack.c.l.b16 %v3412
      %v3932 = vunpack.c.l.b16 %v3413
      %v3933 = vunpack.c.l.b16 %v3414
      %v3934 = vunpack.c.l.b16 %v3415
      %v3935 = vunpack.c.l.b16 %v3416
      %v3936 = vunpack.c.l.b16 %v3417
      %v3937 = vunpack.c.l.b16 %v3418
      %v3938 = vunpack.c.l.b16 %v3419
      %v3939 = vunpack.c.l.b16 %v3420
      %v3940 = vunpack.c.l.b16 %v3421
      %v3941 = vunpack.c.l.b16 %v3422
      %v3942 = vunpack.c.l.b16 %v3423
      %v3943 = vunpack.c.l.b16 %v3424
      %v3944 = vunpack.c.l.b16 %v3425
      %v3945 = vunpack.c.l.b16 %v3426
      %v3946 = vunpack.c.l.b16 %v3427
      %v3947 = vunpack.c.l.b16 %v3428
      %v3948 = vunpack.c.l.b16 %v3429
      %v3949 = vunpack.c.l.b16 %v3430
      %v3950 = vunpack.c.l.b16 %v3431
      %v3951 = vunpack.c.l.b16 %v3432
      %v3952 = vunpack.c.l.b16 %v3433
      %v3953 = vunpack.c.l.b16 %v3434
      %v3954 = vunpack.c.l.b16 %v3435
      %v3955 = vunpack.c.l.b16 %v3436
      %v3956 = vunpack.c.l.b16 %v3437
      %v3957 = vunpack.c.l.b16 %v3438
      %v3958 = vunpack.c.l.b16 %v3439
      %v3959 = vunpack.c.l.b16 %v3440
      %v3960 = vunpack.c.l.b16 %v3441
      %v3961 = vunpack.c.l.b16 %v3442
      %v3962 = vunpack.c.l.b16 %v3443
      %v3963 = vunpack.c.l.b16 %v3444
      %v3964 = vunpack.c.l.b16 %v3445
      %v3965 = vunpack.c.l.b16 %v3446
      %v3966 = vunpack.c.l.b16 %v3447
      %v3967 = vunpack.c.l.b16 %v3448
      %v3968 = vunpack.c.l.b16 %v3449
      %v3969 = vunpack.c.l.b16 %v3450
      %v3970 = vunpack.c.l.b16 %v3451
      %v3971 = vunpack.c.l.b16 %v3452
      %v3972 = vunpack.c.l.b16 %v3453
      %v3973 = vunpack.c.l.b16 %v3454
      %v3974 = vunpack.c.l.b16 %v3455
      %v3975 = vunpack.c.l.b16 %v3456
      %v3976 = vunpack.c.l.b16 %v3457
      %v3977 = vunpack.c.l.b16 %v3458
      %v3978 = vunpack.c.l.b16 %v3459
      %v3979 = vunpack.c.l.b16 %v3460
      %v3980 = vunpack.c.l.b16 %v3461
      %v3981 = vunpack.c.l.b16 %v3462
      %v3982 = vunpack.c.l.b16 %v3463
      %v3983 = vunpack.c.l.b16 %v3464
      %v3984 = vunpack.c.l.b16 %v3465
      %v3985 = vunpack.c.l.b16 %v3466
      %v3986 = vunpack.c.l.b16 %v3467
      %v3987 = vunpack.c.l.b16 %v3468
      %v3988 = vunpack.c.l.b16 %v3469
      %v3989 = vunpack.c.l.b16 %v3470
      %v3990 = vunpack.c.l.b16 %v3471
      %v3991 = vunpack.c.l.b16 %v3472
      %v3992 = vunpack.c.l.b16 %v3473
      %v3993 = vunpack.c.l.b16 %v3474
      %v3994 = vunpack.c.l.b16 %v3475
      %v3995 = vunpack.c.l.b16 %v3476
      %v3996 = vunpack.c.l.b16 %v3477
      %v3997 = vunpack.c.l.b16 %v3478
      %v3998 = vunpack.c.l.b16 %v3479
      %v3999 = vunpack.c.l.b16 %v3480
      %v4000 = vunpack.c.l.b16 %v3481
      %v4001 = vunpack.c.l.b16 %v3482
      %v4002 = vunpack.c.l.b16 %v3483
      %v4003 = vunpack.c.l.b16 %v3484
      %v4004 = vunpack.c.l.b16 %v3485
      %v4005 = vunpack.c.l.b16 %v3486
      %v4006 = vunpack.c.l.b16 %v3487
      %v4007 = vunpack.c.l.b16 %v3488
      %v4008 = vunpack.c.l.b16 %v3489
      %v4009 = vunpack.c.l.b16 %v3490
      %v4010 = vunpack.c.l.b16 %v3491
      %v4011 = vunpack.c.l.b16 %v3492
      %v4012 = vunpack.c.l.b16 %v3493
      %v4013 = vunpack.c.l.b16 %v3494
      %v4014 = vunpack.c.l.b16 %v3495
      %v4015 = vunpack.c.l.b16 %v3496
      %v4016 = vunpack.c.l.b16 %v3497
      %v4017 = vunpack.c.l.b16 %v3498
      %v4018 = vunpack.c.l.b16 %v3499
      %v4019 = vunpack.c.l.b16 %v3500
      %v4020 = vunpack.c.l.b16 %v3501
      %v4021 = vunpack.c.l.b16 %v3502
      %v4022 = vunpack.c.l.b16 %v3503
      %v4023 = vunpack.c.l.b16 %v3504
      %v4024 = vunpack.c.l.b16 %v3505
      %v4025 = vunpack.c.l.b16 %v3506
      %v4026 = vunpack.c.l.b16 %v3507
      %v4027 = vunpack.c.l.b16 %v3508
      %v4028 = vunpack.c.l.b16 %v3509
      %v4029 = vunpack.c.l.b16 %v3510
      %v4030 = vunpack.c.l.b16 %v3511
      %v4031 = vunpack.c.l.b16 %v3512
      %v4032 = vunpack.c.l.b16 %v3513
      %v4033 = vunpack.c.l.b16 %v3514
      %v4034 = vunpack.c.l.b16 %v3515
      %v4035 = vunpack.c.l.b16 %v3516
      %v4036 = vunpack.c.l.b16 %v3517
      %v4037 = vunpack.c.l.b16 %v3518
      %v4038 = vunpack.c.l.b16 %v3519
      %v4039 = vunpack.c.l.b16 %v3520
      %v4040 = vunpack.c.l.b16 %v3521
      %v4041 = vunpack.c.l.b16 %v3522
      %v4042 = vunpack.c.l.b16 %v3523
      %v4043 = vunpack.c.l.b16 %v3524
      %v4044 = vunpack.c.l.b16 %v3525
      %v4045 = vunpack.c.l.b16 %v3526
      %v4046 = vunpack.c.l.b16 %v3527
      %v4047 = vunpack.c.l.b16 %v3528
      %v4048 = vunpack.c.l.b16 %v3529
      %v4049 = vunpack.c.l.b16 %v3530
      %v4050 = vunpack.c.l.b16 %v3531
      %v4051 = vunpack.c.l.b16 %v3532
      %v4052 = vunpack.c.l.b16 %v3533
      %v4053 = vunpack.c.l.b16 %v3534
      %v4054 = vunpack.c.l.b16 %v3535
      %v4055 = vunpack.c.l.b16 %v3536
      %v4056 = vpack.c.b16 %v3801, %v3800
      %v4057 = vpack.c.b16 %v3803, %v3802
      %v4058 = vpack.c.b16 %v3805, %v3804
      %v4059 = vpack.c.b16 %v3807, %v3806
      %v4060 = vpack.c.b16 %v3809, %v3808
      %v4061 = vpack.c.b16 %v3811, %v3810
      %v4062 = vpack.c.b16 %v3813, %v3812
      %v4063 = vpack.c.b16 %v3815, %v3814
      %v4064 = vpack.c.b16 %v3817, %v3816
      %v4065 = vpack.c.b16 %v3819, %v3818
      %v4066 = vpack.c.b16 %v3821, %v3820
      %v4067 = vpack.c.b16 %v3823, %v3822
      %v4068 = vpack.c.b16 %v3825, %v3824
      %v4069 = vpack.c.b16 %v3827, %v3826
      %v4070 = vpack.c.b16 %v3829, %v3828
      %v4071 = vpack.c.b16 %v3831, %v3830
      %v4072 = vpack.c.b16 %v3833, %v3832
      %v4073 = vpack.c.b16 %v3835, %v3834
      %v4074 = vpack.c.b16 %v3837, %v3836
      %v4075 = vpack.c.b16 %v3839, %v3838
      %v4076 = vpack.c.b16 %v3841, %v3840
      %v4077 = vpack.c.b16 %v3843, %v3842
      %v4078 = vpack.c.b16 %v3845, %v3844
      %v4079 = vpack.c.b16 %v3847, %v3846
      %v4080 = vpack.c.b16 %v3849, %v3848
      %v4081 = vpack.c.b16 %v3851, %v3850
      %v4082 = vpack.c.b16 %v3853, %v3852
      %v4083 = vpack.c.b16 %v3855, %v3854
      %v4084 = vpack.c.b16 %v3857, %v3856
      %v4085 = vpack.c.b16 %v3859, %v3858
      %v4086 = vpack.c.b16 %v3861, %v3860
      %v4087 = vpack.c.b16 %v3863, %v3862
      %v4088 = vpack.c.b16 %v3865, %v3864
      %v4089 = vpack.c.b16 %v3867, %v3866
      %v4090 = vpack.c.b16 %v3869, %v3868
      %v4091 = vpack.c.b16 %v3871, %v3870
      %v4092 = vpack.c.b16 %v3873, %v3872
      %v4093 = vpack.c.b16 %v3875, %v3874
      %v4094 = vpack.c.b16 %v3877, %v3876
      %v4095 = vpack.c.b16 %v3879, %v3878
      %v4096 = vpack.c.b16 %v3881, %v3880
      %v4097 = vpack.c.b16 %v3883, %v3882
      %v4098 = vpack.c.b16 %v3885, %v3884
      %v4099 = vpack.c.b16 %v3887, %v3886
      %v4100 = vpack.c.b16 %v3889, %v3888
      %v4101 = vpack.c.b16 %v3891, %v3890
      %v4102 = vpack.c.b16 %v3893, %v3892
      %v4103 = vpack.c.b16 %v3895, %v3894
      %v4104 = vpack.c.b16 %v3897, %v3896
      %v4105 = vpack.c.b16 %v3899, %v3898
      %v4106 = vpack.c.b16 %v3901, %v3900
      %v4107 = vpack.c.b16 %v3903, %v3902
      %v4108 = vpack.c.b16 %v3905, %v3904
      %v4109 = vpack.c.b16 %v3907, %v3906
      %v4110 = vpack.c.b16 %v3909, %v3908
      %v4111 = vpack.c.b16 %v3911, %v3910
      %v4112 = vpack.c.b16 %v3913, %v3912
      %v4113 = vpack.c.b16 %v3915, %v3914
      %v4114 = vpack.c.b16 %v3917, %v3916
      %v4115 = vpack.c.b16 %v3919, %v3918
      %v4116 = vpack.c.b16 %v3921, %v3920
      %v4117 = vpack.c.b16 %v3923, %v3922
      %v4118 = vpack.c.b16 %v3925, %v3924
      %v4119 = vpack.c.b16 %v3927, %v3926
      %v4120 = vpack.c.b16 %v3929, %v3928
      %v4121 = vpack.c.b16 %v3931, %v3930
      %v4122 = vpack.c.b16 %v3933, %v3932
      %v4123 = vpack.c.b16 %v3935, %v3934
      %v4124 = vpack.c.b16 %v3937, %v3936
      %v4125 = vpack.c.b16 %v3939, %v3938
      %v4126 = vpack.c.b16 %v3941, %v3940
      %v4127 = vpack.c.b16 %v3943, %v3942
      %v4128 = vpack.c.b16 %v3945, %v3944
      %v4129 = vpack.c.b16 %v3947, %v3946
      %v4130 = vpack.c.b16 %v3949, %v3948
      %v4131 = vpack.c.b16 %v3951, %v3950
      %v4132 = vpack.c.b16 %v3953, %v3952
      %v4133 = vpack.c.b16 %v3955, %v3954
      %v4134 = vpack.c.b16 %v3957, %v3956
      %v4135 = vpack.c.b16 %v3959, %v3958
      %v4136 = vpack.c.b16 %v3961, %v3960
      %v4137 = vpack.c.b16 %v3963, %v3962
      %v4138 = vpack.c.b16 %v3965, %v3964
      %v4139 = vpack.c.b16 %v3967, %v3966
      %v4140 = vpack.c.b16 %v3969, %v3968
      %v4141 = vpack.c.b16 %v3971, %v3970
      %v4142 = vpack.c.b16 %v3973, %v3972
      %v4143 = vpack.c.b16 %v3975, %v3974
      %v4144 = vpack.c.b16 %v3977, %v3976
      %v4145 = vpack.c.b16 %v3979, %v3978
      %v4146 = vpack.c.b16 %v3981, %v3980
      %v4147 = vpack.c.b16 %v3983, %v3982
      %v4148 = vpack.c.b16 %v3985, %v3984
      %v4149 = vpack.c.b16 %v3987, %v3986
      %v4150 = vpack.c.b16 %v3989, %v3988
      %v4151 = vpack.c.b16 %v3991, %v3990
      %v4152 = vpack.c.b16 %v3993, %v3992
      %v4153 = vpack.c.b16 %v3995, %v3994
      %v4154 = vpack.c.b16 %v3997, %v3996
      %v4155 = vpack.c.b16 %v3999, %v3998
      %v4156 = vpack.c.b16 %v4001, %v4000
      %v4157 = vpack.c.b16 %v4003, %v4002
      %v4158 = vpack.c.b16 %v4005, %v4004
      %v4159 = vpack.c.b16 %v4007, %v4006
      %v4160 = vpack.c.b16 %v4009, %v4008
      %v4161 = vpack.c.b16 %v4011, %v4010
      %v4162 = vpack.c.b16 %v4013, %v4012
      %v4163 = vpack.c.b16 %v4015, %v4014
      %v4164 = vpack.c.b16 %v4017, %v4016
      %v4165 = vpack.c.b16 %v4019, %v4018
      %v4166 = vpack.c.b16 %v4021, %v4020
      %v4167 = vpack.c.b16 %v4023, %v4022
      %v4168 = vpack.c.b16 %v4025, %v4024
      %v4169 = vpack.c.b16 %v4027, %v4026
      %v4170 = vpack.c.b16 %v4029, %v4028
      %v4171 = vpack.c.b16 %v4031, %v4030
      %v4172 = vpack.c.b16 %v4033, %v4032
      %v4173 = vpack.c.b16 %v4035, %v4034
      %v4174 = vpack.c.b16 %v4037, %v4036
      %v4175 = vpack.c.b16 %v4039, %v4038
      %v4176 = vpack.c.b16 %v4041, %v4040
      %v4177 = vpack.c.b16 %v4043, %v4042
      %v4178 = vpack.c.b16 %v4045, %v4044
      %v4179 = vpack.c.b16 %v4047, %v4046
      %v4180 = vpack.c.b16 %v4049, %v4048
      %v4181 = vpack.c.b16 %v4051, %v4050
      %v4182 = vpack.c.b16 %v4053, %v4052
      %v4183 = vpack.c.b16 %v4055, %v4054
      %4312 = vmatprep.subr.bf16.mxu0 0
      %4313 = vmatpush1.bf16.msra.mxu0 %v4056
      %4314 = vmatprep.subr.bf16.mxu0 0
      %4315 = vmatpush1.bf16.msra.mxu0 %v4057
      %4316 = vmatprep.subr.bf16.mxu0 0
      %4317 = vmatpush1.bf16.msra.mxu0 %v4058
      %4318 = vmatprep.subr.bf16.mxu0 0
      %4319 = vmatpush1.bf16.msra.mxu0 %v4059
      %4320 = vmatprep.subr.bf16.mxu0 0
      %4321 = vmatpush1.bf16.msra.mxu0 %v4060
      %4322 = vmatprep.subr.bf16.mxu0 0
      %4323 = vmatpush1.bf16.msra.mxu0 %v4061
      %4324 = vmatprep.subr.bf16.mxu0 0
      %4325 = vmatpush1.bf16.msra.mxu0 %v4062
      %4326 = vmatprep.subr.bf16.mxu0 0
      %4327 = vmatpush1.bf16.msra.mxu0 %v4063
      %4328 = vmatprep.subr.bf16.mxu0 0
      %4329 = vmatpush1.bf16.msra.mxu0 %v4064
      %4330 = vmatprep.subr.bf16.mxu0 0
      %4331 = vmatpush1.bf16.msra.mxu0 %v4065
      %4332 = vmatprep.subr.bf16.mxu0 0
      %4333 = vmatpush1.bf16.msra.mxu0 %v4066
      %4334 = vmatprep.subr.bf16.mxu0 0
      %4335 = vmatpush1.bf16.msra.mxu0 %v4067
      %4336 = vmatprep.subr.bf16.mxu0 0
      %4337 = vmatpush1.bf16.msra.mxu0 %v4068
      %4338 = vmatprep.subr.bf16.mxu0 0
      %4339 = vmatpush1.bf16.msra.mxu0 %v4069
      %4340 = vmatprep.subr.bf16.mxu0 0
      %4341 = vmatpush1.bf16.msra.mxu0 %v4070
      %4342 = vmatprep.subr.bf16.mxu0 0
      %4343 = vmatpush1.bf16.msra.mxu0 %v4071
      %4344 = vmatprep.mubr.bf16.mxu0 %v3266
      %4345 = vmatmul.mubr.bf16.gmra.mrb[0].mxu0 %v3265
      %v4346 = vpop.f32.mrb[0].mxu0
      %v4347 = vadd.f32 %v3542, %v4346
      %v4348 = vpop.f32.mrb[0].mxu0
      %v4349 = vpop.f32.mrb[0].mxu0
      %v4350 = vadd.f32 %v3542, %v4349
      %v4351 = vpop.f32.mrb[0].mxu0
      %4352 = vdwg.mxu0
      %4353 = vmatprep.subr.bf16.mxu0 0
      %4354 = vmatpush1.bf16.msra.mxu0 %v4072
      %4355 = vmatprep.subr.bf16.mxu0 0
      %4356 = vmatpush1.bf16.msra.mxu0 %v4073
      %4357 = vmatprep.subr.bf16.mxu0 0
      %4358 = vmatpush1.bf16.msra.mxu0 %v4074
      %4359 = vmatprep.subr.bf16.mxu0 0
      %4360 = vmatpush1.bf16.msra.mxu0 %v4075
      %4361 = vmatprep.subr.bf16.mxu0 0
      %4362 = vmatpush1.bf16.msra.mxu0 %v4076
      %4363 = vmatprep.subr.bf16.mxu0 0
      %4364 = vmatpush1.bf16.msra.mxu0 %v4077
      %4365 = vmatprep.subr.bf16.mxu0 0
      %4366 = vmatpush1.bf16.msra.mxu0 %v4078
      %4367 = vmatprep.subr.bf16.mxu0 0
      %4368 = vmatpush1.bf16.msra.mxu0 %v4079
      %4369 = vmatprep.subr.bf16.mxu0 0
      %4370 = vmatpush1.bf16.msra.mxu0 %v4080
      %4371 = vmatprep.subr.bf16.mxu0 0
      %4372 = vmatpush1.bf16.msra.mxu0 %v4081
      %4373 = vmatprep.subr.bf16.mxu0 0
      %4374 = vmatpush1.bf16.msra.mxu0 %v4082
      %4375 = vmatprep.subr.bf16.mxu0 0
      %4376 = vmatpush1.bf16.msra.mxu0 %v4083
      %4377 = vmatprep.subr.bf16.mxu0 0
      %4378 = vmatpush1.bf16.msra.mxu0 %v4084
      %4379 = vmatprep.subr.bf16.mxu0 0
      %4380 = vmatpush1.bf16.msra.mxu0 %v4085
      %4381 = vmatprep.subr.bf16.mxu0 0
      %4382 = vmatpush1.bf16.msra.mxu0 %v4086
      %4383 = vmatprep.subr.bf16.mxu0 0
      %4384 = vmatpush1.bf16.msra.mxu0 %v4087
      %4385 = vmatprep.mubr.bf16.mxu0 %v3268
      %4386 = vmatmul.mubr.bf16.gmra.mrb[0].mxu0 %v3267
      %v4387 = vpop.f32.mrb[0].mxu0
      %v4388 = vadd.f32 %v4347, %v4387
      %v4389 = vpop.f32.mrb[0].mxu0
      %v4390 = vpop.f32.mrb[0].mxu0
      %v4391 = vadd.f32 %v4350, %v4390
      %v4392 = vpop.f32.mrb[0].mxu0
      %4393 = vdwg.mxu0
      %4394 = vmatprep.subr.bf16.mxu0 0
      %4395 = vmatpush1.bf16.msra.mxu0 %v4088
      %4396 = vmatprep.subr.bf16.mxu0 0
      %4397 = vmatpush1.bf16.msra.mxu0 %v4089
      %4398 = vmatprep.subr.bf16.mxu0 0
      %4399 = vmatpush1.bf16.msra.mxu0 %v4090
      %4400 = vmatprep.subr.bf16.mxu0 0
      %4401 = vmatpush1.bf16.msra.mxu0 %v4091
      %4402 = vmatprep.subr.bf16.mxu0 0
      %4403 = vmatpush1.bf16.msra.mxu0 %v4092
      %4404 = vmatprep.subr.bf16.mxu0 0
      %4405 = vmatpush1.bf16.msra.mxu0 %v4093
      %4406 = vmatprep.subr.bf16.mxu0 0
      %4407 = vmatpush1.bf16.msra.mxu0 %v4094
      %4408 = vmatprep.subr.bf16.mxu0 0
      %4409 = vmatpush1.bf16.msra.mxu0 %v4095
      %4410 = vmatprep.subr.bf16.mxu0 0
      %4411 = vmatpush1.bf16.msra.mxu0 %v4096
      %4412 = vmatprep.subr.bf16.mxu0 0
      %4413 = vmatpush1.bf16.msra.mxu0 %v4097
      %4414 = vmatprep.subr.bf16.mxu0 0
      %4415 = vmatpush1.bf16.msra.mxu0 %v4098
      %4416 = vmatprep.subr.bf16.mxu0 0
      %4417 = vmatpush1.bf16.msra.mxu0 %v4099
      %4418 = vmatprep.subr.bf16.mxu0 0
      %4419 = vmatpush1.bf16.msra.mxu0 %v4100
      %4420 = vmatprep.subr.bf16.mxu0 0
      %4421 = vmatpush1.bf16.msra.mxu0 %v4101
      %4422 = vmatprep.subr.bf16.mxu0 0
      %4423 = vmatpush1.bf16.msra.mxu0 %v4102
      %4424 = vmatprep.subr.bf16.mxu0 0
      %4425 = vmatpush1.bf16.msra.mxu0 %v4103
      %4426 = vmatprep.mubr.bf16.mxu0 %v3270
      %4427 = vmatmul.mubr.bf16.gmra.mrb[0].mxu0 %v3269
      %v4428 = vpop.f32.mrb[0].mxu0
      %v4429 = vadd.f32 %v4388, %v4428
      %v4430 = vpop.f32.mrb[0].mxu0
      %v4431 = vpop.f32.mrb[0].mxu0
      %v4432 = vadd.f32 %v4391, %v4431
      %v4433 = vpop.f32.mrb[0].mxu0
      %4434 = vdwg.mxu0
      %4435 = vmatprep.subr.bf16.mxu0 0
      %4436 = vmatpush1.bf16.msra.mxu0 %v4104
      %4437 = vmatprep.subr.bf16.mxu0 0
      %4438 = vmatpush1.bf16.msra.mxu0 %v4105
      %4439 = vmatprep.subr.bf16.mxu0 0
      %4440 = vmatpush1.bf16.msra.mxu0 %v4106
      %4441 = vmatprep.subr.bf16.mxu0 0
      %4442 = vmatpush1.bf16.msra.mxu0 %v4107
      %4443 = vmatprep.subr.bf16.mxu0 0
      %4444 = vmatpush1.bf16.msra.mxu0 %v4108
      %4445 = vmatprep.subr.bf16.mxu0 0
      %4446 = vmatpush1.bf16.msra.mxu0 %v4109
      %4447 = vmatprep.subr.bf16.mxu0 0
      %4448 = vmatpush1.bf16.msra.mxu0 %v4110
      %4449 = vmatprep.subr.bf16.mxu0 0
      %4450 = vmatpush1.bf16.msra.mxu0 %v4111
      %4451 = vmatprep.subr.bf16.mxu0 0
      %4452 = vmatpush1.bf16.msra.mxu0 %v4112
      %4453 = vmatprep.subr.bf16.mxu0 0
      %4454 = vmatpush1.bf16.msra.mxu0 %v4113
      %4455 = vmatprep.subr.bf16.mxu0 0
      %4456 = vmatpush1.bf16.msra.mxu0 %v4114
      %4457 = vmatprep.subr.bf16.mxu0 0
      %4458 = vmatpush1.bf16.msra.mxu0 %v4115
      %4459 = vmatprep.subr.bf16.mxu0 0
      %4460 = vmatpush1.bf16.msra.mxu0 %v4116
      %4461 = vmatprep.subr.bf16.mxu0 0
      %4462 = vmatpush1.bf16.msra.mxu0 %v4117
      %4463 = vmatprep.subr.bf16.mxu0 0
      %4464 = vmatpush1.bf16.msra.mxu0 %v4118
      %4465 = vmatprep.subr.bf16.mxu0 0
      %4466 = vmatpush1.bf16.msra.mxu0 %v4119
      %4467 = vmatprep.mubr.bf16.mxu0 %v3272
      %4468 = vmatmul.mubr.bf16.gmra.mrb[0].mxu0 %v3271
      %v4469 = vpop.f32.mrb[0].mxu0
      %v4470 = vadd.f32 %v4429, %v4469
      %v4471 = vpop.f32.mrb[0].mxu0
      %v4472 = vpop.f32.mrb[0].mxu0
      %v4473 = vadd.f32 %v4432, %v4472
      %v4474 = vpop.f32.mrb[0].mxu0
      %4475 = vdwg.mxu0
      %4476 = vmatprep.subr.bf16.mxu0 0
      %4477 = vmatpush1.bf16.msra.mxu0 %v4120
      %4478 = vmatprep.subr.bf16.mxu0 0
      %4479 = vmatpush1.bf16.msra.mxu0 %v4121
      %4480 = vmatprep.subr.bf16.mxu0 0
      %4481 = vmatpush1.bf16.msra.mxu0 %v4122
      %4482 = vmatprep.subr.bf16.mxu0 0
      %4483 = vmatpush1.bf16.msra.mxu0 %v4123
      %4484 = vmatprep.subr.bf16.mxu0 0
      %4485 = vmatpush1.bf16.msra.mxu0 %v4124
      %4486 = vmatprep.subr.bf16.mxu0 0
      %4487 = vmatpush1.bf16.msra.mxu0 %v4125
      %4488 = vmatprep.subr.bf16.mxu0 0
      %4489 = vmatpush1.bf16.msra.mxu0 %v4126
      %4490 = vmatprep.subr.bf16.mxu0 0
      %4491 = vmatpush1.bf16.msra.mxu0 %v4127
      %4492 = vmatprep.subr.bf16.mxu0 0
      %4493 = vmatpush1.bf16.msra.mxu0 %v4128
      %4494 = vmatprep.subr.bf16.mxu0 0
      %4495 = vmatpush1.bf16.msra.mxu0 %v4129
      %4496 = vmatprep.subr.bf16.mxu0 0
      %4497 = vmatpush1.bf16.msra.mxu0 %v4130
      %4498 = vmatprep.subr.bf16.mxu0 0
      %4499 = vmatpush1.bf16.msra.mxu0 %v4131
      %4500 = vmatprep.subr.bf16.mxu0 0
      %4501 = vmatpush1.bf16.msra.mxu0 %v4132
      %4502 = vmatprep.subr.bf16.mxu0 0
      %4503 = vmatpush1.bf16.msra.mxu0 %v4133
      %4504 = vmatprep.subr.bf16.mxu0 0
      %4505 = vmatpush1.bf16.msra.mxu0 %v4134
      %4506 = vmatprep.subr.bf16.mxu0 0
      %4507 = vmatpush1.bf16.msra.mxu0 %v4135
      %4508 = vmatprep.mubr.bf16.mxu0 %v3274
      %4509 = vmatmul.mubr.bf16.gmra.mrb[0].mxu0 %v3273
      %v4510 = vpop.f32.mrb[0].mxu0
      %v4511 = vadd.f32 %v4470, %v4510
      %v4512 = vpop.f32.mrb[0].mxu0
      %v4513 = vpop.f32.mrb[0].mxu0
      %v4514 = vadd.f32 %v4473, %v4513
      %v4515 = vpop.f32.mrb[0].mxu0
      %4516 = vdwg.mxu0
      %4517 = vmatprep.subr.bf16.mxu0 0
      %4518 = vmatpush1.bf16.msra.mxu0 %v4136
      %4519 = vmatprep.subr.bf16.mxu0 0
      %4520 = vmatpush1.bf16.msra.mxu0 %v4137
      %4521 = vmatprep.subr.bf16.mxu0 0
      %4522 = vmatpush1.bf16.msra.mxu0 %v4138
      %4523 = vmatprep.subr.bf16.mxu0 0
      %4524 = vmatpush1.bf16.msra.mxu0 %v4139
      %4525 = vmatprep.subr.bf16.mxu0 0
      %4526 = vmatpush1.bf16.msra.mxu0 %v4140
      %4527 = vmatprep.subr.bf16.mxu0 0
      %4528 = vmatpush1.bf16.msra.mxu0 %v4141
      %4529 = vmatprep.subr.bf16.mxu0 0
      %4530 = vmatpush1.bf16.msra.mxu0 %v4142
      %4531 = vmatprep.subr.bf16.mxu0 0
      %4532 = vmatpush1.bf16.msra.mxu0 %v4143
      %4533 = vmatprep.subr.bf16.mxu0 0
      %4534 = vmatpush1.bf16.msra.mxu0 %v4144
      %4535 = vmatprep.subr.bf16.mxu0 0
      %4536 = vmatpush1.bf16.msra.mxu0 %v4145
      %4537 = vmatprep.subr.bf16.mxu0 0
      %4538 = vmatpush1.bf16.msra.mxu0 %v4146
      %4539 = vmatprep.subr.bf16.mxu0 0
      %4540 = vmatpush1.bf16.msra.mxu0 %v4147
      %4541 = vmatprep.subr.bf16.mxu0 0
      %4542 = vmatpush1.bf16.msra.mxu0 %v4148
      %4543 = vmatprep.subr.bf16.mxu0 0
      %4544 = vmatpush1.bf16.msra.mxu0 %v4149
      %4545 = vmatprep.subr.bf16.mxu0 0
      %4546 = vmatpush1.bf16.msra.mxu0 %v4150
      %4547 = vmatprep.subr.bf16.mxu0 0
      %4548 = vmatpush1.bf16.msra.mxu0 %v4151
      %4549 = vmatprep.mubr.bf16.mxu0 %v3276
      %4550 = vmatmul.mubr.bf16.gmra.mrb[0].mxu0 %v3275
      %v4551 = vpop.f32.mrb[0].mxu0
      %v4552 = vadd.f32 %v4511, %v4551
      %v4553 = vpop.f32.mrb[0].mxu0
      %v4554 = vpop.f32.mrb[0].mxu0
      %v4555 = vadd.f32 %v4514, %v4554
      %v4556 = vpop.f32.mrb[0].mxu0
      %4557 = vdwg.mxu0
      %4558 = vmatprep.subr.bf16.mxu0 0
      %4559 = vmatpush1.bf16.msra.mxu0 %v4152
      %4560 = vmatprep.subr.bf16.mxu0 0
      %4561 = vmatpush1.bf16.msra.mxu0 %v4153
      %4562 = vmatprep.subr.bf16.mxu0 0
      %4563 = vmatpush1.bf16.msra.mxu0 %v4154
      %4564 = vmatprep.subr.bf16.mxu0 0
      %4565 = vmatpush1.bf16.msra.mxu0 %v4155
      %4566 = vmatprep.subr.bf16.mxu0 0
      %4567 = vmatpush1.bf16.msra.mxu0 %v4156
      %4568 = vmatprep.subr.bf16.mxu0 0
      %4569 = vmatpush1.bf16.msra.mxu0 %v4157
      %4570 = vmatprep.subr.bf16.mxu0 0
      %4571 = vmatpush1.bf16.msra.mxu0 %v4158
      %4572 = vmatprep.subr.bf16.mxu0 0
      %4573 = vmatpush1.bf16.msra.mxu0 %v4159
      %4574 = vmatprep.subr.bf16.mxu0 0
      %4575 = vmatpush1.bf16.msra.mxu0 %v4160
      %4576 = vmatprep.subr.bf16.mxu0 0
      %4577 = vmatpush1.bf16.msra.mxu0 %v4161
      %4578 = vmatprep.subr.bf16.mxu0 0
      %4579 = vmatpush1.bf16.msra.mxu0 %v4162
      %4580 = vmatprep.subr.bf16.mxu0 0
      %4581 = vmatpush1.bf16.msra.mxu0 %v4163
      %4582 = vmatprep.subr.bf16.mxu0 0
      %4583 = vmatpush1.bf16.msra.mxu0 %v4164
      %4584 = vmatprep.subr.bf16.mxu0 0
      %4585 = vmatpush1.bf16.msra.mxu0 %v4165
      %4586 = vmatprep.subr.bf16.mxu0 0
      %4587 = vmatpush1.bf16.msra.mxu0 %v4166
      %4588 = vmatprep.subr.bf16.mxu0 0
      %4589 = vmatpush1.bf16.msra.mxu0 %v4167
      %4590 = vmatprep.mubr.bf16.mxu0 %v3278
      %4591 = vmatmul.mubr.bf16.gmra.mrb[0].mxu0 %v3277
      %v4592 = vpop.f32.mrb[0].mxu0
      %v4593 = vadd.f32 %v4552, %v4592
      %v4594 = vpop.f32.mrb[0].mxu0
      %v4595 = vpop.f32.mrb[0].mxu0
      %v4596 = vadd.f32 %v4555, %v4595
      %v4597 = vpop.f32.mrb[0].mxu0
      %4598 = vdwg.mxu0
      %4599 = vmatprep.subr.bf16.mxu0 0
      %4600 = vmatpush1.bf16.msra.mxu0 %v4168
      %4601 = vmatprep.subr.bf16.mxu0 0
      %4602 = vmatpush1.bf16.msra.mxu0 %v4169
      %4603 = vmatprep.subr.bf16.mxu0 0
      %4604 = vmatpush1.bf16.msra.mxu0 %v4170
      %4605 = vmatprep.subr.bf16.mxu0 0
      %4606 = vmatpush1.bf16.msra.mxu0 %v4171
      %4607 = vmatprep.subr.bf16.mxu0 0
      %4608 = vmatpush1.bf16.msra.mxu0 %v4172
      %4609 = vmatprep.subr.bf16.mxu0 0
      %4610 = vmatpush1.bf16.msra.mxu0 %v4173
      %4611 = vmatprep.subr.bf16.mxu0 0
      %4612 = vmatpush1.bf16.msra.mxu0 %v4174
      %4613 = vmatprep.subr.bf16.mxu0 0
      %4614 = vmatpush1.bf16.msra.mxu0 %v4175
      %4615 = vmatprep.subr.bf16.mxu0 0
      %4616 = vmatpush1.bf16.msra.mxu0 %v4176
      %4617 = vmatprep.subr.bf16.mxu0 0
      %4618 = vmatpush1.bf16.msra.mxu0 %v4177
      %4619 = vmatprep.subr.bf16.mxu0 0
      %4620 = vmatpush1.bf16.msra.mxu0 %v4178
      %4621 = vmatprep.subr.bf16.mxu0 0
      %4622 = vmatpush1.bf16.msra.mxu0 %v4179
      %4623 = vmatprep.subr.bf16.mxu0 0
      %4624 = vmatpush1.bf16.msra.mxu0 %v4180
      %4625 = vmatprep.subr.bf16.mxu0 0
      %4626 = vmatpush1.bf16.msra.mxu0 %v4181
      %4627 = vmatprep.subr.bf16.mxu0 0
      %4628 = vmatpush1.bf16.msra.mxu0 %v4182
      %4629 = vmatprep.subr.bf16.mxu0 0
      %4630 = vmatpush1.bf16.msra.mxu0 %v4183
      %4631 = vmatprep.mubr.bf16.mxu0 %v3280
      %4632 = vmatmul.mubr.bf16.gmra.mrb[0].mxu0 %v3279
      %v4633 = vpop.f32.mrb[0].mxu0
      %v4634 = vadd.f32 %v4593, %v4633
      %v4635 = vpop.f32.mrb[0].mxu0
      %v4636 = vpop.f32.mrb[0].mxu0
      %v4637 = vadd.f32 %v4596, %v4636
      %v4638 = vpop.f32.mrb[0].mxu0
      %4639 = vdwg.mxu0
      %v4640 = vadd.f32 %v2415, %v4634
      %v4641 = vadd.f32 %v2416, %v4637
      %v4642 = vld [vmem:[%s724] sm:$0x1]
      %v4643 = vld [vmem:[%s727] sm:$0x1]
      %v4644 = vsel %vm782, %v4640, 0.0
      %4645 = vadd.xlane.f32.xlu0 %v4644
      %v4646 = vpop.xlane.xlu0 %4645
      %v4647 = vsel %vm782, %v4641, 0.0
      %4648 = vadd.xlane.f32.xlu0 %v4647
      %v4649 = vpop.xlane.xlu0 %4648
      %v4650 = vmul.f32 %v4646, %v2380
      %v4651 = vmul.f32 %v4649, %v2380
      %v4652 = vsub.f32 %v4640, %v4650
      %v4653 = vsub.f32 %v4641, %v4651
      %v4654 = vmul.f32 %v4652, %v4652
      %v4655 = vmul.f32 %v4653, %v4653
      %v4656 = vsel %vm782, %v4654, 0.0
      %4657 = vadd.xlane.f32.xlu0 %v4656
      %v4658 = vpop.xlane.xlu0 %4657
      %v4659 = vsel %vm782, %v4655, 0.0
      %4660 = vadd.xlane.f32.xlu0 %v4659
      %v4661 = vpop.xlane.xlu0 %4660
      %v4662 = vmul.f32 %v4658, %v2380
      %v4663 = vmul.f32 %v4661, %v2380
      %v4664 = vadd.f32 %v4662, 1e-05
      %v4665 = vadd.f32 %v4663, 1e-05
      %v4666 = vrsqrt.pop %v4664
      %v4667 = vrsqrt.pop %v4665
      %v4668 = vmul.f32 %v4652, %v4666
      %v4669 = vmul.f32 %v4653, %v4667
      %v4671 = vlaneseq
      %v4672 = vshrl.u32 %v4671, 7
      %v4673 = vsub.s32 0, %v4672
      %v4674 = vrot.slane %v4642, %v4673
      %v4676 = vmul.f32 %v4668, %v4674
      %v4677 = vmul.f32 %v4669, %v4674
      %v4679 = vlaneseq
      %v4680 = vshrl.u32 %v4679, 7
      %v4681 = vsub.s32 0, %v4680
      %v4682 = vrot.slane %v4643, %v4681
      %v4684 = vadd.f32 %v4676, %v4682
      %v4685 = vadd.f32 %v4677, %v4682
      %4686 = vst.msk [vmem:[#allocation2] sm:$0xff] %vm782, %v4684
      %4687 = vst.msk [vmem:[#allocation2 + $0x8] sm:$0xff] %vm782, %v4685
      %p4688 = scmp.eq.s32.totalorder %s30, 1
      // Predicated region
      $region93: #{mnist_trans_forward.3} parent=87 // pred_check
        %p4689 = pneg %p4688
      $region94: #{mnist_trans_forward.3} parent=87 // pred_check_branch
        %4691 = sbr.rel (%p4689) target = $region96
      $region95: #{mnist_trans_forward.3} parent=87 // pred_region
        %v4692 = vmax.f32 %v4684, 0.0
        %v4693 = vmax.f32 %v4685, 0.0
        %v4694 = vpack.c.bf16 %v4693, %v4692
        %v4695 = vld [vmem:[%s15] sm:$0xf]
        %v4696 = vld [vmem:[%s15 + $0x4] sm:$0xf]
        %v4697 = vld [vmem:[%s15 + $0x8] sm:$0xf]
        %v4698 = vld [vmem:[%s15 + $0xc] sm:$0xf]
        %v4699 = vld [vmem:[%s15 + $0x10] sm:$0xf]
        %v4700 = vld [vmem:[%s15 + $0x14] sm:$0xf]
        %v4701 = vld [vmem:[%s15 + $0x18] sm:$0xf]
        %v4702 = vld [vmem:[%s15 + $0x1c] sm:$0xf]
        %v4703 = vld [vmem:[#allocation3] sm:$0x1]
        %v4705 = vlaneseq
        %v4706 = vshrl.u32 %v4705, 7
        %v4707 = vsub.s32 0, %v4706
        %v4708 = vrot.slane %v4703, %v4707
        %v4718 = vunpack.c.l.b16 %v4695
        %v4719 = vunpack.c.l.b16 %v4696
        %v4720 = vunpack.c.l.b16 %v4697
        %v4721 = vunpack.c.l.b16 %v4698
        %v4722 = vunpack.c.l.b16 %v4699
        %v4723 = vunpack.c.l.b16 %v4700
        %v4724 = vunpack.c.l.b16 %v4701
        %v4725 = vunpack.c.l.b16 %v4702
        %v4726 = vpack.c.b16 %v4719, %v4718
        %v4727 = vpack.c.b16 %v4721, %v4720
        %v4728 = vpack.c.b16 %v4723, %v4722
        %v4729 = vpack.c.b16 %v4725, %v4724
        %v4735 = vsel %vm782, %v4694, 0
        %4737 = vmatprep.subr.bf16.mxu0 0
        %4738 = vmatpush1.bf16.msra.mxu0 %v4726
        %4739 = vmatprep.subr.bf16.mxu0 0
        %4740 = vmatpush1.bf16.msra.mxu0 %v4727
        %4741 = vmatprep.subr.bf16.mxu0 0
        %4742 = vmatpush1.bf16.msra.mxu0 %v4728
        %4743 = vmatprep.subr.bf16.mxu0 0
        %4744 = vmatpush1.bf16.msra.mxu0 %v4729
        %4745 = vmatprep.subr.bf16.mxu0 0
        %4746 = vmatpush1.bf16.msra.mxu0 0
        %4747 = vmatprep.subr.bf16.mxu0 0
        %4748 = vmatpush1.bf16.msra.mxu0 0
        %4749 = vmatprep.subr.bf16.mxu0 0
        %4750 = vmatpush1.bf16.msra.mxu0 0
        %4751 = vmatprep.subr.bf16.mxu0 0
        %4752 = vmatpush1.bf16.msra.mxu0 0
        %4753 = vmatprep.subr.bf16.mxu0 0
        %4754 = vmatpush1.bf16.msra.mxu0 0
        %4755 = vmatprep.subr.bf16.mxu0 0
        %4756 = vmatpush1.bf16.msra.mxu0 0
        %4757 = vmatprep.subr.bf16.mxu0 0
        %4758 = vmatpush1.bf16.msra.mxu0 0
        %4759 = vmatprep.subr.bf16.mxu0 0
        %4760 = vmatpush1.bf16.msra.mxu0 0
        %4761 = vmatprep.subr.bf16.mxu0 0
        %4762 = vmatpush1.bf16.msra.mxu0 0
        %4763 = vmatprep.subr.bf16.mxu0 0
        %4764 = vmatpush1.bf16.msra.mxu0 0
        %4765 = vmatprep.subr.bf16.mxu0 0
        %4766 = vmatpush1.bf16.msra.mxu0 0
        %4767 = vmatprep.subr.bf16.mxu0 0
        %4768 = vmatpush1.bf16.msra.mxu0 0
        %4769 = vmatprep.mubr.bf16.mxu0 0
        %4770 = vmatmul.mubr.bf16.gmra.mrb[0].mxu0 %v4735
        %v4771 = vpop.f32.mrb[0].mxu0
        %v4772 = vadd.f32 %v4708, %v4771
        %v4773 = vpop.f32.mrb[0].mxu0
        %v4774 = vpop.f32.mrb[0].mxu0
        %v4775 = vadd.f32 %v4708, %v4774
        %v4776 = vpop.f32.mrb[0].mxu0
        %4777 = vdwg.mxu0
        %vm4778 = vcmask 7168
        %4779 = vst.msk [vmem:[%s17] sm:$0xff] %vm4778, %v4772
        %4780 = vst.msk [vmem:[%s17 + $0x8] sm:$0xff] %vm4778, %v4775
      $region96: #{mnist_trans_forward.3} parent=87 // pred_fallthru
        _
      // Predicated region
      $region97: #{mnist_trans_forward.3} parent=87 // pred_check
        %p4781 = pneg %p465
      $region98: #{mnist_trans_forward.3} parent=87 // pred_check_branch
        %4783 = sbr.rel (%p4781) target = $region100
      $region99: #{mnist_trans_forward.3} parent=87 // pred_region
        _
      $region100: #{mnist_trans_forward.3} parent=87 // pred_fallthru
        _
      // Predicated region
      $region101: #{mnist_trans_forward.3} parent=87 // pred_check
        %p4784 = pneg %p465
      $region102: #{mnist_trans_forward.3} parent=87 // pred_check_branch
        %4786 = sbr.rel (%p4784) target = $region104
      $region103: #{mnist_trans_forward.3} parent=87 // pred_region
        _
      $region104: #{mnist_trans_forward.3} parent=87 // pred_fallthru
        _
    $region88: #{mnist_trans_forward.3} parent=5 // pred_fallthru
      _
    %p4787 = scmp.le.s32.totalorder 2, %s25
    // Predicated region
    $region105: #{mnist_trans_forward.3} parent=5 // pred_check
      %p4788 = pneg %p4787
    $region106: #{mnist_trans_forward.3} parent=5 // pred_check_branch
      %4790 = sbr.rel (%p4788) target = $region108
    $region107: #{mnist_trans_forward.3} parent=5 // pred_region
      %s4791 = ssub.s32 %s25, 2
    $region108: #{mnist_trans_forward.3} parent=5 // pred_fallthru
      _
  $region6: #{mnist_trans_forward.3} parent=0 // loop_footer
    %s29 = sadd.s32 1, %s25
  $region7: #{mnist_trans_forward.3} parent=0 // loop_footer_branch
    %24 = sbr.rel target = $region3
  $region8: #{mnist_trans_forward.3} parent=0 // loop_exit
    _

</llo_original>
